<compile_context>
chip_gen: v5e
topology: v5e:2x2
jax: 0.10.0
libtpu: 0.0.40
codegen_flags: <defaults>
</compile_context>

<pallas_src>
import functools

import jax
import jax.numpy as jnp
from jax.experimental import pallas as pl
from jax.experimental.pallas import tpu as pltpu

NEG_SLOPE = 0.01          # F.leaky_relu default negative slope
NUM_SEM = 4               # Tree.num_sem (synthetic)


def _leaky(x):
    return jnp.where(x > 0, x, NEG_SLOPE * x)


def _round_up(x, m):
    return ((x + m - 1) // m) * m


# ----------------------------------------------------------------------------
# One-time (import-time) capability / hardware decisions.  No per-forward
# try/except, no per-forward host sync.
# ----------------------------------------------------------------------------
def _probe_single_buffered_weights():
    """Check once whether pipeline_mode=pl.Buffered(1) lowers on this jax/TPU."""
    try:
        mode = pl.Buffered(1)
    except Exception:
        return None

    def k(w_ref, x_ref, o_ref):
        o_ref[...] = x_ref[...] + w_ref[...]

    try:
        f = pl.pallas_call(
            k,
            out_shape=jax.ShapeDtypeStruct((16, 128), jnp.float32),
            grid=(2,),
            in_specs=[pl.BlockSpec((8, 128), lambda i: (0, 0), pipeline_mode=mode),
                      pl.BlockSpec((8, 128), lambda i: (i, 0))],
            out_specs=pl.BlockSpec((8, 128), lambda i: (i, 0)),
        )
        jax.block_until_ready(f(jnp.zeros((8, 128), jnp.float32),
                                jnp.zeros((16, 128), jnp.float32)))
        return mode
    except Exception:
        return None


_WEIGHT_MODE = _probe_single_buffered_weights()


def _pick_compute_dtype():
    """bf16 elementwise (h1/h2) on chips with a bf16 VPU (v6e/v7x); f32 on v5e-."""
    try:
        kind = jax.devices()[0].device_kind.lower()
    except Exception:
        return jnp.float32
    if any(t in kind for t in ("v2", "v3", "v4", "v5")):
        return jnp.float32
    return jnp.bfloat16


_COMPUTE_DTYPE = _pick_compute_dtype()


# ----------------------------------------------------------------------------
# Pallas kernel: PartDecoder hot path.
#   layer 1 = leaky( (lf @ W1[:feat] + b1)  +  (pc @ W1[feat:]) )
#     - the per-leaf-row partial (incl. b1) is precomputed outside (tiny),
#     - the per-point K=3 partial is computed in-kernel from an 8-lane-padded
#       base_pc tile (no (P,1024) f32 partial streamed from HBM).
#   layers 2/3: resident bf16 weights, f32 MXU accumulation, 8-lane output head.
# ----------------------------------------------------------------------------
def _make_pd_kernel(compute_dtype):
    def kernel(lfh_ref, pc_ref, w1p_ref, w2_ref, b2_ref, w3_ref, b3_ref, o_ref):
        # per-point layer-1 partial: (tp, 8) @ (8, 1024), zero-padded K rows
        pc_part = jnp.dot(pc_ref[...], w1p_ref[...],
                          preferred_element_type=jnp.float32)           # (tp, 1024)
        h1 = _leaky(lfh_ref[...].astype(compute_dtype)
                    + pc_part.astype(compute_dtype))                    # (tp, 1024)
        h2 = jnp.dot(h1.astype(jnp.bfloat16), w2_ref[...],
                     preferred_element_type=jnp.float32)                # (tp, 1024)
        h2 = _leaky(h2.astype(compute_dtype) + b2_ref[...].astype(compute_dtype))
        # 8-lane padded head; padded lanes/rows are sliced off in the wrapper.
        o_ref[...] = (jnp.dot(h2.astype(jnp.bfloat16), w3_ref[...],
                              preferred_element_type=jnp.float32)
                      + b3_ref[...])
    return kernel


def _const_spec(shape, mode):
    idx = lambda b, p, _n=len(shape): (0,) * _n
    if mode is None:
        return pl.BlockSpec(shape, idx)
    return pl.BlockSpec(shape, idx, pipeline_mode=mode)


def _make_pd_call(BL, Pp, tp, H, mode):
    return pl.pallas_call(
        _make_pd_kernel(_COMPUTE_DTYPE),
        out_shape=jax.ShapeDtypeStruct((BL, Pp, 8), jnp.float32),
        grid=(BL, Pp // tp),
        in_specs=[
            pl.BlockSpec((None, 1, H), lambda b, p: (b, 0, 0)),   # lf partial (f32)
            pl.BlockSpec((tp, 8), lambda b, p: (p, 0)),           # base_pc tile (f32)
            _const_spec((8, H), mode),                            # W1 point-part (f32)
            _const_spec((H, H), mode),                            # W2 (bf16)
            _const_spec((1, H), mode),                            # b2 (f32)
            _const_spec((H, 8), mode),                            # W3 padded (bf16)
            _const_spec((1, 8), mode),                            # b3 padded (f32)
        ],
        out_specs=pl.BlockSpec((None, tp, 8), lambda b, p: (b, p, 0)),
        compiler_params=pltpu.CompilerParams(
            dimension_semantics=("parallel", "parallel"),
            vmem_limit_bytes=48 << 20),
    )


def part_decoder_mlp(lf_h, base_pc, w1p_pad, w2_bf16, b2, w3p_bf16, b3p):
    """lf_h: (BL, 1024) f32; base_pc: (P, 3) f32 -> (BL, P, 3) f32."""
    BL, H = lf_h.shape
    P = base_pc.shape[0]
    tp = 512 if P >= 512 else _round_up(P, 8)
    Pp = _round_up(P, tp)
    pc_pad = jnp.zeros((Pp, 8), jnp.float32).at[:P, :3].set(base_pc)
    out = _make_pd_call(BL, Pp, tp, H, _WEIGHT_MODE)(
        lf_h[:, None, :], pc_pad, w1p_pad, w2_bf16, b2, w3p_bf16, b3p)
    return out[:, :P, :3]


# ----------------------------------------------------------------------------
# Per-level decode MLP: plain XLA (per perf review: at B=2 / hidden=32 one grid
# step is ~8 KFLOP — Pallas would be pure dispatch/pipeline overhead).
# ----------------------------------------------------------------------------
def decode_level(parent_feats, const_bias, w1f, w2, b2):
    """parent_feats: (C, B, feat); const_bias: (C, 1, hidden) -> (C, B, feat)."""
    h = _leaky(jnp.einsum("cbf,fh->cbh", parent_feats, w1f) + const_bias)
    return _leaky(jnp.einsum("cbh,hf->cbf", h, w2) + b2)


# ----------------------------------------------------------------------------
# Tree glue (host Python, traced once under jit for a fixed tree).
# TODO(synk): recursive tree traversal / variable child counts have no clean
#             Pallas equivalent; they stay as Python-static structure traced
#             into plain XLA ops inside jit.
# ----------------------------------------------------------------------------
class Node:
    def __init__(self, sem_id, group_ins_id, children=()):
        self.sem_id = sem_id
        self.group_ins_id = group_ins_id
        self.children = list(children)
        self.template_feature = None
        self.geo_id = None


def assign_geo_ids(node, counter):
    if not node.children:
        node.geo_id = counter[0]
        counter[0] += 1
    else:
        for c in node.children:
            assign_geo_ids(c, counter)


# ----------------------------------------------------------------------------
# Parameter init (deterministic, PyTorch-Linear-style uniform).
# ----------------------------------------------------------------------------
def linear_params(key, fan_in, fan_out):
    k1, k2 = jax.random.split(key)
    bound = 1.0 / (fan_in ** 0.5)
    w = jax.random.uniform(k1, (fan_in, fan_out), jnp.float32, -bound, bound)
    b = jax.random.uniform(k2, (1, fan_out), jnp.float32, -bound, bound)
    return w, b


def build_params(key, feat_len, template_feat_len, hidden_len, maxp):
    ks = jax.random.split(key, 8)
    p = {}
    # TemplateChildrenEncoder
    p["tce_w1"], p["tce_b1"] = linear_params(
        ks[0], template_feat_len + NUM_SEM + maxp, hidden_len)
    p["tce_w2"], p["tce_b2"] = linear_params(ks[1], hidden_len, template_feat_len)
    # Network mlp1 / mlp2
    p["mlp1_w"], p["mlp1_b"] = linear_params(
        ks[2], feat_len + NUM_SEM + template_feat_len + maxp, hidden_len)
    p["mlp2_w"], p["mlp2_b"] = linear_params(ks[3], hidden_len, feat_len)
    # PartDecoder: layer-1 kept f32 (precision of geometry); point-part of W1
    # zero-padded to 8 rows so the in-kernel dot has an aligned K.
    p["pd_w1"], p["pd_b1"] = linear_params(ks[4], feat_len + 3, 1024)
    p["pd_w1p_pad"] = jnp.zeros((8, 1024), jnp.float32).at[:3].set(
        p["pd_w1"][feat_len:])
    w2, b2 = linear_params(ks[5], 1024, 1024)
    w3, b3 = linear_params(ks[6], 1024, 3)
    p["pd_w2"] = w2.astype(jnp.bfloat16)
    p["pd_b2"] = b2
    # 3 -> 8 lane padded head (small masked store in-kernel, 16x fewer HBM writes
    # than a 128-lane head at large P).
    p["pd_w3p"] = jnp.zeros((1024, 8), jnp.float32).at[:, :3].set(w3).astype(jnp.bfloat16)
    p["pd_b3p"] = jnp.zeros((1, 8), jnp.float32).at[:, :3].set(b3)
    # TODO(synk): on v7x pd_w2 could be stored fp8 (MXU-native) after an
    #             accuracy check; not applicable to v5e/v6e.
    return p


# ----------------------------------------------------------------------------
# Forward pass (mirrors Network.forward semantics).
# ----------------------------------------------------------------------------
def template_encode(node, params, template_feat_len, maxp):
    """Per-node TemplateChildrenEncoder: tiny, variable child count -> plain XLA."""
    if not node.children:
        ret = jnp.zeros((1, template_feat_len), jnp.float32)
    else:
        cfeats = jnp.concatenate(
            [template_encode(c, params, template_feat_len, maxp)
             for c in node.children], axis=0)                      # (n, tmpl)
        sem = jax.nn.one_hot(jnp.array([c.sem_id for c in node.children]),
                             NUM_SEM, dtype=jnp.float32)
        grp = jax.nn.one_hot(jnp.array([c.group_ins_id for c in node.children]),
                             maxp, dtype=jnp.float32)
        x = jnp.concatenate([cfeats, sem, grp], axis=1)
        h = _leaky(x @ params["tce_w1"] + params["tce_b1"])
        parent = jnp.max(h, axis=0, keepdims=True)                 # symmetric_type=='max'
        ret = _leaky(parent @ params["tce_w2"] + params["tce_b2"])
    node.template_feature = ret
    return ret


def level_const_bias(nodes, params, feat_len, maxp):
    """Batched node-constant mlp1 contribution for a whole tree level:
    concat(sem, template, group) @ W1[feat:] + b1  ->  (C, hidden)."""
    sem = jax.nn.one_hot(jnp.array([n.sem_id for n in nodes]),
                         NUM_SEM, dtype=jnp.float32)
    grp = jax.nn.one_hot(jnp.array([n.group_ins_id for n in nodes]),
                         maxp, dtype=jnp.float32)
    tmpl = jnp.concatenate([n.template_feature for n in nodes], axis=0)
    const_in = jnp.concatenate([sem, tmpl, grp], axis=1)
    return const_in @ params["mlp1_w"][feat_len:] + params["mlp1_b"]


def part_decoder_ref(lf, pc, params, feat_len):
    """Pure-jnp f32 reference for the part decoder (PyTorch repeat/concat path)."""
    w1, b1 = params["pd_w1"], params["pd_b1"]
    w2, b2 = params["pd_w2"].astype(jnp.float32), params["pd_b2"]
    w3, b3 = params["pd_w3p"][:, :3].astype(jnp.float32), params["pd_b3p"][:, :3]
    B, F = lf.shape
    P = pc.shape[0]
    net = jnp.concatenate([jnp.broadcast_to(lf[:, None, :], (B, P, F)),
                           jnp.broadcast_to(pc[None], (B, P, 3))], axis=-1)
    net = _leaky(net @ w1 + b1)
    net = _leaky(net @ w2 + b2)
    return net @ w3 + b3


def network_forward(root, z, base_pc, params, feat_len, template_feat_len,
                    maxp, leaf_cnt, use_pallas=True):
    B = z.shape[0]
    template_encode(root, params, template_feat_len, maxp)

    w1f = params["mlp1_w"][:feat_len]                              # (feat, hidden)

    # Root feature (root treated as a single "child" of z).
    root_cb = level_const_bias([root], params, feat_len, maxp)     # (1, hidden)
    feat = decode_level(z[None], root_cb[:, None, :],
                        w1f, params["mlp2_w"], params["mlp2_b"])[0]  # (B, feat)

    # Level-by-level decode: all children of a level in one batched einsum.
    leaf_feats = [None] * leaf_cnt
    frontier = [(root, feat)]
    while frontier:
        parent_feats, child_nodes = [], []
        for node, f in frontier:
            if not node.children:
                leaf_feats[node.geo_id] = f[:, None, :]
            else:
                for c in node.children:
                    parent_feats.append(f)
                    child_nodes.append(c)
        frontier = []
        if child_nodes:
            pf = jnp.stack(parent_feats, axis=0)                   # (C, B, feat)
            cb = level_const_bias(child_nodes, params, feat_len, maxp)  # (C, hidden)
            cf = decode_level(pf, cb[:, None, :],
                              w1f, params["mlp2_w"], params["mlp2_b"])
            frontier = [(c, cf[i]) for i, c in enumerate(child_nodes)]

    leaf = jnp.concatenate(leaf_feats, axis=1)                     # (B, leaf, feat)
    BL = B * leaf_cnt
    P = base_pc.shape[0]
    lf = leaf.reshape(BL, feat_len)

    if use_pallas:
        # Per-leaf-row layer-1 partial (tiny); the per-point partial is fused
        # into the Pallas kernel from base_pc directly.
        lf_h = lf @ params["pd_w1"][:feat_len] + params["pd_b1"]   # (BL, 1024)
        pcs = part_decoder_mlp(lf_h, base_pc, params["pd_w1p_pad"],
                               params["pd_w2"], params["pd_b2"],
                               params["pd_w3p"], params["pd_b3p"])  # (BL, P, 3)
    else:
        pcs = part_decoder_ref(lf, base_pc, params, feat_len)
    return pcs.reshape(B, leaf_cnt, P, 3)


# ----------------------------------------------------------------------------
if __name__ == "__main__":
    # synthetic config (mirrors args)
    feat_len = 32
    template_feat_len = 32
    hidden_len = 32
    max_part_per_parent = 4
    batch = 2
    num_point = 128                 # "cube.pts" point count (synthetic)

    key = jax.random.PRNGKey(0)
    kp, kz, kpc = jax.random.split(key, 3)
    params = build_params(kp, feat_len, template_feat_len, hidden_len,
                          max_part_per_parent)

    # synthetic tree: root -> [leaf A, internal B -> [leaf B1, leaf B2]]
    root = Node(0, 0, [
        Node(1, 0),
        Node(2, 1, [Node(1, 0), Node(3, 1)]),
    ])
    counter = [0]
    assign_geo_ids(root, counter)
    leaf_cnt = counter[0]           # = 3

    z = jax.random.normal(kz, (batch, feat_len), jnp.float32)
    base_pc = jax.random.uniform(kpc, (num_point, 3), jnp.float32, -0.5, 0.5)

    # Fixed tree -> Python-static structure: jit the whole forward once.
    fwd = jax.jit(functools.partial(
        network_forward, root,
        feat_len=feat_len, template_feat_len=template_feat_len,
        maxp=max_part_per_parent, leaf_cnt=leaf_cnt, use_pallas=True))

    pcs = jax.block_until_ready(fwd(z, base_pc, params))
    assert pcs.shape == (batch, leaf_cnt, num_point, 3), pcs.shape
    assert bool(jnp.all(jnp.isfinite(pcs)))

    # Sanity-check the Pallas part decoder against the pure-jnp f32 reference
    # (same bf16-quantized weights -> only mixed-precision/accumulation diff).
    ref = network_forward(root, z, base_pc, params, feat_len, template_feat_len,
                          max_part_per_parent, leaf_cnt, use_pallas=False)
    rel = float(jnp.linalg.norm(pcs - ref) / (jnp.linalg.norm(ref) + 1e-6))
    assert rel < 1e-1, rel

    print("KERNEL_OK")
</pallas_src>

<mosaic_0001>
module attributes {stable_mosaic.version = 11 : i64} {
  func.func @k(%arg0: i32, %arg1: memref<8x128xf32, #tpu.memory_space<vmem>>, %arg2: memref<8x128xf32, #tpu.memory_space<vmem>>, %arg3: memref<8x128xf32, #tpu.memory_space<vmem>>) attributes {dimension_semantics = [#tpu.dimension_semantics<arbitrary>], iteration_bounds = array<i64: 2>, scalar_prefetch = 0 : i64, scratch_operands = 0 : i64, tpu.core_type = #tpu.core_type<tc>, window_params = [{pipeline_mode = #tpu.pipeline_mode<synchronous>, transform_indices = @transform_0, window_bounds = array<i64: 8, 128>}, {transform_indices = @transform_1, window_bounds = array<i64: 8, 128>}, {transform_indices = @transform_2, window_bounds = array<i64: 8, 128>}]} {
    %c0 = arith.constant 0 : index
    %c0_0 = arith.constant 0 : index
    %0 = vector.load %arg2[%c0, %c0_0] : memref<8x128xf32, #tpu.memory_space<vmem>>, vector<8x128xf32>
    %c0_1 = arith.constant 0 : index
    %c0_2 = arith.constant 0 : index
    %1 = vector.load %arg1[%c0_1, %c0_2] : memref<8x128xf32, #tpu.memory_space<vmem>>, vector<8x128xf32>
    %2 = arith.addf %0, %1 : vector<8x128xf32>
    %c0_3 = arith.constant 0 : index
    %c0_4 = arith.constant 0 : index
    %3 = vector.load %arg3[%c0_3, %c0_4] : memref<8x128xf32, #tpu.memory_space<vmem>>, vector<8x128xf32>
    tpu.vector_store %arg3[%c0_3, %c0_4], %2 {strides = array<i32>} : memref<8x128xf32, #tpu.memory_space<vmem>>, vector<8x128xf32>,
    return
  }
  func.func @transform_0(%arg0: i32) -> (i32, i32) {
    %c0_i32 = arith.constant 0 : i32
    %c0_i32_0 = arith.constant 0 : i32
    %c0_i32_1 = arith.constant 0 : i32
    return %c0_i32, %c0_i32_0 : i32, i32
  }
  func.func @transform_1(%arg0: i32) -> (i32, i32) {
    %c0_i32 = arith.constant 0 : i32
    %c0_i32_0 = arith.constant 0 : i32
    return %arg0, %c0_i32 : i32, i32
  }
  func.func @transform_2(%arg0: i32) -> (i32, i32) {
    %c0_i32 = arith.constant 0 : i32
    %c0_i32_0 = arith.constant 0 : i32
    return %arg0, %c0_i32 : i32, i32
  }
}

module attributes {stable_mosaic.version = 11 : i64} {
  func.func @kernel(%arg0: i32, %arg1: i32, %arg2: memref<1x1x1024xf32, #tpu.memory_space<vmem>>, %arg3: memref<128x8xf32, #tpu.memory_space<vmem>>, %arg4: memref<8x1024xf32, #tpu.memory_space<vmem>>, %arg5: memref<1024x1024xbf16, #tpu.memory_space<vmem>>, %arg6: memref<1x1024xf32, #tpu.memory_space<vmem>>, %arg7: memref<1024x8xbf16, #tpu.memory_space<vmem>>, %arg8: memref<1x8xf32, #tpu.memory_space<vmem>>, %arg9: memref<1x128x8xf32, #tpu.memory_space<vmem>>) attributes {dimension_semantics = [#tpu.dimension_semantics<parallel>, #tpu.dimension_semantics<parallel>], iteration_bounds = array<i64: 6, 1>, scalar_prefetch = 0 : i64, scratch_operands = 0 : i64, tpu.core_type = #tpu.core_type<tc>, window_params = [{transform_indices = @transform_0, window_bounds = array<i64: 1, 1, 1024>}, {transform_indices = @transform_1, window_bounds = array<i64: 128, 8>}, {pipeline_mode = #tpu.pipeline_mode<synchronous>, transform_indices = @transform_2, window_bounds = array<i64: 8, 1024>}, {pipeline_mode = #tpu.pipeline_mode<synchronous>, transform_indices = @transform_3, window_bounds = array<i64: 1024, 1024>}, {pipeline_mode = #tpu.pipeline_mode<synchronous>, transform_indices = @transform_4, window_bounds = array<i64: 1, 1024>}, {pipeline_mode = #tpu.pipeline_mode<synchronous>, transform_indices = @transform_5, window_bounds = array<i64: 1024, 8>}, {pipeline_mode = #tpu.pipeline_mode<synchronous>, transform_indices = @transform_6, window_bounds = array<i64: 1, 8>}, {transform_indices = @transform_7, window_bounds = array<i64: 1, 128, 8>}]} {
    %c0 = arith.constant 0 : index
    %c0_0 = arith.constant 0 : index
    %0 = vector.load %arg3[%c0, %c0_0] : memref<128x8xf32, #tpu.memory_space<vmem>>, vector<128x8xf32>
    %c0_1 = arith.constant 0 : index
    %c0_2 = arith.constant 0 : index
    %1 = vector.load %arg4[%c0_1, %c0_2] : memref<8x1024xf32, #tpu.memory_space<vmem>>, vector<8x1024xf32>
    %cst = arith.constant dense<0.000000e+00> : vector<128x1024xf32>
    %2 = tpu.matmul %0, %1, %cst {dimension_numbers = #tpu.dot_dimension_numbers<[1], [0], [0], [1], [0, 0, 1, 1], [], []>} : vector<128x8xf32>, vector<8x1024xf32>, vector<128x1024xf32> -> vector<128x1024xf32>
    %c0_3 = arith.constant 0 : index
    %c0_4 = arith.constant 0 : index
    %c0_5 = arith.constant 0 : index
    %3 = vector.load %arg2[%c0_3, %c0_4, %c0_5] : memref<1x1x1024xf32, #tpu.memory_space<vmem>>, vector<1x1x1024xf32>
    %4 = vector.shape_cast %3 : vector<1x1x1024xf32> to vector<1x1024xf32>
    %5 = arith.truncf %4 : vector<1x1024xf32> to vector<1x1024xbf16>
    %6 = arith.truncf %2 : vector<128x1024xf32> to vector<128x1024xbf16>
    %7 = vector.broadcast %5 : vector<1x1024xbf16> to vector<128x1024xbf16>
    %8 = arith.addf %7, %6 : vector<128x1024xbf16>
    %cst_6 = arith.constant 0.000000e+00 : bf16
    %9 = vector.broadcast %cst_6 : bf16 to vector<128x1024xbf16>
    %10 = arith.cmpf ogt, %8, %9 : vector<128x1024xbf16>
    %cst_7 = arith.constant 1.000980e-02 : bf16
    %11 = vector.broadcast %cst_7 : bf16 to vector<128x1024xbf16>
    %12 = arith.mulf %11, %8 : vector<128x1024xbf16>
    %13 = arith.select %10, %8, %12 : vector<128x1024xi1>, vector<128x1024xbf16>
    %c0_8 = arith.constant 0 : index
    %c0_9 = arith.constant 0 : index
    %14 = vector.load %arg5[%c0_8, %c0_9] : memref<1024x1024xbf16, #tpu.memory_space<vmem>>, vector<1024x1024xbf16>
    %cst_10 = arith.constant dense<0.000000e+00> : vector<128x1024xf32>
    %15 = tpu.matmul %13, %14, %cst_10 {dimension_numbers = #tpu.dot_dimension_numbers<[1], [0], [0], [1], [0, 0, 1, 1], [], []>} : vector<128x1024xbf16>, vector<1024x1024xbf16>, vector<128x1024xf32> -> vector<128x1024xf32>
    %16 = arith.truncf %15 : vector<128x1024xf32> to vector<128x1024xbf16>
    %c0_11 = arith.constant 0 : index
    %c0_12 = arith.constant 0 : index
    %17 = vector.load %arg6[%c0_11, %c0_12] : memref<1x1024xf32, #tpu.memory_space<vmem>>, vector<1x1024xf32>
    %18 = arith.truncf %17 : vector<1x1024xf32> to vector<1x1024xbf16>
    %19 = vector.broadcast %18 : vector<1x1024xbf16> to vector<128x1024xbf16>
    %20 = arith.addf %16, %19 : vector<128x1024xbf16>
    %cst_13 = arith.constant 0.000000e+00 : bf16
    %21 = vector.broadcast %cst_13 : bf16 to vector<128x1024xbf16>
    %22 = arith.cmpf ogt, %20, %21 : vector<128x1024xbf16>
    %cst_14 = arith.constant 1.000980e-02 : bf16
    %23 = vector.broadcast %cst_14 : bf16 to vector<128x1024xbf16>
    %24 = arith.mulf %23, %20 : vector<128x1024xbf16>
    %25 = arith.select %22, %20, %24 : vector<128x1024xi1>, vector<128x1024xbf16>
    %c0_15 = arith.constant 0 : index
    %c0_16 = arith.constant 0 : index
    %26 = vector.load %arg7[%c0_15, %c0_16] : memref<1024x8xbf16, #tpu.memory_space<vmem>>, vector<1024x8xbf16>
    %cst_17 = arith.constant dense<0.000000e+00> : vector<128x8xf32>
    %27 = tpu.matmul %25, %26, %cst_17 {dimension_numbers = #tpu.dot_dimension_numbers<[1], [0], [0], [1], [0, 0, 1, 1], [], []>} : vector<128x1024xbf16>, vector<1024x8xbf16>, vector<128x8xf32> -> vector<128x8xf32>
    %c0_18 = arith.constant 0 : index
    %c0_19 = arith.constant 0 : index
    %28 = vector.load %arg8[%c0_18, %c0_19] : memref<1x8xf32, #tpu.memory_space<vmem>>, vector<1x8xf32>
    %29 = vector.broadcast %28 : vector<1x8xf32> to vector<128x8xf32>
    %30 = arith.addf %27, %29 : vector<128x8xf32>
    %c0_20 = arith.constant 0 : index
    %c0_21 = arith.constant 0 : index
    %c0_22 = arith.constant 0 : index
    %31 = vector.load %arg9[%c0_20, %c0_21, %c0_22] : memref<1x128x8xf32, #tpu.memory_space<vmem>>, vector<1x128x8xf32>
    %32 = vector.shape_cast %31 : vector<1x128x8xf32> to vector<128x8xf32>
    %33 = vector.shape_cast %30 : vector<128x8xf32> to vector<1x128x8xf32>
    tpu.vector_store %arg9[%c0_20, %c0_21, %c0_22], %33 {strides = array<i32>} : memref<1x128x8xf32, #tpu.memory_space<vmem>>, vector<1x128x8xf32>,
    return
  }
  func.func @transform_0(%arg0: i32, %arg1: i32) -> (i32, i32, i32) {
    %c0_i32 = arith.constant 0 : i32
    %c0_i32_0 = arith.constant 0 : i32
    %c0_i32_1 = arith.constant 0 : i32
    return %arg0, %c0_i32, %c0_i32_0 : i32, i32, i32
  }
  func.func @transform_1(%arg0: i32, %arg1: i32) -> (i32, i32) {
    %c0_i32 = arith.constant 0 : i32
    %c0_i32_0 = arith.constant 0 : i32
    return %arg1, %c0_i32 : i32, i32
  }
  func.func @transform_2(%arg0: i32, %arg1: i32) -> (i32, i32) {
    %c0_i32 = arith.constant 0 : i32
    %c0_i32_0 = arith.constant 0 : i32
    %c0_i32_1 = arith.constant 0 : i32
    return %c0_i32, %c0_i32_0 : i32, i32
  }
  func.func @transform_3(%arg0: i32, %arg1: i32) -> (i32, i32) {
    %c0_i32 = arith.constant 0 : i32
    %c0_i32_0 = arith.constant 0 : i32
    %c0_i32_1 = arith.constant 0 : i32
    return %c0_i32, %c0_i32_0 : i32, i32
  }
  func.func @transform_4(%arg0: i32, %arg1: i32) -> (i32, i32) {
    %c0_i32 = arith.constant 0 : i32
    %c0_i32_0 = arith.constant 0 : i32
    %c0_i32_1 = arith.constant 0 : i32
    return %c0_i32, %c0_i32_0 : i32, i32
  }
  func.func @transform_5(%arg0: i32, %arg1: i32) -> (i32, i32) {
    %c0_i32 = arith.constant 0 : i32
    %c0_i32_0 = arith.constant 0 : i32
    %c0_i32_1 = arith.constant 0 : i32
    return %c0_i32, %c0_i32_0 : i32, i32
  }
  func.func @transform_6(%arg0: i32, %arg1: i32) -> (i32, i32) {
    %c0_i32 = arith.constant 0 : i32
    %c0_i32_0 = arith.constant 0 : i32
    %c0_i32_1 = arith.constant 0 : i32
    return %c0_i32, %c0_i32_0 : i32, i32
  }
  func.func @transform_7(%arg0: i32, %arg1: i32) -> (i32, i32, i32) {
    %c0_i32 = arith.constant 0 : i32
    %c0_i32_0 = arith.constant 0 : i32
    return %arg0, %arg1, %c0_i32 : i32, i32, i32
  }
}

</mosaic_0001>

<llo_original>
// kernel: tpu_custom_call.1
$region0: #{tpu_custom_call.1}
  #allocation0 [shape = 'u32[]', space=smem, size = 0x4, offset = 0x4, fixed_abs, tag = 'smem constant byte address 0x4 - core index']
  #allocation1 [shape = 'u32[72,128]{1,0:T(1,128)}', space=vmem, size = 0x9000, scoped, tag = 'internal scratch']
  %s0 = inlined_call_operand.hbm [shape: f32[8,128], index: 0, kind: input, shape index: {}]
  %s1 = inlined_call_operand.hbm [shape: f32[16,128], index: 1, kind: input, shape index: {}]
  %s2 = inlined_call_operand.hbm [shape: f32[16,128], index: 2, kind: output, shape index: {}]
  %s3 = sld [smem:[#allocation0]]
  $region49: #{tpu_custom_call.1} parent=0
    _
  %s5 = ssub.s32 1, %s3
  %s6 = scalar_select 0, %s5, %s3
  $region1: #{tpu_custom_call.1} parent=0
    #allocation2 [shape = 'u8[4096]{0}', space=vmem, size = 0x1000, scoped, tag = 'input window, operand 0, single buffered']
    #allocation3 [shape = 's32[2]{0}', space=sflag, size = 0x8, scoped, tag = 'scoped memory for tpu_custom_call.1']
    #allocation4 [shape = 's32[2]{0}', space=sflag, size = 0x8, scoped, tag = 'scoped memory for tpu_custom_call.1']
    #allocation5 [shape = 'u8[8192]{0}', space=vmem, size = 0x2000, scoped, tag = 'input window, operand 1']
    #allocation6 [shape = 's32[2]{0}', space=sflag, size = 0x8, scoped, tag = 'scoped memory for tpu_custom_call.1']
    #allocation7 [shape = 'u8[8192]{0}', space=vmem, size = 0x2000, scoped, tag = 'output window, operand 0']
    %7 = vsyncpa [#allocation3], 0
    %8 = vsyncpa [#allocation6], 0
    %s9 = scalar_lea.sflag [#allocation6], 1
    %10 = vsyncpa %s9, 0
    %11 = vsyncpa [#allocation4], 0
    %s12 = scalar_lea.sflag [#allocation4], 1
    %13 = vsyncpa %s12, 0
    loop: start=0, step=1, limit=4
    $region2: #{tpu_custom_call.1} parent=1 // loop_pre_header
      _
    $region3: #{tpu_custom_call.1} parent=1 // loop_header
      %s15 = sphi 0, %s19
      %p16 = scmp.ge.s32.totalorder %s15, 4
      %s23 = sphi 0, %s23
      %s25 = sphi 0, %s23
      %s26 = sphi 0, %s25
      %s40 = sphi 0, %s26
      %s46 = sphi 0, %s48
      %s49 = sphi 0, %s46
      %s50 = sphi 0, %s49
      %s66 = sphi 0, %s50
      %s72 = sphi 0, %s74
      %s75 = sphi 0, %s72
      %s76 = sphi 0, %s75
      %s92 = sphi 0, %s76
    $region4: #{tpu_custom_call.1} parent=1 // loop_header_branch
      %18 = sbr.rel (%p16) target = $region8
    $region5: #{tpu_custom_call.1} parent=1 // loop_body
      %s20 = ssub.s32 %s15, 1
      %s21 = ssub.s32 %s15, 2
      %s22 = sadd.s32 %s15, 1
      %s24 = sadd.s32 %s23, 1
      %p27 = scmp.eq.s32.totalorder %s15, 1
      %p28 = scmp.ne.s32.totalorder %s23, %s25
      %p29 = scmp.eq.s32.totalorder %s15, 0
      %p30 = por %p28, %p29
      %p31 = scmp.ne.s32.totalorder %s23, %s25
      %p32 = scmp.eq.s32.totalorder %s20, 1
      %p33 = por %p31, %p32
      %p34 = scmp.ne.s32.totalorder %s25, %s26
      %p35 = scmp.eq.s32.totalorder %s20, 0
      %p36 = por %p34, %p35
      %p37 = scmp.ne.s32.totalorder %s25, %s26
      %p38 = scmp.eq.s32.totalorder %s21, 1
      %p39 = por %p37, %p38
      %p41 = scmp.ne.s32.totalorder %s26, %s40
      %p42 = scmp.eq.s32.totalorder %s21, 0
      %p43 = por %p41, %p42
      %s44 = ssub.s32 %s15, %s22
      %p45 = scmp.eq.s32.totalorder %s44, 0
      %s47 = sadd.s32 %s46, 1
      %s48 = scalar_select %p45, %s46, %s47
      %p51 = pneg %p45
      %p52 = scmp.eq.s32.totalorder %s15, 1
      %p53 = por %p51, %p52
      %p54 = scmp.ne.s32.totalorder %s46, %s49
      %p55 = scmp.eq.s32.totalorder %s15, 0
      %p56 = por %p54, %p55
      %p57 = scmp.ne.s32.totalorder %s46, %s49
      %p58 = scmp.eq.s32.totalorder %s20, 1
      %p59 = por %p57, %p58
      %p60 = scmp.ne.s32.totalorder %s49, %s50
      %p61 = scmp.eq.s32.totalorder %s20, 0
      %p62 = por %p60, %p61
      %p63 = scmp.ne.s32.totalorder %s49, %s50
      %p64 = scmp.eq.s32.totalorder %s21, 1
      %p65 = por %p63, %p64
      %p67 = scmp.ne.s32.totalorder %s50, %s66
      %p68 = scmp.eq.s32.totalorder %s21, 0
      %p69 = por %p67, %p68
      %s70 = ssub.s32 %s15, %s22
      %p71 = scmp.eq.s32.totalorder %s70, 0
      %s73 = sadd.s32 %s72, 1
      %s74 = scalar_select %p71, %s72, %s73
      %p77 = pneg %p71
      %p78 = scmp.eq.s32.totalorder %s15, 1
      %p79 = por %p77, %p78
      %p80 = scmp.ne.s32.totalorder %s72, %s75
      %p81 = scmp.eq.s32.totalorder %s15, 0
      %p82 = por %p80, %p81
      %p83 = scmp.ne.s32.totalorder %s72, %s75
      %p84 = scmp.eq.s32.totalorder %s20, 1
      %p85 = por %p83, %p84
      %p86 = scmp.ne.s32.totalorder %s75, %s76
      %p87 = scmp.eq.s32.totalorder %s20, 0
      %p88 = por %p86, %p87
      %p89 = scmp.ne.s32.totalorder %s75, %s76
      %p90 = scmp.eq.s32.totalorder %s21, 1
      %p91 = por %p89, %p90
      %p93 = scmp.ne.s32.totalorder %s76, %s92
      %p94 = scmp.eq.s32.totalorder %s21, 0
      %p95 = por %p93, %p94
      %p96 = scmp.le.s32.totalorder 1, %s15
      %p97 = scmp.lt.s32.totalorder %s15, 3
      %p98 = pnand %p96, %p97
      %p99 = pneg %p98
      // Predicated region
      $region9: #{tpu_custom_call.1} parent=5 // pred_check
        _
      $region10: #{tpu_custom_call.1} parent=5 // pred_check_branch
        %101 = sbr.rel (%p98) target = $region12
      $region11: #{tpu_custom_call.1} parent=5 // pred_region
        %s102 = ssub.s32 %s15, 1
        // Predicated region
        $region13: #{tpu_custom_call.1} parent=11 // pred_check
          %p103 = pneg %p36
        $region14: #{tpu_custom_call.1} parent=11 // pred_check_branch
          %105 = sbr.rel (%p103) target = $region16
        $region15: #{tpu_custom_call.1} parent=11 // pred_region
          %107 = vsyncadd [#allocation3], 0
          %s109 = sshll.u32 %s0, 4
          %s110 = int_to_ptr.hbm [resolvable:$true] %s109
          %s111 = sshll.u32 [#allocation2], 4
          %s112 = int_to_ptr.vmem [resolvable:$true] %s111
          %114 = dma.hbm_to_vmem [thread:$0]  %s110, 128, %s112, [#allocation3]
        $region16: #{tpu_custom_call.1} parent=11 // pred_fallthru
          _
      $region12: #{tpu_custom_call.1} parent=5 // pred_fallthru
        _
      %p115 = scmp.lt.s32.totalorder %s15, 2
      // Predicated region
      $region17: #{tpu_custom_call.1} parent=5 // pred_check
        %p116 = pneg %p115
      $region18: #{tpu_custom_call.1} parent=5 // pred_check_branch
        %118 = sbr.rel (%p116) target = $region20
      $region19: #{tpu_custom_call.1} parent=5 // pred_region
        // Predicated region
        $region21: #{tpu_custom_call.1} parent=19 // pred_check
          %p119 = pneg %p56
        $region22: #{tpu_custom_call.1} parent=19 // pred_check_branch
          %121 = sbr.rel (%p119) target = $region24
        $region23: #{tpu_custom_call.1} parent=19 // pred_region
          %s122 = sand.u32 %s46, 1
          %s123 = scalar_lea.sflag [#allocation6], %s122
          %s124 = sand.u32 %s46, 1
          %s125 = smul.addr %s124, 8
          %s126 = scalar_lea.vmem [#allocation5], %s125
          %128 = vsyncadd %s123, 0
          %s129 = smul.addr %s15, 8
          %s130 = scalar_lea.hbm %s1, %s129
          %s132 = sshll.u32 %s130, 4
          %s133 = int_to_ptr.hbm [resolvable:$true] %s132
          %s134 = sshll.u32 %s126, 4
          %s135 = int_to_ptr.vmem [resolvable:$true] %s134
          %137 = dma.hbm_to_vmem [thread:$0]  %s133, 128, %s135, %s123
        $region24: #{tpu_custom_call.1} parent=19 // pred_fallthru
          _
      $region20: #{tpu_custom_call.1} parent=5 // pred_fallthru
        _
      %p138 = scmp.le.s32.totalorder 1, %s15
      %p139 = scmp.lt.s32.totalorder %s15, 3
      %p140 = pnand %p138, %p139
      %p141 = pneg %p140
      // Predicated region
      $region25: #{tpu_custom_call.1} parent=5 // pred_check
        _
      $region26: #{tpu_custom_call.1} parent=5 // pred_check_branch
        %143 = sbr.rel (%p140) target = $region28
      $region27: #{tpu_custom_call.1} parent=5 // pred_region
        %s144 = ssub.s32 %s15, 1
        // Predicated region
        $region29: #{tpu_custom_call.1} parent=27 // pred_check
          %p145 = pneg %p36
        $region30: #{tpu_custom_call.1} parent=27 // pred_check_branch
          %147 = sbr.rel (%p145) target = $region32
        $region31: #{tpu_custom_call.1} parent=27 // pred_region
          %149 = dma.done [#allocation3], 128
        $region32: #{tpu_custom_call.1} parent=27 // pred_fallthru
          _
        %s150 = sand.u32 %s49, 1
        %s151 = scalar_lea.sflag [#allocation6], %s150
        %s152 = sand.u32 %s49, 1
        %s153 = smul.addr %s152, 8
        %s154 = scalar_lea.vmem [#allocation5], %s153
        // Predicated region
        $region33: #{tpu_custom_call.1} parent=27 // pred_check
          %p155 = pneg %p62
        $region34: #{tpu_custom_call.1} parent=27 // pred_check_branch
          %157 = sbr.rel (%p155) target = $region36
        $region35: #{tpu_custom_call.1} parent=27 // pred_region
          %159 = dma.done %s151, 128
        $region36: #{tpu_custom_call.1} parent=27 // pred_fallthru
          _
        %p160 = pneg %p36
        %p161 = pneg %p33
        %s162 = sand.u32 %s49, 1
        %s163 = scalar_lea.sflag [#allocation6], %s162
        %s164 = sand.u32 %s49, 1
        %s165 = smul.addr %s164, 8
        %s166 = scalar_lea.vmem [#allocation5], %s165
        %p167 = pneg %p62
        %p168 = pneg %p59
        %p169 = pneg %p88
        %p170 = pneg %p85
        %s171 = sand.u32 %s75, 1
        %s172 = scalar_lea.sflag [#allocation4], %s171
        %s173 = sand.u32 %s75, 1
        %s174 = smul.addr %s173, 8
        %s175 = scalar_lea.vmem [#allocation7], %s174
        %v176 = vld [vmem:[%s154] sm:$0xff]
        %v177 = vld [vmem:[#allocation2] sm:$0xff]
        %v178 = vadd.f32 %v176, %v177
        %179 = vst [vmem:[%s175] sm:$0xff] %v178
        %s180 = sand.u32 %s75, 1
        %s181 = scalar_lea.sflag [#allocation4], %s180
        %s182 = sand.u32 %s75, 1
        %s183 = smul.addr %s182, 8
        %s184 = scalar_lea.vmem [#allocation7], %s183
        // Predicated region
        $region37: #{tpu_custom_call.1} parent=27 // pred_check
          %p185 = pneg %p85
        $region38: #{tpu_custom_call.1} parent=27 // pred_check_branch
          %187 = sbr.rel (%p185) target = $region40
        $region39: #{tpu_custom_call.1} parent=27 // pred_region
          %189 = vsyncadd %s181, 0
          %s190 = smul.addr %s20, 8
          %s191 = scalar_lea.hbm %s2, %s190
          %s193 = sshll.u32 %s184, 4
          %s194 = int_to_ptr.vmem [resolvable:$true] %s193
          %s195 = sshll.u32 %s191, 4
          %s196 = int_to_ptr.hbm [resolvable:$true] %s195
          %198 = dma.vmem_to_hbm [thread:$0]  %s194, 128, %s196, %s181
        $region40: #{tpu_custom_call.1} parent=27 // pred_fallthru
          _
      $region28: #{tpu_custom_call.1} parent=5 // pred_fallthru
        _
      %p199 = scmp.le.s32.totalorder 2, %s15
      // Predicated region
      $region41: #{tpu_custom_call.1} parent=5 // pred_check
        %p200 = pneg %p199
      $region42: #{tpu_custom_call.1} parent=5 // pred_check_branch
        %202 = sbr.rel (%p200) target = $region44
      $region43: #{tpu_custom_call.1} parent=5 // pred_region
        %s203 = ssub.s32 %s15, 2
        // Predicated region
        $region45: #{tpu_custom_call.1} parent=43 // pred_check
          %p204 = pneg %p91
        $region46: #{tpu_custom_call.1} parent=43 // pred_check_branch
          %206 = sbr.rel (%p204) target = $region48
        $region47: #{tpu_custom_call.1} parent=43 // pred_region
          %s207 = sand.u32 %s76, 1
          %s208 = scalar_lea.sflag [#allocation4], %s207
          %s209 = sand.u32 %s76, 1
          %s210 = smul.addr %s209, 8
          %s211 = scalar_lea.vmem [#allocation7], %s210
          %213 = dma.done %s208, 128
        $region48: #{tpu_custom_call.1} parent=43 // pred_fallthru
          _
      $region44: #{tpu_custom_call.1} parent=5 // pred_fallthru
        _
    $region6: #{tpu_custom_call.1} parent=1 // loop_footer
      %s19 = sadd.s32 1, %s15
    $region7: #{tpu_custom_call.1} parent=1 // loop_footer_branch
      %14 = sbr.rel target = $region3
    $region8: #{tpu_custom_call.1} parent=1 // loop_exit
      _
    %214 = vsyncpa [#allocation3], 1
    %s215 = scalar_lea.sflag [#allocation3], 1
    %216 = vsyncpa %s215, 1
    %217 = vsyncpa [#allocation6], 1
    %s218 = scalar_lea.sflag [#allocation6], 1
    %219 = vsyncpa %s218, 1
    %220 = vsyncpa [#allocation4], 1
    %s221 = scalar_lea.sflag [#allocation4], 1
    %222 = vsyncpa %s221, 1

// kernel: network_forward.1
$region0: #{network_forward.1}
  #allocation0 [shape = 'u32[]', space=smem, size = 0x4, offset = 0x4, fixed_abs, tag = 'smem constant byte address 0x4 - core index']
  #allocation1 [shape = 'u32[72,128]{1,0:T(1,128)}', space=vmem, size = 0x9000, scoped, tag = 'internal scratch']
  %s0 = inlined_call_operand.vmem [shape: f32[6,1,1024], index: 0, kind: input, shape index: {}]
  %s1 = inlined_call_operand.vmem [shape: f32[128,8], index: 1, kind: input, shape index: {}]
  %s2 = inlined_call_operand.hbm [shape: f32[8,1024], index: 2, kind: input, shape index: {}]
  %s3 = inlined_call_operand.hbm [shape: bf16[1024,1024], index: 3, kind: input, shape index: {}]
  %s4 = inlined_call_operand.hbm [shape: f32[1,1024], index: 4, kind: input, shape index: {}]
  %s5 = inlined_call_operand.vmem [shape: bf16[1024,8], index: 5, kind: input, shape index: {}]
  %s6 = inlined_call_operand.hbm [shape: f32[1,8], index: 6, kind: input, shape index: {}]
  %s7 = inlined_call_operand.vmem [shape: f32[6,128,8], index: 7, kind: output, shape index: {}]
  %s8 = sld [smem:[#allocation0]]
  $region77: #{network_forward.1} parent=0
    _
  %s10 = ssub.s32 1, %s8
  %s11 = scalar_select 0, %s10, %s8
  $region1: #{network_forward.1} parent=0
    #allocation2 [shape = 'u8[32768]{0}', space=vmem, size = 0x8000, scoped, tag = 'input window, operand 2, single buffered']
    #allocation3 [shape = 's32[2]{0}', space=sflag, size = 0x8, scoped, tag = 'scoped memory for network_forward.1']
    #allocation4 [shape = 'u8[2097152]{0}', space=vmem, size = 0x200000, scoped, tag = 'input window, operand 3, single buffered']
    #allocation5 [shape = 's32[1]{0}', space=sflag, size = 0x4, scoped, tag = 'scoped memory for network_forward.1']
    #allocation6 [shape = 'u8[4096]{0}', space=vmem, size = 0x1000, scoped, tag = 'input window, operand 4, single buffered']
    #allocation7 [shape = 'u8[512]{0}', space=vmem, size = 0x400, scoped, tag = 'input window, operand 6, single buffered']
    #allocation8 [shape = 's32[1]{0}', space=sflag, size = 0x4, scoped, tag = 'scoped memory for network_forward.1']
    %12 = vsyncpa [#allocation3], 0
    %13 = vsyncpa [#allocation5], 0
    %14 = vsyncpa [#allocation8], 0
    loop: start=0, step=1, limit=8
    $region2: #{network_forward.1} parent=1 // loop_pre_header
      _
    $region3: #{network_forward.1} parent=1 // loop_header
      %s16 = sphi 0, %s20
      %p17 = scmp.ge.s32.totalorder %s16, 8
      %s23 = sphi 0, %s35
      %s24 = sphi 0, %s31
      %s25 = sphi 0, %s23
      %s26 = sphi 0, %s24
      %s27 = sphi 0, %s25
      %s28 = sphi 0, %s26
      %s38 = sphi 0, %s40
      %s41 = sphi 0, %s38
      %s42 = sphi 0, %s41
      %s58 = sphi 0, %s42
      %s64 = sphi 0, %s66
      %s67 = sphi 0, %s64
      %s68 = sphi 0, %s67
      %s84 = sphi 0, %s68
      %s88 = sphi 0, %s88
      %s90 = sphi 0, %s88
      %s91 = sphi 0, %s90
      %s105 = sphi 0, %s91
      %s109 = sphi 0, %s109
      %s111 = sphi 0, %s109
      %s112 = sphi 0, %s111
      %s126 = sphi 0, %s112
      %s130 = sphi 0, %s130
      %s132 = sphi 0, %s130
      %s133 = sphi 0, %s132
      %s147 = sphi 0, %s133
      %s151 = sphi 0, %s151
      %s153 = sphi 0, %s151
      %s154 = sphi 0, %s153
      %s168 = sphi 0, %s154
      %s172 = sphi 0, %s172
      %s174 = sphi 0, %s172
      %s175 = sphi 0, %s174
      %s189 = sphi 0, %s175
      %s197 = sphi 0, %s199
      %s200 = sphi 0, %s197
      %s201 = sphi 0, %s200
      %s217 = sphi 0, %s201
    $region4: #{network_forward.1} parent=1 // loop_header_branch
      %19 = sbr.rel (%p17) target = $region8
    $region5: #{network_forward.1} parent=1 // loop_body
      %s21 = ssub.s32 %s16, 1
      %s22 = ssub.s32 %s16, 2
      %s29 = sadd.s32 1, %s24
      %p30 = scmp.ge.s32.totalorder %s29, 1
      %s31 = scalar_select %p30, 0, %s29
      %s32 = sadd.s32 1, %s23
      %s33 = scalar_select %p30, %s32, %s23
      %p34 = scmp.ge.s32.totalorder %s33, 6
      %s35 = scalar_select %p34, 0, %s33
      %s36 = ssub.s32 %s23, %s35
      %p37 = scmp.eq.s32.totalorder %s36, 0
      %s39 = sadd.s32 %s38, 1
      %s40 = scalar_select %p37, %s38, %s39
      %p43 = pneg %p37
      %p44 = scmp.eq.s32.totalorder %s16, 5
      %p45 = por %p43, %p44
      %p46 = scmp.ne.s32.totalorder %s38, %s41
      %p47 = scmp.eq.s32.totalorder %s16, 0
      %p48 = por %p46, %p47
      %p49 = scmp.ne.s32.totalorder %s38, %s41
      %p50 = scmp.eq.s32.totalorder %s21, 5
      %p51 = por %p49, %p50
      %p52 = scmp.ne.s32.totalorder %s41, %s42
      %p53 = scmp.eq.s32.totalorder %s21, 0
      %p54 = por %p52, %p53
      %p55 = scmp.ne.s32.totalorder %s41, %s42
      %p56 = scmp.eq.s32.totalorder %s22, 5
      %p57 = por %p55, %p56
      %p59 = scmp.ne.s32.totalorder %s42, %s58
      %p60 = scmp.eq.s32.totalorder %s22, 0
      %p61 = por %p59, %p60
      %s62 = ssub.s32 %s24, %s31
      %p63 = scmp.eq.s32.totalorder %s62, 0
      %s65 = sadd.s32 %s64, 1
      %s66 = scalar_select %p63, %s64, %s65
      %p69 = pneg %p63
      %p70 = scmp.eq.s32.totalorder %s16, 5
      %p71 = por %p69, %p70
      %p72 = scmp.ne.s32.totalorder %s64, %s67
      %p73 = scmp.eq.s32.totalorder %s16, 0
      %p74 = por %p72, %p73
      %p75 = scmp.ne.s32.totalorder %s64, %s67
      %p76 = scmp.eq.s32.totalorder %s21, 5
      %p77 = por %p75, %p76
      %p78 = scmp.ne.s32.totalorder %s67, %s68
      %p79 = scmp.eq.s32.totalorder %s21, 0
      %p80 = por %p78, %p79
      %p81 = scmp.ne.s32.totalorder %s67, %s68
      %p82 = scmp.eq.s32.totalorder %s22, 5
      %p83 = por %p81, %p82
      %p85 = scmp.ne.s32.totalorder %s68, %s84
      %p86 = scmp.eq.s32.totalorder %s22, 0
      %p87 = por %p85, %p86
      %s89 = sadd.s32 %s88, 1
      %p92 = scmp.eq.s32.totalorder %s16, 5
      %p93 = scmp.ne.s32.totalorder %s88, %s90
      %p94 = scmp.eq.s32.totalorder %s16, 0
      %p95 = por %p93, %p94
      %p96 = scmp.ne.s32.totalorder %s88, %s90
      %p97 = scmp.eq.s32.totalorder %s21, 5
      %p98 = por %p96, %p97
      %p99 = scmp.ne.s32.totalorder %s90, %s91
      %p100 = scmp.eq.s32.totalorder %s21, 0
      %p101 = por %p99, %p100
      %p102 = scmp.ne.s32.totalorder %s90, %s91
      %p103 = scmp.eq.s32.totalorder %s22, 5
      %p104 = por %p102, %p103
      %p106 = scmp.ne.s32.totalorder %s91, %s105
      %p107 = scmp.eq.s32.totalorder %s22, 0
      %p108 = por %p106, %p107
      %s110 = sadd.s32 %s109, 1
      %p113 = scmp.eq.s32.totalorder %s16, 5
      %p114 = scmp.ne.s32.totalorder %s109, %s111
      %p115 = scmp.eq.s32.totalorder %s16, 0
      %p116 = por %p114, %p115
      %p117 = scmp.ne.s32.totalorder %s109, %s111
      %p118 = scmp.eq.s32.totalorder %s21, 5
      %p119 = por %p117, %p118
      %p120 = scmp.ne.s32.totalorder %s111, %s112
      %p121 = scmp.eq.s32.totalorder %s21, 0
      %p122 = por %p120, %p121
      %p123 = scmp.ne.s32.totalorder %s111, %s112
      %p124 = scmp.eq.s32.totalorder %s22, 5
      %p125 = por %p123, %p124
      %p127 = scmp.ne.s32.totalorder %s112, %s126
      %p128 = scmp.eq.s32.totalorder %s22, 0
      %p129 = por %p127, %p128
      %s131 = sadd.s32 %s130, 1
      %p134 = scmp.eq.s32.totalorder %s16, 5
      %p135 = scmp.ne.s32.totalorder %s130, %s132
      %p136 = scmp.eq.s32.totalorder %s16, 0
      %p137 = por %p135, %p136
      %p138 = scmp.ne.s32.totalorder %s130, %s132
      %p139 = scmp.eq.s32.totalorder %s21, 5
      %p140 = por %p138, %p139
      %p141 = scmp.ne.s32.totalorder %s132, %s133
      %p142 = scmp.eq.s32.totalorder %s21, 0
      %p143 = por %p141, %p142
      %p144 = scmp.ne.s32.totalorder %s132, %s133
      %p145 = scmp.eq.s32.totalorder %s22, 5
      %p146 = por %p144, %p145
      %p148 = scmp.ne.s32.totalorder %s133, %s147
      %p149 = scmp.eq.s32.totalorder %s22, 0
      %p150 = por %p148, %p149
      %s152 = sadd.s32 %s151, 1
      %p155 = scmp.eq.s32.totalorder %s16, 5
      %p156 = scmp.ne.s32.totalorder %s151, %s153
      %p157 = scmp.eq.s32.totalorder %s16, 0
      %p158 = por %p156, %p157
      %p159 = scmp.ne.s32.totalorder %s151, %s153
      %p160 = scmp.eq.s32.totalorder %s21, 5
      %p161 = por %p159, %p160
      %p162 = scmp.ne.s32.totalorder %s153, %s154
      %p163 = scmp.eq.s32.totalorder %s21, 0
      %p164 = por %p162, %p163
      %p165 = scmp.ne.s32.totalorder %s153, %s154
      %p166 = scmp.eq.s32.totalorder %s22, 5
      %p167 = por %p165, %p166
      %p169 = scmp.ne.s32.totalorder %s154, %s168
      %p170 = scmp.eq.s32.totalorder %s22, 0
      %p171 = por %p169, %p170
      %s173 = sadd.s32 %s172, 1
      %p176 = scmp.eq.s32.totalorder %s16, 5
      %p177 = scmp.ne.s32.totalorder %s172, %s174
      %p178 = scmp.eq.s32.totalorder %s16, 0
      %p179 = por %p177, %p178
      %p180 = scmp.ne.s32.totalorder %s172, %s174
      %p181 = scmp.eq.s32.totalorder %s21, 5
      %p182 = por %p180, %p181
      %p183 = scmp.ne.s32.totalorder %s174, %s175
      %p184 = scmp.eq.s32.totalorder %s21, 0
      %p185 = por %p183, %p184
      %p186 = scmp.ne.s32.totalorder %s174, %s175
      %p187 = scmp.eq.s32.totalorder %s22, 5
      %p188 = por %p186, %p187
      %p190 = scmp.ne.s32.totalorder %s175, %s189
      %p191 = scmp.eq.s32.totalorder %s22, 0
      %p192 = por %p190, %p191
      %s193 = ssub.s32 %s23, %s35
      %s194 = ssub.s32 %s24, %s31
      %s195 = sor.u32 %s193, %s194
      %p196 = scmp.eq.s32.totalorder %s195, 0
      %s198 = sadd.s32 %s197, 1
      %s199 = scalar_select %p196, %s197, %s198
      %p202 = pneg %p196
      %p203 = scmp.eq.s32.totalorder %s16, 5
      %p204 = por %p202, %p203
      %p205 = scmp.ne.s32.totalorder %s197, %s200
      %p206 = scmp.eq.s32.totalorder %s16, 0
      %p207 = por %p205, %p206
      %p208 = scmp.ne.s32.totalorder %s197, %s200
      %p209 = scmp.eq.s32.totalorder %s21, 5
      %p210 = por %p208, %p209
      %p211 = scmp.ne.s32.totalorder %s200, %s201
      %p212 = scmp.eq.s32.totalorder %s21, 0
      %p213 = por %p211, %p212
      %p214 = scmp.ne.s32.totalorder %s200, %s201
      %p215 = scmp.eq.s32.totalorder %s22, 5
      %p216 = por %p214, %p215
      %p218 = scmp.ne.s32.totalorder %s201, %s217
      %p219 = scmp.eq.s32.totalorder %s22, 0
      %p220 = por %p218, %p219
      %p221 = scmp.le.s32.totalorder 1, %s16
      %p222 = scmp.lt.s32.totalorder %s16, 7
      %p223 = pnand %p221, %p222
      %p224 = pneg %p223
      // Predicated region
      $region9: #{network_forward.1} parent=5 // pred_check
        _
      $region10: #{network_forward.1} parent=5 // pred_check_branch
        %226 = sbr.rel (%p223) target = $region12
      $region11: #{network_forward.1} parent=5 // pred_region
        %s227 = ssub.s32 %s16, 1
        // Predicated region
        $region13: #{network_forward.1} parent=11 // pred_check
          %p228 = pneg %p80
        $region14: #{network_forward.1} parent=11 // pred_check_branch
          %230 = sbr.rel (%p228) target = $region16
        $region15: #{network_forward.1} parent=11 // pred_region
          %s231 = smul.u32 16, %s26
          %p232 = scmp.lt.s32.totalorder %s231, 15
          %s233 = scalar_select %p232, %s231, 15
          %s234 = smul.addr %s233, 8
          %s235 = scalar_lea.vmem %s1, %s234
          %s236 = smul.u32 16, %s26
        $region16: #{network_forward.1} parent=11 // pred_fallthru
          _
        // Predicated region
        $region17: #{network_forward.1} parent=11 // pred_check
          %p237 = pneg %p101
        $region18: #{network_forward.1} parent=11 // pred_check_branch
          %239 = sbr.rel (%p237) target = $region20
        $region19: #{network_forward.1} parent=11 // pred_region
          %241 = vsyncadd [#allocation3], 0
          %s243 = sshll.u32 %s2, 4
          %s244 = int_to_ptr.hbm [resolvable:$true] %s243
          %s245 = sshll.u32 [#allocation2], 4
          %s246 = int_to_ptr.vmem [resolvable:$true] %s245
          %248 = dma.hbm_to_vmem [thread:$0]  %s244, 1024, %s246, [#allocation3]
        $region20: #{network_forward.1} parent=11 // pred_fallthru
          _
        // Predicated region
        $region21: #{network_forward.1} parent=11 // pred_check
          %p249 = pneg %p122
        $region22: #{network_forward.1} parent=11 // pred_check_branch
          %251 = sbr.rel (%p249) target = $region24
        $region23: #{network_forward.1} parent=11 // pred_region
          %253 = vsyncadd [#allocation5], 0
          %s254 = sshll.u32 %s3, 4
          %s255 = int_to_ptr.hbm [resolvable:$true] %s254
          %s256 = sshll.u32 [#allocation4], 4
          %s257 = int_to_ptr.vmem [resolvable:$true] %s256
          %262 = dma.hbm_to_vmem [thread:$0]  %s255, 65536, %s257, [#allocation5], 512, 512, 32
        $region24: #{network_forward.1} parent=11 // pred_fallthru
          _
        // Predicated region
        $region25: #{network_forward.1} parent=11 // pred_check
          %p263 = pneg %p143
        $region26: #{network_forward.1} parent=11 // pred_check_branch
          %265 = sbr.rel (%p263) target = $region28
        $region27: #{network_forward.1} parent=11 // pred_region
          %267 = vsyncadd [#allocation5], 0
          %s269 = sshll.u32 %s4, 4
          %s270 = int_to_ptr.hbm [resolvable:$true] %s269
          %s271 = sshll.u32 [#allocation6], 4
          %s272 = int_to_ptr.vmem [resolvable:$true] %s271
          %274 = dma.hbm_to_vmem [thread:$0]  %s270, 128, %s272, [#allocation5]
        $region28: #{network_forward.1} parent=11 // pred_fallthru
          _
        // Predicated region
        $region29: #{network_forward.1} parent=11 // pred_check
          %p275 = pneg %p164
        $region30: #{network_forward.1} parent=11 // pred_check_branch
          %277 = sbr.rel (%p275) target = $region32
        $region31: #{network_forward.1} parent=11 // pred_region
          _
        $region32: #{network_forward.1} parent=11 // pred_fallthru
          _
        // Predicated region
        $region33: #{network_forward.1} parent=11 // pred_check
          %p278 = pneg %p185
        $region34: #{network_forward.1} parent=11 // pred_check_branch
          %280 = sbr.rel (%p278) target = $region36
        $region35: #{network_forward.1} parent=11 // pred_region
          %282 = vsyncadd [#allocation8], 0
          %s284 = sshll.u32 %s6, 4
          %s285 = int_to_ptr.hbm [resolvable:$true] %s284
          %s286 = sshll.u32 [#allocation7], 4
          %s287 = int_to_ptr.vmem [resolvable:$true] %s286
          %289 = dma.hbm_to_vmem [thread:$0]  %s285, 16, %s287, [#allocation8]
        $region36: #{network_forward.1} parent=11 // pred_fallthru
          _
      $region12: #{network_forward.1} parent=5 // pred_fallthru
        _
      %p290 = scmp.lt.s32.totalorder %s16, 6
      // Predicated region
      $region37: #{network_forward.1} parent=5 // pred_check
        %p291 = pneg %p290
      $region38: #{network_forward.1} parent=5 // pred_check_branch
        %293 = sbr.rel (%p291) target = $region40
      $region39: #{network_forward.1} parent=5 // pred_region
        // Predicated region
        $region41: #{network_forward.1} parent=39 // pred_check
          %p294 = pneg %p48
        $region42: #{network_forward.1} parent=39 // pred_check_branch
          %296 = sbr.rel (%p294) target = $region44
        $region43: #{network_forward.1} parent=39 // pred_region
          %p297 = scmp.lt.s32.totalorder %s23, 5
          %s298 = scalar_select %p297, %s23, 5
          %s299 = smul.addr %s298, 8
          %s300 = scalar_lea.vmem %s0, %s299
        $region44: #{network_forward.1} parent=39 // pred_fallthru
          _
      $region40: #{network_forward.1} parent=5 // pred_fallthru
        _
      %p301 = scmp.le.s32.totalorder 1, %s16
      %p302 = scmp.lt.s32.totalorder %s16, 7
      %p303 = pnand %p301, %p302
      %p304 = pneg %p303
      // Predicated region
      $region45: #{network_forward.1} parent=5 // pred_check
        _
      $region46: #{network_forward.1} parent=5 // pred_check_branch
        %306 = sbr.rel (%p303) target = $region48
      $region47: #{network_forward.1} parent=5 // pred_region
        %s307 = ssub.s32 %s16, 1
        // Predicated region
        $region49: #{network_forward.1} parent=47 // pred_check
          %p308 = pneg %p101
        $region50: #{network_forward.1} parent=47 // pred_check_branch
          %310 = sbr.rel (%p308) target = $region52
        $region51: #{network_forward.1} parent=47 // pred_region
          %312 = dma.done [#allocation3], 1024
        $region52: #{network_forward.1} parent=47 // pred_fallthru
          _
        // Predicated region
        $region53: #{network_forward.1} parent=47 // pred_check
          %p313 = pneg %p122
        $region54: #{network_forward.1} parent=47 // pred_check_branch
          %315 = sbr.rel (%p313) target = $region56
        $region55: #{network_forward.1} parent=47 // pred_region
          %317 = dma.done [#allocation5], 65536
        $region56: #{network_forward.1} parent=47 // pred_fallthru
          _
        // Predicated region
        $region57: #{network_forward.1} parent=47 // pred_check
          %p318 = pneg %p143
        $region58: #{network_forward.1} parent=47 // pred_check_branch
          %320 = sbr.rel (%p318) target = $region60
        $region59: #{network_forward.1} parent=47 // pred_region
          %322 = dma.done [#allocation5], 128
        $region60: #{network_forward.1} parent=47 // pred_fallthru
          _
        // Predicated region
        $region61: #{network_forward.1} parent=47 // pred_check
          %p323 = pneg %p185
        $region62: #{network_forward.1} parent=47 // pred_check_branch
          %325 = sbr.rel (%p323) target = $region64
        $region63: #{network_forward.1} parent=47 // pred_region
          %327 = dma.done [#allocation8], 16
        $region64: #{network_forward.1} parent=47 // pred_fallthru
          _
        %p328 = scmp.lt.s32.totalorder %s25, 5
        %s329 = scalar_select %p328, %s25, 5
        %s330 = smul.addr %s329, 8
        %s331 = scalar_lea.vmem %s0, %s330
        %p332 = pneg %p54
        %p333 = pneg %p51
        %s334 = smul.u32 16, %s26
        %p335 = scmp.lt.s32.totalorder %s334, 15
        %s336 = scalar_select %p335, %s334, 15
        %s337 = smul.addr %s336, 8
        %s338 = scalar_lea.vmem %s1, %s337
        %p339 = pneg %p80
        %p340 = pneg %p77
        %p341 = pneg %p101
        %p342 = pneg %p98
        %p343 = pneg %p122
        %p344 = pneg %p119
        %p345 = pneg %p143
        %p346 = pneg %p140
        %p347 = pneg %p164
        %p348 = pneg %p161
        %p349 = pneg %p185
        %p350 = pneg %p182
        %p351 = pneg %p213
        %p352 = pneg %p210
        %s353 = smul.u32 16, %s26
        %p354 = scmp.lt.s32.totalorder %s25, 5
        %s355 = scalar_select %p354, %s25, 5
        %p356 = scmp.lt.s32.totalorder %s353, 15
        %s357 = scalar_select %p356, %s353, 15
        %s358 = smul.addr %s355, 16
        %s359 = sadd.s32 %s357, %s358
        %s360 = smul.addr %s359, 8
        %s361 = scalar_lea.vmem %s7, %s360
        %p362 = scmp.lt.s32.totalorder %s25, 5
        %s363 = scalar_select %p362, %s25, 5
        %s364 = smul.addr %s363, 8
        %s365 = scalar_lea.vmem %s0, %s364
        %s366 = smul.u32 16, %s26
        %p367 = scmp.lt.s32.totalorder %s366, 15
        %s368 = scalar_select %p367, %s366, 15
        %s369 = smul.addr %s368, 8
        %s370 = scalar_lea.vmem %s1, %s369
        %s371 = smul.u32 16, %s26
        %s372 = smul.u32 16, %s26
        %p373 = scmp.lt.s32.totalorder %s25, 5
        %s374 = scalar_select %p373, %s25, 5
        %p375 = scmp.lt.s32.totalorder %s372, 15
        %s376 = scalar_select %p375, %s372, 15
        %s377 = smul.addr %s374, 16
        %s378 = sadd.s32 %s376, %s377
        %s379 = smul.addr %s378, 8
        %s380 = scalar_lea.vmem %s7, %s379
        %s381 = smul.u32 16, %s26
        %v382 = vld [vmem:[%s370] sm:$0xff]
        %v383 = vld [vmem:[%s370 + $0x8] sm:$0xff]
        %v384 = vld [vmem:[%s370 + $0x10] sm:$0xff]
        %v385 = vld [vmem:[%s370 + $0x18] sm:$0xff]
        %v386 = vld [vmem:[%s370 + $0x20] sm:$0xff]
        %v387 = vld [vmem:[%s370 + $0x28] sm:$0xff]
        %v388 = vld [vmem:[%s370 + $0x30] sm:$0xff]
        %v389 = vld [vmem:[%s370 + $0x38] sm:$0xff]
        %v390 = vld [vmem:[%s370 + $0x40] sm:$0xff]
        %v391 = vld [vmem:[%s370 + $0x48] sm:$0xff]
        %v392 = vld [vmem:[%s370 + $0x50] sm:$0xff]
        %v393 = vld [vmem:[%s370 + $0x58] sm:$0xff]
        %v394 = vld [vmem:[%s370 + $0x60] sm:$0xff]
        %v395 = vld [vmem:[%s370 + $0x68] sm:$0xff]
        %v396 = vld [vmem:[%s370 + $0x70] sm:$0xff]
        %v397 = vld [vmem:[%s370 + $0x78] sm:$0xff]
        %v398 = vld [vmem:[#allocation2] sm:$0xff]
        %v399 = vld [vmem:[#allocation2 + $0x8] sm:$0xff]
        %v400 = vld [vmem:[#allocation2 + $0x10] sm:$0xff]
        %v401 = vld [vmem:[#allocation2 + $0x18] sm:$0xff]
        %v402 = vld [vmem:[#allocation2 + $0x20] sm:$0xff]
        %v403 = vld [vmem:[#allocation2 + $0x28] sm:$0xff]
        %v404 = vld [vmem:[#allocation2 + $0x30] sm:$0xff]
        %v405 = vld [vmem:[#allocation2 + $0x38] sm:$0xff]
        %vm406 = vcmask 64512
        %v408 = vsel %vm406, %v382, 0
        %v411 = vsel %vm406, %v383, 0
        %v414 = vsel %vm406, %v384, 0
        %v417 = vsel %vm406, %v385, 0
        %v420 = vsel %vm406, %v386, 0
        %v423 = vsel %vm406, %v387, 0
        %v426 = vsel %vm406, %v388, 0
        %v429 = vsel %vm406, %v389, 0
        %v432 = vsel %vm406, %v390, 0
        %v435 = vsel %vm406, %v391, 0
        %v438 = vsel %vm406, %v392, 0
        %v441 = vsel %vm406, %v393, 0
        %v444 = vsel %vm406, %v394, 0
        %v447 = vsel %vm406, %v395, 0
        %v450 = vsel %vm406, %v396, 0
        %v453 = vsel %vm406, %v397, 0
        %455 = vmatpush.msra.mxu0 0.0
        %456 = vmatpush.msra.mxu0 0.0
        %457 = vmatpush.msra.mxu0 0.0
        %458 = vmatpush.msra.mxu0 0.0
        %459 = vmatpush.msra.mxu0 0.0
        %460 = vmatpush.msra.mxu0 0.0
        %461 = vmatpush.msra.mxu0 0.0
        %462 = vmatpush.msra.mxu0 0.0
        %463 = vmatpush.msra.mxu0 0.0
        %464 = vmatpush.msra.mxu0 0.0
        %465 = vmatpush.msra.mxu0 0.0
        %466 = vmatpush.msra.mxu0 0.0
        %467 = vmatpush.msra.mxu0 0.0
        %468 = vmatpush.msra.mxu0 0.0
        %469 = vmatpush.msra.mxu0 0.0
        %470 = vmatpush.msra.mxu0 %v398
        %471 = vmatmul.f32.gmra.mxu0 %v408
        %v472 = vpop.f32.mrf.mxu0
        %v473 = vadd.f32 0.0, %v472
        %474 = vmatmul.f32.gmra.mxu0 %v411
        %v475 = vpop.f32.mrf.mxu0
        %v476 = vadd.f32 0.0, %v475
        %477 = vmatmul.f32.gmra.mxu0 %v414
        %v478 = vpop.f32.mrf.mxu0
        %v479 = vadd.f32 0.0, %v478
        %480 = vmatmul.f32.gmra.mxu0 %v417
        %v481 = vpop.f32.mrf.mxu0
        %v482 = vadd.f32 0.0, %v481
        %483 = vmatmul.f32.gmra.mxu0 %v420
        %v484 = vpop.f32.mrf.mxu0
        %v485 = vadd.f32 0.0, %v484
        %486 = vmatmul.f32.gmra.mxu0 %v423
        %v487 = vpop.f32.mrf.mxu0
        %v488 = vadd.f32 0.0, %v487
        %489 = vmatmul.f32.gmra.mxu0 %v426
        %v490 = vpop.f32.mrf.mxu0
        %v491 = vadd.f32 0.0, %v490
        %492 = vmatmul.f32.gmra.mxu0 %v429
        %v493 = vpop.f32.mrf.mxu0
        %v494 = vadd.f32 0.0, %v493
        %495 = vmatmul.f32.gmra.mxu0 %v432
        %v496 = vpop.f32.mrf.mxu0
        %v497 = vadd.f32 0.0, %v496
        %498 = vmatmul.f32.gmra.mxu0 %v435
        %v499 = vpop.f32.mrf.mxu0
        %v500 = vadd.f32 0.0, %v499
        %501 = vmatmul.f32.gmra.mxu0 %v438
        %v502 = vpop.f32.mrf.mxu0
        %v503 = vadd.f32 0.0, %v502
        %504 = vmatmul.f32.gmra.mxu0 %v441
        %v505 = vpop.f32.mrf.mxu0
        %v506 = vadd.f32 0.0, %v505
        %507 = vmatmul.f32.gmra.mxu0 %v444
        %v508 = vpop.f32.mrf.mxu0
        %v509 = vadd.f32 0.0, %v508
        %510 = vmatmul.f32.gmra.mxu0 %v447
        %v511 = vpop.f32.mrf.mxu0
        %v512 = vadd.f32 0.0, %v511
        %513 = vmatmul.f32.gmra.mxu0 %v450
        %v514 = vpop.f32.mrf.mxu0
        %v515 = vadd.f32 0.0, %v514
        %516 = vmatmul.f32.gmra.mxu0 %v453
        %v517 = vpop.f32.mrf.mxu0
        %v518 = vadd.f32 0.0, %v517
        %519 = vdwg.mxu0
        %520 = vmatpush.msra.mxu0 0.0
        %521 = vmatpush.msra.mxu0 0.0
        %522 = vmatpush.msra.mxu0 0.0
        %523 = vmatpush.msra.mxu0 0.0
        %524 = vmatpush.msra.mxu0 0.0
        %525 = vmatpush.msra.mxu0 0.0
        %526 = vmatpush.msra.mxu0 0.0
        %527 = vmatpush.msra.mxu0 0.0
        %528 = vmatpush.msra.mxu0 0.0
        %529 = vmatpush.msra.mxu0 0.0
        %530 = vmatpush.msra.mxu0 0.0
        %531 = vmatpush.msra.mxu0 0.0
        %532 = vmatpush.msra.mxu0 0.0
        %533 = vmatpush.msra.mxu0 0.0
        %534 = vmatpush.msra.mxu0 0.0
        %535 = vmatpush.msra.mxu0 %v399
        %536 = vmatmul.f32.gmra.mxu0 %v408
        %v537 = vpop.f32.mrf.mxu0
        %v538 = vadd.f32 0.0, %v537
        %539 = vmatmul.f32.gmra.mxu0 %v411
        %v540 = vpop.f32.mrf.mxu0
        %v541 = vadd.f32 0.0, %v540
        %542 = vmatmul.f32.gmra.mxu0 %v414
        %v543 = vpop.f32.mrf.mxu0
        %v544 = vadd.f32 0.0, %v543
        %545 = vmatmul.f32.gmra.mxu0 %v417
        %v546 = vpop.f32.mrf.mxu0
        %v547 = vadd.f32 0.0, %v546
        %548 = vmatmul.f32.gmra.mxu0 %v420
        %v549 = vpop.f32.mrf.mxu0
        %v550 = vadd.f32 0.0, %v549
        %551 = vmatmul.f32.gmra.mxu0 %v423
        %v552 = vpop.f32.mrf.mxu0
        %v553 = vadd.f32 0.0, %v552
        %554 = vmatmul.f32.gmra.mxu0 %v426
        %v555 = vpop.f32.mrf.mxu0
        %v556 = vadd.f32 0.0, %v555
        %557 = vmatmul.f32.gmra.mxu0 %v429
        %v558 = vpop.f32.mrf.mxu0
        %v559 = vadd.f32 0.0, %v558
        %560 = vmatmul.f32.gmra.mxu0 %v432
        %v561 = vpop.f32.mrf.mxu0
        %v562 = vadd.f32 0.0, %v561
        %563 = vmatmul.f32.gmra.mxu0 %v435
        %v564 = vpop.f32.mrf.mxu0
        %v565 = vadd.f32 0.0, %v564
        %566 = vmatmul.f32.gmra.mxu0 %v438
        %v567 = vpop.f32.mrf.mxu0
        %v568 = vadd.f32 0.0, %v567
        %569 = vmatmul.f32.gmra.mxu0 %v441
        %v570 = vpop.f32.mrf.mxu0
        %v571 = vadd.f32 0.0, %v570
        %572 = vmatmul.f32.gmra.mxu0 %v444
        %v573 = vpop.f32.mrf.mxu0
        %v574 = vadd.f32 0.0, %v573
        %575 = vmatmul.f32.gmra.mxu0 %v447
        %v576 = vpop.f32.mrf.mxu0
        %v577 = vadd.f32 0.0, %v576
        %578 = vmatmul.f32.gmra.mxu0 %v450
        %v579 = vpop.f32.mrf.mxu0
        %v580 = vadd.f32 0.0, %v579
        %581 = vmatmul.f32.gmra.mxu0 %v453
        %v582 = vpop.f32.mrf.mxu0
        %v583 = vadd.f32 0.0, %v582
        %584 = vdwg.mxu0
        %585 = vmatpush.msra.mxu0 0.0
        %586 = vmatpush.msra.mxu0 0.0
        %587 = vmatpush.msra.mxu0 0.0
        %588 = vmatpush.msra.mxu0 0.0
        %589 = vmatpush.msra.mxu0 0.0
        %590 = vmatpush.msra.mxu0 0.0
        %591 = vmatpush.msra.mxu0 0.0
        %592 = vmatpush.msra.mxu0 0.0
        %593 = vmatpush.msra.mxu0 0.0
        %594 = vmatpush.msra.mxu0 0.0
        %595 = vmatpush.msra.mxu0 0.0
        %596 = vmatpush.msra.mxu0 0.0
        %597 = vmatpush.msra.mxu0 0.0
        %598 = vmatpush.msra.mxu0 0.0
        %599 = vmatpush.msra.mxu0 0.0
        %600 = vmatpush.msra.mxu0 %v400
        %601 = vmatmul.f32.gmra.mxu0 %v408
        %v602 = vpop.f32.mrf.mxu0
        %v603 = vadd.f32 0.0, %v602
        %604 = vmatmul.f32.gmra.mxu0 %v411
        %v605 = vpop.f32.mrf.mxu0
        %v606 = vadd.f32 0.0, %v605
        %607 = vmatmul.f32.gmra.mxu0 %v414
        %v608 = vpop.f32.mrf.mxu0
        %v609 = vadd.f32 0.0, %v608
        %610 = vmatmul.f32.gmra.mxu0 %v417
        %v611 = vpop.f32.mrf.mxu0
        %v612 = vadd.f32 0.0, %v611
        %613 = vmatmul.f32.gmra.mxu0 %v420
        %v614 = vpop.f32.mrf.mxu0
        %v615 = vadd.f32 0.0, %v614
        %616 = vmatmul.f32.gmra.mxu0 %v423
        %v617 = vpop.f32.mrf.mxu0
        %v618 = vadd.f32 0.0, %v617
        %619 = vmatmul.f32.gmra.mxu0 %v426
        %v620 = vpop.f32.mrf.mxu0
        %v621 = vadd.f32 0.0, %v620
        %622 = vmatmul.f32.gmra.mxu0 %v429
        %v623 = vpop.f32.mrf.mxu0
        %v624 = vadd.f32 0.0, %v623
        %625 = vmatmul.f32.gmra.mxu0 %v432
        %v626 = vpop.f32.mrf.mxu0
        %v627 = vadd.f32 0.0, %v626
        %628 = vmatmul.f32.gmra.mxu0 %v435
        %v629 = vpop.f32.mrf.mxu0
        %v630 = vadd.f32 0.0, %v629
        %631 = vmatmul.f32.gmra.mxu0 %v438
        %v632 = vpop.f32.mrf.mxu0
        %v633 = vadd.f32 0.0, %v632
        %634 = vmatmul.f32.gmra.mxu0 %v441
        %v635 = vpop.f32.mrf.mxu0
        %v636 = vadd.f32 0.0, %v635
        %637 = vmatmul.f32.gmra.mxu0 %v444
        %v638 = vpop.f32.mrf.mxu0
        %v639 = vadd.f32 0.0, %v638
        %640 = vmatmul.f32.gmra.mxu0 %v447
        %v641 = vpop.f32.mrf.mxu0
        %v642 = vadd.f32 0.0, %v641
        %643 = vmatmul.f32.gmra.mxu0 %v450
        %v644 = vpop.f32.mrf.mxu0
        %v645 = vadd.f32 0.0, %v644
        %646 = vmatmul.f32.gmra.mxu0 %v453
        %v647 = vpop.f32.mrf.mxu0
        %v648 = vadd.f32 0.0, %v647
        %649 = vdwg.mxu0
        %650 = vmatpush.msra.mxu0 0.0
        %651 = vmatpush.msra.mxu0 0.0
        %652 = vmatpush.msra.mxu0 0.0
        %653 = vmatpush.msra.mxu0 0.0
        %654 = vmatpush.msra.mxu0 0.0
        %655 = vmatpush.msra.mxu0 0.0
        %656 = vmatpush.msra.mxu0 0.0
        %657 = vmatpush.msra.mxu0 0.0
        %658 = vmatpush.msra.mxu0 0.0
        %659 = vmatpush.msra.mxu0 0.0
        %660 = vmatpush.msra.mxu0 0.0
        %661 = vmatpush.msra.mxu0 0.0
        %662 = vmatpush.msra.mxu0 0.0
        %663 = vmatpush.msra.mxu0 0.0
        %664 = vmatpush.msra.mxu0 0.0
        %665 = vmatpush.msra.mxu0 %v401
        %666 = vmatmul.f32.gmra.mxu0 %v408
        %v667 = vpop.f32.mrf.mxu0
        %v668 = vadd.f32 0.0, %v667
        %669 = vmatmul.f32.gmra.mxu0 %v411
        %v670 = vpop.f32.mrf.mxu0
        %v671 = vadd.f32 0.0, %v670
        %672 = vmatmul.f32.gmra.mxu0 %v414
        %v673 = vpop.f32.mrf.mxu0
        %v674 = vadd.f32 0.0, %v673
        %675 = vmatmul.f32.gmra.mxu0 %v417
        %v676 = vpop.f32.mrf.mxu0
        %v677 = vadd.f32 0.0, %v676
        %678 = vmatmul.f32.gmra.mxu0 %v420
        %v679 = vpop.f32.mrf.mxu0
        %v680 = vadd.f32 0.0, %v679
        %681 = vmatmul.f32.gmra.mxu0 %v423
        %v682 = vpop.f32.mrf.mxu0
        %v683 = vadd.f32 0.0, %v682
        %684 = vmatmul.f32.gmra.mxu0 %v426
        %v685 = vpop.f32.mrf.mxu0
        %v686 = vadd.f32 0.0, %v685
        %687 = vmatmul.f32.gmra.mxu0 %v429
        %v688 = vpop.f32.mrf.mxu0
        %v689 = vadd.f32 0.0, %v688
        %690 = vmatmul.f32.gmra.mxu0 %v432
        %v691 = vpop.f32.mrf.mxu0
        %v692 = vadd.f32 0.0, %v691
        %693 = vmatmul.f32.gmra.mxu0 %v435
        %v694 = vpop.f32.mrf.mxu0
        %v695 = vadd.f32 0.0, %v694
        %696 = vmatmul.f32.gmra.mxu0 %v438
        %v697 = vpop.f32.mrf.mxu0
        %v698 = vadd.f32 0.0, %v697
        %699 = vmatmul.f32.gmra.mxu0 %v441
        %v700 = vpop.f32.mrf.mxu0
        %v701 = vadd.f32 0.0, %v700
        %702 = vmatmul.f32.gmra.mxu0 %v444
        %v703 = vpop.f32.mrf.mxu0
        %v704 = vadd.f32 0.0, %v703
        %705 = vmatmul.f32.gmra.mxu0 %v447
        %v706 = vpop.f32.mrf.mxu0
        %v707 = vadd.f32 0.0, %v706
        %708 = vmatmul.f32.gmra.mxu0 %v450
        %v709 = vpop.f32.mrf.mxu0
        %v710 = vadd.f32 0.0, %v709
        %711 = vmatmul.f32.gmra.mxu0 %v453
        %v712 = vpop.f32.mrf.mxu0
        %v713 = vadd.f32 0.0, %v712
        %714 = vdwg.mxu0
        %715 = vmatpush.msra.mxu0 0.0
        %716 = vmatpush.msra.mxu0 0.0
        %717 = vmatpush.msra.mxu0 0.0
        %718 = vmatpush.msra.mxu0 0.0
        %719 = vmatpush.msra.mxu0 0.0
        %720 = vmatpush.msra.mxu0 0.0
        %721 = vmatpush.msra.mxu0 0.0
        %722 = vmatpush.msra.mxu0 0.0
        %723 = vmatpush.msra.mxu0 0.0
        %724 = vmatpush.msra.mxu0 0.0
        %725 = vmatpush.msra.mxu0 0.0
        %726 = vmatpush.msra.mxu0 0.0
        %727 = vmatpush.msra.mxu0 0.0
        %728 = vmatpush.msra.mxu0 0.0
        %729 = vmatpush.msra.mxu0 0.0
        %730 = vmatpush.msra.mxu0 %v402
        %731 = vmatmul.f32.gmra.mxu0 %v408
        %v732 = vpop.f32.mrf.mxu0
        %v733 = vadd.f32 0.0, %v732
        %734 = vmatmul.f32.gmra.mxu0 %v411
        %v735 = vpop.f32.mrf.mxu0
        %v736 = vadd.f32 0.0, %v735
        %737 = vmatmul.f32.gmra.mxu0 %v414
        %v738 = vpop.f32.mrf.mxu0
        %v739 = vadd.f32 0.0, %v738
        %740 = vmatmul.f32.gmra.mxu0 %v417
        %v741 = vpop.f32.mrf.mxu0
        %v742 = vadd.f32 0.0, %v741
        %743 = vmatmul.f32.gmra.mxu0 %v420
        %v744 = vpop.f32.mrf.mxu0
        %v745 = vadd.f32 0.0, %v744
        %746 = vmatmul.f32.gmra.mxu0 %v423
        %v747 = vpop.f32.mrf.mxu0
        %v748 = vadd.f32 0.0, %v747
        %749 = vmatmul.f32.gmra.mxu0 %v426
        %v750 = vpop.f32.mrf.mxu0
        %v751 = vadd.f32 0.0, %v750
        %752 = vmatmul.f32.gmra.mxu0 %v429
        %v753 = vpop.f32.mrf.mxu0
        %v754 = vadd.f32 0.0, %v753
        %755 = vmatmul.f32.gmra.mxu0 %v432
        %v756 = vpop.f32.mrf.mxu0
        %v757 = vadd.f32 0.0, %v756
        %758 = vmatmul.f32.gmra.mxu0 %v435
        %v759 = vpop.f32.mrf.mxu0
        %v760 = vadd.f32 0.0, %v759
        %761 = vmatmul.f32.gmra.mxu0 %v438
        %v762 = vpop.f32.mrf.mxu0
        %v763 = vadd.f32 0.0, %v762
        %764 = vmatmul.f32.gmra.mxu0 %v441
        %v765 = vpop.f32.mrf.mxu0
        %v766 = vadd.f32 0.0, %v765
        %767 = vmatmul.f32.gmra.mxu0 %v444
        %v768 = vpop.f32.mrf.mxu0
        %v769 = vadd.f32 0.0, %v768
        %770 = vmatmul.f32.gmra.mxu0 %v447
        %v771 = vpop.f32.mrf.mxu0
        %v772 = vadd.f32 0.0, %v771
        %773 = vmatmul.f32.gmra.mxu0 %v450
        %v774 = vpop.f32.mrf.mxu0
        %v775 = vadd.f32 0.0, %v774
        %776 = vmatmul.f32.gmra.mxu0 %v453
        %v777 = vpop.f32.mrf.mxu0
        %v778 = vadd.f32 0.0, %v777
        %779 = vdwg.mxu0
        %780 = vmatpush.msra.mxu0 0.0
        %781 = vmatpush.msra.mxu0 0.0
        %782 = vmatpush.msra.mxu0 0.0
        %783 = vmatpush.msra.mxu0 0.0
        %784 = vmatpush.msra.mxu0 0.0
        %785 = vmatpush.msra.mxu0 0.0
        %786 = vmatpush.msra.mxu0 0.0
        %787 = vmatpush.msra.mxu0 0.0
        %788 = vmatpush.msra.mxu0 0.0
        %789 = vmatpush.msra.mxu0 0.0
        %790 = vmatpush.msra.mxu0 0.0
        %791 = vmatpush.msra.mxu0 0.0
        %792 = vmatpush.msra.mxu0 0.0
        %793 = vmatpush.msra.mxu0 0.0
        %794 = vmatpush.msra.mxu0 0.0
        %795 = vmatpush.msra.mxu0 %v403
        %796 = vmatmul.f32.gmra.mxu0 %v408
        %v797 = vpop.f32.mrf.mxu0
        %v798 = vadd.f32 0.0, %v797
        %799 = vmatmul.f32.gmra.mxu0 %v411
        %v800 = vpop.f32.mrf.mxu0
        %v801 = vadd.f32 0.0, %v800
        %802 = vmatmul.f32.gmra.mxu0 %v414
        %v803 = vpop.f32.mrf.mxu0
        %v804 = vadd.f32 0.0, %v803
        %805 = vmatmul.f32.gmra.mxu0 %v417
        %v806 = vpop.f32.mrf.mxu0
        %v807 = vadd.f32 0.0, %v806
        %808 = vmatmul.f32.gmra.mxu0 %v420
        %v809 = vpop.f32.mrf.mxu0
        %v810 = vadd.f32 0.0, %v809
        %811 = vmatmul.f32.gmra.mxu0 %v423
        %v812 = vpop.f32.mrf.mxu0
        %v813 = vadd.f32 0.0, %v812
        %814 = vmatmul.f32.gmra.mxu0 %v426
        %v815 = vpop.f32.mrf.mxu0
        %v816 = vadd.f32 0.0, %v815
        %817 = vmatmul.f32.gmra.mxu0 %v429
        %v818 = vpop.f32.mrf.mxu0
        %v819 = vadd.f32 0.0, %v818
        %820 = vmatmul.f32.gmra.mxu0 %v432
        %v821 = vpop.f32.mrf.mxu0
        %v822 = vadd.f32 0.0, %v821
        %823 = vmatmul.f32.gmra.mxu0 %v435
        %v824 = vpop.f32.mrf.mxu0
        %v825 = vadd.f32 0.0, %v824
        %826 = vmatmul.f32.gmra.mxu0 %v438
        %v827 = vpop.f32.mrf.mxu0
        %v828 = vadd.f32 0.0, %v827
        %829 = vmatmul.f32.gmra.mxu0 %v441
        %v830 = vpop.f32.mrf.mxu0
        %v831 = vadd.f32 0.0, %v830
        %832 = vmatmul.f32.gmra.mxu0 %v444
        %v833 = vpop.f32.mrf.mxu0
        %v834 = vadd.f32 0.0, %v833
        %835 = vmatmul.f32.gmra.mxu0 %v447
        %v836 = vpop.f32.mrf.mxu0
        %v837 = vadd.f32 0.0, %v836
        %838 = vmatmul.f32.gmra.mxu0 %v450
        %v839 = vpop.f32.mrf.mxu0
        %v840 = vadd.f32 0.0, %v839
        %841 = vmatmul.f32.gmra.mxu0 %v453
        %v842 = vpop.f32.mrf.mxu0
        %v843 = vadd.f32 0.0, %v842
        %844 = vdwg.mxu0
        %845 = vmatpush.msra.mxu0 0.0
        %846 = vmatpush.msra.mxu0 0.0
        %847 = vmatpush.msra.mxu0 0.0
        %848 = vmatpush.msra.mxu0 0.0
        %849 = vmatpush.msra.mxu0 0.0
        %850 = vmatpush.msra.mxu0 0.0
        %851 = vmatpush.msra.mxu0 0.0
        %852 = vmatpush.msra.mxu0 0.0
        %853 = vmatpush.msra.mxu0 0.0
        %854 = vmatpush.msra.mxu0 0.0
        %855 = vmatpush.msra.mxu0 0.0
        %856 = vmatpush.msra.mxu0 0.0
        %857 = vmatpush.msra.mxu0 0.0
        %858 = vmatpush.msra.mxu0 0.0
        %859 = vmatpush.msra.mxu0 0.0
        %860 = vmatpush.msra.mxu0 %v404
        %861 = vmatmul.f32.gmra.mxu0 %v408
        %v862 = vpop.f32.mrf.mxu0
        %v863 = vadd.f32 0.0, %v862
        %864 = vmatmul.f32.gmra.mxu0 %v411
        %v865 = vpop.f32.mrf.mxu0
        %v866 = vadd.f32 0.0, %v865
        %867 = vmatmul.f32.gmra.mxu0 %v414
        %v868 = vpop.f32.mrf.mxu0
        %v869 = vadd.f32 0.0, %v868
        %870 = vmatmul.f32.gmra.mxu0 %v417
        %v871 = vpop.f32.mrf.mxu0
        %v872 = vadd.f32 0.0, %v871
        %873 = vmatmul.f32.gmra.mxu0 %v420
        %v874 = vpop.f32.mrf.mxu0
        %v875 = vadd.f32 0.0, %v874
        %876 = vmatmul.f32.gmra.mxu0 %v423
        %v877 = vpop.f32.mrf.mxu0
        %v878 = vadd.f32 0.0, %v877
        %879 = vmatmul.f32.gmra.mxu0 %v426
        %v880 = vpop.f32.mrf.mxu0
        %v881 = vadd.f32 0.0, %v880
        %882 = vmatmul.f32.gmra.mxu0 %v429
        %v883 = vpop.f32.mrf.mxu0
        %v884 = vadd.f32 0.0, %v883
        %885 = vmatmul.f32.gmra.mxu0 %v432
        %v886 = vpop.f32.mrf.mxu0
        %v887 = vadd.f32 0.0, %v886
        %888 = vmatmul.f32.gmra.mxu0 %v435
        %v889 = vpop.f32.mrf.mxu0
        %v890 = vadd.f32 0.0, %v889
        %891 = vmatmul.f32.gmra.mxu0 %v438
        %v892 = vpop.f32.mrf.mxu0
        %v893 = vadd.f32 0.0, %v892
        %894 = vmatmul.f32.gmra.mxu0 %v441
        %v895 = vpop.f32.mrf.mxu0
        %v896 = vadd.f32 0.0, %v895
        %897 = vmatmul.f32.gmra.mxu0 %v444
        %v898 = vpop.f32.mrf.mxu0
        %v899 = vadd.f32 0.0, %v898
        %900 = vmatmul.f32.gmra.mxu0 %v447
        %v901 = vpop.f32.mrf.mxu0
        %v902 = vadd.f32 0.0, %v901
        %903 = vmatmul.f32.gmra.mxu0 %v450
        %v904 = vpop.f32.mrf.mxu0
        %v905 = vadd.f32 0.0, %v904
        %906 = vmatmul.f32.gmra.mxu0 %v453
        %v907 = vpop.f32.mrf.mxu0
        %v908 = vadd.f32 0.0, %v907
        %909 = vdwg.mxu0
        %910 = vmatpush.msra.mxu0 0.0
        %911 = vmatpush.msra.mxu0 0.0
        %912 = vmatpush.msra.mxu0 0.0
        %913 = vmatpush.msra.mxu0 0.0
        %914 = vmatpush.msra.mxu0 0.0
        %915 = vmatpush.msra.mxu0 0.0
        %916 = vmatpush.msra.mxu0 0.0
        %917 = vmatpush.msra.mxu0 0.0
        %918 = vmatpush.msra.mxu0 0.0
        %919 = vmatpush.msra.mxu0 0.0
        %920 = vmatpush.msra.mxu0 0.0
        %921 = vmatpush.msra.mxu0 0.0
        %922 = vmatpush.msra.mxu0 0.0
        %923 = vmatpush.msra.mxu0 0.0
        %924 = vmatpush.msra.mxu0 0.0
        %925 = vmatpush.msra.mxu0 %v405
        %926 = vmatmul.f32.gmra.mxu0 %v408
        %v927 = vpop.f32.mrf.mxu0
        %v928 = vadd.f32 0.0, %v927
        %929 = vmatmul.f32.gmra.mxu0 %v411
        %v930 = vpop.f32.mrf.mxu0
        %v931 = vadd.f32 0.0, %v930
        %932 = vmatmul.f32.gmra.mxu0 %v414
        %v933 = vpop.f32.mrf.mxu0
        %v934 = vadd.f32 0.0, %v933
        %935 = vmatmul.f32.gmra.mxu0 %v417
        %v936 = vpop.f32.mrf.mxu0
        %v937 = vadd.f32 0.0, %v936
        %938 = vmatmul.f32.gmra.mxu0 %v420
        %v939 = vpop.f32.mrf.mxu0
        %v940 = vadd.f32 0.0, %v939
        %941 = vmatmul.f32.gmra.mxu0 %v423
        %v942 = vpop.f32.mrf.mxu0
        %v943 = vadd.f32 0.0, %v942
        %944 = vmatmul.f32.gmra.mxu0 %v426
        %v945 = vpop.f32.mrf.mxu0
        %v946 = vadd.f32 0.0, %v945
        %947 = vmatmul.f32.gmra.mxu0 %v429
        %v948 = vpop.f32.mrf.mxu0
        %v949 = vadd.f32 0.0, %v948
        %950 = vmatmul.f32.gmra.mxu0 %v432
        %v951 = vpop.f32.mrf.mxu0
        %v952 = vadd.f32 0.0, %v951
        %953 = vmatmul.f32.gmra.mxu0 %v435
        %v954 = vpop.f32.mrf.mxu0
        %v955 = vadd.f32 0.0, %v954
        %956 = vmatmul.f32.gmra.mxu0 %v438
        %v957 = vpop.f32.mrf.mxu0
        %v958 = vadd.f32 0.0, %v957
        %959 = vmatmul.f32.gmra.mxu0 %v441
        %v960 = vpop.f32.mrf.mxu0
        %v961 = vadd.f32 0.0, %v960
        %962 = vmatmul.f32.gmra.mxu0 %v444
        %v963 = vpop.f32.mrf.mxu0
        %v964 = vadd.f32 0.0, %v963
        %965 = vmatmul.f32.gmra.mxu0 %v447
        %v966 = vpop.f32.mrf.mxu0
        %v967 = vadd.f32 0.0, %v966
        %968 = vmatmul.f32.gmra.mxu0 %v450
        %v969 = vpop.f32.mrf.mxu0
        %v970 = vadd.f32 0.0, %v969
        %971 = vmatmul.f32.gmra.mxu0 %v453
        %v972 = vpop.f32.mrf.mxu0
        %v973 = vadd.f32 0.0, %v972
        %974 = vdwg.mxu0
        %v975 = vld [vmem:[%s365] sm:$0xff]
        %v977 = vperm.slane %v975, 0
        %v978 = vperm.slane %v975, 1
        %v979 = vperm.slane %v975, 2
        %v980 = vperm.slane %v975, 3
        %v981 = vperm.slane %v975, 4
        %v982 = vperm.slane %v975, 5
        %v983 = vperm.slane %v975, 6
        %v984 = vperm.slane %v975, 7
        %v993 = vpack.c.bf16 %v978, %v977
        %v994 = vpack.c.bf16 %v980, %v979
        %v995 = vpack.c.bf16 %v982, %v981
        %v996 = vpack.c.bf16 %v984, %v983
        %v997 = vpack.c.bf16 %v538, %v473
        %v998 = vpack.c.bf16 %v668, %v603
        %v999 = vpack.c.bf16 %v798, %v733
        %v1000 = vpack.c.bf16 %v928, %v863
        %v1001 = vpack.c.bf16 %v541, %v476
        %v1002 = vpack.c.bf16 %v671, %v606
        %v1003 = vpack.c.bf16 %v801, %v736
        %v1004 = vpack.c.bf16 %v931, %v866
        %v1005 = vpack.c.bf16 %v544, %v479
        %v1006 = vpack.c.bf16 %v674, %v609
        %v1007 = vpack.c.bf16 %v804, %v739
        %v1008 = vpack.c.bf16 %v934, %v869
        %v1009 = vpack.c.bf16 %v547, %v482
        %v1010 = vpack.c.bf16 %v677, %v612
        %v1011 = vpack.c.bf16 %v807, %v742
        %v1012 = vpack.c.bf16 %v937, %v872
        %v1013 = vpack.c.bf16 %v550, %v485
        %v1014 = vpack.c.bf16 %v680, %v615
        %v1015 = vpack.c.bf16 %v810, %v745
        %v1016 = vpack.c.bf16 %v940, %v875
        %v1017 = vpack.c.bf16 %v553, %v488
        %v1018 = vpack.c.bf16 %v683, %v618
        %v1019 = vpack.c.bf16 %v813, %v748
        %v1020 = vpack.c.bf16 %v943, %v878
        %v1021 = vpack.c.bf16 %v556, %v491
        %v1022 = vpack.c.bf16 %v686, %v621
        %v1023 = vpack.c.bf16 %v816, %v751
        %v1024 = vpack.c.bf16 %v946, %v881
        %v1025 = vpack.c.bf16 %v559, %v494
        %v1026 = vpack.c.bf16 %v689, %v624
        %v1027 = vpack.c.bf16 %v819, %v754
        %v1028 = vpack.c.bf16 %v949, %v884
        %v1029 = vpack.c.bf16 %v562, %v497
        %v1030 = vpack.c.bf16 %v692, %v627
        %v1031 = vpack.c.bf16 %v822, %v757
        %v1032 = vpack.c.bf16 %v952, %v887
        %v1033 = vpack.c.bf16 %v565, %v500
        %v1034 = vpack.c.bf16 %v695, %v630
        %v1035 = vpack.c.bf16 %v825, %v760
        %v1036 = vpack.c.bf16 %v955, %v890
        %v1037 = vpack.c.bf16 %v568, %v503
        %v1038 = vpack.c.bf16 %v698, %v633
        %v1039 = vpack.c.bf16 %v828, %v763
        %v1040 = vpack.c.bf16 %v958, %v893
        %v1041 = vpack.c.bf16 %v571, %v506
        %v1042 = vpack.c.bf16 %v701, %v636
        %v1043 = vpack.c.bf16 %v831, %v766
        %v1044 = vpack.c.bf16 %v961, %v896
        %v1045 = vpack.c.bf16 %v574, %v509
        %v1046 = vpack.c.bf16 %v704, %v639
        %v1047 = vpack.c.bf16 %v834, %v769
        %v1048 = vpack.c.bf16 %v964, %v899
        %v1049 = vpack.c.bf16 %v577, %v512
        %v1050 = vpack.c.bf16 %v707, %v642
        %v1051 = vpack.c.bf16 %v837, %v772
        %v1052 = vpack.c.bf16 %v967, %v902
        %v1053 = vpack.c.bf16 %v580, %v515
        %v1054 = vpack.c.bf16 %v710, %v645
        %v1055 = vpack.c.bf16 %v840, %v775
        %v1056 = vpack.c.bf16 %v970, %v905
        %v1057 = vpack.c.bf16 %v583, %v518
        %v1058 = vpack.c.bf16 %v713, %v648
        %v1059 = vpack.c.bf16 %v843, %v778
        %v1060 = vpack.c.bf16 %v973, %v908
        %v1065 = vunpack.c.l.b16 %v993
        %v1066 = vunpack.c.h.b16 %v993
        %v1067 = vunpack.c.l.b16 %v994
        %v1068 = vunpack.c.h.b16 %v994
        %v1069 = vunpack.c.l.b16 %v995
        %v1070 = vunpack.c.h.b16 %v995
        %v1071 = vunpack.c.l.b16 %v996
        %v1072 = vunpack.c.h.b16 %v996
        %v1073 = vpack.c.b16 %v1065, %v1065
        %v1074 = vpack.c.b16 %v1066, %v1066
        %v1075 = vpack.c.b16 %v1067, %v1067
        %v1076 = vpack.c.b16 %v1068, %v1068
        %v1077 = vpack.c.b16 %v1069, %v1069
        %v1078 = vpack.c.b16 %v1070, %v1070
        %v1079 = vpack.c.b16 %v1071, %v1071
        %v1080 = vpack.c.b16 %v1072, %v1072
        %v1082 = vpack.i.b16 %v1073, %v1073
        %v1084 = vperm.slane %v1082, 0
        %v1086 = vpack.i.b16 %v1074, %v1074
        %v1088 = vperm.slane %v1086, 0
        %v1090 = vpack.i.b16 %v1075, %v1075
        %v1092 = vperm.slane %v1090, 0
        %v1094 = vpack.i.b16 %v1076, %v1076
        %v1096 = vperm.slane %v1094, 0
        %v1098 = vpack.i.b16 %v1077, %v1077
        %v1100 = vperm.slane %v1098, 0
        %v1102 = vpack.i.b16 %v1078, %v1078
        %v1104 = vperm.slane %v1102, 0
        %v1106 = vpack.i.b16 %v1079, %v1079
        %v1108 = vperm.slane %v1106, 0
        %v1110 = vpack.i.b16 %v1080, %v1080
        %v1112 = vperm.slane %v1110, 0
        %v1113 = vunpack.c.l.bf16 %v1084
        %v1114 = vunpack.c.l.bf16 %v1088
        %v1115 = vunpack.c.l.bf16 %v1092
        %v1116 = vunpack.c.l.bf16 %v1096
        %v1117 = vunpack.c.l.bf16 %v1100
        %v1118 = vunpack.c.l.bf16 %v1104
        %v1119 = vunpack.c.l.bf16 %v1108
        %v1120 = vunpack.c.l.bf16 %v1112
        %v1121 = vunpack.c.l.bf16 %v997
        %v1122 = vunpack.c.h.bf16 %v997
        %v1123 = vunpack.c.l.bf16 %v998
        %v1124 = vunpack.c.h.bf16 %v998
        %v1125 = vunpack.c.l.bf16 %v999
        %v1126 = vunpack.c.h.bf16 %v999
        %v1127 = vunpack.c.l.bf16 %v1000
        %v1128 = vunpack.c.h.bf16 %v1000
        %v1129 = vunpack.c.l.bf16 %v1001
        %v1130 = vunpack.c.h.bf16 %v1001
        %v1131 = vunpack.c.l.bf16 %v1002
        %v1132 = vunpack.c.h.bf16 %v1002
        %v1133 = vunpack.c.l.bf16 %v1003
        %v1134 = vunpack.c.h.bf16 %v1003
        %v1135 = vunpack.c.l.bf16 %v1004
        %v1136 = vunpack.c.h.bf16 %v1004
        %v1137 = vunpack.c.l.bf16 %v1005
        %v1138 = vunpack.c.h.bf16 %v1005
        %v1139 = vunpack.c.l.bf16 %v1006
        %v1140 = vunpack.c.h.bf16 %v1006
        %v1141 = vunpack.c.l.bf16 %v1007
        %v1142 = vunpack.c.h.bf16 %v1007
        %v1143 = vunpack.c.l.bf16 %v1008
        %v1144 = vunpack.c.h.bf16 %v1008
        %v1145 = vunpack.c.l.bf16 %v1009
        %v1146 = vunpack.c.h.bf16 %v1009
        %v1147 = vunpack.c.l.bf16 %v1010
        %v1148 = vunpack.c.h.bf16 %v1010
        %v1149 = vunpack.c.l.bf16 %v1011
        %v1150 = vunpack.c.h.bf16 %v1011
        %v1151 = vunpack.c.l.bf16 %v1012
        %v1152 = vunpack.c.h.bf16 %v1012
        %v1153 = vunpack.c.l.bf16 %v1013
        %v1154 = vunpack.c.h.bf16 %v1013
        %v1155 = vunpack.c.l.bf16 %v1014
        %v1156 = vunpack.c.h.bf16 %v1014
        %v1157 = vunpack.c.l.bf16 %v1015
        %v1158 = vunpack.c.h.bf16 %v1015
        %v1159 = vunpack.c.l.bf16 %v1016
        %v1160 = vunpack.c.h.bf16 %v1016
        %v1161 = vunpack.c.l.bf16 %v1017
        %v1162 = vunpack.c.h.bf16 %v1017
        %v1163 = vunpack.c.l.bf16 %v1018
        %v1164 = vunpack.c.h.bf16 %v1018
        %v1165 = vunpack.c.l.bf16 %v1019
        %v1166 = vunpack.c.h.bf16 %v1019
        %v1167 = vunpack.c.l.bf16 %v1020
        %v1168 = vunpack.c.h.bf16 %v1020
        %v1169 = vunpack.c.l.bf16 %v1021
        %v1170 = vunpack.c.h.bf16 %v1021
        %v1171 = vunpack.c.l.bf16 %v1022
        %v1172 = vunpack.c.h.bf16 %v1022
        %v1173 = vunpack.c.l.bf16 %v1023
        %v1174 = vunpack.c.h.bf16 %v1023
        %v1175 = vunpack.c.l.bf16 %v1024
        %v1176 = vunpack.c.h.bf16 %v1024
        %v1177 = vunpack.c.l.bf16 %v1025
        %v1178 = vunpack.c.h.bf16 %v1025
        %v1179 = vunpack.c.l.bf16 %v1026
        %v1180 = vunpack.c.h.bf16 %v1026
        %v1181 = vunpack.c.l.bf16 %v1027
        %v1182 = vunpack.c.h.bf16 %v1027
        %v1183 = vunpack.c.l.bf16 %v1028
        %v1184 = vunpack.c.h.bf16 %v1028
        %v1185 = vunpack.c.l.bf16 %v1029
        %v1186 = vunpack.c.h.bf16 %v1029
        %v1187 = vunpack.c.l.bf16 %v1030
        %v1188 = vunpack.c.h.bf16 %v1030
        %v1189 = vunpack.c.l.bf16 %v1031
        %v1190 = vunpack.c.h.bf16 %v1031
        %v1191 = vunpack.c.l.bf16 %v1032
        %v1192 = vunpack.c.h.bf16 %v1032
        %v1193 = vunpack.c.l.bf16 %v1033
        %v1194 = vunpack.c.h.bf16 %v1033
        %v1195 = vunpack.c.l.bf16 %v1034
        %v1196 = vunpack.c.h.bf16 %v1034
        %v1197 = vunpack.c.l.bf16 %v1035
        %v1198 = vunpack.c.h.bf16 %v1035
        %v1199 = vunpack.c.l.bf16 %v1036
        %v1200 = vunpack.c.h.bf16 %v1036
        %v1201 = vunpack.c.l.bf16 %v1037
        %v1202 = vunpack.c.h.bf16 %v1037
        %v1203 = vunpack.c.l.bf16 %v1038
        %v1204 = vunpack.c.h.bf16 %v1038
        %v1205 = vunpack.c.l.bf16 %v1039
        %v1206 = vunpack.c.h.bf16 %v1039
        %v1207 = vunpack.c.l.bf16 %v1040
        %v1208 = vunpack.c.h.bf16 %v1040
        %v1209 = vunpack.c.l.bf16 %v1041
        %v1210 = vunpack.c.h.bf16 %v1041
        %v1211 = vunpack.c.l.bf16 %v1042
        %v1212 = vunpack.c.h.bf16 %v1042
        %v1213 = vunpack.c.l.bf16 %v1043
        %v1214 = vunpack.c.h.bf16 %v1043
        %v1215 = vunpack.c.l.bf16 %v1044
        %v1216 = vunpack.c.h.bf16 %v1044
        %v1217 = vunpack.c.l.bf16 %v1045
        %v1218 = vunpack.c.h.bf16 %v1045
        %v1219 = vunpack.c.l.bf16 %v1046
        %v1220 = vunpack.c.h.bf16 %v1046
        %v1221 = vunpack.c.l.bf16 %v1047
        %v1222 = vunpack.c.h.bf16 %v1047
        %v1223 = vunpack.c.l.bf16 %v1048
        %v1224 = vunpack.c.h.bf16 %v1048
        %v1225 = vunpack.c.l.bf16 %v1049
        %v1226 = vunpack.c.h.bf16 %v1049
        %v1227 = vunpack.c.l.bf16 %v1050
        %v1228 = vunpack.c.h.bf16 %v1050
        %v1229 = vunpack.c.l.bf16 %v1051
        %v1230 = vunpack.c.h.bf16 %v1051
        %v1231 = vunpack.c.l.bf16 %v1052
        %v1232 = vunpack.c.h.bf16 %v1052
        %v1233 = vunpack.c.l.bf16 %v1053
        %v1234 = vunpack.c.h.bf16 %v1053
        %v1235 = vunpack.c.l.bf16 %v1054
        %v1236 = vunpack.c.h.bf16 %v1054
        %v1237 = vunpack.c.l.bf16 %v1055
        %v1238 = vunpack.c.h.bf16 %v1055
        %v1239 = vunpack.c.l.bf16 %v1056
        %v1240 = vunpack.c.h.bf16 %v1056
        %v1241 = vunpack.c.l.bf16 %v1057
        %v1242 = vunpack.c.h.bf16 %v1057
        %v1243 = vunpack.c.l.bf16 %v1058
        %v1244 = vunpack.c.h.bf16 %v1058
        %v1245 = vunpack.c.l.bf16 %v1059
        %v1246 = vunpack.c.h.bf16 %v1059
        %v1247 = vunpack.c.l.bf16 %v1060
        %v1248 = vunpack.c.h.bf16 %v1060
        %v1249 = vadd.f32 %v1113, %v1121
        %v1250 = vadd.f32 %v1114, %v1122
        %v1251 = vadd.f32 %v1115, %v1123
        %v1252 = vadd.f32 %v1116, %v1124
        %v1253 = vadd.f32 %v1117, %v1125
        %v1254 = vadd.f32 %v1118, %v1126
        %v1255 = vadd.f32 %v1119, %v1127
        %v1256 = vadd.f32 %v1120, %v1128
        %v1257 = vadd.f32 %v1113, %v1129
        %v1258 = vadd.f32 %v1114, %v1130
        %v1259 = vadd.f32 %v1115, %v1131
        %v1260 = vadd.f32 %v1116, %v1132
        %v1261 = vadd.f32 %v1117, %v1133
        %v1262 = vadd.f32 %v1118, %v1134
        %v1263 = vadd.f32 %v1119, %v1135
        %v1264 = vadd.f32 %v1120, %v1136
        %v1265 = vadd.f32 %v1113, %v1137
        %v1266 = vadd.f32 %v1114, %v1138
        %v1267 = vadd.f32 %v1115, %v1139
        %v1268 = vadd.f32 %v1116, %v1140
        %v1269 = vadd.f32 %v1117, %v1141
        %v1270 = vadd.f32 %v1118, %v1142
        %v1271 = vadd.f32 %v1119, %v1143
        %v1272 = vadd.f32 %v1120, %v1144
        %v1273 = vadd.f32 %v1113, %v1145
        %v1274 = vadd.f32 %v1114, %v1146
        %v1275 = vadd.f32 %v1115, %v1147
        %v1276 = vadd.f32 %v1116, %v1148
        %v1277 = vadd.f32 %v1117, %v1149
        %v1278 = vadd.f32 %v1118, %v1150
        %v1279 = vadd.f32 %v1119, %v1151
        %v1280 = vadd.f32 %v1120, %v1152
        %v1281 = vadd.f32 %v1113, %v1153
        %v1282 = vadd.f32 %v1114, %v1154
        %v1283 = vadd.f32 %v1115, %v1155
        %v1284 = vadd.f32 %v1116, %v1156
        %v1285 = vadd.f32 %v1117, %v1157
        %v1286 = vadd.f32 %v1118, %v1158
        %v1287 = vadd.f32 %v1119, %v1159
        %v1288 = vadd.f32 %v1120, %v1160
        %v1289 = vadd.f32 %v1113, %v1161
        %v1290 = vadd.f32 %v1114, %v1162
        %v1291 = vadd.f32 %v1115, %v1163
        %v1292 = vadd.f32 %v1116, %v1164
        %v1293 = vadd.f32 %v1117, %v1165
        %v1294 = vadd.f32 %v1118, %v1166
        %v1295 = vadd.f32 %v1119, %v1167
        %v1296 = vadd.f32 %v1120, %v1168
        %v1297 = vadd.f32 %v1113, %v1169
        %v1298 = vadd.f32 %v1114, %v1170
        %v1299 = vadd.f32 %v1115, %v1171
        %v1300 = vadd.f32 %v1116, %v1172
        %v1301 = vadd.f32 %v1117, %v1173
        %v1302 = vadd.f32 %v1118, %v1174
        %v1303 = vadd.f32 %v1119, %v1175
        %v1304 = vadd.f32 %v1120, %v1176
        %v1305 = vadd.f32 %v1113, %v1177
        %v1306 = vadd.f32 %v1114, %v1178
        %v1307 = vadd.f32 %v1115, %v1179
        %v1308 = vadd.f32 %v1116, %v1180
        %v1309 = vadd.f32 %v1117, %v1181
        %v1310 = vadd.f32 %v1118, %v1182
        %v1311 = vadd.f32 %v1119, %v1183
        %v1312 = vadd.f32 %v1120, %v1184
        %v1313 = vadd.f32 %v1113, %v1185
        %v1314 = vadd.f32 %v1114, %v1186
        %v1315 = vadd.f32 %v1115, %v1187
        %v1316 = vadd.f32 %v1116, %v1188
        %v1317 = vadd.f32 %v1117, %v1189
        %v1318 = vadd.f32 %v1118, %v1190
        %v1319 = vadd.f32 %v1119, %v1191
        %v1320 = vadd.f32 %v1120, %v1192
        %v1321 = vadd.f32 %v1113, %v1193
        %v1322 = vadd.f32 %v1114, %v1194
        %v1323 = vadd.f32 %v1115, %v1195
        %v1324 = vadd.f32 %v1116, %v1196
        %v1325 = vadd.f32 %v1117, %v1197
        %v1326 = vadd.f32 %v1118, %v1198
        %v1327 = vadd.f32 %v1119, %v1199
        %v1328 = vadd.f32 %v1120, %v1200
        %v1329 = vadd.f32 %v1113, %v1201
        %v1330 = vadd.f32 %v1114, %v1202
        %v1331 = vadd.f32 %v1115, %v1203
        %v1332 = vadd.f32 %v1116, %v1204
        %v1333 = vadd.f32 %v1117, %v1205
        %v1334 = vadd.f32 %v1118, %v1206
        %v1335 = vadd.f32 %v1119, %v1207
        %v1336 = vadd.f32 %v1120, %v1208
        %v1337 = vadd.f32 %v1113, %v1209
        %v1338 = vadd.f32 %v1114, %v1210
        %v1339 = vadd.f32 %v1115, %v1211
        %v1340 = vadd.f32 %v1116, %v1212
        %v1341 = vadd.f32 %v1117, %v1213
        %v1342 = vadd.f32 %v1118, %v1214
        %v1343 = vadd.f32 %v1119, %v1215
        %v1344 = vadd.f32 %v1120, %v1216
        %v1345 = vadd.f32 %v1113, %v1217
        %v1346 = vadd.f32 %v1114, %v1218
        %v1347 = vadd.f32 %v1115, %v1219
        %v1348 = vadd.f32 %v1116, %v1220
        %v1349 = vadd.f32 %v1117, %v1221
        %v1350 = vadd.f32 %v1118, %v1222
        %v1351 = vadd.f32 %v1119, %v1223
        %v1352 = vadd.f32 %v1120, %v1224
        %v1353 = vadd.f32 %v1113, %v1225
        %v1354 = vadd.f32 %v1114, %v1226
        %v1355 = vadd.f32 %v1115, %v1227
        %v1356 = vadd.f32 %v1116, %v1228
        %v1357 = vadd.f32 %v1117, %v1229
        %v1358 = vadd.f32 %v1118, %v1230
        %v1359 = vadd.f32 %v1119, %v1231
        %v1360 = vadd.f32 %v1120, %v1232
        %v1361 = vadd.f32 %v1113, %v1233
        %v1362 = vadd.f32 %v1114, %v1234
        %v1363 = vadd.f32 %v1115, %v1235
        %v1364 = vadd.f32 %v1116, %v1236
        %v1365 = vadd.f32 %v1117, %v1237
        %v1366 = vadd.f32 %v1118, %v1238
        %v1367 = vadd.f32 %v1119, %v1239
        %v1368 = vadd.f32 %v1120, %v1240
        %v1369 = vadd.f32 %v1113, %v1241
        %v1370 = vadd.f32 %v1114, %v1242
        %v1371 = vadd.f32 %v1115, %v1243
        %v1372 = vadd.f32 %v1116, %v1244
        %v1373 = vadd.f32 %v1117, %v1245
        %v1374 = vadd.f32 %v1118, %v1246
        %v1375 = vadd.f32 %v1119, %v1247
        %v1376 = vadd.f32 %v1120, %v1248
        %v1377 = vpack.c.bf16 %v1250, %v1249
        %v1378 = vpack.c.bf16 %v1252, %v1251
        %v1379 = vpack.c.bf16 %v1254, %v1253
        %v1380 = vpack.c.bf16 %v1256, %v1255
        %v1381 = vpack.c.bf16 %v1258, %v1257
        %v1382 = vpack.c.bf16 %v1260, %v1259
        %v1383 = vpack.c.bf16 %v1262, %v1261
        %v1384 = vpack.c.bf16 %v1264, %v1263
        %v1385 = vpack.c.bf16 %v1266, %v1265
        %v1386 = vpack.c.bf16 %v1268, %v1267
        %v1387 = vpack.c.bf16 %v1270, %v1269
        %v1388 = vpack.c.bf16 %v1272, %v1271
        %v1389 = vpack.c.bf16 %v1274, %v1273
        %v1390 = vpack.c.bf16 %v1276, %v1275
        %v1391 = vpack.c.bf16 %v1278, %v1277
        %v1392 = vpack.c.bf16 %v1280, %v1279
        %v1393 = vpack.c.bf16 %v1282, %v1281
        %v1394 = vpack.c.bf16 %v1284, %v1283
        %v1395 = vpack.c.bf16 %v1286, %v1285
        %v1396 = vpack.c.bf16 %v1288, %v1287
        %v1397 = vpack.c.bf16 %v1290, %v1289
        %v1398 = vpack.c.bf16 %v1292, %v1291
        %v1399 = vpack.c.bf16 %v1294, %v1293
        %v1400 = vpack.c.bf16 %v1296, %v1295
        %v1401 = vpack.c.bf16 %v1298, %v1297
        %v1402 = vpack.c.bf16 %v1300, %v1299
        %v1403 = vpack.c.bf16 %v1302, %v1301
        %v1404 = vpack.c.bf16 %v1304, %v1303
        %v1405 = vpack.c.bf16 %v1306, %v1305
        %v1406 = vpack.c.bf16 %v1308, %v1307
        %v1407 = vpack.c.bf16 %v1310, %v1309
        %v1408 = vpack.c.bf16 %v1312, %v1311
        %v1409 = vpack.c.bf16 %v1314, %v1313
        %v1410 = vpack.c.bf16 %v1316, %v1315
        %v1411 = vpack.c.bf16 %v1318, %v1317
        %v1412 = vpack.c.bf16 %v1320, %v1319
        %v1413 = vpack.c.bf16 %v1322, %v1321
        %v1414 = vpack.c.bf16 %v1324, %v1323
        %v1415 = vpack.c.bf16 %v1326, %v1325
        %v1416 = vpack.c.bf16 %v1328, %v1327
        %v1417 = vpack.c.bf16 %v1330, %v1329
        %v1418 = vpack.c.bf16 %v1332, %v1331
        %v1419 = vpack.c.bf16 %v1334, %v1333
        %v1420 = vpack.c.bf16 %v1336, %v1335
        %v1421 = vpack.c.bf16 %v1338, %v1337
        %v1422 = vpack.c.bf16 %v1340, %v1339
        %v1423 = vpack.c.bf16 %v1342, %v1341
        %v1424 = vpack.c.bf16 %v1344, %v1343
        %v1425 = vpack.c.bf16 %v1346, %v1345
        %v1426 = vpack.c.bf16 %v1348, %v1347
        %v1427 = vpack.c.bf16 %v1350, %v1349
        %v1428 = vpack.c.bf16 %v1352, %v1351
        %v1429 = vpack.c.bf16 %v1354, %v1353
        %v1430 = vpack.c.bf16 %v1356, %v1355
        %v1431 = vpack.c.bf16 %v1358, %v1357
        %v1432 = vpack.c.bf16 %v1360, %v1359
        %v1433 = vpack.c.bf16 %v1362, %v1361
        %v1434 = vpack.c.bf16 %v1364, %v1363
        %v1435 = vpack.c.bf16 %v1366, %v1365
        %v1436 = vpack.c.bf16 %v1368, %v1367
        %v1437 = vpack.c.bf16 %v1370, %v1369
        %v1438 = vpack.c.bf16 %v1372, %v1371
        %v1439 = vpack.c.bf16 %v1374, %v1373
        %v1440 = vpack.c.bf16 %v1376, %v1375
        %v1441 = vunpack.c.l.bf16 %v1377
        %v1442 = vunpack.c.h.bf16 %v1377
        %v1443 = vunpack.c.l.bf16 %v1378
        %v1444 = vunpack.c.h.bf16 %v1378
        %v1445 = vunpack.c.l.bf16 %v1379
        %v1446 = vunpack.c.h.bf16 %v1379
        %v1447 = vunpack.c.l.bf16 %v1380
        %v1448 = vunpack.c.h.bf16 %v1380
        %v1449 = vunpack.c.l.bf16 %v1381
        %v1450 = vunpack.c.h.bf16 %v1381
        %v1451 = vunpack.c.l.bf16 %v1382
        %v1452 = vunpack.c.h.bf16 %v1382
        %v1453 = vunpack.c.l.bf16 %v1383
        %v1454 = vunpack.c.h.bf16 %v1383
        %v1455 = vunpack.c.l.bf16 %v1384
        %v1456 = vunpack.c.h.bf16 %v1384
        %v1457 = vunpack.c.l.bf16 %v1385
        %v1458 = vunpack.c.h.bf16 %v1385
        %v1459 = vunpack.c.l.bf16 %v1386
        %v1460 = vunpack.c.h.bf16 %v1386
        %v1461 = vunpack.c.l.bf16 %v1387
        %v1462 = vunpack.c.h.bf16 %v1387
        %v1463 = vunpack.c.l.bf16 %v1388
        %v1464 = vunpack.c.h.bf16 %v1388
        %v1465 = vunpack.c.l.bf16 %v1389
        %v1466 = vunpack.c.h.bf16 %v1389
        %v1467 = vunpack.c.l.bf16 %v1390
        %v1468 = vunpack.c.h.bf16 %v1390
        %v1469 = vunpack.c.l.bf16 %v1391
        %v1470 = vunpack.c.h.bf16 %v1391
        %v1471 = vunpack.c.l.bf16 %v1392
        %v1472 = vunpack.c.h.bf16 %v1392
        %v1473 = vunpack.c.l.bf16 %v1393
        %v1474 = vunpack.c.h.bf16 %v1393
        %v1475 = vunpack.c.l.bf16 %v1394
        %v1476 = vunpack.c.h.bf16 %v1394
        %v1477 = vunpack.c.l.bf16 %v1395
        %v1478 = vunpack.c.h.bf16 %v1395
        %v1479 = vunpack.c.l.bf16 %v1396
        %v1480 = vunpack.c.h.bf16 %v1396
        %v1481 = vunpack.c.l.bf16 %v1397
        %v1482 = vunpack.c.h.bf16 %v1397
        %v1483 = vunpack.c.l.bf16 %v1398
        %v1484 = vunpack.c.h.bf16 %v1398
        %v1485 = vunpack.c.l.bf16 %v1399
        %v1486 = vunpack.c.h.bf16 %v1399
        %v1487 = vunpack.c.l.bf16 %v1400
        %v1488 = vunpack.c.h.bf16 %v1400
        %v1489 = vunpack.c.l.bf16 %v1401
        %v1490 = vunpack.c.h.bf16 %v1401
        %v1491 = vunpack.c.l.bf16 %v1402
        %v1492 = vunpack.c.h.bf16 %v1402
        %v1493 = vunpack.c.l.bf16 %v1403
        %v1494 = vunpack.c.h.bf16 %v1403
        %v1495 = vunpack.c.l.bf16 %v1404
        %v1496 = vunpack.c.h.bf16 %v1404
        %v1497 = vunpack.c.l.bf16 %v1405
        %v1498 = vunpack.c.h.bf16 %v1405
        %v1499 = vunpack.c.l.bf16 %v1406
        %v1500 = vunpack.c.h.bf16 %v1406
        %v1501 = vunpack.c.l.bf16 %v1407
        %v1502 = vunpack.c.h.bf16 %v1407
        %v1503 = vunpack.c.l.bf16 %v1408
        %v1504 = vunpack.c.h.bf16 %v1408
        %v1505 = vunpack.c.l.bf16 %v1409
        %v1506 = vunpack.c.h.bf16 %v1409
        %v1507 = vunpack.c.l.bf16 %v1410
        %v1508 = vunpack.c.h.bf16 %v1410
        %v1509 = vunpack.c.l.bf16 %v1411
        %v1510 = vunpack.c.h.bf16 %v1411
        %v1511 = vunpack.c.l.bf16 %v1412
        %v1512 = vunpack.c.h.bf16 %v1412
        %v1513 = vunpack.c.l.bf16 %v1413
        %v1514 = vunpack.c.h.bf16 %v1413
        %v1515 = vunpack.c.l.bf16 %v1414
        %v1516 = vunpack.c.h.bf16 %v1414
        %v1517 = vunpack.c.l.bf16 %v1415
        %v1518 = vunpack.c.h.bf16 %v1415
        %v1519 = vunpack.c.l.bf16 %v1416
        %v1520 = vunpack.c.h.bf16 %v1416
        %v1521 = vunpack.c.l.bf16 %v1417
        %v1522 = vunpack.c.h.bf16 %v1417
        %v1523 = vunpack.c.l.bf16 %v1418
        %v1524 = vunpack.c.h.bf16 %v1418
        %v1525 = vunpack.c.l.bf16 %v1419
        %v1526 = vunpack.c.h.bf16 %v1419
        %v1527 = vunpack.c.l.bf16 %v1420
        %v1528 = vunpack.c.h.bf16 %v1420
        %v1529 = vunpack.c.l.bf16 %v1421
        %v1530 = vunpack.c.h.bf16 %v1421
        %v1531 = vunpack.c.l.bf16 %v1422
        %v1532 = vunpack.c.h.bf16 %v1422
        %v1533 = vunpack.c.l.bf16 %v1423
        %v1534 = vunpack.c.h.bf16 %v1423
        %v1535 = vunpack.c.l.bf16 %v1424
        %v1536 = vunpack.c.h.bf16 %v1424
        %v1537 = vunpack.c.l.bf16 %v1425
        %v1538 = vunpack.c.h.bf16 %v1425
        %v1539 = vunpack.c.l.bf16 %v1426
        %v1540 = vunpack.c.h.bf16 %v1426
        %v1541 = vunpack.c.l.bf16 %v1427
        %v1542 = vunpack.c.h.bf16 %v1427
        %v1543 = vunpack.c.l.bf16 %v1428
        %v1544 = vunpack.c.h.bf16 %v1428
        %v1545 = vunpack.c.l.bf16 %v1429
        %v1546 = vunpack.c.h.bf16 %v1429
        %v1547 = vunpack.c.l.bf16 %v1430
        %v1548 = vunpack.c.h.bf16 %v1430
        %v1549 = vunpack.c.l.bf16 %v1431
        %v1550 = vunpack.c.h.bf16 %v1431
        %v1551 = vunpack.c.l.bf16 %v1432
        %v1552 = vunpack.c.h.bf16 %v1432
        %v1553 = vunpack.c.l.bf16 %v1433
        %v1554 = vunpack.c.h.bf16 %v1433
        %v1555 = vunpack.c.l.bf16 %v1434
        %v1556 = vunpack.c.h.bf16 %v1434
        %v1557 = vunpack.c.l.bf16 %v1435
        %v1558 = vunpack.c.h.bf16 %v1435
        %v1559 = vunpack.c.l.bf16 %v1436
        %v1560 = vunpack.c.h.bf16 %v1436
        %v1561 = vunpack.c.l.bf16 %v1437
        %v1562 = vunpack.c.h.bf16 %v1437
        %v1563 = vunpack.c.l.bf16 %v1438
        %v1564 = vunpack.c.h.bf16 %v1438
        %v1565 = vunpack.c.l.bf16 %v1439
        %v1566 = vunpack.c.h.bf16 %v1439
        %v1567 = vunpack.c.l.bf16 %v1440
        %v1568 = vunpack.c.h.bf16 %v1440
        %vm1569 = vcmp.gt.f32.partialorder %v1441, 0.0
        %vm1570 = vcmp.gt.f32.partialorder %v1442, 0.0
        %vm1571 = vcmp.gt.f32.partialorder %v1443, 0.0
        %vm1572 = vcmp.gt.f32.partialorder %v1444, 0.0
        %vm1573 = vcmp.gt.f32.partialorder %v1445, 0.0
        %vm1574 = vcmp.gt.f32.partialorder %v1446, 0.0
        %vm1575 = vcmp.gt.f32.partialorder %v1447, 0.0
        %vm1576 = vcmp.gt.f32.partialorder %v1448, 0.0
        %vm1577 = vcmp.gt.f32.partialorder %v1449, 0.0
        %vm1578 = vcmp.gt.f32.partialorder %v1450, 0.0
        %vm1579 = vcmp.gt.f32.partialorder %v1451, 0.0
        %vm1580 = vcmp.gt.f32.partialorder %v1452, 0.0
        %vm1581 = vcmp.gt.f32.partialorder %v1453, 0.0
        %vm1582 = vcmp.gt.f32.partialorder %v1454, 0.0
        %vm1583 = vcmp.gt.f32.partialorder %v1455, 0.0
        %vm1584 = vcmp.gt.f32.partialorder %v1456, 0.0
        %vm1585 = vcmp.gt.f32.partialorder %v1457, 0.0
        %vm1586 = vcmp.gt.f32.partialorder %v1458, 0.0
        %vm1587 = vcmp.gt.f32.partialorder %v1459, 0.0
        %vm1588 = vcmp.gt.f32.partialorder %v1460, 0.0
        %vm1589 = vcmp.gt.f32.partialorder %v1461, 0.0
        %vm1590 = vcmp.gt.f32.partialorder %v1462, 0.0
        %vm1591 = vcmp.gt.f32.partialorder %v1463, 0.0
        %vm1592 = vcmp.gt.f32.partialorder %v1464, 0.0
        %vm1593 = vcmp.gt.f32.partialorder %v1465, 0.0
        %vm1594 = vcmp.gt.f32.partialorder %v1466, 0.0
        %vm1595 = vcmp.gt.f32.partialorder %v1467, 0.0
        %vm1596 = vcmp.gt.f32.partialorder %v1468, 0.0
        %vm1597 = vcmp.gt.f32.partialorder %v1469, 0.0
        %vm1598 = vcmp.gt.f32.partialorder %v1470, 0.0
        %vm1599 = vcmp.gt.f32.partialorder %v1471, 0.0
        %vm1600 = vcmp.gt.f32.partialorder %v1472, 0.0
        %vm1601 = vcmp.gt.f32.partialorder %v1473, 0.0
        %vm1602 = vcmp.gt.f32.partialorder %v1474, 0.0
        %vm1603 = vcmp.gt.f32.partialorder %v1475, 0.0
        %vm1604 = vcmp.gt.f32.partialorder %v1476, 0.0
        %vm1605 = vcmp.gt.f32.partialorder %v1477, 0.0
        %vm1606 = vcmp.gt.f32.partialorder %v1478, 0.0
        %vm1607 = vcmp.gt.f32.partialorder %v1479, 0.0
        %vm1608 = vcmp.gt.f32.partialorder %v1480, 0.0
        %vm1609 = vcmp.gt.f32.partialorder %v1481, 0.0
        %vm1610 = vcmp.gt.f32.partialorder %v1482, 0.0
        %vm1611 = vcmp.gt.f32.partialorder %v1483, 0.0
        %vm1612 = vcmp.gt.f32.partialorder %v1484, 0.0
        %vm1613 = vcmp.gt.f32.partialorder %v1485, 0.0
        %vm1614 = vcmp.gt.f32.partialorder %v1486, 0.0
        %vm1615 = vcmp.gt.f32.partialorder %v1487, 0.0
        %vm1616 = vcmp.gt.f32.partialorder %v1488, 0.0
        %vm1617 = vcmp.gt.f32.partialorder %v1489, 0.0
        %vm1618 = vcmp.gt.f32.partialorder %v1490, 0.0
        %vm1619 = vcmp.gt.f32.partialorder %v1491, 0.0
        %vm1620 = vcmp.gt.f32.partialorder %v1492, 0.0
        %vm1621 = vcmp.gt.f32.partialorder %v1493, 0.0
        %vm1622 = vcmp.gt.f32.partialorder %v1494, 0.0
        %vm1623 = vcmp.gt.f32.partialorder %v1495, 0.0
        %vm1624 = vcmp.gt.f32.partialorder %v1496, 0.0
        %vm1625 = vcmp.gt.f32.partialorder %v1497, 0.0
        %vm1626 = vcmp.gt.f32.partialorder %v1498, 0.0
        %vm1627 = vcmp.gt.f32.partialorder %v1499, 0.0
        %vm1628 = vcmp.gt.f32.partialorder %v1500, 0.0
        %vm1629 = vcmp.gt.f32.partialorder %v1501, 0.0
        %vm1630 = vcmp.gt.f32.partialorder %v1502, 0.0
        %vm1631 = vcmp.gt.f32.partialorder %v1503, 0.0
        %vm1632 = vcmp.gt.f32.partialorder %v1504, 0.0
        %vm1633 = vcmp.gt.f32.partialorder %v1505, 0.0
        %vm1634 = vcmp.gt.f32.partialorder %v1506, 0.0
        %vm1635 = vcmp.gt.f32.partialorder %v1507, 0.0
        %vm1636 = vcmp.gt.f32.partialorder %v1508, 0.0
        %vm1637 = vcmp.gt.f32.partialorder %v1509, 0.0
        %vm1638 = vcmp.gt.f32.partialorder %v1510, 0.0
        %vm1639 = vcmp.gt.f32.partialorder %v1511, 0.0
        %vm1640 = vcmp.gt.f32.partialorder %v1512, 0.0
        %vm1641 = vcmp.gt.f32.partialorder %v1513, 0.0
        %vm1642 = vcmp.gt.f32.partialorder %v1514, 0.0
        %vm1643 = vcmp.gt.f32.partialorder %v1515, 0.0
        %vm1644 = vcmp.gt.f32.partialorder %v1516, 0.0
        %vm1645 = vcmp.gt.f32.partialorder %v1517, 0.0
        %vm1646 = vcmp.gt.f32.partialorder %v1518, 0.0
        %vm1647 = vcmp.gt.f32.partialorder %v1519, 0.0
        %vm1648 = vcmp.gt.f32.partialorder %v1520, 0.0
        %vm1649 = vcmp.gt.f32.partialorder %v1521, 0.0
        %vm1650 = vcmp.gt.f32.partialorder %v1522, 0.0
        %vm1651 = vcmp.gt.f32.partialorder %v1523, 0.0
        %vm1652 = vcmp.gt.f32.partialorder %v1524, 0.0
        %vm1653 = vcmp.gt.f32.partialorder %v1525, 0.0
        %vm1654 = vcmp.gt.f32.partialorder %v1526, 0.0
        %vm1655 = vcmp.gt.f32.partialorder %v1527, 0.0
        %vm1656 = vcmp.gt.f32.partialorder %v1528, 0.0
        %vm1657 = vcmp.gt.f32.partialorder %v1529, 0.0
        %vm1658 = vcmp.gt.f32.partialorder %v1530, 0.0
        %vm1659 = vcmp.gt.f32.partialorder %v1531, 0.0
        %vm1660 = vcmp.gt.f32.partialorder %v1532, 0.0
        %vm1661 = vcmp.gt.f32.partialorder %v1533, 0.0
        %vm1662 = vcmp.gt.f32.partialorder %v1534, 0.0
        %vm1663 = vcmp.gt.f32.partialorder %v1535, 0.0
        %vm1664 = vcmp.gt.f32.partialorder %v1536, 0.0
        %vm1665 = vcmp.gt.f32.partialorder %v1537, 0.0
        %vm1666 = vcmp.gt.f32.partialorder %v1538, 0.0
        %vm1667 = vcmp.gt.f32.partialorder %v1539, 0.0
        %vm1668 = vcmp.gt.f32.partialorder %v1540, 0.0
        %vm1669 = vcmp.gt.f32.partialorder %v1541, 0.0
        %vm1670 = vcmp.gt.f32.partialorder %v1542, 0.0
        %vm1671 = vcmp.gt.f32.partialorder %v1543, 0.0
        %vm1672 = vcmp.gt.f32.partialorder %v1544, 0.0
        %vm1673 = vcmp.gt.f32.partialorder %v1545, 0.0
        %vm1674 = vcmp.gt.f32.partialorder %v1546, 0.0
        %vm1675 = vcmp.gt.f32.partialorder %v1547, 0.0
        %vm1676 = vcmp.gt.f32.partialorder %v1548, 0.0
        %vm1677 = vcmp.gt.f32.partialorder %v1549, 0.0
        %vm1678 = vcmp.gt.f32.partialorder %v1550, 0.0
        %vm1679 = vcmp.gt.f32.partialorder %v1551, 0.0
        %vm1680 = vcmp.gt.f32.partialorder %v1552, 0.0
        %vm1681 = vcmp.gt.f32.partialorder %v1553, 0.0
        %vm1682 = vcmp.gt.f32.partialorder %v1554, 0.0
        %vm1683 = vcmp.gt.f32.partialorder %v1555, 0.0
        %vm1684 = vcmp.gt.f32.partialorder %v1556, 0.0
        %vm1685 = vcmp.gt.f32.partialorder %v1557, 0.0
        %vm1686 = vcmp.gt.f32.partialorder %v1558, 0.0
        %vm1687 = vcmp.gt.f32.partialorder %v1559, 0.0
        %vm1688 = vcmp.gt.f32.partialorder %v1560, 0.0
        %vm1689 = vcmp.gt.f32.partialorder %v1561, 0.0
        %vm1690 = vcmp.gt.f32.partialorder %v1562, 0.0
        %vm1691 = vcmp.gt.f32.partialorder %v1563, 0.0
        %vm1692 = vcmp.gt.f32.partialorder %v1564, 0.0
        %vm1693 = vcmp.gt.f32.partialorder %v1565, 0.0
        %vm1694 = vcmp.gt.f32.partialorder %v1566, 0.0
        %vm1695 = vcmp.gt.f32.partialorder %v1567, 0.0
        %vm1696 = vcmp.gt.f32.partialorder %v1568, 0.0
        %v1697 = vmul.f32 %v1441, 0.010009766
        %v1698 = vmul.f32 %v1442, 0.010009766
        %v1699 = vmul.f32 %v1443, 0.010009766
        %v1700 = vmul.f32 %v1444, 0.010009766
        %v1701 = vmul.f32 %v1445, 0.010009766
        %v1702 = vmul.f32 %v1446, 0.010009766
        %v1703 = vmul.f32 %v1447, 0.010009766
        %v1704 = vmul.f32 %v1448, 0.010009766
        %v1705 = vmul.f32 %v1449, 0.010009766
        %v1706 = vmul.f32 %v1450, 0.010009766
        %v1707 = vmul.f32 %v1451, 0.010009766
        %v1708 = vmul.f32 %v1452, 0.010009766
        %v1709 = vmul.f32 %v1453, 0.010009766
        %v1710 = vmul.f32 %v1454, 0.010009766
        %v1711 = vmul.f32 %v1455, 0.010009766
        %v1712 = vmul.f32 %v1456, 0.010009766
        %v1713 = vmul.f32 %v1457, 0.010009766
        %v1714 = vmul.f32 %v1458, 0.010009766
        %v1715 = vmul.f32 %v1459, 0.010009766
        %v1716 = vmul.f32 %v1460, 0.010009766
        %v1717 = vmul.f32 %v1461, 0.010009766
        %v1718 = vmul.f32 %v1462, 0.010009766
        %v1719 = vmul.f32 %v1463, 0.010009766
        %v1720 = vmul.f32 %v1464, 0.010009766
        %v1721 = vmul.f32 %v1465, 0.010009766
        %v1722 = vmul.f32 %v1466, 0.010009766
        %v1723 = vmul.f32 %v1467, 0.010009766
        %v1724 = vmul.f32 %v1468, 0.010009766
        %v1725 = vmul.f32 %v1469, 0.010009766
        %v1726 = vmul.f32 %v1470, 0.010009766
        %v1727 = vmul.f32 %v1471, 0.010009766
        %v1728 = vmul.f32 %v1472, 0.010009766
        %v1729 = vmul.f32 %v1473, 0.010009766
        %v1730 = vmul.f32 %v1474, 0.010009766
        %v1731 = vmul.f32 %v1475, 0.010009766
        %v1732 = vmul.f32 %v1476, 0.010009766
        %v1733 = vmul.f32 %v1477, 0.010009766
        %v1734 = vmul.f32 %v1478, 0.010009766
        %v1735 = vmul.f32 %v1479, 0.010009766
        %v1736 = vmul.f32 %v1480, 0.010009766
        %v1737 = vmul.f32 %v1481, 0.010009766
        %v1738 = vmul.f32 %v1482, 0.010009766
        %v1739 = vmul.f32 %v1483, 0.010009766
        %v1740 = vmul.f32 %v1484, 0.010009766
        %v1741 = vmul.f32 %v1485, 0.010009766
        %v1742 = vmul.f32 %v1486, 0.010009766
        %v1743 = vmul.f32 %v1487, 0.010009766
        %v1744 = vmul.f32 %v1488, 0.010009766
        %v1745 = vmul.f32 %v1489, 0.010009766
        %v1746 = vmul.f32 %v1490, 0.010009766
        %v1747 = vmul.f32 %v1491, 0.010009766
        %v1748 = vmul.f32 %v1492, 0.010009766
        %v1749 = vmul.f32 %v1493, 0.010009766
        %v1750 = vmul.f32 %v1494, 0.010009766
        %v1751 = vmul.f32 %v1495, 0.010009766
        %v1752 = vmul.f32 %v1496, 0.010009766
        %v1753 = vmul.f32 %v1497, 0.010009766
        %v1754 = vmul.f32 %v1498, 0.010009766
        %v1755 = vmul.f32 %v1499, 0.010009766
        %v1756 = vmul.f32 %v1500, 0.010009766
        %v1757 = vmul.f32 %v1501, 0.010009766
        %v1758 = vmul.f32 %v1502, 0.010009766
        %v1759 = vmul.f32 %v1503, 0.010009766
        %v1760 = vmul.f32 %v1504, 0.010009766
        %v1761 = vmul.f32 %v1505, 0.010009766
        %v1762 = vmul.f32 %v1506, 0.010009766
        %v1763 = vmul.f32 %v1507, 0.010009766
        %v1764 = vmul.f32 %v1508, 0.010009766
        %v1765 = vmul.f32 %v1509, 0.010009766
        %v1766 = vmul.f32 %v1510, 0.010009766
        %v1767 = vmul.f32 %v1511, 0.010009766
        %v1768 = vmul.f32 %v1512, 0.010009766
        %v1769 = vmul.f32 %v1513, 0.010009766
        %v1770 = vmul.f32 %v1514, 0.010009766
        %v1771 = vmul.f32 %v1515, 0.010009766
        %v1772 = vmul.f32 %v1516, 0.010009766
        %v1773 = vmul.f32 %v1517, 0.010009766
        %v1774 = vmul.f32 %v1518, 0.010009766
        %v1775 = vmul.f32 %v1519, 0.010009766
        %v1776 = vmul.f32 %v1520, 0.010009766
        %v1777 = vmul.f32 %v1521, 0.010009766
        %v1778 = vmul.f32 %v1522, 0.010009766
        %v1779 = vmul.f32 %v1523, 0.010009766
        %v1780 = vmul.f32 %v1524, 0.010009766
        %v1781 = vmul.f32 %v1525, 0.010009766
        %v1782 = vmul.f32 %v1526, 0.010009766
        %v1783 = vmul.f32 %v1527, 0.010009766
        %v1784 = vmul.f32 %v1528, 0.010009766
        %v1785 = vmul.f32 %v1529, 0.010009766
        %v1786 = vmul.f32 %v1530, 0.010009766
        %v1787 = vmul.f32 %v1531, 0.010009766
        %v1788 = vmul.f32 %v1532, 0.010009766
        %v1789 = vmul.f32 %v1533, 0.010009766
        %v1790 = vmul.f32 %v1534, 0.010009766
        %v1791 = vmul.f32 %v1535, 0.010009766
        %v1792 = vmul.f32 %v1536, 0.010009766
        %v1793 = vmul.f32 %v1537, 0.010009766
        %v1794 = vmul.f32 %v1538, 0.010009766
        %v1795 = vmul.f32 %v1539, 0.010009766
        %v1796 = vmul.f32 %v1540, 0.010009766
        %v1797 = vmul.f32 %v1541, 0.010009766
        %v1798 = vmul.f32 %v1542, 0.010009766
        %v1799 = vmul.f32 %v1543, 0.010009766
        %v1800 = vmul.f32 %v1544, 0.010009766
        %v1801 = vmul.f32 %v1545, 0.010009766
        %v1802 = vmul.f32 %v1546, 0.010009766
        %v1803 = vmul.f32 %v1547, 0.010009766
        %v1804 = vmul.f32 %v1548, 0.010009766
        %v1805 = vmul.f32 %v1549, 0.010009766
        %v1806 = vmul.f32 %v1550, 0.010009766
        %v1807 = vmul.f32 %v1551, 0.010009766
        %v1808 = vmul.f32 %v1552, 0.010009766
        %v1809 = vmul.f32 %v1553, 0.010009766
        %v1810 = vmul.f32 %v1554, 0.010009766
        %v1811 = vmul.f32 %v1555, 0.010009766
        %v1812 = vmul.f32 %v1556, 0.010009766
        %v1813 = vmul.f32 %v1557, 0.010009766
        %v1814 = vmul.f32 %v1558, 0.010009766
        %v1815 = vmul.f32 %v1559, 0.010009766
        %v1816 = vmul.f32 %v1560, 0.010009766
        %v1817 = vmul.f32 %v1561, 0.010009766
        %v1818 = vmul.f32 %v1562, 0.010009766
        %v1819 = vmul.f32 %v1563, 0.010009766
        %v1820 = vmul.f32 %v1564, 0.010009766
        %v1821 = vmul.f32 %v1565, 0.010009766
        %v1822 = vmul.f32 %v1566, 0.010009766
        %v1823 = vmul.f32 %v1567, 0.010009766
        %v1824 = vmul.f32 %v1568, 0.010009766
        %v1825 = vpack.c.bf16 %v1698, %v1697
        %v1826 = vpack.c.bf16 %v1700, %v1699
        %v1827 = vpack.c.bf16 %v1702, %v1701
        %v1828 = vpack.c.bf16 %v1704, %v1703
        %v1829 = vpack.c.bf16 %v1706, %v1705
        %v1830 = vpack.c.bf16 %v1708, %v1707
        %v1831 = vpack.c.bf16 %v1710, %v1709
        %v1832 = vpack.c.bf16 %v1712, %v1711
        %v1833 = vpack.c.bf16 %v1714, %v1713
        %v1834 = vpack.c.bf16 %v1716, %v1715
        %v1835 = vpack.c.bf16 %v1718, %v1717
        %v1836 = vpack.c.bf16 %v1720, %v1719
        %v1837 = vpack.c.bf16 %v1722, %v1721
        %v1838 = vpack.c.bf16 %v1724, %v1723
        %v1839 = vpack.c.bf16 %v1726, %v1725
        %v1840 = vpack.c.bf16 %v1728, %v1727
        %v1841 = vpack.c.bf16 %v1730, %v1729
        %v1842 = vpack.c.bf16 %v1732, %v1731
        %v1843 = vpack.c.bf16 %v1734, %v1733
        %v1844 = vpack.c.bf16 %v1736, %v1735
        %v1845 = vpack.c.bf16 %v1738, %v1737
        %v1846 = vpack.c.bf16 %v1740, %v1739
        %v1847 = vpack.c.bf16 %v1742, %v1741
        %v1848 = vpack.c.bf16 %v1744, %v1743
        %v1849 = vpack.c.bf16 %v1746, %v1745
        %v1850 = vpack.c.bf16 %v1748, %v1747
        %v1851 = vpack.c.bf16 %v1750, %v1749
        %v1852 = vpack.c.bf16 %v1752, %v1751
        %v1853 = vpack.c.bf16 %v1754, %v1753
        %v1854 = vpack.c.bf16 %v1756, %v1755
        %v1855 = vpack.c.bf16 %v1758, %v1757
        %v1856 = vpack.c.bf16 %v1760, %v1759
        %v1857 = vpack.c.bf16 %v1762, %v1761
        %v1858 = vpack.c.bf16 %v1764, %v1763
        %v1859 = vpack.c.bf16 %v1766, %v1765
        %v1860 = vpack.c.bf16 %v1768, %v1767
        %v1861 = vpack.c.bf16 %v1770, %v1769
        %v1862 = vpack.c.bf16 %v1772, %v1771
        %v1863 = vpack.c.bf16 %v1774, %v1773
        %v1864 = vpack.c.bf16 %v1776, %v1775
        %v1865 = vpack.c.bf16 %v1778, %v1777
        %v1866 = vpack.c.bf16 %v1780, %v1779
        %v1867 = vpack.c.bf16 %v1782, %v1781
        %v1868 = vpack.c.bf16 %v1784, %v1783
        %v1869 = vpack.c.bf16 %v1786, %v1785
        %v1870 = vpack.c.bf16 %v1788, %v1787
        %v1871 = vpack.c.bf16 %v1790, %v1789
        %v1872 = vpack.c.bf16 %v1792, %v1791
        %v1873 = vpack.c.bf16 %v1794, %v1793
        %v1874 = vpack.c.bf16 %v1796, %v1795
        %v1875 = vpack.c.bf16 %v1798, %v1797
        %v1876 = vpack.c.bf16 %v1800, %v1799
        %v1877 = vpack.c.bf16 %v1802, %v1801
        %v1878 = vpack.c.bf16 %v1804, %v1803
        %v1879 = vpack.c.bf16 %v1806, %v1805
        %v1880 = vpack.c.bf16 %v1808, %v1807
        %v1881 = vpack.c.bf16 %v1810, %v1809
        %v1882 = vpack.c.bf16 %v1812, %v1811
        %v1883 = vpack.c.bf16 %v1814, %v1813
        %v1884 = vpack.c.bf16 %v1816, %v1815
        %v1885 = vpack.c.bf16 %v1818, %v1817
        %v1886 = vpack.c.bf16 %v1820, %v1819
        %v1887 = vpack.c.bf16 %v1822, %v1821
        %v1888 = vpack.c.bf16 %v1824, %v1823
        %vm1889 = vmpackc.low %vm1570, %vm1569
        %vm1890 = vmpackc.low %vm1572, %vm1571
        %vm1891 = vmpackc.low %vm1574, %vm1573
        %vm1892 = vmpackc.low %vm1576, %vm1575
        %vm1893 = vmpackc.low %vm1578, %vm1577
        %vm1894 = vmpackc.low %vm1580, %vm1579
        %vm1895 = vmpackc.low %vm1582, %vm1581
        %vm1896 = vmpackc.low %vm1584, %vm1583
        %vm1897 = vmpackc.low %vm1586, %vm1585
        %vm1898 = vmpackc.low %vm1588, %vm1587
        %vm1899 = vmpackc.low %vm1590, %vm1589
        %vm1900 = vmpackc.low %vm1592, %vm1591
        %vm1901 = vmpackc.low %vm1594, %vm1593
        %vm1902 = vmpackc.low %vm1596, %vm1595
        %vm1903 = vmpackc.low %vm1598, %vm1597
        %vm1904 = vmpackc.low %vm1600, %vm1599
        %vm1905 = vmpackc.low %vm1602, %vm1601
        %vm1906 = vmpackc.low %vm1604, %vm1603
        %vm1907 = vmpackc.low %vm1606, %vm1605
        %vm1908 = vmpackc.low %vm1608, %vm1607
        %vm1909 = vmpackc.low %vm1610, %vm1609
        %vm1910 = vmpackc.low %vm1612, %vm1611
        %vm1911 = vmpackc.low %vm1614, %vm1613
        %vm1912 = vmpackc.low %vm1616, %vm1615
        %vm1913 = vmpackc.low %vm1618, %vm1617
        %vm1914 = vmpackc.low %vm1620, %vm1619
        %vm1915 = vmpackc.low %vm1622, %vm1621
        %vm1916 = vmpackc.low %vm1624, %vm1623
        %vm1917 = vmpackc.low %vm1626, %vm1625
        %vm1918 = vmpackc.low %vm1628, %vm1627
        %vm1919 = vmpackc.low %vm1630, %vm1629
        %vm1920 = vmpackc.low %vm1632, %vm1631
        %vm1921 = vmpackc.low %vm1634, %vm1633
        %vm1922 = vmpackc.low %vm1636, %vm1635
        %vm1923 = vmpackc.low %vm1638, %vm1637
        %vm1924 = vmpackc.low %vm1640, %vm1639
        %vm1925 = vmpackc.low %vm1642, %vm1641
        %vm1926 = vmpackc.low %vm1644, %vm1643
        %vm1927 = vmpackc.low %vm1646, %vm1645
        %vm1928 = vmpackc.low %vm1648, %vm1647
        %vm1929 = vmpackc.low %vm1650, %vm1649
        %vm1930 = vmpackc.low %vm1652, %vm1651
        %vm1931 = vmpackc.low %vm1654, %vm1653
        %vm1932 = vmpackc.low %vm1656, %vm1655
        %vm1933 = vmpackc.low %vm1658, %vm1657
        %vm1934 = vmpackc.low %vm1660, %vm1659
        %vm1935 = vmpackc.low %vm1662, %vm1661
        %vm1936 = vmpackc.low %vm1664, %vm1663
        %vm1937 = vmpackc.low %vm1666, %vm1665
        %vm1938 = vmpackc.low %vm1668, %vm1667
        %vm1939 = vmpackc.low %vm1670, %vm1669
        %vm1940 = vmpackc.low %vm1672, %vm1671
        %vm1941 = vmpackc.low %vm1674, %vm1673
        %vm1942 = vmpackc.low %vm1676, %vm1675
        %vm1943 = vmpackc.low %vm1678, %vm1677
        %vm1944 = vmpackc.low %vm1680, %vm1679
        %vm1945 = vmpackc.low %vm1682, %vm1681
        %vm1946 = vmpackc.low %vm1684, %vm1683
        %vm1947 = vmpackc.low %vm1686, %vm1685
        %vm1948 = vmpackc.low %vm1688, %vm1687
        %vm1949 = vmpackc.low %vm1690, %vm1689
        %vm1950 = vmpackc.low %vm1692, %vm1691
        %vm1951 = vmpackc.low %vm1694, %vm1693
        %vm1952 = vmpackc.low %vm1696, %vm1695
        %v1953 = vsel %vm1889, %v1377, %v1825
        %v1954 = vsel %vm1890, %v1378, %v1826
        %v1955 = vsel %vm1891, %v1379, %v1827
        %v1956 = vsel %vm1892, %v1380, %v1828
        %v1957 = vsel %vm1893, %v1381, %v1829
        %v1958 = vsel %vm1894, %v1382, %v1830
        %v1959 = vsel %vm1895, %v1383, %v1831
        %v1960 = vsel %vm1896, %v1384, %v1832
        %v1961 = vsel %vm1897, %v1385, %v1833
        %v1962 = vsel %vm1898, %v1386, %v1834
        %v1963 = vsel %vm1899, %v1387, %v1835
        %v1964 = vsel %vm1900, %v1388, %v1836
        %v1965 = vsel %vm1901, %v1389, %v1837
        %v1966 = vsel %vm1902, %v1390, %v1838
        %v1967 = vsel %vm1903, %v1391, %v1839
        %v1968 = vsel %vm1904, %v1392, %v1840
        %v1969 = vsel %vm1905, %v1393, %v1841
        %v1970 = vsel %vm1906, %v1394, %v1842
        %v1971 = vsel %vm1907, %v1395, %v1843
        %v1972 = vsel %vm1908, %v1396, %v1844
        %v1973 = vsel %vm1909, %v1397, %v1845
        %v1974 = vsel %vm1910, %v1398, %v1846
        %v1975 = vsel %vm1911, %v1399, %v1847
        %v1976 = vsel %vm1912, %v1400, %v1848
        %v1977 = vsel %vm1913, %v1401, %v1849
        %v1978 = vsel %vm1914, %v1402, %v1850
        %v1979 = vsel %vm1915, %v1403, %v1851
        %v1980 = vsel %vm1916, %v1404, %v1852
        %v1981 = vsel %vm1917, %v1405, %v1853
        %v1982 = vsel %vm1918, %v1406, %v1854
        %v1983 = vsel %vm1919, %v1407, %v1855
        %v1984 = vsel %vm1920, %v1408, %v1856
        %v1985 = vsel %vm1921, %v1409, %v1857
        %v1986 = vsel %vm1922, %v1410, %v1858
        %v1987 = vsel %vm1923, %v1411, %v1859
        %v1988 = vsel %vm1924, %v1412, %v1860
        %v1989 = vsel %vm1925, %v1413, %v1861
        %v1990 = vsel %vm1926, %v1414, %v1862
        %v1991 = vsel %vm1927, %v1415, %v1863
        %v1992 = vsel %vm1928, %v1416, %v1864
        %v1993 = vsel %vm1929, %v1417, %v1865
        %v1994 = vsel %vm1930, %v1418, %v1866
        %v1995 = vsel %vm1931, %v1419, %v1867
        %v1996 = vsel %vm1932, %v1420, %v1868
        %v1997 = vsel %vm1933, %v1421, %v1869
        %v1998 = vsel %vm1934, %v1422, %v1870
        %v1999 = vsel %vm1935, %v1423, %v1871
        %v2000 = vsel %vm1936, %v1424, %v1872
        %v2001 = vsel %vm1937, %v1425, %v1873
        %v2002 = vsel %vm1938, %v1426, %v1874
        %v2003 = vsel %vm1939, %v1427, %v1875
        %v2004 = vsel %vm1940, %v1428, %v1876
        %v2005 = vsel %vm1941, %v1429, %v1877
        %v2006 = vsel %vm1942, %v1430, %v1878
        %v2007 = vsel %vm1943, %v1431, %v1879
        %v2008 = vsel %vm1944, %v1432, %v1880
        %v2009 = vsel %vm1945, %v1433, %v1881
        %v2010 = vsel %vm1946, %v1434, %v1882
        %v2011 = vsel %vm1947, %v1435, %v1883
        %v2012 = vsel %vm1948, %v1436, %v1884
        %v2013 = vsel %vm1949, %v1437, %v1885
        %v2014 = vsel %vm1950, %v1438, %v1886
        %v2015 = vsel %vm1951, %v1439, %v1887
        %v2016 = vsel %vm1952, %v1440, %v1888
        %v2017 = vld [vmem:[#allocation4] sm:$0xff]
        %v2018 = vld [vmem:[#allocation4 + $0x8] sm:$0xff]
        %v2019 = vld [vmem:[#allocation4 + $0x10] sm:$0xff]
        %v2020 = vld [vmem:[#allocation4 + $0x18] sm:$0xff]
        %v2021 = vld [vmem:[#allocation4 + $0x20] sm:$0xff]
        %v2022 = vld [vmem:[#allocation4 + $0x28] sm:$0xff]
        %v2023 = vld [vmem:[#allocation4 + $0x30] sm:$0xff]
        %v2024 = vld [vmem:[#allocation4 + $0x38] sm:$0xff]
        %v2025 = vld [vmem:[#allocation4 + $0x40] sm:$0xff]
        %v2026 = vld [vmem:[#allocation4 + $0x48] sm:$0xff]
        %v2027 = vld [vmem:[#allocation4 + $0x50] sm:$0xff]
        %v2028 = vld [vmem:[#allocation4 + $0x58] sm:$0xff]
        %v2029 = vld [vmem:[#allocation4 + $0x60] sm:$0xff]
        %v2030 = vld [vmem:[#allocation4 + $0x68] sm:$0xff]
        %v2031 = vld [vmem:[#allocation4 + $0x70] sm:$0xff]
        %v2032 = vld [vmem:[#allocation4 + $0x78] sm:$0xff]
        %v2033 = vld [vmem:[#allocation4 + $0x80] sm:$0xff]
        %v2034 = vld [vmem:[#allocation4 + $0x88] sm:$0xff]
        %v2035 = vld [vmem:[#allocation4 + $0x90] sm:$0xff]
        %v2036 = vld [vmem:[#allocation4 + $0x98] sm:$0xff]
        %v2037 = vld [vmem:[#allocation4 + $0xa0] sm:$0xff]
        %v2038 = vld [vmem:[#allocation4 + $0xa8] sm:$0xff]
        %v2039 = vld [vmem:[#allocation4 + $0xb0] sm:$0xff]
        %v2040 = vld [vmem:[#allocation4 + $0xb8] sm:$0xff]
        %v2041 = vld [vmem:[#allocation4 + $0xc0] sm:$0xff]
        %v2042 = vld [vmem:[#allocation4 + $0xc8] sm:$0xff]
        %v2043 = vld [vmem:[#allocation4 + $0xd0] sm:$0xff]
        %v2044 = vld [vmem:[#allocation4 + $0xd8] sm:$0xff]
        %v2045 = vld [vmem:[#allocation4 + $0xe0] sm:$0xff]
        %v2046 = vld [vmem:[#allocation4 + $0xe8] sm:$0xff]
        %v2047 = vld [vmem:[#allocation4 + $0xf0] sm:$0xff]
        %v2048 = vld [vmem:[#allocation4 + $0xf8] sm:$0xff]
        %v2049 = vld [vmem:[#allocation4 + $0x100] sm:$0xff]
        %v2050 = vld [vmem:[#allocation4 + $0x108] sm:$0xff]
        %v2051 = vld [vmem:[#allocation4 + $0x110] sm:$0xff]
        %v2052 = vld [vmem:[#allocation4 + $0x118] sm:$0xff]
        %v2053 = vld [vmem:[#allocation4 + $0x120] sm:$0xff]
        %v2054 = vld [vmem:[#allocation4 + $0x128] sm:$0xff]
        %v2055 = vld [vmem:[#allocation4 + $0x130] sm:$0xff]
        %v2056 = vld [vmem:[#allocation4 + $0x138] sm:$0xff]
        %v2057 = vld [vmem:[#allocation4 + $0x140] sm:$0xff]
        %v2058 = vld [vmem:[#allocation4 + $0x148] sm:$0xff]
        %v2059 = vld [vmem:[#allocation4 + $0x150] sm:$0xff]
        %v2060 = vld [vmem:[#allocation4 + $0x158] sm:$0xff]
        %v2061 = vld [vmem:[#allocation4 + $0x160] sm:$0xff]
        %v2062 = vld [vmem:[#allocation4 + $0x168] sm:$0xff]
        %v2063 = vld [vmem:[#allocation4 + $0x170] sm:$0xff]
        %v2064 = vld [vmem:[#allocation4 + $0x178] sm:$0xff]
        %v2065 = vld [vmem:[#allocation4 + $0x180] sm:$0xff]
        %v2066 = vld [vmem:[#allocation4 + $0x188] sm:$0xff]
        %v2067 = vld [vmem:[#allocation4 + $0x190] sm:$0xff]
        %v2068 = vld [vmem:[#allocation4 + $0x198] sm:$0xff]
        %v2069 = vld [vmem:[#allocation4 + $0x1a0] sm:$0xff]
        %v2070 = vld [vmem:[#allocation4 + $0x1a8] sm:$0xff]
        %v2071 = vld [vmem:[#allocation4 + $0x1b0] sm:$0xff]
        %v2072 = vld [vmem:[#allocation4 + $0x1b8] sm:$0xff]
        %v2073 = vld [vmem:[#allocation4 + $0x1c0] sm:$0xff]
        %v2074 = vld [vmem:[#allocation4 + $0x1c8] sm:$0xff]
        %v2075 = vld [vmem:[#allocation4 + $0x1d0] sm:$0xff]
        %v2076 = vld [vmem:[#allocation4 + $0x1d8] sm:$0xff]
        %v2077 = vld [vmem:[#allocation4 + $0x1e0] sm:$0xff]
        %v2078 = vld [vmem:[#allocation4 + $0x1e8] sm:$0xff]
        %v2079 = vld [vmem:[#allocation4 + $0x1f0] sm:$0xff]
        %v2080 = vld [vmem:[#allocation4 + $0x1f8] sm:$0xff]
        %v2081 = vld [vmem:[#allocation4 + $0x200] sm:$0xff]
        %v2082 = vld [vmem:[#allocation4 + $0x208] sm:$0xff]
        %v2083 = vld [vmem:[#allocation4 + $0x210] sm:$0xff]
        %v2084 = vld [vmem:[#allocation4 + $0x218] sm:$0xff]
        %v2085 = vld [vmem:[#allocation4 + $0x220] sm:$0xff]
        %v2086 = vld [vmem:[#allocation4 + $0x228] sm:$0xff]
        %v2087 = vld [vmem:[#allocation4 + $0x230] sm:$0xff]
        %v2088 = vld [vmem:[#allocation4 + $0x238] sm:$0xff]
        %v2089 = vld [vmem:[#allocation4 + $0x240] sm:$0xff]
        %v2090 = vld [vmem:[#allocation4 + $0x248] sm:$0xff]
        %v2091 = vld [vmem:[#allocation4 + $0x250] sm:$0xff]
        %v2092 = vld [vmem:[#allocation4 + $0x258] sm:$0xff]
        %v2093 = vld [vmem:[#allocation4 + $0x260] sm:$0xff]
        %v2094 = vld [vmem:[#allocation4 + $0x268] sm:$0xff]
        %v2095 = vld [vmem:[#allocation4 + $0x270] sm:$0xff]
        %v2096 = vld [vmem:[#allocation4 + $0x278] sm:$0xff]
        %v2097 = vld [vmem:[#allocation4 + $0x280] sm:$0xff]
        %v2098 = vld [vmem:[#allocation4 + $0x288] sm:$0xff]
        %v2099 = vld [vmem:[#allocation4 + $0x290] sm:$0xff]
        %v2100 = vld [vmem:[#allocation4 + $0x298] sm:$0xff]
        %v2101 = vld [vmem:[#allocation4 + $0x2a0] sm:$0xff]
        %v2102 = vld [vmem:[#allocation4 + $0x2a8] sm:$0xff]
        %v2103 = vld [vmem:[#allocation4 + $0x2b0] sm:$0xff]
        %v2104 = vld [vmem:[#allocation4 + $0x2b8] sm:$0xff]
        %v2105 = vld [vmem:[#allocation4 + $0x2c0] sm:$0xff]
        %v2106 = vld [vmem:[#allocation4 + $0x2c8] sm:$0xff]
        %v2107 = vld [vmem:[#allocation4 + $0x2d0] sm:$0xff]
        %v2108 = vld [vmem:[#allocation4 + $0x2d8] sm:$0xff]
        %v2109 = vld [vmem:[#allocation4 + $0x2e0] sm:$0xff]
        %v2110 = vld [vmem:[#allocation4 + $0x2e8] sm:$0xff]
        %v2111 = vld [vmem:[#allocation4 + $0x2f0] sm:$0xff]
        %v2112 = vld [vmem:[#allocation4 + $0x2f8] sm:$0xff]
        %v2113 = vld [vmem:[#allocation4 + $0x300] sm:$0xff]
        %v2114 = vld [vmem:[#allocation4 + $0x308] sm:$0xff]
        %v2115 = vld [vmem:[#allocation4 + $0x310] sm:$0xff]
        %v2116 = vld [vmem:[#allocation4 + $0x318] sm:$0xff]
        %v2117 = vld [vmem:[#allocation4 + $0x320] sm:$0xff]
        %v2118 = vld [vmem:[#allocation4 + $0x328] sm:$0xff]
        %v2119 = vld [vmem:[#allocation4 + $0x330] sm:$0xff]
        %v2120 = vld [vmem:[#allocation4 + $0x338] sm:$0xff]
        %v2121 = vld [vmem:[#allocation4 + $0x340] sm:$0xff]
        %v2122 = vld [vmem:[#allocation4 + $0x348] sm:$0xff]
        %v2123 = vld [vmem:[#allocation4 + $0x350] sm:$0xff]
        %v2124 = vld [vmem:[#allocation4 + $0x358] sm:$0xff]
        %v2125 = vld [vmem:[#allocation4 + $0x360] sm:$0xff]
        %v2126 = vld [vmem:[#allocation4 + $0x368] sm:$0xff]
        %v2127 = vld [vmem:[#allocation4 + $0x370] sm:$0xff]
        %v2128 = vld [vmem:[#allocation4 + $0x378] sm:$0xff]
        %v2129 = vld [vmem:[#allocation4 + $0x380] sm:$0xff]
        %v2130 = vld [vmem:[#allocation4 + $0x388] sm:$0xff]
        %v2131 = vld [vmem:[#allocation4 + $0x390] sm:$0xff]
        %v2132 = vld [vmem:[#allocation4 + $0x398] sm:$0xff]
        %v2133 = vld [vmem:[#allocation4 + $0x3a0] sm:$0xff]
        %v2134 = vld [vmem:[#allocation4 + $0x3a8] sm:$0xff]
        %v2135 = vld [vmem:[#allocation4 + $0x3b0] sm:$0xff]
        %v2136 = vld [vmem:[#allocation4 + $0x3b8] sm:$0xff]
        %v2137 = vld [vmem:[#allocation4 + $0x3c0] sm:$0xff]
        %v2138 = vld [vmem:[#allocation4 + $0x3c8] sm:$0xff]
        %v2139 = vld [vmem:[#allocation4 + $0x3d0] sm:$0xff]
        %v2140 = vld [vmem:[#allocation4 + $0x3d8] sm:$0xff]
        %v2141 = vld [vmem:[#allocation4 + $0x3e0] sm:$0xff]
        %v2142 = vld [vmem:[#allocation4 + $0x3e8] sm:$0xff]
        %v2143 = vld [vmem:[#allocation4 + $0x3f0] sm:$0xff]
        %v2144 = vld [vmem:[#allocation4 + $0x3f8] sm:$0xff]
        %v2145 = vld [vmem:[#allocation4 + $0x400] sm:$0xff]
        %v2146 = vld [vmem:[#allocation4 + $0x408] sm:$0xff]
        %v2147 = vld [vmem:[#allocation4 + $0x410] sm:$0xff]
        %v2148 = vld [vmem:[#allocation4 + $0x418] sm:$0xff]
        %v2149 = vld [vmem:[#allocation4 + $0x420] sm:$0xff]
        %v2150 = vld [vmem:[#allocation4 + $0x428] sm:$0xff]
        %v2151 = vld [vmem:[#allocation4 + $0x430] sm:$0xff]
        %v2152 = vld [vmem:[#allocation4 + $0x438] sm:$0xff]
        %v2153 = vld [vmem:[#allocation4 + $0x440] sm:$0xff]
        %v2154 = vld [vmem:[#allocation4 + $0x448] sm:$0xff]
        %v2155 = vld [vmem:[#allocation4 + $0x450] sm:$0xff]
        %v2156 = vld [vmem:[#allocation4 + $0x458] sm:$0xff]
        %v2157 = vld [vmem:[#allocation4 + $0x460] sm:$0xff]
        %v2158 = vld [vmem:[#allocation4 + $0x468] sm:$0xff]
        %v2159 = vld [vmem:[#allocation4 + $0x470] sm:$0xff]
        %v2160 = vld [vmem:[#allocation4 + $0x478] sm:$0xff]
        %v2161 = vld [vmem:[#allocation4 + $0x480] sm:$0xff]
        %v2162 = vld [vmem:[#allocation4 + $0x488] sm:$0xff]
        %v2163 = vld [vmem:[#allocation4 + $0x490] sm:$0xff]
        %v2164 = vld [vmem:[#allocation4 + $0x498] sm:$0xff]
        %v2165 = vld [vmem:[#allocation4 + $0x4a0] sm:$0xff]
        %v2166 = vld [vmem:[#allocation4 + $0x4a8] sm:$0xff]
        %v2167 = vld [vmem:[#allocation4 + $0x4b0] sm:$0xff]
        %v2168 = vld [vmem:[#allocation4 + $0x4b8] sm:$0xff]
        %v2169 = vld [vmem:[#allocation4 + $0x4c0] sm:$0xff]
        %v2170 = vld [vmem:[#allocation4 + $0x4c8] sm:$0xff]
        %v2171 = vld [vmem:[#allocation4 + $0x4d0] sm:$0xff]
        %v2172 = vld [vmem:[#allocation4 + $0x4d8] sm:$0xff]
        %v2173 = vld [vmem:[#allocation4 + $0x4e0] sm:$0xff]
        %v2174 = vld [vmem:[#allocation4 + $0x4e8] sm:$0xff]
        %v2175 = vld [vmem:[#allocation4 + $0x4f0] sm:$0xff]
        %v2176 = vld [vmem:[#allocation4 + $0x4f8] sm:$0xff]
        %v2177 = vld [vmem:[#allocation4 + $0x500] sm:$0xff]
        %v2178 = vld [vmem:[#allocation4 + $0x508] sm:$0xff]
        %v2179 = vld [vmem:[#allocation4 + $0x510] sm:$0xff]
        %v2180 = vld [vmem:[#allocation4 + $0x518] sm:$0xff]
        %v2181 = vld [vmem:[#allocation4 + $0x520] sm:$0xff]
        %v2182 = vld [vmem:[#allocation4 + $0x528] sm:$0xff]
        %v2183 = vld [vmem:[#allocation4 + $0x530] sm:$0xff]
        %v2184 = vld [vmem:[#allocation4 + $0x538] sm:$0xff]
        %v2185 = vld [vmem:[#allocation4 + $0x540] sm:$0xff]
        %v2186 = vld [vmem:[#allocation4 + $0x548] sm:$0xff]
        %v2187 = vld [vmem:[#allocation4 + $0x550] sm:$0xff]
        %v2188 = vld [vmem:[#allocation4 + $0x558] sm:$0xff]
        %v2189 = vld [vmem:[#allocation4 + $0x560] sm:$0xff]
        %v2190 = vld [vmem:[#allocation4 + $0x568] sm:$0xff]
        %v2191 = vld [vmem:[#allocation4 + $0x570] sm:$0xff]
        %v2192 = vld [vmem:[#allocation4 + $0x578] sm:$0xff]
        %v2193 = vld [vmem:[#allocation4 + $0x580] sm:$0xff]
        %v2194 = vld [vmem:[#allocation4 + $0x588] sm:$0xff]
        %v2195 = vld [vmem:[#allocation4 + $0x590] sm:$0xff]
        %v2196 = vld [vmem:[#allocation4 + $0x598] sm:$0xff]
        %v2197 = vld [vmem:[#allocation4 + $0x5a0] sm:$0xff]
        %v2198 = vld [vmem:[#allocation4 + $0x5a8] sm:$0xff]
        %v2199 = vld [vmem:[#allocation4 + $0x5b0] sm:$0xff]
        %v2200 = vld [vmem:[#allocation4 + $0x5b8] sm:$0xff]
        %v2201 = vld [vmem:[#allocation4 + $0x5c0] sm:$0xff]
        %v2202 = vld [vmem:[#allocation4 + $0x5c8] sm:$0xff]
        %v2203 = vld [vmem:[#allocation4 + $0x5d0] sm:$0xff]
        %v2204 = vld [vmem:[#allocation4 + $0x5d8] sm:$0xff]
        %v2205 = vld [vmem:[#allocation4 + $0x5e0] sm:$0xff]
        %v2206 = vld [vmem:[#allocation4 + $0x5e8] sm:$0xff]
        %v2207 = vld [vmem:[#allocation4 + $0x5f0] sm:$0xff]
        %v2208 = vld [vmem:[#allocation4 + $0x5f8] sm:$0xff]
        %v2209 = vld [vmem:[#allocation4 + $0x600] sm:$0xff]
        %v2210 = vld [vmem:[#allocation4 + $0x608] sm:$0xff]
        %v2211 = vld [vmem:[#allocation4 + $0x610] sm:$0xff]
        %v2212 = vld [vmem:[#allocation4 + $0x618] sm:$0xff]
        %v2213 = vld [vmem:[#allocation4 + $0x620] sm:$0xff]
        %v2214 = vld [vmem:[#allocation4 + $0x628] sm:$0xff]
        %v2215 = vld [vmem:[#allocation4 + $0x630] sm:$0xff]
        %v2216 = vld [vmem:[#allocation4 + $0x638] sm:$0xff]
        %v2217 = vld [vmem:[#allocation4 + $0x640] sm:$0xff]
        %v2218 = vld [vmem:[#allocation4 + $0x648] sm:$0xff]
        %v2219 = vld [vmem:[#allocation4 + $0x650] sm:$0xff]
        %v2220 = vld [vmem:[#allocation4 + $0x658] sm:$0xff]
        %v2221 = vld [vmem:[#allocation4 + $0x660] sm:$0xff]
        %v2222 = vld [vmem:[#allocation4 + $0x668] sm:$0xff]
        %v2223 = vld [vmem:[#allocation4 + $0x670] sm:$0xff]
        %v2224 = vld [vmem:[#allocation4 + $0x678] sm:$0xff]
        %v2225 = vld [vmem:[#allocation4 + $0x680] sm:$0xff]
        %v2226 = vld [vmem:[#allocation4 + $0x688] sm:$0xff]
        %v2227 = vld [vmem:[#allocation4 + $0x690] sm:$0xff]
        %v2228 = vld [vmem:[#allocation4 + $0x698] sm:$0xff]
        %v2229 = vld [vmem:[#allocation4 + $0x6a0] sm:$0xff]
        %v2230 = vld [vmem:[#allocation4 + $0x6a8] sm:$0xff]
        %v2231 = vld [vmem:[#allocation4 + $0x6b0] sm:$0xff]
        %v2232 = vld [vmem:[#allocation4 + $0x6b8] sm:$0xff]
        %v2233 = vld [vmem:[#allocation4 + $0x6c0] sm:$0xff]
        %v2234 = vld [vmem:[#allocation4 + $0x6c8] sm:$0xff]
        %v2235 = vld [vmem:[#allocation4 + $0x6d0] sm:$0xff]
        %v2236 = vld [vmem:[#allocation4 + $0x6d8] sm:$0xff]
        %v2237 = vld [vmem:[#allocation4 + $0x6e0] sm:$0xff]
        %v2238 = vld [vmem:[#allocation4 + $0x6e8] sm:$0xff]
        %v2239 = vld [vmem:[#allocation4 + $0x6f0] sm:$0xff]
        %v2240 = vld [vmem:[#allocation4 + $0x6f8] sm:$0xff]
        %v2241 = vld [vmem:[#allocation4 + $0x700] sm:$0xff]
        %v2242 = vld [vmem:[#allocation4 + $0x708] sm:$0xff]
        %v2243 = vld [vmem:[#allocation4 + $0x710] sm:$0xff]
        %v2244 = vld [vmem:[#allocation4 + $0x718] sm:$0xff]
        %v2245 = vld [vmem:[#allocation4 + $0x720] sm:$0xff]
        %v2246 = vld [vmem:[#allocation4 + $0x728] sm:$0xff]
        %v2247 = vld [vmem:[#allocation4 + $0x730] sm:$0xff]
        %v2248 = vld [vmem:[#allocation4 + $0x738] sm:$0xff]
        %v2249 = vld [vmem:[#allocation4 + $0x740] sm:$0xff]
        %v2250 = vld [vmem:[#allocation4 + $0x748] sm:$0xff]
        %v2251 = vld [vmem:[#allocation4 + $0x750] sm:$0xff]
        %v2252 = vld [vmem:[#allocation4 + $0x758] sm:$0xff]
        %v2253 = vld [vmem:[#allocation4 + $0x760] sm:$0xff]
        %v2254 = vld [vmem:[#allocation4 + $0x768] sm:$0xff]
        %v2255 = vld [vmem:[#allocation4 + $0x770] sm:$0xff]
        %v2256 = vld [vmem:[#allocation4 + $0x778] sm:$0xff]
        %v2257 = vld [vmem:[#allocation4 + $0x780] sm:$0xff]
        %v2258 = vld [vmem:[#allocation4 + $0x788] sm:$0xff]
        %v2259 = vld [vmem:[#allocation4 + $0x790] sm:$0xff]
        %v2260 = vld [vmem:[#allocation4 + $0x798] sm:$0xff]
        %v2261 = vld [vmem:[#allocation4 + $0x7a0] sm:$0xff]
        %v2262 = vld [vmem:[#allocation4 + $0x7a8] sm:$0xff]
        %v2263 = vld [vmem:[#allocation4 + $0x7b0] sm:$0xff]
        %v2264 = vld [vmem:[#allocation4 + $0x7b8] sm:$0xff]
        %v2265 = vld [vmem:[#allocation4 + $0x7c0] sm:$0xff]
        %v2266 = vld [vmem:[#allocation4 + $0x7c8] sm:$0xff]
        %v2267 = vld [vmem:[#allocation4 + $0x7d0] sm:$0xff]
        %v2268 = vld [vmem:[#allocation4 + $0x7d8] sm:$0xff]
        %v2269 = vld [vmem:[#allocation4 + $0x7e0] sm:$0xff]
        %v2270 = vld [vmem:[#allocation4 + $0x7e8] sm:$0xff]
        %v2271 = vld [vmem:[#allocation4 + $0x7f0] sm:$0xff]
        %v2272 = vld [vmem:[#allocation4 + $0x7f8] sm:$0xff]
        %v2273 = vld [vmem:[#allocation4 + $0x800] sm:$0xff]
        %v2274 = vld [vmem:[#allocation4 + $0x808] sm:$0xff]
        %v2275 = vld [vmem:[#allocation4 + $0x810] sm:$0xff]
        %v2276 = vld [vmem:[#allocation4 + $0x818] sm:$0xff]
        %v2277 = vld [vmem:[#allocation4 + $0x820] sm:$0xff]
        %v2278 = vld [vmem:[#allocation4 + $0x828] sm:$0xff]
        %v2279 = vld [vmem:[#allocation4 + $0x830] sm:$0xff]
        %v2280 = vld [vmem:[#allocation4 + $0x838] sm:$0xff]
        %v2281 = vld [vmem:[#allocation4 + $0x840] sm:$0xff]
        %v2282 = vld [vmem:[#allocation4 + $0x848] sm:$0xff]
        %v2283 = vld [vmem:[#allocation4 + $0x850] sm:$0xff]
        %v2284 = vld [vmem:[#allocation4 + $0x858] sm:$0xff]
        %v2285 = vld [vmem:[#allocation4 + $0x860] sm:$0xff]
        %v2286 = vld [vmem:[#allocation4 + $0x868] sm:$0xff]
        %v2287 = vld [vmem:[#allocation4 + $0x870] sm:$0xff]
        %v2288 = vld [vmem:[#allocation4 + $0x878] sm:$0xff]
        %v2289 = vld [vmem:[#allocation4 + $0x880] sm:$0xff]
        %v2290 = vld [vmem:[#allocation4 + $0x888] sm:$0xff]
        %v2291 = vld [vmem:[#allocation4 + $0x890] sm:$0xff]
        %v2292 = vld [vmem:[#allocation4 + $0x898] sm:$0xff]
        %v2293 = vld [vmem:[#allocation4 + $0x8a0] sm:$0xff]
        %v2294 = vld [vmem:[#allocation4 + $0x8a8] sm:$0xff]
        %v2295 = vld [vmem:[#allocation4 + $0x8b0] sm:$0xff]
        %v2296 = vld [vmem:[#allocation4 + $0x8b8] sm:$0xff]
        %v2297 = vld [vmem:[#allocation4 + $0x8c0] sm:$0xff]
        %v2298 = vld [vmem:[#allocation4 + $0x8c8] sm:$0xff]
        %v2299 = vld [vmem:[#allocation4 + $0x8d0] sm:$0xff]
        %v2300 = vld [vmem:[#allocation4 + $0x8d8] sm:$0xff]
        %v2301 = vld [vmem:[#allocation4 + $0x8e0] sm:$0xff]
        %v2302 = vld [vmem:[#allocation4 + $0x8e8] sm:$0xff]
        %v2303 = vld [vmem:[#allocation4 + $0x8f0] sm:$0xff]
        %v2304 = vld [vmem:[#allocation4 + $0x8f8] sm:$0xff]
        %v2305 = vld [vmem:[#allocation4 + $0x900] sm:$0xff]
        %v2306 = vld [vmem:[#allocation4 + $0x908] sm:$0xff]
        %v2307 = vld [vmem:[#allocation4 + $0x910] sm:$0xff]
        %v2308 = vld [vmem:[#allocation4 + $0x918] sm:$0xff]
        %v2309 = vld [vmem:[#allocation4 + $0x920] sm:$0xff]
        %v2310 = vld [vmem:[#allocation4 + $0x928] sm:$0xff]
        %v2311 = vld [vmem:[#allocation4 + $0x930] sm:$0xff]
        %v2312 = vld [vmem:[#allocation4 + $0x938] sm:$0xff]
        %v2313 = vld [vmem:[#allocation4 + $0x940] sm:$0xff]
        %v2314 = vld [vmem:[#allocation4 + $0x948] sm:$0xff]
        %v2315 = vld [vmem:[#allocation4 + $0x950] sm:$0xff]
        %v2316 = vld [vmem:[#allocation4 + $0x958] sm:$0xff]
        %v2317 = vld [vmem:[#allocation4 + $0x960] sm:$0xff]
        %v2318 = vld [vmem:[#allocation4 + $0x968] sm:$0xff]
        %v2319 = vld [vmem:[#allocation4 + $0x970] sm:$0xff]
        %v2320 = vld [vmem:[#allocation4 + $0x978] sm:$0xff]
        %v2321 = vld [vmem:[#allocation4 + $0x980] sm:$0xff]
        %v2322 = vld [vmem:[#allocation4 + $0x988] sm:$0xff]
        %v2323 = vld [vmem:[#allocation4 + $0x990] sm:$0xff]
        %v2324 = vld [vmem:[#allocation4 + $0x998] sm:$0xff]
        %v2325 = vld [vmem:[#allocation4 + $0x9a0] sm:$0xff]
        %v2326 = vld [vmem:[#allocation4 + $0x9a8] sm:$0xff]
        %v2327 = vld [vmem:[#allocation4 + $0x9b0] sm:$0xff]
        %v2328 = vld [vmem:[#allocation4 + $0x9b8] sm:$0xff]
        %v2329 = vld [vmem:[#allocation4 + $0x9c0] sm:$0xff]
        %v2330 = vld [vmem:[#allocation4 + $0x9c8] sm:$0xff]
        %v2331 = vld [vmem:[#allocation4 + $0x9d0] sm:$0xff]
        %v2332 = vld [vmem:[#allocation4 + $0x9d8] sm:$0xff]
        %v2333 = vld [vmem:[#allocation4 + $0x9e0] sm:$0xff]
        %v2334 = vld [vmem:[#allocation4 + $0x9e8] sm:$0xff]
        %v2335 = vld [vmem:[#allocation4 + $0x9f0] sm:$0xff]
        %v2336 = vld [vmem:[#allocation4 + $0x9f8] sm:$0xff]
        %v2337 = vld [vmem:[#allocation4 + $0xa00] sm:$0xff]
        %v2338 = vld [vmem:[#allocation4 + $0xa08] sm:$0xff]
        %v2339 = vld [vmem:[#allocation4 + $0xa10] sm:$0xff]
        %v2340 = vld [vmem:[#allocation4 + $0xa18] sm:$0xff]
        %v2341 = vld [vmem:[#allocation4 + $0xa20] sm:$0xff]
        %v2342 = vld [vmem:[#allocation4 + $0xa28] sm:$0xff]
        %v2343 = vld [vmem:[#allocation4 + $0xa30] sm:$0xff]
        %v2344 = vld [vmem:[#allocation4 + $0xa38] sm:$0xff]
        %v2345 = vld [vmem:[#allocation4 + $0xa40] sm:$0xff]
        %v2346 = vld [vmem:[#allocation4 + $0xa48] sm:$0xff]
        %v2347 = vld [vmem:[#allocation4 + $0xa50] sm:$0xff]
        %v2348 = vld [vmem:[#allocation4 + $0xa58] sm:$0xff]
        %v2349 = vld [vmem:[#allocation4 + $0xa60] sm:$0xff]
        %v2350 = vld [vmem:[#allocation4 + $0xa68] sm:$0xff]
        %v2351 = vld [vmem:[#allocation4 + $0xa70] sm:$0xff]
        %v2352 = vld [vmem:[#allocation4 + $0xa78] sm:$0xff]
        %v2353 = vld [vmem:[#allocation4 + $0xa80] sm:$0xff]
        %v2354 = vld [vmem:[#allocation4 + $0xa88] sm:$0xff]
        %v2355 = vld [vmem:[#allocation4 + $0xa90] sm:$0xff]
        %v2356 = vld [vmem:[#allocation4 + $0xa98] sm:$0xff]
        %v2357 = vld [vmem:[#allocation4 + $0xaa0] sm:$0xff]
        %v2358 = vld [vmem:[#allocation4 + $0xaa8] sm:$0xff]
        %v2359 = vld [vmem:[#allocation4 + $0xab0] sm:$0xff]
        %v2360 = vld [vmem:[#allocation4 + $0xab8] sm:$0xff]
        %v2361 = vld [vmem:[#allocation4 + $0xac0] sm:$0xff]
        %v2362 = vld [vmem:[#allocation4 + $0xac8] sm:$0xff]
        %v2363 = vld [vmem:[#allocation4 + $0xad0] sm:$0xff]
        %v2364 = vld [vmem:[#allocation4 + $0xad8] sm:$0xff]
        %v2365 = vld [vmem:[#allocation4 + $0xae0] sm:$0xff]
        %v2366 = vld [vmem:[#allocation4 + $0xae8] sm:$0xff]
        %v2367 = vld [vmem:[#allocation4 + $0xaf0] sm:$0xff]
        %v2368 = vld [vmem:[#allocation4 + $0xaf8] sm:$0xff]
        %v2369 = vld [vmem:[#allocation4 + $0xb00] sm:$0xff]
        %v2370 = vld [vmem:[#allocation4 + $0xb08] sm:$0xff]
        %v2371 = vld [vmem:[#allocation4 + $0xb10] sm:$0xff]
        %v2372 = vld [vmem:[#allocation4 + $0xb18] sm:$0xff]
        %v2373 = vld [vmem:[#allocation4 + $0xb20] sm:$0xff]
        %v2374 = vld [vmem:[#allocation4 + $0xb28] sm:$0xff]
        %v2375 = vld [vmem:[#allocation4 + $0xb30] sm:$0xff]
        %v2376 = vld [vmem:[#allocation4 + $0xb38] sm:$0xff]
        %v2377 = vld [vmem:[#allocation4 + $0xb40] sm:$0xff]
        %v2378 = vld [vmem:[#allocation4 + $0xb48] sm:$0xff]
        %v2379 = vld [vmem:[#allocation4 + $0xb50] sm:$0xff]
        %v2380 = vld [vmem:[#allocation4 + $0xb58] sm:$0xff]
        %v2381 = vld [vmem:[#allocation4 + $0xb60] sm:$0xff]
        %v2382 = vld [vmem:[#allocation4 + $0xb68] sm:$0xff]
        %v2383 = vld [vmem:[#allocation4 + $0xb70] sm:$0xff]
        %v2384 = vld [vmem:[#allocation4 + $0xb78] sm:$0xff]
        %v2385 = vld [vmem:[#allocation4 + $0xb80] sm:$0xff]
        %v2386 = vld [vmem:[#allocation4 + $0xb88] sm:$0xff]
        %v2387 = vld [vmem:[#allocation4 + $0xb90] sm:$0xff]
        %v2388 = vld [vmem:[#allocation4 + $0xb98] sm:$0xff]
        %v2389 = vld [vmem:[#allocation4 + $0xba0] sm:$0xff]
        %v2390 = vld [vmem:[#allocation4 + $0xba8] sm:$0xff]
        %v2391 = vld [vmem:[#allocation4 + $0xbb0] sm:$0xff]
        %v2392 = vld [vmem:[#allocation4 + $0xbb8] sm:$0xff]
        %v2393 = vld [vmem:[#allocation4 + $0xbc0] sm:$0xff]
        %v2394 = vld [vmem:[#allocation4 + $0xbc8] sm:$0xff]
        %v2395 = vld [vmem:[#allocation4 + $0xbd0] sm:$0xff]
        %v2396 = vld [vmem:[#allocation4 + $0xbd8] sm:$0xff]
        %v2397 = vld [vmem:[#allocation4 + $0xbe0] sm:$0xff]
        %v2398 = vld [vmem:[#allocation4 + $0xbe8] sm:$0xff]
        %v2399 = vld [vmem:[#allocation4 + $0xbf0] sm:$0xff]
        %v2400 = vld [vmem:[#allocation4 + $0xbf8] sm:$0xff]
        %v2401 = vld [vmem:[#allocation4 + $0xc00] sm:$0xff]
        %v2402 = vld [vmem:[#allocation4 + $0xc08] sm:$0xff]
        %v2403 = vld [vmem:[#allocation4 + $0xc10] sm:$0xff]
        %v2404 = vld [vmem:[#allocation4 + $0xc18] sm:$0xff]
        %v2405 = vld [vmem:[#allocation4 + $0xc20] sm:$0xff]
        %v2406 = vld [vmem:[#allocation4 + $0xc28] sm:$0xff]
        %v2407 = vld [vmem:[#allocation4 + $0xc30] sm:$0xff]
        %v2408 = vld [vmem:[#allocation4 + $0xc38] sm:$0xff]
        %v2409 = vld [vmem:[#allocation4 + $0xc40] sm:$0xff]
        %v2410 = vld [vmem:[#allocation4 + $0xc48] sm:$0xff]
        %v2411 = vld [vmem:[#allocation4 + $0xc50] sm:$0xff]
        %v2412 = vld [vmem:[#allocation4 + $0xc58] sm:$0xff]
        %v2413 = vld [vmem:[#allocation4 + $0xc60] sm:$0xff]
        %v2414 = vld [vmem:[#allocation4 + $0xc68] sm:$0xff]
        %v2415 = vld [vmem:[#allocation4 + $0xc70] sm:$0xff]
        %v2416 = vld [vmem:[#allocation4 + $0xc78] sm:$0xff]
        %v2417 = vld [vmem:[#allocation4 + $0xc80] sm:$0xff]
        %v2418 = vld [vmem:[#allocation4 + $0xc88] sm:$0xff]
        %v2419 = vld [vmem:[#allocation4 + $0xc90] sm:$0xff]
        %v2420 = vld [vmem:[#allocation4 + $0xc98] sm:$0xff]
        %v2421 = vld [vmem:[#allocation4 + $0xca0] sm:$0xff]
        %v2422 = vld [vmem:[#allocation4 + $0xca8] sm:$0xff]
        %v2423 = vld [vmem:[#allocation4 + $0xcb0] sm:$0xff]
        %v2424 = vld [vmem:[#allocation4 + $0xcb8] sm:$0xff]
        %v2425 = vld [vmem:[#allocation4 + $0xcc0] sm:$0xff]
        %v2426 = vld [vmem:[#allocation4 + $0xcc8] sm:$0xff]
        %v2427 = vld [vmem:[#allocation4 + $0xcd0] sm:$0xff]
        %v2428 = vld [vmem:[#allocation4 + $0xcd8] sm:$0xff]
        %v2429 = vld [vmem:[#allocation4 + $0xce0] sm:$0xff]
        %v2430 = vld [vmem:[#allocation4 + $0xce8] sm:$0xff]
        %v2431 = vld [vmem:[#allocation4 + $0xcf0] sm:$0xff]
        %v2432 = vld [vmem:[#allocation4 + $0xcf8] sm:$0xff]
        %v2433 = vld [vmem:[#allocation4 + $0xd00] sm:$0xff]
        %v2434 = vld [vmem:[#allocation4 + $0xd08] sm:$0xff]
        %v2435 = vld [vmem:[#allocation4 + $0xd10] sm:$0xff]
        %v2436 = vld [vmem:[#allocation4 + $0xd18] sm:$0xff]
        %v2437 = vld [vmem:[#allocation4 + $0xd20] sm:$0xff]
        %v2438 = vld [vmem:[#allocation4 + $0xd28] sm:$0xff]
        %v2439 = vld [vmem:[#allocation4 + $0xd30] sm:$0xff]
        %v2440 = vld [vmem:[#allocation4 + $0xd38] sm:$0xff]
        %v2441 = vld [vmem:[#allocation4 + $0xd40] sm:$0xff]
        %v2442 = vld [vmem:[#allocation4 + $0xd48] sm:$0xff]
        %v2443 = vld [vmem:[#allocation4 + $0xd50] sm:$0xff]
        %v2444 = vld [vmem:[#allocation4 + $0xd58] sm:$0xff]
        %v2445 = vld [vmem:[#allocation4 + $0xd60] sm:$0xff]
        %v2446 = vld [vmem:[#allocation4 + $0xd68] sm:$0xff]
        %v2447 = vld [vmem:[#allocation4 + $0xd70] sm:$0xff]
        %v2448 = vld [vmem:[#allocation4 + $0xd78] sm:$0xff]
        %v2449 = vld [vmem:[#allocation4 + $0xd80] sm:$0xff]
        %v2450 = vld [vmem:[#allocation4 + $0xd88] sm:$0xff]
        %v2451 = vld [vmem:[#allocation4 + $0xd90] sm:$0xff]
        %v2452 = vld [vmem:[#allocation4 + $0xd98] sm:$0xff]
        %v2453 = vld [vmem:[#allocation4 + $0xda0] sm:$0xff]
        %v2454 = vld [vmem:[#allocation4 + $0xda8] sm:$0xff]
        %v2455 = vld [vmem:[#allocation4 + $0xdb0] sm:$0xff]
        %v2456 = vld [vmem:[#allocation4 + $0xdb8] sm:$0xff]
        %v2457 = vld [vmem:[#allocation4 + $0xdc0] sm:$0xff]
        %v2458 = vld [vmem:[#allocation4 + $0xdc8] sm:$0xff]
        %v2459 = vld [vmem:[#allocation4 + $0xdd0] sm:$0xff]
        %v2460 = vld [vmem:[#allocation4 + $0xdd8] sm:$0xff]
        %v2461 = vld [vmem:[#allocation4 + $0xde0] sm:$0xff]
        %v2462 = vld [vmem:[#allocation4 + $0xde8] sm:$0xff]
        %v2463 = vld [vmem:[#allocation4 + $0xdf0] sm:$0xff]
        %v2464 = vld [vmem:[#allocation4 + $0xdf8] sm:$0xff]
        %v2465 = vld [vmem:[#allocation4 + $0xe00] sm:$0xff]
        %v2466 = vld [vmem:[#allocation4 + $0xe08] sm:$0xff]
        %v2467 = vld [vmem:[#allocation4 + $0xe10] sm:$0xff]
        %v2468 = vld [vmem:[#allocation4 + $0xe18] sm:$0xff]
        %v2469 = vld [vmem:[#allocation4 + $0xe20] sm:$0xff]
        %v2470 = vld [vmem:[#allocation4 + $0xe28] sm:$0xff]
        %v2471 = vld [vmem:[#allocation4 + $0xe30] sm:$0xff]
        %v2472 = vld [vmem:[#allocation4 + $0xe38] sm:$0xff]
        %v2473 = vld [vmem:[#allocation4 + $0xe40] sm:$0xff]
        %v2474 = vld [vmem:[#allocation4 + $0xe48] sm:$0xff]
        %v2475 = vld [vmem:[#allocation4 + $0xe50] sm:$0xff]
        %v2476 = vld [vmem:[#allocation4 + $0xe58] sm:$0xff]
        %v2477 = vld [vmem:[#allocation4 + $0xe60] sm:$0xff]
        %v2478 = vld [vmem:[#allocation4 + $0xe68] sm:$0xff]
        %v2479 = vld [vmem:[#allocation4 + $0xe70] sm:$0xff]
        %v2480 = vld [vmem:[#allocation4 + $0xe78] sm:$0xff]
        %v2481 = vld [vmem:[#allocation4 + $0xe80] sm:$0xff]
        %v2482 = vld [vmem:[#allocation4 + $0xe88] sm:$0xff]
        %v2483 = vld [vmem:[#allocation4 + $0xe90] sm:$0xff]
        %v2484 = vld [vmem:[#allocation4 + $0xe98] sm:$0xff]
        %v2485 = vld [vmem:[#allocation4 + $0xea0] sm:$0xff]
        %v2486 = vld [vmem:[#allocation4 + $0xea8] sm:$0xff]
        %v2487 = vld [vmem:[#allocation4 + $0xeb0] sm:$0xff]
        %v2488 = vld [vmem:[#allocation4 + $0xeb8] sm:$0xff]
        %v2489 = vld [vmem:[#allocation4 + $0xec0] sm:$0xff]
        %v2490 = vld [vmem:[#allocation4 + $0xec8] sm:$0xff]
        %v2491 = vld [vmem:[#allocation4 + $0xed0] sm:$0xff]
        %v2492 = vld [vmem:[#allocation4 + $0xed8] sm:$0xff]
        %v2493 = vld [vmem:[#allocation4 + $0xee0] sm:$0xff]
        %v2494 = vld [vmem:[#allocation4 + $0xee8] sm:$0xff]
        %v2495 = vld [vmem:[#allocation4 + $0xef0] sm:$0xff]
        %v2496 = vld [vmem:[#allocation4 + $0xef8] sm:$0xff]
        %v2497 = vld [vmem:[#allocation4 + $0xf00] sm:$0xff]
        %v2498 = vld [vmem:[#allocation4 + $0xf08] sm:$0xff]
        %v2499 = vld [vmem:[#allocation4 + $0xf10] sm:$0xff]
        %v2500 = vld [vmem:[#allocation4 + $0xf18] sm:$0xff]
        %v2501 = vld [vmem:[#allocation4 + $0xf20] sm:$0xff]
        %v2502 = vld [vmem:[#allocation4 + $0xf28] sm:$0xff]
        %v2503 = vld [vmem:[#allocation4 + $0xf30] sm:$0xff]
        %v2504 = vld [vmem:[#allocation4 + $0xf38] sm:$0xff]
        %v2505 = vld [vmem:[#allocation4 + $0xf40] sm:$0xff]
        %v2506 = vld [vmem:[#allocation4 + $0xf48] sm:$0xff]
        %v2507 = vld [vmem:[#allocation4 + $0xf50] sm:$0xff]
        %v2508 = vld [vmem:[#allocation4 + $0xf58] sm:$0xff]
        %v2509 = vld [vmem:[#allocation4 + $0xf60] sm:$0xff]
        %v2510 = vld [vmem:[#allocation4 + $0xf68] sm:$0xff]
        %v2511 = vld [vmem:[#allocation4 + $0xf70] sm:$0xff]
        %v2512 = vld [vmem:[#allocation4 + $0xf78] sm:$0xff]
        %v2513 = vld [vmem:[#allocation4 + $0xf80] sm:$0xff]
        %v2514 = vld [vmem:[#allocation4 + $0xf88] sm:$0xff]
        %v2515 = vld [vmem:[#allocation4 + $0xf90] sm:$0xff]
        %v2516 = vld [vmem:[#allocation4 + $0xf98] sm:$0xff]
        %v2517 = vld [vmem:[#allocation4 + $0xfa0] sm:$0xff]
        %v2518 = vld [vmem:[#allocation4 + $0xfa8] sm:$0xff]
        %v2519 = vld [vmem:[#allocation4 + $0xfb0] sm:$0xff]
        %v2520 = vld [vmem:[#allocation4 + $0xfb8] sm:$0xff]
        %v2521 = vld [vmem:[#allocation4 + $0xfc0] sm:$0xff]
        %v2522 = vld [vmem:[#allocation4 + $0xfc8] sm:$0xff]
        %v2523 = vld [vmem:[#allocation4 + $0xfd0] sm:$0xff]
        %v2524 = vld [vmem:[#allocation4 + $0xfd8] sm:$0xff]
        %v2525 = vld [vmem:[#allocation4 + $0xfe0] sm:$0xff]
        %v2526 = vld [vmem:[#allocation4 + $0xfe8] sm:$0xff]
        %v2527 = vld [vmem:[#allocation4 + $0xff0] sm:$0xff]
        %v2528 = vld [vmem:[#allocation4 + $0xff8] sm:$0xff]
        %v2593 = vunpack.c.l.b16 %v1953
        %v2594 = vunpack.c.h.b16 %v1953
        %v2595 = vunpack.c.l.b16 %v1954
        %v2596 = vunpack.c.h.b16 %v1954
        %v2597 = vunpack.c.l.b16 %v1955
        %v2598 = vunpack.c.h.b16 %v1955
        %v2599 = vunpack.c.l.b16 %v1956
        %v2600 = vunpack.c.h.b16 %v1956
        %v2601 = vunpack.c.l.b16 %v1957
        %v2602 = vunpack.c.h.b16 %v1957
        %v2603 = vunpack.c.l.b16 %v1958
        %v2604 = vunpack.c.h.b16 %v1958
        %v2605 = vunpack.c.l.b16 %v1959
        %v2606 = vunpack.c.h.b16 %v1959
        %v2607 = vunpack.c.l.b16 %v1960
        %v2608 = vunpack.c.h.b16 %v1960
        %v2609 = vunpack.c.l.b16 %v1961
        %v2610 = vunpack.c.h.b16 %v1961
        %v2611 = vunpack.c.l.b16 %v1962
        %v2612 = vunpack.c.h.b16 %v1962
        %v2613 = vunpack.c.l.b16 %v1963
        %v2614 = vunpack.c.h.b16 %v1963
        %v2615 = vunpack.c.l.b16 %v1964
        %v2616 = vunpack.c.h.b16 %v1964
        %v2617 = vunpack.c.l.b16 %v1965
        %v2618 = vunpack.c.h.b16 %v1965
        %v2619 = vunpack.c.l.b16 %v1966
        %v2620 = vunpack.c.h.b16 %v1966
        %v2621 = vunpack.c.l.b16 %v1967
        %v2622 = vunpack.c.h.b16 %v1967
        %v2623 = vunpack.c.l.b16 %v1968
        %v2624 = vunpack.c.h.b16 %v1968
        %v2625 = vunpack.c.l.b16 %v1969
        %v2626 = vunpack.c.h.b16 %v1969
        %v2627 = vunpack.c.l.b16 %v1970
        %v2628 = vunpack.c.h.b16 %v1970
        %v2629 = vunpack.c.l.b16 %v1971
        %v2630 = vunpack.c.h.b16 %v1971
        %v2631 = vunpack.c.l.b16 %v1972
        %v2632 = vunpack.c.h.b16 %v1972
        %v2633 = vunpack.c.l.b16 %v1973
        %v2634 = vunpack.c.h.b16 %v1973
        %v2635 = vunpack.c.l.b16 %v1974
        %v2636 = vunpack.c.h.b16 %v1974
        %v2637 = vunpack.c.l.b16 %v1975
        %v2638 = vunpack.c.h.b16 %v1975
        %v2639 = vunpack.c.l.b16 %v1976
        %v2640 = vunpack.c.h.b16 %v1976
        %v2641 = vunpack.c.l.b16 %v1977
        %v2642 = vunpack.c.h.b16 %v1977
        %v2643 = vunpack.c.l.b16 %v1978
        %v2644 = vunpack.c.h.b16 %v1978
        %v2645 = vunpack.c.l.b16 %v1979
        %v2646 = vunpack.c.h.b16 %v1979
        %v2647 = vunpack.c.l.b16 %v1980
        %v2648 = vunpack.c.h.b16 %v1980
        %v2649 = vunpack.c.l.b16 %v1981
        %v2650 = vunpack.c.h.b16 %v1981
        %v2651 = vunpack.c.l.b16 %v1982
        %v2652 = vunpack.c.h.b16 %v1982
        %v2653 = vunpack.c.l.b16 %v1983
        %v2654 = vunpack.c.h.b16 %v1983
        %v2655 = vunpack.c.l.b16 %v1984
        %v2656 = vunpack.c.h.b16 %v1984
        %v2657 = vunpack.c.l.b16 %v1985
        %v2658 = vunpack.c.h.b16 %v1985
        %v2659 = vunpack.c.l.b16 %v1986
        %v2660 = vunpack.c.h.b16 %v1986
        %v2661 = vunpack.c.l.b16 %v1987
        %v2662 = vunpack.c.h.b16 %v1987
        %v2663 = vunpack.c.l.b16 %v1988
        %v2664 = vunpack.c.h.b16 %v1988
        %v2665 = vunpack.c.l.b16 %v1989
        %v2666 = vunpack.c.h.b16 %v1989
        %v2667 = vunpack.c.l.b16 %v1990
        %v2668 = vunpack.c.h.b16 %v1990
        %v2669 = vunpack.c.l.b16 %v1991
        %v2670 = vunpack.c.h.b16 %v1991
        %v2671 = vunpack.c.l.b16 %v1992
        %v2672 = vunpack.c.h.b16 %v1992
        %v2673 = vunpack.c.l.b16 %v1993
        %v2674 = vunpack.c.h.b16 %v1993
        %v2675 = vunpack.c.l.b16 %v1994
        %v2676 = vunpack.c.h.b16 %v1994
        %v2677 = vunpack.c.l.b16 %v1995
        %v2678 = vunpack.c.h.b16 %v1995
        %v2679 = vunpack.c.l.b16 %v1996
        %v2680 = vunpack.c.h.b16 %v1996
        %v2681 = vunpack.c.l.b16 %v1997
        %v2682 = vunpack.c.h.b16 %v1997
        %v2683 = vunpack.c.l.b16 %v1998
        %v2684 = vunpack.c.h.b16 %v1998
        %v2685 = vunpack.c.l.b16 %v1999
        %v2686 = vunpack.c.h.b16 %v1999
        %v2687 = vunpack.c.l.b16 %v2000
        %v2688 = vunpack.c.h.b16 %v2000
        %v2689 = vunpack.c.l.b16 %v2001
        %v2690 = vunpack.c.h.b16 %v2001
        %v2691 = vunpack.c.l.b16 %v2002
        %v2692 = vunpack.c.h.b16 %v2002
        %v2693 = vunpack.c.l.b16 %v2003
        %v2694 = vunpack.c.h.b16 %v2003
        %v2695 = vunpack.c.l.b16 %v2004
        %v2696 = vunpack.c.h.b16 %v2004
        %v2697 = vunpack.c.l.b16 %v2005
        %v2698 = vunpack.c.h.b16 %v2005
        %v2699 = vunpack.c.l.b16 %v2006
        %v2700 = vunpack.c.h.b16 %v2006
        %v2701 = vunpack.c.l.b16 %v2007
        %v2702 = vunpack.c.h.b16 %v2007
        %v2703 = vunpack.c.l.b16 %v2008
        %v2704 = vunpack.c.h.b16 %v2008
        %v2705 = vunpack.c.l.b16 %v2009
        %v2706 = vunpack.c.h.b16 %v2009
        %v2707 = vunpack.c.l.b16 %v2010
        %v2708 = vunpack.c.h.b16 %v2010
        %v2709 = vunpack.c.l.b16 %v2011
        %v2710 = vunpack.c.h.b16 %v2011
        %v2711 = vunpack.c.l.b16 %v2012
        %v2712 = vunpack.c.h.b16 %v2012
        %v2713 = vunpack.c.l.b16 %v2013
        %v2714 = vunpack.c.h.b16 %v2013
        %v2715 = vunpack.c.l.b16 %v2014
        %v2716 = vunpack.c.h.b16 %v2014
        %v2717 = vunpack.c.l.b16 %v2015
        %v2718 = vunpack.c.h.b16 %v2015
        %v2719 = vunpack.c.l.b16 %v2016
        %v2720 = vunpack.c.h.b16 %v2016
        %v2721 = vpack.c.b16 %v2601, %v2593
        %v2722 = vpack.c.b16 %v2602, %v2594
        %v2723 = vpack.c.b16 %v2603, %v2595
        %v2724 = vpack.c.b16 %v2604, %v2596
        %v2725 = vpack.c.b16 %v2605, %v2597
        %v2726 = vpack.c.b16 %v2606, %v2598
        %v2727 = vpack.c.b16 %v2607, %v2599
        %v2728 = vpack.c.b16 %v2608, %v2600
        %v2729 = vpack.c.b16 %v2617, %v2609
        %v2730 = vpack.c.b16 %v2618, %v2610
        %v2731 = vpack.c.b16 %v2619, %v2611
        %v2732 = vpack.c.b16 %v2620, %v2612
        %v2733 = vpack.c.b16 %v2621, %v2613
        %v2734 = vpack.c.b16 %v2622, %v2614
        %v2735 = vpack.c.b16 %v2623, %v2615
        %v2736 = vpack.c.b16 %v2624, %v2616
        %v2737 = vpack.c.b16 %v2633, %v2625
        %v2738 = vpack.c.b16 %v2634, %v2626
        %v2739 = vpack.c.b16 %v2635, %v2627
        %v2740 = vpack.c.b16 %v2636, %v2628
        %v2741 = vpack.c.b16 %v2637, %v2629
        %v2742 = vpack.c.b16 %v2638, %v2630
        %v2743 = vpack.c.b16 %v2639, %v2631
        %v2744 = vpack.c.b16 %v2640, %v2632
        %v2745 = vpack.c.b16 %v2649, %v2641
        %v2746 = vpack.c.b16 %v2650, %v2642
        %v2747 = vpack.c.b16 %v2651, %v2643
        %v2748 = vpack.c.b16 %v2652, %v2644
        %v2749 = vpack.c.b16 %v2653, %v2645
        %v2750 = vpack.c.b16 %v2654, %v2646
        %v2751 = vpack.c.b16 %v2655, %v2647
        %v2752 = vpack.c.b16 %v2656, %v2648
        %v2753 = vpack.c.b16 %v2665, %v2657
        %v2754 = vpack.c.b16 %v2666, %v2658
        %v2755 = vpack.c.b16 %v2667, %v2659
        %v2756 = vpack.c.b16 %v2668, %v2660
        %v2757 = vpack.c.b16 %v2669, %v2661
        %v2758 = vpack.c.b16 %v2670, %v2662
        %v2759 = vpack.c.b16 %v2671, %v2663
        %v2760 = vpack.c.b16 %v2672, %v2664
        %v2761 = vpack.c.b16 %v2681, %v2673
        %v2762 = vpack.c.b16 %v2682, %v2674
        %v2763 = vpack.c.b16 %v2683, %v2675
        %v2764 = vpack.c.b16 %v2684, %v2676
        %v2765 = vpack.c.b16 %v2685, %v2677
        %v2766 = vpack.c.b16 %v2686, %v2678
        %v2767 = vpack.c.b16 %v2687, %v2679
        %v2768 = vpack.c.b16 %v2688, %v2680
        %v2769 = vpack.c.b16 %v2697, %v2689
        %v2770 = vpack.c.b16 %v2698, %v2690
        %v2771 = vpack.c.b16 %v2699, %v2691
        %v2772 = vpack.c.b16 %v2700, %v2692
        %v2773 = vpack.c.b16 %v2701, %v2693
        %v2774 = vpack.c.b16 %v2702, %v2694
        %v2775 = vpack.c.b16 %v2703, %v2695
        %v2776 = vpack.c.b16 %v2704, %v2696
        %v2777 = vpack.c.b16 %v2713, %v2705
        %v2778 = vpack.c.b16 %v2714, %v2706
        %v2779 = vpack.c.b16 %v2715, %v2707
        %v2780 = vpack.c.b16 %v2716, %v2708
        %v2781 = vpack.c.b16 %v2717, %v2709
        %v2782 = vpack.c.b16 %v2718, %v2710
        %v2783 = vpack.c.b16 %v2719, %v2711
        %v2784 = vpack.c.b16 %v2720, %v2712
        %v3361 = vunpack.c.l.b16 %v2017
        %v3362 = vunpack.c.h.b16 %v2017
        %v3363 = vunpack.c.l.b16 %v2018
        %v3364 = vunpack.c.h.b16 %v2018
        %v3365 = vunpack.c.l.b16 %v2019
        %v3366 = vunpack.c.h.b16 %v2019
        %v3367 = vunpack.c.l.b16 %v2020
        %v3368 = vunpack.c.h.b16 %v2020
        %v3369 = vunpack.c.l.b16 %v2021
        %v3370 = vunpack.c.h.b16 %v2021
        %v3371 = vunpack.c.l.b16 %v2022
        %v3372 = vunpack.c.h.b16 %v2022
        %v3373 = vunpack.c.l.b16 %v2023
        %v3374 = vunpack.c.h.b16 %v2023
        %v3375 = vunpack.c.l.b16 %v2024
        %v3376 = vunpack.c.h.b16 %v2024
        %v3377 = vunpack.c.l.b16 %v2025
        %v3378 = vunpack.c.h.b16 %v2025
        %v3379 = vunpack.c.l.b16 %v2026
        %v3380 = vunpack.c.h.b16 %v2026
        %v3381 = vunpack.c.l.b16 %v2027
        %v3382 = vunpack.c.h.b16 %v2027
        %v3383 = vunpack.c.l.b16 %v2028
        %v3384 = vunpack.c.h.b16 %v2028
        %v3385 = vunpack.c.l.b16 %v2029
        %v3386 = vunpack.c.h.b16 %v2029
        %v3387 = vunpack.c.l.b16 %v2030
        %v3388 = vunpack.c.h.b16 %v2030
        %v3389 = vunpack.c.l.b16 %v2031
        %v3390 = vunpack.c.h.b16 %v2031
        %v3391 = vunpack.c.l.b16 %v2032
        %v3392 = vunpack.c.h.b16 %v2032
        %v3393 = vunpack.c.l.b16 %v2033
        %v3394 = vunpack.c.h.b16 %v2033
        %v3395 = vunpack.c.l.b16 %v2034
        %v3396 = vunpack.c.h.b16 %v2034
        %v3397 = vunpack.c.l.b16 %v2035
        %v3398 = vunpack.c.h.b16 %v2035
        %v3399 = vunpack.c.l.b16 %v2036
        %v3400 = vunpack.c.h.b16 %v2036
        %v3401 = vunpack.c.l.b16 %v2037
        %v3402 = vunpack.c.h.b16 %v2037
        %v3403 = vunpack.c.l.b16 %v2038
        %v3404 = vunpack.c.h.b16 %v2038
        %v3405 = vunpack.c.l.b16 %v2039
        %v3406 = vunpack.c.h.b16 %v2039
        %v3407 = vunpack.c.l.b16 %v2040
        %v3408 = vunpack.c.h.b16 %v2040
        %v3409 = vunpack.c.l.b16 %v2041
        %v3410 = vunpack.c.h.b16 %v2041
        %v3411 = vunpack.c.l.b16 %v2042
        %v3412 = vunpack.c.h.b16 %v2042
        %v3413 = vunpack.c.l.b16 %v2043
        %v3414 = vunpack.c.h.b16 %v2043
        %v3415 = vunpack.c.l.b16 %v2044
        %v3416 = vunpack.c.h.b16 %v2044
        %v3417 = vunpack.c.l.b16 %v2045
        %v3418 = vunpack.c.h.b16 %v2045
        %v3419 = vunpack.c.l.b16 %v2046
        %v3420 = vunpack.c.h.b16 %v2046
        %v3421 = vunpack.c.l.b16 %v2047
        %v3422 = vunpack.c.h.b16 %v2047
        %v3423 = vunpack.c.l.b16 %v2048
        %v3424 = vunpack.c.h.b16 %v2048
        %v3425 = vunpack.c.l.b16 %v2049
        %v3426 = vunpack.c.h.b16 %v2049
        %v3427 = vunpack.c.l.b16 %v2050
        %v3428 = vunpack.c.h.b16 %v2050
        %v3429 = vunpack.c.l.b16 %v2051
        %v3430 = vunpack.c.h.b16 %v2051
        %v3431 = vunpack.c.l.b16 %v2052
        %v3432 = vunpack.c.h.b16 %v2052
        %v3433 = vunpack.c.l.b16 %v2053
        %v3434 = vunpack.c.h.b16 %v2053
        %v3435 = vunpack.c.l.b16 %v2054
        %v3436 = vunpack.c.h.b16 %v2054
        %v3437 = vunpack.c.l.b16 %v2055
        %v3438 = vunpack.c.h.b16 %v2055
        %v3439 = vunpack.c.l.b16 %v2056
        %v3440 = vunpack.c.h.b16 %v2056
        %v3441 = vunpack.c.l.b16 %v2057
        %v3442 = vunpack.c.h.b16 %v2057
        %v3443 = vunpack.c.l.b16 %v2058
        %v3444 = vunpack.c.h.b16 %v2058
        %v3445 = vunpack.c.l.b16 %v2059
        %v3446 = vunpack.c.h.b16 %v2059
        %v3447 = vunpack.c.l.b16 %v2060
        %v3448 = vunpack.c.h.b16 %v2060
        %v3449 = vunpack.c.l.b16 %v2061
        %v3450 = vunpack.c.h.b16 %v2061
        %v3451 = vunpack.c.l.b16 %v2062
        %v3452 = vunpack.c.h.b16 %v2062
        %v3453 = vunpack.c.l.b16 %v2063
        %v3454 = vunpack.c.h.b16 %v2063
        %v3455 = vunpack.c.l.b16 %v2064
        %v3456 = vunpack.c.h.b16 %v2064
        %v3457 = vunpack.c.l.b16 %v2065
        %v3458 = vunpack.c.h.b16 %v2065
        %v3459 = vunpack.c.l.b16 %v2066
        %v3460 = vunpack.c.h.b16 %v2066
        %v3461 = vunpack.c.l.b16 %v2067
        %v3462 = vunpack.c.h.b16 %v2067
        %v3463 = vunpack.c.l.b16 %v2068
        %v3464 = vunpack.c.h.b16 %v2068
        %v3465 = vunpack.c.l.b16 %v2069
        %v3466 = vunpack.c.h.b16 %v2069
        %v3467 = vunpack.c.l.b16 %v2070
        %v3468 = vunpack.c.h.b16 %v2070
        %v3469 = vunpack.c.l.b16 %v2071
        %v3470 = vunpack.c.h.b16 %v2071
        %v3471 = vunpack.c.l.b16 %v2072
        %v3472 = vunpack.c.h.b16 %v2072
        %v3473 = vunpack.c.l.b16 %v2073
        %v3474 = vunpack.c.h.b16 %v2073
        %v3475 = vunpack.c.l.b16 %v2074
        %v3476 = vunpack.c.h.b16 %v2074
        %v3477 = vunpack.c.l.b16 %v2075
        %v3478 = vunpack.c.h.b16 %v2075
        %v3479 = vunpack.c.l.b16 %v2076
        %v3480 = vunpack.c.h.b16 %v2076
        %v3481 = vunpack.c.l.b16 %v2077
        %v3482 = vunpack.c.h.b16 %v2077
        %v3483 = vunpack.c.l.b16 %v2078
        %v3484 = vunpack.c.h.b16 %v2078
        %v3485 = vunpack.c.l.b16 %v2079
        %v3486 = vunpack.c.h.b16 %v2079
        %v3487 = vunpack.c.l.b16 %v2080
        %v3488 = vunpack.c.h.b16 %v2080
        %v3489 = vunpack.c.l.b16 %v2081
        %v3490 = vunpack.c.h.b16 %v2081
        %v3491 = vunpack.c.l.b16 %v2082
        %v3492 = vunpack.c.h.b16 %v2082
        %v3493 = vunpack.c.l.b16 %v2083
        %v3494 = vunpack.c.h.b16 %v2083
        %v3495 = vunpack.c.l.b16 %v2084
        %v3496 = vunpack.c.h.b16 %v2084
        %v3497 = vunpack.c.l.b16 %v2085
        %v3498 = vunpack.c.h.b16 %v2085
        %v3499 = vunpack.c.l.b16 %v2086
        %v3500 = vunpack.c.h.b16 %v2086
        %v3501 = vunpack.c.l.b16 %v2087
        %v3502 = vunpack.c.h.b16 %v2087
        %v3503 = vunpack.c.l.b16 %v2088
        %v3504 = vunpack.c.h.b16 %v2088
        %v3505 = vunpack.c.l.b16 %v2089
        %v3506 = vunpack.c.h.b16 %v2089
        %v3507 = vunpack.c.l.b16 %v2090
        %v3508 = vunpack.c.h.b16 %v2090
        %v3509 = vunpack.c.l.b16 %v2091
        %v3510 = vunpack.c.h.b16 %v2091
        %v3511 = vunpack.c.l.b16 %v2092
        %v3512 = vunpack.c.h.b16 %v2092
        %v3513 = vunpack.c.l.b16 %v2093
        %v3514 = vunpack.c.h.b16 %v2093
        %v3515 = vunpack.c.l.b16 %v2094
        %v3516 = vunpack.c.h.b16 %v2094
        %v3517 = vunpack.c.l.b16 %v2095
        %v3518 = vunpack.c.h.b16 %v2095
        %v3519 = vunpack.c.l.b16 %v2096
        %v3520 = vunpack.c.h.b16 %v2096
        %v3521 = vunpack.c.l.b16 %v2097
        %v3522 = vunpack.c.h.b16 %v2097
        %v3523 = vunpack.c.l.b16 %v2098
        %v3524 = vunpack.c.h.b16 %v2098
        %v3525 = vunpack.c.l.b16 %v2099
        %v3526 = vunpack.c.h.b16 %v2099
        %v3527 = vunpack.c.l.b16 %v2100
        %v3528 = vunpack.c.h.b16 %v2100
        %v3529 = vunpack.c.l.b16 %v2101
        %v3530 = vunpack.c.h.b16 %v2101
        %v3531 = vunpack.c.l.b16 %v2102
        %v3532 = vunpack.c.h.b16 %v2102
        %v3533 = vunpack.c.l.b16 %v2103
        %v3534 = vunpack.c.h.b16 %v2103
        %v3535 = vunpack.c.l.b16 %v2104
        %v3536 = vunpack.c.h.b16 %v2104
        %v3537 = vunpack.c.l.b16 %v2105
        %v3538 = vunpack.c.h.b16 %v2105
        %v3539 = vunpack.c.l.b16 %v2106
        %v3540 = vunpack.c.h.b16 %v2106
        %v3541 = vunpack.c.l.b16 %v2107
        %v3542 = vunpack.c.h.b16 %v2107
        %v3543 = vunpack.c.l.b16 %v2108
        %v3544 = vunpack.c.h.b16 %v2108
        %v3545 = vunpack.c.l.b16 %v2109
        %v3546 = vunpack.c.h.b16 %v2109
        %v3547 = vunpack.c.l.b16 %v2110
        %v3548 = vunpack.c.h.b16 %v2110
        %v3549 = vunpack.c.l.b16 %v2111
        %v3550 = vunpack.c.h.b16 %v2111
        %v3551 = vunpack.c.l.b16 %v2112
        %v3552 = vunpack.c.h.b16 %v2112
        %v3553 = vunpack.c.l.b16 %v2113
        %v3554 = vunpack.c.h.b16 %v2113
        %v3555 = vunpack.c.l.b16 %v2114
        %v3556 = vunpack.c.h.b16 %v2114
        %v3557 = vunpack.c.l.b16 %v2115
        %v3558 = vunpack.c.h.b16 %v2115
        %v3559 = vunpack.c.l.b16 %v2116
        %v3560 = vunpack.c.h.b16 %v2116
        %v3561 = vunpack.c.l.b16 %v2117
        %v3562 = vunpack.c.h.b16 %v2117
        %v3563 = vunpack.c.l.b16 %v2118
        %v3564 = vunpack.c.h.b16 %v2118
        %v3565 = vunpack.c.l.b16 %v2119
        %v3566 = vunpack.c.h.b16 %v2119
        %v3567 = vunpack.c.l.b16 %v2120
        %v3568 = vunpack.c.h.b16 %v2120
        %v3569 = vunpack.c.l.b16 %v2121
        %v3570 = vunpack.c.h.b16 %v2121
        %v3571 = vunpack.c.l.b16 %v2122
        %v3572 = vunpack.c.h.b16 %v2122
        %v3573 = vunpack.c.l.b16 %v2123
        %v3574 = vunpack.c.h.b16 %v2123
        %v3575 = vunpack.c.l.b16 %v2124
        %v3576 = vunpack.c.h.b16 %v2124
        %v3577 = vunpack.c.l.b16 %v2125
        %v3578 = vunpack.c.h.b16 %v2125
        %v3579 = vunpack.c.l.b16 %v2126
        %v3580 = vunpack.c.h.b16 %v2126
        %v3581 = vunpack.c.l.b16 %v2127
        %v3582 = vunpack.c.h.b16 %v2127
        %v3583 = vunpack.c.l.b16 %v2128
        %v3584 = vunpack.c.h.b16 %v2128
        %v3585 = vunpack.c.l.b16 %v2129
        %v3586 = vunpack.c.h.b16 %v2129
        %v3587 = vunpack.c.l.b16 %v2130
        %v3588 = vunpack.c.h.b16 %v2130
        %v3589 = vunpack.c.l.b16 %v2131
        %v3590 = vunpack.c.h.b16 %v2131
        %v3591 = vunpack.c.l.b16 %v2132
        %v3592 = vunpack.c.h.b16 %v2132
        %v3593 = vunpack.c.l.b16 %v2133
        %v3594 = vunpack.c.h.b16 %v2133
        %v3595 = vunpack.c.l.b16 %v2134
        %v3596 = vunpack.c.h.b16 %v2134
        %v3597 = vunpack.c.l.b16 %v2135
        %v3598 = vunpack.c.h.b16 %v2135
        %v3599 = vunpack.c.l.b16 %v2136
        %v3600 = vunpack.c.h.b16 %v2136
        %v3601 = vunpack.c.l.b16 %v2137
        %v3602 = vunpack.c.h.b16 %v2137
        %v3603 = vunpack.c.l.b16 %v2138
        %v3604 = vunpack.c.h.b16 %v2138
        %v3605 = vunpack.c.l.b16 %v2139
        %v3606 = vunpack.c.h.b16 %v2139
        %v3607 = vunpack.c.l.b16 %v2140
        %v3608 = vunpack.c.h.b16 %v2140
        %v3609 = vunpack.c.l.b16 %v2141
        %v3610 = vunpack.c.h.b16 %v2141
        %v3611 = vunpack.c.l.b16 %v2142
        %v3612 = vunpack.c.h.b16 %v2142
        %v3613 = vunpack.c.l.b16 %v2143
        %v3614 = vunpack.c.h.b16 %v2143
        %v3615 = vunpack.c.l.b16 %v2144
        %v3616 = vunpack.c.h.b16 %v2144
        %v3617 = vunpack.c.l.b16 %v2145
        %v3618 = vunpack.c.h.b16 %v2145
        %v3619 = vunpack.c.l.b16 %v2146
        %v3620 = vunpack.c.h.b16 %v2146
        %v3621 = vunpack.c.l.b16 %v2147
        %v3622 = vunpack.c.h.b16 %v2147
        %v3623 = vunpack.c.l.b16 %v2148
        %v3624 = vunpack.c.h.b16 %v2148
        %v3625 = vunpack.c.l.b16 %v2149
        %v3626 = vunpack.c.h.b16 %v2149
        %v3627 = vunpack.c.l.b16 %v2150
        %v3628 = vunpack.c.h.b16 %v2150
        %v3629 = vunpack.c.l.b16 %v2151
        %v3630 = vunpack.c.h.b16 %v2151
        %v3631 = vunpack.c.l.b16 %v2152
        %v3632 = vunpack.c.h.b16 %v2152
        %v3633 = vunpack.c.l.b16 %v2153
        %v3634 = vunpack.c.h.b16 %v2153
        %v3635 = vunpack.c.l.b16 %v2154
        %v3636 = vunpack.c.h.b16 %v2154
        %v3637 = vunpack.c.l.b16 %v2155
        %v3638 = vunpack.c.h.b16 %v2155
        %v3639 = vunpack.c.l.b16 %v2156
        %v3640 = vunpack.c.h.b16 %v2156
        %v3641 = vunpack.c.l.b16 %v2157
        %v3642 = vunpack.c.h.b16 %v2157
        %v3643 = vunpack.c.l.b16 %v2158
        %v3644 = vunpack.c.h.b16 %v2158
        %v3645 = vunpack.c.l.b16 %v2159
        %v3646 = vunpack.c.h.b16 %v2159
        %v3647 = vunpack.c.l.b16 %v2160
        %v3648 = vunpack.c.h.b16 %v2160
        %v3649 = vunpack.c.l.b16 %v2161
        %v3650 = vunpack.c.h.b16 %v2161
        %v3651 = vunpack.c.l.b16 %v2162
        %v3652 = vunpack.c.h.b16 %v2162
        %v3653 = vunpack.c.l.b16 %v2163
        %v3654 = vunpack.c.h.b16 %v2163
        %v3655 = vunpack.c.l.b16 %v2164
        %v3656 = vunpack.c.h.b16 %v2164
        %v3657 = vunpack.c.l.b16 %v2165
        %v3658 = vunpack.c.h.b16 %v2165
        %v3659 = vunpack.c.l.b16 %v2166
        %v3660 = vunpack.c.h.b16 %v2166
        %v3661 = vunpack.c.l.b16 %v2167
        %v3662 = vunpack.c.h.b16 %v2167
        %v3663 = vunpack.c.l.b16 %v2168
        %v3664 = vunpack.c.h.b16 %v2168
        %v3665 = vunpack.c.l.b16 %v2169
        %v3666 = vunpack.c.h.b16 %v2169
        %v3667 = vunpack.c.l.b16 %v2170
        %v3668 = vunpack.c.h.b16 %v2170
        %v3669 = vunpack.c.l.b16 %v2171
        %v3670 = vunpack.c.h.b16 %v2171
        %v3671 = vunpack.c.l.b16 %v2172
        %v3672 = vunpack.c.h.b16 %v2172
        %v3673 = vunpack.c.l.b16 %v2173
        %v3674 = vunpack.c.h.b16 %v2173
        %v3675 = vunpack.c.l.b16 %v2174
        %v3676 = vunpack.c.h.b16 %v2174
        %v3677 = vunpack.c.l.b16 %v2175
        %v3678 = vunpack.c.h.b16 %v2175
        %v3679 = vunpack.c.l.b16 %v2176
        %v3680 = vunpack.c.h.b16 %v2176
        %v3681 = vunpack.c.l.b16 %v2177
        %v3682 = vunpack.c.h.b16 %v2177
        %v3683 = vunpack.c.l.b16 %v2178
        %v3684 = vunpack.c.h.b16 %v2178
        %v3685 = vunpack.c.l.b16 %v2179
        %v3686 = vunpack.c.h.b16 %v2179
        %v3687 = vunpack.c.l.b16 %v2180
        %v3688 = vunpack.c.h.b16 %v2180
        %v3689 = vunpack.c.l.b16 %v2181
        %v3690 = vunpack.c.h.b16 %v2181
        %v3691 = vunpack.c.l.b16 %v2182
        %v3692 = vunpack.c.h.b16 %v2182
        %v3693 = vunpack.c.l.b16 %v2183
        %v3694 = vunpack.c.h.b16 %v2183
        %v3695 = vunpack.c.l.b16 %v2184
        %v3696 = vunpack.c.h.b16 %v2184
        %v3697 = vunpack.c.l.b16 %v2185
        %v3698 = vunpack.c.h.b16 %v2185
        %v3699 = vunpack.c.l.b16 %v2186
        %v3700 = vunpack.c.h.b16 %v2186
        %v3701 = vunpack.c.l.b16 %v2187
        %v3702 = vunpack.c.h.b16 %v2187
        %v3703 = vunpack.c.l.b16 %v2188
        %v3704 = vunpack.c.h.b16 %v2188
        %v3705 = vunpack.c.l.b16 %v2189
        %v3706 = vunpack.c.h.b16 %v2189
        %v3707 = vunpack.c.l.b16 %v2190
        %v3708 = vunpack.c.h.b16 %v2190
        %v3709 = vunpack.c.l.b16 %v2191
        %v3710 = vunpack.c.h.b16 %v2191
        %v3711 = vunpack.c.l.b16 %v2192
        %v3712 = vunpack.c.h.b16 %v2192
        %v3713 = vunpack.c.l.b16 %v2193
        %v3714 = vunpack.c.h.b16 %v2193
        %v3715 = vunpack.c.l.b16 %v2194
        %v3716 = vunpack.c.h.b16 %v2194
        %v3717 = vunpack.c.l.b16 %v2195
        %v3718 = vunpack.c.h.b16 %v2195
        %v3719 = vunpack.c.l.b16 %v2196
        %v3720 = vunpack.c.h.b16 %v2196
        %v3721 = vunpack.c.l.b16 %v2197
        %v3722 = vunpack.c.h.b16 %v2197
        %v3723 = vunpack.c.l.b16 %v2198
        %v3724 = vunpack.c.h.b16 %v2198
        %v3725 = vunpack.c.l.b16 %v2199
        %v3726 = vunpack.c.h.b16 %v2199
        %v3727 = vunpack.c.l.b16 %v2200
        %v3728 = vunpack.c.h.b16 %v2200
        %v3729 = vunpack.c.l.b16 %v2201
        %v3730 = vunpack.c.h.b16 %v2201
        %v3731 = vunpack.c.l.b16 %v2202
        %v3732 = vunpack.c.h.b16 %v2202
        %v3733 = vunpack.c.l.b16 %v2203
        %v3734 = vunpack.c.h.b16 %v2203
        %v3735 = vunpack.c.l.b16 %v2204
        %v3736 = vunpack.c.h.b16 %v2204
        %v3737 = vunpack.c.l.b16 %v2205
        %v3738 = vunpack.c.h.b16 %v2205
        %v3739 = vunpack.c.l.b16 %v2206
        %v3740 = vunpack.c.h.b16 %v2206
        %v3741 = vunpack.c.l.b16 %v2207
        %v3742 = vunpack.c.h.b16 %v2207
        %v3743 = vunpack.c.l.b16 %v2208
        %v3744 = vunpack.c.h.b16 %v2208
        %v3745 = vunpack.c.l.b16 %v2209
        %v3746 = vunpack.c.h.b16 %v2209
        %v3747 = vunpack.c.l.b16 %v2210
        %v3748 = vunpack.c.h.b16 %v2210
        %v3749 = vunpack.c.l.b16 %v2211
        %v3750 = vunpack.c.h.b16 %v2211
        %v3751 = vunpack.c.l.b16 %v2212
        %v3752 = vunpack.c.h.b16 %v2212
        %v3753 = vunpack.c.l.b16 %v2213
        %v3754 = vunpack.c.h.b16 %v2213
        %v3755 = vunpack.c.l.b16 %v2214
        %v3756 = vunpack.c.h.b16 %v2214
        %v3757 = vunpack.c.l.b16 %v2215
        %v3758 = vunpack.c.h.b16 %v2215
        %v3759 = vunpack.c.l.b16 %v2216
        %v3760 = vunpack.c.h.b16 %v2216
        %v3761 = vunpack.c.l.b16 %v2217
        %v3762 = vunpack.c.h.b16 %v2217
        %v3763 = vunpack.c.l.b16 %v2218
        %v3764 = vunpack.c.h.b16 %v2218
        %v3765 = vunpack.c.l.b16 %v2219
        %v3766 = vunpack.c.h.b16 %v2219
        %v3767 = vunpack.c.l.b16 %v2220
        %v3768 = vunpack.c.h.b16 %v2220
        %v3769 = vunpack.c.l.b16 %v2221
        %v3770 = vunpack.c.h.b16 %v2221
        %v3771 = vunpack.c.l.b16 %v2222
        %v3772 = vunpack.c.h.b16 %v2222
        %v3773 = vunpack.c.l.b16 %v2223
        %v3774 = vunpack.c.h.b16 %v2223
        %v3775 = vunpack.c.l.b16 %v2224
        %v3776 = vunpack.c.h.b16 %v2224
        %v3777 = vunpack.c.l.b16 %v2225
        %v3778 = vunpack.c.h.b16 %v2225
        %v3779 = vunpack.c.l.b16 %v2226
        %v3780 = vunpack.c.h.b16 %v2226
        %v3781 = vunpack.c.l.b16 %v2227
        %v3782 = vunpack.c.h.b16 %v2227
        %v3783 = vunpack.c.l.b16 %v2228
        %v3784 = vunpack.c.h.b16 %v2228
        %v3785 = vunpack.c.l.b16 %v2229
        %v3786 = vunpack.c.h.b16 %v2229
        %v3787 = vunpack.c.l.b16 %v2230
        %v3788 = vunpack.c.h.b16 %v2230
        %v3789 = vunpack.c.l.b16 %v2231
        %v3790 = vunpack.c.h.b16 %v2231
        %v3791 = vunpack.c.l.b16 %v2232
        %v3792 = vunpack.c.h.b16 %v2232
        %v3793 = vunpack.c.l.b16 %v2233
        %v3794 = vunpack.c.h.b16 %v2233
        %v3795 = vunpack.c.l.b16 %v2234
        %v3796 = vunpack.c.h.b16 %v2234
        %v3797 = vunpack.c.l.b16 %v2235
        %v3798 = vunpack.c.h.b16 %v2235
        %v3799 = vunpack.c.l.b16 %v2236
        %v3800 = vunpack.c.h.b16 %v2236
        %v3801 = vunpack.c.l.b16 %v2237
        %v3802 = vunpack.c.h.b16 %v2237
        %v3803 = vunpack.c.l.b16 %v2238
        %v3804 = vunpack.c.h.b16 %v2238
        %v3805 = vunpack.c.l.b16 %v2239
        %v3806 = vunpack.c.h.b16 %v2239
        %v3807 = vunpack.c.l.b16 %v2240
        %v3808 = vunpack.c.h.b16 %v2240
        %v3809 = vunpack.c.l.b16 %v2241
        %v3810 = vunpack.c.h.b16 %v2241
        %v3811 = vunpack.c.l.b16 %v2242
        %v3812 = vunpack.c.h.b16 %v2242
        %v3813 = vunpack.c.l.b16 %v2243
        %v3814 = vunpack.c.h.b16 %v2243
        %v3815 = vunpack.c.l.b16 %v2244
        %v3816 = vunpack.c.h.b16 %v2244
        %v3817 = vunpack.c.l.b16 %v2245
        %v3818 = vunpack.c.h.b16 %v2245
        %v3819 = vunpack.c.l.b16 %v2246
        %v3820 = vunpack.c.h.b16 %v2246
        %v3821 = vunpack.c.l.b16 %v2247
        %v3822 = vunpack.c.h.b16 %v2247
        %v3823 = vunpack.c.l.b16 %v2248
        %v3824 = vunpack.c.h.b16 %v2248
        %v3825 = vunpack.c.l.b16 %v2249
        %v3826 = vunpack.c.h.b16 %v2249
        %v3827 = vunpack.c.l.b16 %v2250
        %v3828 = vunpack.c.h.b16 %v2250
        %v3829 = vunpack.c.l.b16 %v2251
        %v3830 = vunpack.c.h.b16 %v2251
        %v3831 = vunpack.c.l.b16 %v2252
        %v3832 = vunpack.c.h.b16 %v2252
        %v3833 = vunpack.c.l.b16 %v2253
        %v3834 = vunpack.c.h.b16 %v2253
        %v3835 = vunpack.c.l.b16 %v2254
        %v3836 = vunpack.c.h.b16 %v2254
        %v3837 = vunpack.c.l.b16 %v2255
        %v3838 = vunpack.c.h.b16 %v2255
        %v3839 = vunpack.c.l.b16 %v2256
        %v3840 = vunpack.c.h.b16 %v2256
        %v3841 = vunpack.c.l.b16 %v2257
        %v3842 = vunpack.c.h.b16 %v2257
        %v3843 = vunpack.c.l.b16 %v2258
        %v3844 = vunpack.c.h.b16 %v2258
        %v3845 = vunpack.c.l.b16 %v2259
        %v3846 = vunpack.c.h.b16 %v2259
        %v3847 = vunpack.c.l.b16 %v2260
        %v3848 = vunpack.c.h.b16 %v2260
        %v3849 = vunpack.c.l.b16 %v2261
        %v3850 = vunpack.c.h.b16 %v2261
        %v3851 = vunpack.c.l.b16 %v2262
        %v3852 = vunpack.c.h.b16 %v2262
        %v3853 = vunpack.c.l.b16 %v2263
        %v3854 = vunpack.c.h.b16 %v2263
        %v3855 = vunpack.c.l.b16 %v2264
        %v3856 = vunpack.c.h.b16 %v2264
        %v3857 = vunpack.c.l.b16 %v2265
        %v3858 = vunpack.c.h.b16 %v2265
        %v3859 = vunpack.c.l.b16 %v2266
        %v3860 = vunpack.c.h.b16 %v2266
        %v3861 = vunpack.c.l.b16 %v2267
        %v3862 = vunpack.c.h.b16 %v2267
        %v3863 = vunpack.c.l.b16 %v2268
        %v3864 = vunpack.c.h.b16 %v2268
        %v3865 = vunpack.c.l.b16 %v2269
        %v3866 = vunpack.c.h.b16 %v2269
        %v3867 = vunpack.c.l.b16 %v2270
        %v3868 = vunpack.c.h.b16 %v2270
        %v3869 = vunpack.c.l.b16 %v2271
        %v3870 = vunpack.c.h.b16 %v2271
        %v3871 = vunpack.c.l.b16 %v2272
        %v3872 = vunpack.c.h.b16 %v2272
        %v3873 = vunpack.c.l.b16 %v2273
        %v3874 = vunpack.c.h.b16 %v2273
        %v3875 = vunpack.c.l.b16 %v2274
        %v3876 = vunpack.c.h.b16 %v2274
        %v3877 = vunpack.c.l.b16 %v2275
        %v3878 = vunpack.c.h.b16 %v2275
        %v3879 = vunpack.c.l.b16 %v2276
        %v3880 = vunpack.c.h.b16 %v2276
        %v3881 = vunpack.c.l.b16 %v2277
        %v3882 = vunpack.c.h.b16 %v2277
        %v3883 = vunpack.c.l.b16 %v2278
        %v3884 = vunpack.c.h.b16 %v2278
        %v3885 = vunpack.c.l.b16 %v2279
        %v3886 = vunpack.c.h.b16 %v2279
        %v3887 = vunpack.c.l.b16 %v2280
        %v3888 = vunpack.c.h.b16 %v2280
        %v3889 = vunpack.c.l.b16 %v2281
        %v3890 = vunpack.c.h.b16 %v2281
        %v3891 = vunpack.c.l.b16 %v2282
        %v3892 = vunpack.c.h.b16 %v2282
        %v3893 = vunpack.c.l.b16 %v2283
        %v3894 = vunpack.c.h.b16 %v2283
        %v3895 = vunpack.c.l.b16 %v2284
        %v3896 = vunpack.c.h.b16 %v2284
        %v3897 = vunpack.c.l.b16 %v2285
        %v3898 = vunpack.c.h.b16 %v2285
        %v3899 = vunpack.c.l.b16 %v2286
        %v3900 = vunpack.c.h.b16 %v2286
        %v3901 = vunpack.c.l.b16 %v2287
        %v3902 = vunpack.c.h.b16 %v2287
        %v3903 = vunpack.c.l.b16 %v2288
        %v3904 = vunpack.c.h.b16 %v2288
        %v3905 = vunpack.c.l.b16 %v2289
        %v3906 = vunpack.c.h.b16 %v2289
        %v3907 = vunpack.c.l.b16 %v2290
        %v3908 = vunpack.c.h.b16 %v2290
        %v3909 = vunpack.c.l.b16 %v2291
        %v3910 = vunpack.c.h.b16 %v2291
        %v3911 = vunpack.c.l.b16 %v2292
        %v3912 = vunpack.c.h.b16 %v2292
        %v3913 = vunpack.c.l.b16 %v2293
        %v3914 = vunpack.c.h.b16 %v2293
        %v3915 = vunpack.c.l.b16 %v2294
        %v3916 = vunpack.c.h.b16 %v2294
        %v3917 = vunpack.c.l.b16 %v2295
        %v3918 = vunpack.c.h.b16 %v2295
        %v3919 = vunpack.c.l.b16 %v2296
        %v3920 = vunpack.c.h.b16 %v2296
        %v3921 = vunpack.c.l.b16 %v2297
        %v3922 = vunpack.c.h.b16 %v2297
        %v3923 = vunpack.c.l.b16 %v2298
        %v3924 = vunpack.c.h.b16 %v2298
        %v3925 = vunpack.c.l.b16 %v2299
        %v3926 = vunpack.c.h.b16 %v2299
        %v3927 = vunpack.c.l.b16 %v2300
        %v3928 = vunpack.c.h.b16 %v2300
        %v3929 = vunpack.c.l.b16 %v2301
        %v3930 = vunpack.c.h.b16 %v2301
        %v3931 = vunpack.c.l.b16 %v2302
        %v3932 = vunpack.c.h.b16 %v2302
        %v3933 = vunpack.c.l.b16 %v2303
        %v3934 = vunpack.c.h.b16 %v2303
        %v3935 = vunpack.c.l.b16 %v2304
        %v3936 = vunpack.c.h.b16 %v2304
        %v3937 = vunpack.c.l.b16 %v2305
        %v3938 = vunpack.c.h.b16 %v2305
        %v3939 = vunpack.c.l.b16 %v2306
        %v3940 = vunpack.c.h.b16 %v2306
        %v3941 = vunpack.c.l.b16 %v2307
        %v3942 = vunpack.c.h.b16 %v2307
        %v3943 = vunpack.c.l.b16 %v2308
        %v3944 = vunpack.c.h.b16 %v2308
        %v3945 = vunpack.c.l.b16 %v2309
        %v3946 = vunpack.c.h.b16 %v2309
        %v3947 = vunpack.c.l.b16 %v2310
        %v3948 = vunpack.c.h.b16 %v2310
        %v3949 = vunpack.c.l.b16 %v2311
        %v3950 = vunpack.c.h.b16 %v2311
        %v3951 = vunpack.c.l.b16 %v2312
        %v3952 = vunpack.c.h.b16 %v2312
        %v3953 = vunpack.c.l.b16 %v2313
        %v3954 = vunpack.c.h.b16 %v2313
        %v3955 = vunpack.c.l.b16 %v2314
        %v3956 = vunpack.c.h.b16 %v2314
        %v3957 = vunpack.c.l.b16 %v2315
        %v3958 = vunpack.c.h.b16 %v2315
        %v3959 = vunpack.c.l.b16 %v2316
        %v3960 = vunpack.c.h.b16 %v2316
        %v3961 = vunpack.c.l.b16 %v2317
        %v3962 = vunpack.c.h.b16 %v2317
        %v3963 = vunpack.c.l.b16 %v2318
        %v3964 = vunpack.c.h.b16 %v2318
        %v3965 = vunpack.c.l.b16 %v2319
        %v3966 = vunpack.c.h.b16 %v2319
        %v3967 = vunpack.c.l.b16 %v2320
        %v3968 = vunpack.c.h.b16 %v2320
        %v3969 = vunpack.c.l.b16 %v2321
        %v3970 = vunpack.c.h.b16 %v2321
        %v3971 = vunpack.c.l.b16 %v2322
        %v3972 = vunpack.c.h.b16 %v2322
        %v3973 = vunpack.c.l.b16 %v2323
        %v3974 = vunpack.c.h.b16 %v2323
        %v3975 = vunpack.c.l.b16 %v2324
        %v3976 = vunpack.c.h.b16 %v2324
        %v3977 = vunpack.c.l.b16 %v2325
        %v3978 = vunpack.c.h.b16 %v2325
        %v3979 = vunpack.c.l.b16 %v2326
        %v3980 = vunpack.c.h.b16 %v2326
        %v3981 = vunpack.c.l.b16 %v2327
        %v3982 = vunpack.c.h.b16 %v2327
        %v3983 = vunpack.c.l.b16 %v2328
        %v3984 = vunpack.c.h.b16 %v2328
        %v3985 = vunpack.c.l.b16 %v2329
        %v3986 = vunpack.c.h.b16 %v2329
        %v3987 = vunpack.c.l.b16 %v2330
        %v3988 = vunpack.c.h.b16 %v2330
        %v3989 = vunpack.c.l.b16 %v2331
        %v3990 = vunpack.c.h.b16 %v2331
        %v3991 = vunpack.c.l.b16 %v2332
        %v3992 = vunpack.c.h.b16 %v2332
        %v3993 = vunpack.c.l.b16 %v2333
        %v3994 = vunpack.c.h.b16 %v2333
        %v3995 = vunpack.c.l.b16 %v2334
        %v3996 = vunpack.c.h.b16 %v2334
        %v3997 = vunpack.c.l.b16 %v2335
        %v3998 = vunpack.c.h.b16 %v2335
        %v3999 = vunpack.c.l.b16 %v2336
        %v4000 = vunpack.c.h.b16 %v2336
        %v4001 = vunpack.c.l.b16 %v2337
        %v4002 = vunpack.c.h.b16 %v2337
        %v4003 = vunpack.c.l.b16 %v2338
        %v4004 = vunpack.c.h.b16 %v2338
        %v4005 = vunpack.c.l.b16 %v2339
        %v4006 = vunpack.c.h.b16 %v2339
        %v4007 = vunpack.c.l.b16 %v2340
        %v4008 = vunpack.c.h.b16 %v2340
        %v4009 = vunpack.c.l.b16 %v2341
        %v4010 = vunpack.c.h.b16 %v2341
        %v4011 = vunpack.c.l.b16 %v2342
        %v4012 = vunpack.c.h.b16 %v2342
        %v4013 = vunpack.c.l.b16 %v2343
        %v4014 = vunpack.c.h.b16 %v2343
        %v4015 = vunpack.c.l.b16 %v2344
        %v4016 = vunpack.c.h.b16 %v2344
        %v4017 = vunpack.c.l.b16 %v2345
        %v4018 = vunpack.c.h.b16 %v2345
        %v4019 = vunpack.c.l.b16 %v2346
        %v4020 = vunpack.c.h.b16 %v2346
        %v4021 = vunpack.c.l.b16 %v2347
        %v4022 = vunpack.c.h.b16 %v2347
        %v4023 = vunpack.c.l.b16 %v2348
        %v4024 = vunpack.c.h.b16 %v2348
        %v4025 = vunpack.c.l.b16 %v2349
        %v4026 = vunpack.c.h.b16 %v2349
        %v4027 = vunpack.c.l.b16 %v2350
        %v4028 = vunpack.c.h.b16 %v2350
        %v4029 = vunpack.c.l.b16 %v2351
        %v4030 = vunpack.c.h.b16 %v2351
        %v4031 = vunpack.c.l.b16 %v2352
        %v4032 = vunpack.c.h.b16 %v2352
        %v4033 = vunpack.c.l.b16 %v2353
        %v4034 = vunpack.c.h.b16 %v2353
        %v4035 = vunpack.c.l.b16 %v2354
        %v4036 = vunpack.c.h.b16 %v2354
        %v4037 = vunpack.c.l.b16 %v2355
        %v4038 = vunpack.c.h.b16 %v2355
        %v4039 = vunpack.c.l.b16 %v2356
        %v4040 = vunpack.c.h.b16 %v2356
        %v4041 = vunpack.c.l.b16 %v2357
        %v4042 = vunpack.c.h.b16 %v2357
        %v4043 = vunpack.c.l.b16 %v2358
        %v4044 = vunpack.c.h.b16 %v2358
        %v4045 = vunpack.c.l.b16 %v2359
        %v4046 = vunpack.c.h.b16 %v2359
        %v4047 = vunpack.c.l.b16 %v2360
        %v4048 = vunpack.c.h.b16 %v2360
        %v4049 = vunpack.c.l.b16 %v2361
        %v4050 = vunpack.c.h.b16 %v2361
        %v4051 = vunpack.c.l.b16 %v2362
        %v4052 = vunpack.c.h.b16 %v2362
        %v4053 = vunpack.c.l.b16 %v2363
        %v4054 = vunpack.c.h.b16 %v2363
        %v4055 = vunpack.c.l.b16 %v2364
        %v4056 = vunpack.c.h.b16 %v2364
        %v4057 = vunpack.c.l.b16 %v2365
        %v4058 = vunpack.c.h.b16 %v2365
        %v4059 = vunpack.c.l.b16 %v2366
        %v4060 = vunpack.c.h.b16 %v2366
        %v4061 = vunpack.c.l.b16 %v2367
        %v4062 = vunpack.c.h.b16 %v2367
        %v4063 = vunpack.c.l.b16 %v2368
        %v4064 = vunpack.c.h.b16 %v2368
        %v4065 = vunpack.c.l.b16 %v2369
        %v4066 = vunpack.c.h.b16 %v2369
        %v4067 = vunpack.c.l.b16 %v2370
        %v4068 = vunpack.c.h.b16 %v2370
        %v4069 = vunpack.c.l.b16 %v2371
        %v4070 = vunpack.c.h.b16 %v2371
        %v4071 = vunpack.c.l.b16 %v2372
        %v4072 = vunpack.c.h.b16 %v2372
        %v4073 = vunpack.c.l.b16 %v2373
        %v4074 = vunpack.c.h.b16 %v2373
        %v4075 = vunpack.c.l.b16 %v2374
        %v4076 = vunpack.c.h.b16 %v2374
        %v4077 = vunpack.c.l.b16 %v2375
        %v4078 = vunpack.c.h.b16 %v2375
        %v4079 = vunpack.c.l.b16 %v2376
        %v4080 = vunpack.c.h.b16 %v2376
        %v4081 = vunpack.c.l.b16 %v2377
        %v4082 = vunpack.c.h.b16 %v2377
        %v4083 = vunpack.c.l.b16 %v2378
        %v4084 = vunpack.c.h.b16 %v2378
        %v4085 = vunpack.c.l.b16 %v2379
        %v4086 = vunpack.c.h.b16 %v2379
        %v4087 = vunpack.c.l.b16 %v2380
        %v4088 = vunpack.c.h.b16 %v2380
        %v4089 = vunpack.c.l.b16 %v2381
        %v4090 = vunpack.c.h.b16 %v2381
        %v4091 = vunpack.c.l.b16 %v2382
        %v4092 = vunpack.c.h.b16 %v2382
        %v4093 = vunpack.c.l.b16 %v2383
        %v4094 = vunpack.c.h.b16 %v2383
        %v4095 = vunpack.c.l.b16 %v2384
        %v4096 = vunpack.c.h.b16 %v2384
        %v4097 = vunpack.c.l.b16 %v2385
        %v4098 = vunpack.c.h.b16 %v2385
        %v4099 = vunpack.c.l.b16 %v2386
        %v4100 = vunpack.c.h.b16 %v2386
        %v4101 = vunpack.c.l.b16 %v2387
        %v4102 = vunpack.c.h.b16 %v2387
        %v4103 = vunpack.c.l.b16 %v2388
        %v4104 = vunpack.c.h.b16 %v2388
        %v4105 = vunpack.c.l.b16 %v2389
        %v4106 = vunpack.c.h.b16 %v2389
        %v4107 = vunpack.c.l.b16 %v2390
        %v4108 = vunpack.c.h.b16 %v2390
        %v4109 = vunpack.c.l.b16 %v2391
        %v4110 = vunpack.c.h.b16 %v2391
        %v4111 = vunpack.c.l.b16 %v2392
        %v4112 = vunpack.c.h.b16 %v2392
        %v4113 = vunpack.c.l.b16 %v2393
        %v4114 = vunpack.c.h.b16 %v2393
        %v4115 = vunpack.c.l.b16 %v2394
        %v4116 = vunpack.c.h.b16 %v2394
        %v4117 = vunpack.c.l.b16 %v2395
        %v4118 = vunpack.c.h.b16 %v2395
        %v4119 = vunpack.c.l.b16 %v2396
        %v4120 = vunpack.c.h.b16 %v2396
        %v4121 = vunpack.c.l.b16 %v2397
        %v4122 = vunpack.c.h.b16 %v2397
        %v4123 = vunpack.c.l.b16 %v2398
        %v4124 = vunpack.c.h.b16 %v2398
        %v4125 = vunpack.c.l.b16 %v2399
        %v4126 = vunpack.c.h.b16 %v2399
        %v4127 = vunpack.c.l.b16 %v2400
        %v4128 = vunpack.c.h.b16 %v2400
        %v4129 = vunpack.c.l.b16 %v2401
        %v4130 = vunpack.c.h.b16 %v2401
        %v4131 = vunpack.c.l.b16 %v2402
        %v4132 = vunpack.c.h.b16 %v2402
        %v4133 = vunpack.c.l.b16 %v2403
        %v4134 = vunpack.c.h.b16 %v2403
        %v4135 = vunpack.c.l.b16 %v2404
        %v4136 = vunpack.c.h.b16 %v2404
        %v4137 = vunpack.c.l.b16 %v2405
        %v4138 = vunpack.c.h.b16 %v2405
        %v4139 = vunpack.c.l.b16 %v2406
        %v4140 = vunpack.c.h.b16 %v2406
        %v4141 = vunpack.c.l.b16 %v2407
        %v4142 = vunpack.c.h.b16 %v2407
        %v4143 = vunpack.c.l.b16 %v2408
        %v4144 = vunpack.c.h.b16 %v2408
        %v4145 = vunpack.c.l.b16 %v2409
        %v4146 = vunpack.c.h.b16 %v2409
        %v4147 = vunpack.c.l.b16 %v2410
        %v4148 = vunpack.c.h.b16 %v2410
        %v4149 = vunpack.c.l.b16 %v2411
        %v4150 = vunpack.c.h.b16 %v2411
        %v4151 = vunpack.c.l.b16 %v2412
        %v4152 = vunpack.c.h.b16 %v2412
        %v4153 = vunpack.c.l.b16 %v2413
        %v4154 = vunpack.c.h.b16 %v2413
        %v4155 = vunpack.c.l.b16 %v2414
        %v4156 = vunpack.c.h.b16 %v2414
        %v4157 = vunpack.c.l.b16 %v2415
        %v4158 = vunpack.c.h.b16 %v2415
        %v4159 = vunpack.c.l.b16 %v2416
        %v4160 = vunpack.c.h.b16 %v2416
        %v4161 = vunpack.c.l.b16 %v2417
        %v4162 = vunpack.c.h.b16 %v2417
        %v4163 = vunpack.c.l.b16 %v2418
        %v4164 = vunpack.c.h.b16 %v2418
        %v4165 = vunpack.c.l.b16 %v2419
        %v4166 = vunpack.c.h.b16 %v2419
        %v4167 = vunpack.c.l.b16 %v2420
        %v4168 = vunpack.c.h.b16 %v2420
        %v4169 = vunpack.c.l.b16 %v2421
        %v4170 = vunpack.c.h.b16 %v2421
        %v4171 = vunpack.c.l.b16 %v2422
        %v4172 = vunpack.c.h.b16 %v2422
        %v4173 = vunpack.c.l.b16 %v2423
        %v4174 = vunpack.c.h.b16 %v2423
        %v4175 = vunpack.c.l.b16 %v2424
        %v4176 = vunpack.c.h.b16 %v2424
        %v4177 = vunpack.c.l.b16 %v2425
        %v4178 = vunpack.c.h.b16 %v2425
        %v4179 = vunpack.c.l.b16 %v2426
        %v4180 = vunpack.c.h.b16 %v2426
        %v4181 = vunpack.c.l.b16 %v2427
        %v4182 = vunpack.c.h.b16 %v2427
        %v4183 = vunpack.c.l.b16 %v2428
        %v4184 = vunpack.c.h.b16 %v2428
        %v4185 = vunpack.c.l.b16 %v2429
        %v4186 = vunpack.c.h.b16 %v2429
        %v4187 = vunpack.c.l.b16 %v2430
        %v4188 = vunpack.c.h.b16 %v2430
        %v4189 = vunpack.c.l.b16 %v2431
        %v4190 = vunpack.c.h.b16 %v2431
        %v4191 = vunpack.c.l.b16 %v2432
        %v4192 = vunpack.c.h.b16 %v2432
        %v4193 = vunpack.c.l.b16 %v2433
        %v4194 = vunpack.c.h.b16 %v2433
        %v4195 = vunpack.c.l.b16 %v2434
        %v4196 = vunpack.c.h.b16 %v2434
        %v4197 = vunpack.c.l.b16 %v2435
        %v4198 = vunpack.c.h.b16 %v2435
        %v4199 = vunpack.c.l.b16 %v2436
        %v4200 = vunpack.c.h.b16 %v2436
        %v4201 = vunpack.c.l.b16 %v2437
        %v4202 = vunpack.c.h.b16 %v2437
        %v4203 = vunpack.c.l.b16 %v2438
        %v4204 = vunpack.c.h.b16 %v2438
        %v4205 = vunpack.c.l.b16 %v2439
        %v4206 = vunpack.c.h.b16 %v2439
        %v4207 = vunpack.c.l.b16 %v2440
        %v4208 = vunpack.c.h.b16 %v2440
        %v4209 = vunpack.c.l.b16 %v2441
        %v4210 = vunpack.c.h.b16 %v2441
        %v4211 = vunpack.c.l.b16 %v2442
        %v4212 = vunpack.c.h.b16 %v2442
        %v4213 = vunpack.c.l.b16 %v2443
        %v4214 = vunpack.c.h.b16 %v2443
        %v4215 = vunpack.c.l.b16 %v2444
        %v4216 = vunpack.c.h.b16 %v2444
        %v4217 = vunpack.c.l.b16 %v2445
        %v4218 = vunpack.c.h.b16 %v2445
        %v4219 = vunpack.c.l.b16 %v2446
        %v4220 = vunpack.c.h.b16 %v2446
        %v4221 = vunpack.c.l.b16 %v2447
        %v4222 = vunpack.c.h.b16 %v2447
        %v4223 = vunpack.c.l.b16 %v2448
        %v4224 = vunpack.c.h.b16 %v2448
        %v4225 = vunpack.c.l.b16 %v2449
        %v4226 = vunpack.c.h.b16 %v2449
        %v4227 = vunpack.c.l.b16 %v2450
        %v4228 = vunpack.c.h.b16 %v2450
        %v4229 = vunpack.c.l.b16 %v2451
        %v4230 = vunpack.c.h.b16 %v2451
        %v4231 = vunpack.c.l.b16 %v2452
        %v4232 = vunpack.c.h.b16 %v2452
        %v4233 = vunpack.c.l.b16 %v2453
        %v4234 = vunpack.c.h.b16 %v2453
        %v4235 = vunpack.c.l.b16 %v2454
        %v4236 = vunpack.c.h.b16 %v2454
        %v4237 = vunpack.c.l.b16 %v2455
        %v4238 = vunpack.c.h.b16 %v2455
        %v4239 = vunpack.c.l.b16 %v2456
        %v4240 = vunpack.c.h.b16 %v2456
        %v4241 = vunpack.c.l.b16 %v2457
        %v4242 = vunpack.c.h.b16 %v2457
        %v4243 = vunpack.c.l.b16 %v2458
        %v4244 = vunpack.c.h.b16 %v2458
        %v4245 = vunpack.c.l.b16 %v2459
        %v4246 = vunpack.c.h.b16 %v2459
        %v4247 = vunpack.c.l.b16 %v2460
        %v4248 = vunpack.c.h.b16 %v2460
        %v4249 = vunpack.c.l.b16 %v2461
        %v4250 = vunpack.c.h.b16 %v2461
        %v4251 = vunpack.c.l.b16 %v2462
        %v4252 = vunpack.c.h.b16 %v2462
        %v4253 = vunpack.c.l.b16 %v2463
        %v4254 = vunpack.c.h.b16 %v2463
        %v4255 = vunpack.c.l.b16 %v2464
        %v4256 = vunpack.c.h.b16 %v2464
        %v4257 = vunpack.c.l.b16 %v2465
        %v4258 = vunpack.c.h.b16 %v2465
        %v4259 = vunpack.c.l.b16 %v2466
        %v4260 = vunpack.c.h.b16 %v2466
        %v4261 = vunpack.c.l.b16 %v2467
        %v4262 = vunpack.c.h.b16 %v2467
        %v4263 = vunpack.c.l.b16 %v2468
        %v4264 = vunpack.c.h.b16 %v2468
        %v4265 = vunpack.c.l.b16 %v2469
        %v4266 = vunpack.c.h.b16 %v2469
        %v4267 = vunpack.c.l.b16 %v2470
        %v4268 = vunpack.c.h.b16 %v2470
        %v4269 = vunpack.c.l.b16 %v2471
        %v4270 = vunpack.c.h.b16 %v2471
        %v4271 = vunpack.c.l.b16 %v2472
        %v4272 = vunpack.c.h.b16 %v2472
        %v4273 = vunpack.c.l.b16 %v2473
        %v4274 = vunpack.c.h.b16 %v2473
        %v4275 = vunpack.c.l.b16 %v2474
        %v4276 = vunpack.c.h.b16 %v2474
        %v4277 = vunpack.c.l.b16 %v2475
        %v4278 = vunpack.c.h.b16 %v2475
        %v4279 = vunpack.c.l.b16 %v2476
        %v4280 = vunpack.c.h.b16 %v2476
        %v4281 = vunpack.c.l.b16 %v2477
        %v4282 = vunpack.c.h.b16 %v2477
        %v4283 = vunpack.c.l.b16 %v2478
        %v4284 = vunpack.c.h.b16 %v2478
        %v4285 = vunpack.c.l.b16 %v2479
        %v4286 = vunpack.c.h.b16 %v2479
        %v4287 = vunpack.c.l.b16 %v2480
        %v4288 = vunpack.c.h.b16 %v2480
        %v4289 = vunpack.c.l.b16 %v2481
        %v4290 = vunpack.c.h.b16 %v2481
        %v4291 = vunpack.c.l.b16 %v2482
        %v4292 = vunpack.c.h.b16 %v2482
        %v4293 = vunpack.c.l.b16 %v2483
        %v4294 = vunpack.c.h.b16 %v2483
        %v4295 = vunpack.c.l.b16 %v2484
        %v4296 = vunpack.c.h.b16 %v2484
        %v4297 = vunpack.c.l.b16 %v2485
        %v4298 = vunpack.c.h.b16 %v2485
        %v4299 = vunpack.c.l.b16 %v2486
        %v4300 = vunpack.c.h.b16 %v2486
        %v4301 = vunpack.c.l.b16 %v2487
        %v4302 = vunpack.c.h.b16 %v2487
        %v4303 = vunpack.c.l.b16 %v2488
        %v4304 = vunpack.c.h.b16 %v2488
        %v4305 = vunpack.c.l.b16 %v2489
        %v4306 = vunpack.c.h.b16 %v2489
        %v4307 = vunpack.c.l.b16 %v2490
        %v4308 = vunpack.c.h.b16 %v2490
        %v4309 = vunpack.c.l.b16 %v2491
        %v4310 = vunpack.c.h.b16 %v2491
        %v4311 = vunpack.c.l.b16 %v2492
        %v4312 = vunpack.c.h.b16 %v2492
        %v4313 = vunpack.c.l.b16 %v2493
        %v4314 = vunpack.c.h.b16 %v2493
        %v4315 = vunpack.c.l.b16 %v2494
        %v4316 = vunpack.c.h.b16 %v2494
        %v4317 = vunpack.c.l.b16 %v2495
        %v4318 = vunpack.c.h.b16 %v2495
        %v4319 = vunpack.c.l.b16 %v2496
        %v4320 = vunpack.c.h.b16 %v2496
        %v4321 = vunpack.c.l.b16 %v2497
        %v4322 = vunpack.c.h.b16 %v2497
        %v4323 = vunpack.c.l.b16 %v2498
        %v4324 = vunpack.c.h.b16 %v2498
        %v4325 = vunpack.c.l.b16 %v2499
        %v4326 = vunpack.c.h.b16 %v2499
        %v4327 = vunpack.c.l.b16 %v2500
        %v4328 = vunpack.c.h.b16 %v2500
        %v4329 = vunpack.c.l.b16 %v2501
        %v4330 = vunpack.c.h.b16 %v2501
        %v4331 = vunpack.c.l.b16 %v2502
        %v4332 = vunpack.c.h.b16 %v2502
        %v4333 = vunpack.c.l.b16 %v2503
        %v4334 = vunpack.c.h.b16 %v2503
        %v4335 = vunpack.c.l.b16 %v2504
        %v4336 = vunpack.c.h.b16 %v2504
        %v4337 = vunpack.c.l.b16 %v2505
        %v4338 = vunpack.c.h.b16 %v2505
        %v4339 = vunpack.c.l.b16 %v2506
        %v4340 = vunpack.c.h.b16 %v2506
        %v4341 = vunpack.c.l.b16 %v2507
        %v4342 = vunpack.c.h.b16 %v2507
        %v4343 = vunpack.c.l.b16 %v2508
        %v4344 = vunpack.c.h.b16 %v2508
        %v4345 = vunpack.c.l.b16 %v2509
        %v4346 = vunpack.c.h.b16 %v2509
        %v4347 = vunpack.c.l.b16 %v2510
        %v4348 = vunpack.c.h.b16 %v2510
        %v4349 = vunpack.c.l.b16 %v2511
        %v4350 = vunpack.c.h.b16 %v2511
        %v4351 = vunpack.c.l.b16 %v2512
        %v4352 = vunpack.c.h.b16 %v2512
        %v4353 = vunpack.c.l.b16 %v2513
        %v4354 = vunpack.c.h.b16 %v2513
        %v4355 = vunpack.c.l.b16 %v2514
        %v4356 = vunpack.c.h.b16 %v2514
        %v4357 = vunpack.c.l.b16 %v2515
        %v4358 = vunpack.c.h.b16 %v2515
        %v4359 = vunpack.c.l.b16 %v2516
        %v4360 = vunpack.c.h.b16 %v2516
        %v4361 = vunpack.c.l.b16 %v2517
        %v4362 = vunpack.c.h.b16 %v2517
        %v4363 = vunpack.c.l.b16 %v2518
        %v4364 = vunpack.c.h.b16 %v2518
        %v4365 = vunpack.c.l.b16 %v2519
        %v4366 = vunpack.c.h.b16 %v2519
        %v4367 = vunpack.c.l.b16 %v2520
        %v4368 = vunpack.c.h.b16 %v2520
        %v4369 = vunpack.c.l.b16 %v2521
        %v4370 = vunpack.c.h.b16 %v2521
        %v4371 = vunpack.c.l.b16 %v2522
        %v4372 = vunpack.c.h.b16 %v2522
        %v4373 = vunpack.c.l.b16 %v2523
        %v4374 = vunpack.c.h.b16 %v2523
        %v4375 = vunpack.c.l.b16 %v2524
        %v4376 = vunpack.c.h.b16 %v2524
        %v4377 = vunpack.c.l.b16 %v2525
        %v4378 = vunpack.c.h.b16 %v2525
        %v4379 = vunpack.c.l.b16 %v2526
        %v4380 = vunpack.c.h.b16 %v2526
        %v4381 = vunpack.c.l.b16 %v2527
        %v4382 = vunpack.c.h.b16 %v2527
        %v4383 = vunpack.c.l.b16 %v2528
        %v4384 = vunpack.c.h.b16 %v2528
        %v4385 = vpack.c.b16 %v3369, %v3361
        %v4386 = vpack.c.b16 %v3370, %v3362
        %v4387 = vpack.c.b16 %v3371, %v3363
        %v4388 = vpack.c.b16 %v3372, %v3364
        %v4389 = vpack.c.b16 %v3373, %v3365
        %v4390 = vpack.c.b16 %v3374, %v3366
        %v4391 = vpack.c.b16 %v3375, %v3367
        %v4392 = vpack.c.b16 %v3376, %v3368
        %v4393 = vpack.c.b16 %v3385, %v3377
        %v4394 = vpack.c.b16 %v3386, %v3378
        %v4395 = vpack.c.b16 %v3387, %v3379
        %v4396 = vpack.c.b16 %v3388, %v3380
        %v4397 = vpack.c.b16 %v3389, %v3381
        %v4398 = vpack.c.b16 %v3390, %v3382
        %v4399 = vpack.c.b16 %v3391, %v3383
        %v4400 = vpack.c.b16 %v3392, %v3384
        %v4401 = vpack.c.b16 %v3401, %v3393
        %v4402 = vpack.c.b16 %v3402, %v3394
        %v4403 = vpack.c.b16 %v3403, %v3395
        %v4404 = vpack.c.b16 %v3404, %v3396
        %v4405 = vpack.c.b16 %v3405, %v3397
        %v4406 = vpack.c.b16 %v3406, %v3398
        %v4407 = vpack.c.b16 %v3407, %v3399
        %v4408 = vpack.c.b16 %v3408, %v3400
        %v4409 = vpack.c.b16 %v3417, %v3409
        %v4410 = vpack.c.b16 %v3418, %v3410
        %v4411 = vpack.c.b16 %v3419, %v3411
        %v4412 = vpack.c.b16 %v3420, %v3412
        %v4413 = vpack.c.b16 %v3421, %v3413
        %v4414 = vpack.c.b16 %v3422, %v3414
        %v4415 = vpack.c.b16 %v3423, %v3415
        %v4416 = vpack.c.b16 %v3424, %v3416
        %v4417 = vpack.c.b16 %v3433, %v3425
        %v4418 = vpack.c.b16 %v3434, %v3426
        %v4419 = vpack.c.b16 %v3435, %v3427
        %v4420 = vpack.c.b16 %v3436, %v3428
        %v4421 = vpack.c.b16 %v3437, %v3429
        %v4422 = vpack.c.b16 %v3438, %v3430
        %v4423 = vpack.c.b16 %v3439, %v3431
        %v4424 = vpack.c.b16 %v3440, %v3432
        %v4425 = vpack.c.b16 %v3449, %v3441
        %v4426 = vpack.c.b16 %v3450, %v3442
        %v4427 = vpack.c.b16 %v3451, %v3443
        %v4428 = vpack.c.b16 %v3452, %v3444
        %v4429 = vpack.c.b16 %v3453, %v3445
        %v4430 = vpack.c.b16 %v3454, %v3446
        %v4431 = vpack.c.b16 %v3455, %v3447
        %v4432 = vpack.c.b16 %v3456, %v3448
        %v4433 = vpack.c.b16 %v3465, %v3457
        %v4434 = vpack.c.b16 %v3466, %v3458
        %v4435 = vpack.c.b16 %v3467, %v3459
        %v4436 = vpack.c.b16 %v3468, %v3460
        %v4437 = vpack.c.b16 %v3469, %v3461
        %v4438 = vpack.c.b16 %v3470, %v3462
        %v4439 = vpack.c.b16 %v3471, %v3463
        %v4440 = vpack.c.b16 %v3472, %v3464
        %v4441 = vpack.c.b16 %v3481, %v3473
        %v4442 = vpack.c.b16 %v3482, %v3474
        %v4443 = vpack.c.b16 %v3483, %v3475
        %v4444 = vpack.c.b16 %v3484, %v3476
        %v4445 = vpack.c.b16 %v3485, %v3477
        %v4446 = vpack.c.b16 %v3486, %v3478
        %v4447 = vpack.c.b16 %v3487, %v3479
        %v4448 = vpack.c.b16 %v3488, %v3480
        %v4449 = vpack.c.b16 %v3497, %v3489
        %v4450 = vpack.c.b16 %v3498, %v3490
        %v4451 = vpack.c.b16 %v3499, %v3491
        %v4452 = vpack.c.b16 %v3500, %v3492
        %v4453 = vpack.c.b16 %v3501, %v3493
        %v4454 = vpack.c.b16 %v3502, %v3494
        %v4455 = vpack.c.b16 %v3503, %v3495
        %v4456 = vpack.c.b16 %v3504, %v3496
        %v4457 = vpack.c.b16 %v3513, %v3505
        %v4458 = vpack.c.b16 %v3514, %v3506
        %v4459 = vpack.c.b16 %v3515, %v3507
        %v4460 = vpack.c.b16 %v3516, %v3508
        %v4461 = vpack.c.b16 %v3517, %v3509
        %v4462 = vpack.c.b16 %v3518, %v3510
        %v4463 = vpack.c.b16 %v3519, %v3511
        %v4464 = vpack.c.b16 %v3520, %v3512
        %v4465 = vpack.c.b16 %v3529, %v3521
        %v4466 = vpack.c.b16 %v3530, %v3522
        %v4467 = vpack.c.b16 %v3531, %v3523
        %v4468 = vpack.c.b16 %v3532, %v3524
        %v4469 = vpack.c.b16 %v3533, %v3525
        %v4470 = vpack.c.b16 %v3534, %v3526
        %v4471 = vpack.c.b16 %v3535, %v3527
        %v4472 = vpack.c.b16 %v3536, %v3528
        %v4473 = vpack.c.b16 %v3545, %v3537
        %v4474 = vpack.c.b16 %v3546, %v3538
        %v4475 = vpack.c.b16 %v3547, %v3539
        %v4476 = vpack.c.b16 %v3548, %v3540
        %v4477 = vpack.c.b16 %v3549, %v3541
        %v4478 = vpack.c.b16 %v3550, %v3542
        %v4479 = vpack.c.b16 %v3551, %v3543
        %v4480 = vpack.c.b16 %v3552, %v3544
        %v4481 = vpack.c.b16 %v3561, %v3553
        %v4482 = vpack.c.b16 %v3562, %v3554
        %v4483 = vpack.c.b16 %v3563, %v3555
        %v4484 = vpack.c.b16 %v3564, %v3556
        %v4485 = vpack.c.b16 %v3565, %v3557
        %v4486 = vpack.c.b16 %v3566, %v3558
        %v4487 = vpack.c.b16 %v3567, %v3559
        %v4488 = vpack.c.b16 %v3568, %v3560
        %v4489 = vpack.c.b16 %v3577, %v3569
        %v4490 = vpack.c.b16 %v3578, %v3570
        %v4491 = vpack.c.b16 %v3579, %v3571
        %v4492 = vpack.c.b16 %v3580, %v3572
        %v4493 = vpack.c.b16 %v3581, %v3573
        %v4494 = vpack.c.b16 %v3582, %v3574
        %v4495 = vpack.c.b16 %v3583, %v3575
        %v4496 = vpack.c.b16 %v3584, %v3576
        %v4497 = vpack.c.b16 %v3593, %v3585
        %v4498 = vpack.c.b16 %v3594, %v3586
        %v4499 = vpack.c.b16 %v3595, %v3587
        %v4500 = vpack.c.b16 %v3596, %v3588
        %v4501 = vpack.c.b16 %v3597, %v3589
        %v4502 = vpack.c.b16 %v3598, %v3590
        %v4503 = vpack.c.b16 %v3599, %v3591
        %v4504 = vpack.c.b16 %v3600, %v3592
        %v4505 = vpack.c.b16 %v3609, %v3601
        %v4506 = vpack.c.b16 %v3610, %v3602
        %v4507 = vpack.c.b16 %v3611, %v3603
        %v4508 = vpack.c.b16 %v3612, %v3604
        %v4509 = vpack.c.b16 %v3613, %v3605
        %v4510 = vpack.c.b16 %v3614, %v3606
        %v4511 = vpack.c.b16 %v3615, %v3607
        %v4512 = vpack.c.b16 %v3616, %v3608
        %v4513 = vpack.c.b16 %v3625, %v3617
        %v4514 = vpack.c.b16 %v3626, %v3618
        %v4515 = vpack.c.b16 %v3627, %v3619
        %v4516 = vpack.c.b16 %v3628, %v3620
        %v4517 = vpack.c.b16 %v3629, %v3621
        %v4518 = vpack.c.b16 %v3630, %v3622
        %v4519 = vpack.c.b16 %v3631, %v3623
        %v4520 = vpack.c.b16 %v3632, %v3624
        %v4521 = vpack.c.b16 %v3641, %v3633
        %v4522 = vpack.c.b16 %v3642, %v3634
        %v4523 = vpack.c.b16 %v3643, %v3635
        %v4524 = vpack.c.b16 %v3644, %v3636
        %v4525 = vpack.c.b16 %v3645, %v3637
        %v4526 = vpack.c.b16 %v3646, %v3638
        %v4527 = vpack.c.b16 %v3647, %v3639
        %v4528 = vpack.c.b16 %v3648, %v3640
        %v4529 = vpack.c.b16 %v3657, %v3649
        %v4530 = vpack.c.b16 %v3658, %v3650
        %v4531 = vpack.c.b16 %v3659, %v3651
        %v4532 = vpack.c.b16 %v3660, %v3652
        %v4533 = vpack.c.b16 %v3661, %v3653
        %v4534 = vpack.c.b16 %v3662, %v3654
        %v4535 = vpack.c.b16 %v3663, %v3655
        %v4536 = vpack.c.b16 %v3664, %v3656
        %v4537 = vpack.c.b16 %v3673, %v3665
        %v4538 = vpack.c.b16 %v3674, %v3666
        %v4539 = vpack.c.b16 %v3675, %v3667
        %v4540 = vpack.c.b16 %v3676, %v3668
        %v4541 = vpack.c.b16 %v3677, %v3669
        %v4542 = vpack.c.b16 %v3678, %v3670
        %v4543 = vpack.c.b16 %v3679, %v3671
        %v4544 = vpack.c.b16 %v3680, %v3672
        %v4545 = vpack.c.b16 %v3689, %v3681
        %v4546 = vpack.c.b16 %v3690, %v3682
        %v4547 = vpack.c.b16 %v3691, %v3683
        %v4548 = vpack.c.b16 %v3692, %v3684
        %v4549 = vpack.c.b16 %v3693, %v3685
        %v4550 = vpack.c.b16 %v3694, %v3686
        %v4551 = vpack.c.b16 %v3695, %v3687
        %v4552 = vpack.c.b16 %v3696, %v3688
        %v4553 = vpack.c.b16 %v3705, %v3697
        %v4554 = vpack.c.b16 %v3706, %v3698
        %v4555 = vpack.c.b16 %v3707, %v3699
        %v4556 = vpack.c.b16 %v3708, %v3700
        %v4557 = vpack.c.b16 %v3709, %v3701
        %v4558 = vpack.c.b16 %v3710, %v3702
        %v4559 = vpack.c.b16 %v3711, %v3703
        %v4560 = vpack.c.b16 %v3712, %v3704
        %v4561 = vpack.c.b16 %v3721, %v3713
        %v4562 = vpack.c.b16 %v3722, %v3714
        %v4563 = vpack.c.b16 %v3723, %v3715
        %v4564 = vpack.c.b16 %v3724, %v3716
        %v4565 = vpack.c.b16 %v3725, %v3717
        %v4566 = vpack.c.b16 %v3726, %v3718
        %v4567 = vpack.c.b16 %v3727, %v3719
        %v4568 = vpack.c.b16 %v3728, %v3720
        %v4569 = vpack.c.b16 %v3737, %v3729
        %v4570 = vpack.c.b16 %v3738, %v3730
        %v4571 = vpack.c.b16 %v3739, %v3731
        %v4572 = vpack.c.b16 %v3740, %v3732
        %v4573 = vpack.c.b16 %v3741, %v3733
        %v4574 = vpack.c.b16 %v3742, %v3734
        %v4575 = vpack.c.b16 %v3743, %v3735
        %v4576 = vpack.c.b16 %v3744, %v3736
        %v4577 = vpack.c.b16 %v3753, %v3745
        %v4578 = vpack.c.b16 %v3754, %v3746
        %v4579 = vpack.c.b16 %v3755, %v3747
        %v4580 = vpack.c.b16 %v3756, %v3748
        %v4581 = vpack.c.b16 %v3757, %v3749
        %v4582 = vpack.c.b16 %v3758, %v3750
        %v4583 = vpack.c.b16 %v3759, %v3751
        %v4584 = vpack.c.b16 %v3760, %v3752
        %v4585 = vpack.c.b16 %v3769, %v3761
        %v4586 = vpack.c.b16 %v3770, %v3762
        %v4587 = vpack.c.b16 %v3771, %v3763
        %v4588 = vpack.c.b16 %v3772, %v3764
        %v4589 = vpack.c.b16 %v3773, %v3765
        %v4590 = vpack.c.b16 %v3774, %v3766
        %v4591 = vpack.c.b16 %v3775, %v3767
        %v4592 = vpack.c.b16 %v3776, %v3768
        %v4593 = vpack.c.b16 %v3785, %v3777
        %v4594 = vpack.c.b16 %v3786, %v3778
        %v4595 = vpack.c.b16 %v3787, %v3779
        %v4596 = vpack.c.b16 %v3788, %v3780
        %v4597 = vpack.c.b16 %v3789, %v3781
        %v4598 = vpack.c.b16 %v3790, %v3782
        %v4599 = vpack.c.b16 %v3791, %v3783
        %v4600 = vpack.c.b16 %v3792, %v3784
        %v4601 = vpack.c.b16 %v3801, %v3793
        %v4602 = vpack.c.b16 %v3802, %v3794
        %v4603 = vpack.c.b16 %v3803, %v3795
        %v4604 = vpack.c.b16 %v3804, %v3796
        %v4605 = vpack.c.b16 %v3805, %v3797
        %v4606 = vpack.c.b16 %v3806, %v3798
        %v4607 = vpack.c.b16 %v3807, %v3799
        %v4608 = vpack.c.b16 %v3808, %v3800
        %v4609 = vpack.c.b16 %v3817, %v3809
        %v4610 = vpack.c.b16 %v3818, %v3810
        %v4611 = vpack.c.b16 %v3819, %v3811
        %v4612 = vpack.c.b16 %v3820, %v3812
        %v4613 = vpack.c.b16 %v3821, %v3813
        %v4614 = vpack.c.b16 %v3822, %v3814
        %v4615 = vpack.c.b16 %v3823, %v3815
        %v4616 = vpack.c.b16 %v3824, %v3816
        %v4617 = vpack.c.b16 %v3833, %v3825
        %v4618 = vpack.c.b16 %v3834, %v3826
        %v4619 = vpack.c.b16 %v3835, %v3827
        %v4620 = vpack.c.b16 %v3836, %v3828
        %v4621 = vpack.c.b16 %v3837, %v3829
        %v4622 = vpack.c.b16 %v3838, %v3830
        %v4623 = vpack.c.b16 %v3839, %v3831
        %v4624 = vpack.c.b16 %v3840, %v3832
        %v4625 = vpack.c.b16 %v3849, %v3841
        %v4626 = vpack.c.b16 %v3850, %v3842
        %v4627 = vpack.c.b16 %v3851, %v3843
        %v4628 = vpack.c.b16 %v3852, %v3844
        %v4629 = vpack.c.b16 %v3853, %v3845
        %v4630 = vpack.c.b16 %v3854, %v3846
        %v4631 = vpack.c.b16 %v3855, %v3847
        %v4632 = vpack.c.b16 %v3856, %v3848
        %v4633 = vpack.c.b16 %v3865, %v3857
        %v4634 = vpack.c.b16 %v3866, %v3858
        %v4635 = vpack.c.b16 %v3867, %v3859
        %v4636 = vpack.c.b16 %v3868, %v3860
        %v4637 = vpack.c.b16 %v3869, %v3861
        %v4638 = vpack.c.b16 %v3870, %v3862
        %v4639 = vpack.c.b16 %v3871, %v3863
        %v4640 = vpack.c.b16 %v3872, %v3864
        %v4641 = vpack.c.b16 %v3881, %v3873
        %v4642 = vpack.c.b16 %v3882, %v3874
        %v4643 = vpack.c.b16 %v3883, %v3875
        %v4644 = vpack.c.b16 %v3884, %v3876
        %v4645 = vpack.c.b16 %v3885, %v3877
        %v4646 = vpack.c.b16 %v3886, %v3878
        %v4647 = vpack.c.b16 %v3887, %v3879
        %v4648 = vpack.c.b16 %v3888, %v3880
        %v4649 = vpack.c.b16 %v3897, %v3889
        %v4650 = vpack.c.b16 %v3898, %v3890
        %v4651 = vpack.c.b16 %v3899, %v3891
        %v4652 = vpack.c.b16 %v3900, %v3892
        %v4653 = vpack.c.b16 %v3901, %v3893
        %v4654 = vpack.c.b16 %v3902, %v3894
        %v4655 = vpack.c.b16 %v3903, %v3895
        %v4656 = vpack.c.b16 %v3904, %v3896
        %v4657 = vpack.c.b16 %v3913, %v3905
        %v4658 = vpack.c.b16 %v3914, %v3906
        %v4659 = vpack.c.b16 %v3915, %v3907
        %v4660 = vpack.c.b16 %v3916, %v3908
        %v4661 = vpack.c.b16 %v3917, %v3909
        %v4662 = vpack.c.b16 %v3918, %v3910
        %v4663 = vpack.c.b16 %v3919, %v3911
        %v4664 = vpack.c.b16 %v3920, %v3912
        %v4665 = vpack.c.b16 %v3929, %v3921
        %v4666 = vpack.c.b16 %v3930, %v3922
        %v4667 = vpack.c.b16 %v3931, %v3923
        %v4668 = vpack.c.b16 %v3932, %v3924
        %v4669 = vpack.c.b16 %v3933, %v3925
        %v4670 = vpack.c.b16 %v3934, %v3926
        %v4671 = vpack.c.b16 %v3935, %v3927
        %v4672 = vpack.c.b16 %v3936, %v3928
        %v4673 = vpack.c.b16 %v3945, %v3937
        %v4674 = vpack.c.b16 %v3946, %v3938
        %v4675 = vpack.c.b16 %v3947, %v3939
        %v4676 = vpack.c.b16 %v3948, %v3940
        %v4677 = vpack.c.b16 %v3949, %v3941
        %v4678 = vpack.c.b16 %v3950, %v3942
        %v4679 = vpack.c.b16 %v3951, %v3943
        %v4680 = vpack.c.b16 %v3952, %v3944
        %v4681 = vpack.c.b16 %v3961, %v3953
        %v4682 = vpack.c.b16 %v3962, %v3954
        %v4683 = vpack.c.b16 %v3963, %v3955
        %v4684 = vpack.c.b16 %v3964, %v3956
        %v4685 = vpack.c.b16 %v3965, %v3957
        %v4686 = vpack.c.b16 %v3966, %v3958
        %v4687 = vpack.c.b16 %v3967, %v3959
        %v4688 = vpack.c.b16 %v3968, %v3960
        %v4689 = vpack.c.b16 %v3977, %v3969
        %v4690 = vpack.c.b16 %v3978, %v3970
        %v4691 = vpack.c.b16 %v3979, %v3971
        %v4692 = vpack.c.b16 %v3980, %v3972
        %v4693 = vpack.c.b16 %v3981, %v3973
        %v4694 = vpack.c.b16 %v3982, %v3974
        %v4695 = vpack.c.b16 %v3983, %v3975
        %v4696 = vpack.c.b16 %v3984, %v3976
        %v4697 = vpack.c.b16 %v3993, %v3985
        %v4698 = vpack.c.b16 %v3994, %v3986
        %v4699 = vpack.c.b16 %v3995, %v3987
        %v4700 = vpack.c.b16 %v3996, %v3988
        %v4701 = vpack.c.b16 %v3997, %v3989
        %v4702 = vpack.c.b16 %v3998, %v3990
        %v4703 = vpack.c.b16 %v3999, %v3991
        %v4704 = vpack.c.b16 %v4000, %v3992
        %v4705 = vpack.c.b16 %v4009, %v4001
        %v4706 = vpack.c.b16 %v4010, %v4002
        %v4707 = vpack.c.b16 %v4011, %v4003
        %v4708 = vpack.c.b16 %v4012, %v4004
        %v4709 = vpack.c.b16 %v4013, %v4005
        %v4710 = vpack.c.b16 %v4014, %v4006
        %v4711 = vpack.c.b16 %v4015, %v4007
        %v4712 = vpack.c.b16 %v4016, %v4008
        %v4713 = vpack.c.b16 %v4025, %v4017
        %v4714 = vpack.c.b16 %v4026, %v4018
        %v4715 = vpack.c.b16 %v4027, %v4019
        %v4716 = vpack.c.b16 %v4028, %v4020
        %v4717 = vpack.c.b16 %v4029, %v4021
        %v4718 = vpack.c.b16 %v4030, %v4022
        %v4719 = vpack.c.b16 %v4031, %v4023
        %v4720 = vpack.c.b16 %v4032, %v4024
        %v4721 = vpack.c.b16 %v4041, %v4033
        %v4722 = vpack.c.b16 %v4042, %v4034
        %v4723 = vpack.c.b16 %v4043, %v4035
        %v4724 = vpack.c.b16 %v4044, %v4036
        %v4725 = vpack.c.b16 %v4045, %v4037
        %v4726 = vpack.c.b16 %v4046, %v4038
        %v4727 = vpack.c.b16 %v4047, %v4039
        %v4728 = vpack.c.b16 %v4048, %v4040
        %v4729 = vpack.c.b16 %v4057, %v4049
        %v4730 = vpack.c.b16 %v4058, %v4050
        %v4731 = vpack.c.b16 %v4059, %v4051
        %v4732 = vpack.c.b16 %v4060, %v4052
        %v4733 = vpack.c.b16 %v4061, %v4053
        %v4734 = vpack.c.b16 %v4062, %v4054
        %v4735 = vpack.c.b16 %v4063, %v4055
        %v4736 = vpack.c.b16 %v4064, %v4056
        %v4737 = vpack.c.b16 %v4073, %v4065
        %v4738 = vpack.c.b16 %v4074, %v4066
        %v4739 = vpack.c.b16 %v4075, %v4067
        %v4740 = vpack.c.b16 %v4076, %v4068
        %v4741 = vpack.c.b16 %v4077, %v4069
        %v4742 = vpack.c.b16 %v4078, %v4070
        %v4743 = vpack.c.b16 %v4079, %v4071
        %v4744 = vpack.c.b16 %v4080, %v4072
        %v4745 = vpack.c.b16 %v4089, %v4081
        %v4746 = vpack.c.b16 %v4090, %v4082
        %v4747 = vpack.c.b16 %v4091, %v4083
        %v4748 = vpack.c.b16 %v4092, %v4084
        %v4749 = vpack.c.b16 %v4093, %v4085
        %v4750 = vpack.c.b16 %v4094, %v4086
        %v4751 = vpack.c.b16 %v4095, %v4087
        %v4752 = vpack.c.b16 %v4096, %v4088
        %v4753 = vpack.c.b16 %v4105, %v4097
        %v4754 = vpack.c.b16 %v4106, %v4098
        %v4755 = vpack.c.b16 %v4107, %v4099
        %v4756 = vpack.c.b16 %v4108, %v4100
        %v4757 = vpack.c.b16 %v4109, %v4101
        %v4758 = vpack.c.b16 %v4110, %v4102
        %v4759 = vpack.c.b16 %v4111, %v4103
        %v4760 = vpack.c.b16 %v4112, %v4104
        %v4761 = vpack.c.b16 %v4121, %v4113
        %v4762 = vpack.c.b16 %v4122, %v4114
        %v4763 = vpack.c.b16 %v4123, %v4115
        %v4764 = vpack.c.b16 %v4124, %v4116
        %v4765 = vpack.c.b16 %v4125, %v4117
        %v4766 = vpack.c.b16 %v4126, %v4118
        %v4767 = vpack.c.b16 %v4127, %v4119
        %v4768 = vpack.c.b16 %v4128, %v4120
        %v4769 = vpack.c.b16 %v4137, %v4129
        %v4770 = vpack.c.b16 %v4138, %v4130
        %v4771 = vpack.c.b16 %v4139, %v4131
        %v4772 = vpack.c.b16 %v4140, %v4132
        %v4773 = vpack.c.b16 %v4141, %v4133
        %v4774 = vpack.c.b16 %v4142, %v4134
        %v4775 = vpack.c.b16 %v4143, %v4135
        %v4776 = vpack.c.b16 %v4144, %v4136
        %v4777 = vpack.c.b16 %v4153, %v4145
        %v4778 = vpack.c.b16 %v4154, %v4146
        %v4779 = vpack.c.b16 %v4155, %v4147
        %v4780 = vpack.c.b16 %v4156, %v4148
        %v4781 = vpack.c.b16 %v4157, %v4149
        %v4782 = vpack.c.b16 %v4158, %v4150
        %v4783 = vpack.c.b16 %v4159, %v4151
        %v4784 = vpack.c.b16 %v4160, %v4152
        %v4785 = vpack.c.b16 %v4169, %v4161
        %v4786 = vpack.c.b16 %v4170, %v4162
        %v4787 = vpack.c.b16 %v4171, %v4163
        %v4788 = vpack.c.b16 %v4172, %v4164
        %v4789 = vpack.c.b16 %v4173, %v4165
        %v4790 = vpack.c.b16 %v4174, %v4166
        %v4791 = vpack.c.b16 %v4175, %v4167
        %v4792 = vpack.c.b16 %v4176, %v4168
        %v4793 = vpack.c.b16 %v4185, %v4177
        %v4794 = vpack.c.b16 %v4186, %v4178
        %v4795 = vpack.c.b16 %v4187, %v4179
        %v4796 = vpack.c.b16 %v4188, %v4180
        %v4797 = vpack.c.b16 %v4189, %v4181
        %v4798 = vpack.c.b16 %v4190, %v4182
        %v4799 = vpack.c.b16 %v4191, %v4183
        %v4800 = vpack.c.b16 %v4192, %v4184
        %v4801 = vpack.c.b16 %v4201, %v4193
        %v4802 = vpack.c.b16 %v4202, %v4194
        %v4803 = vpack.c.b16 %v4203, %v4195
        %v4804 = vpack.c.b16 %v4204, %v4196
        %v4805 = vpack.c.b16 %v4205, %v4197
        %v4806 = vpack.c.b16 %v4206, %v4198
        %v4807 = vpack.c.b16 %v4207, %v4199
        %v4808 = vpack.c.b16 %v4208, %v4200
        %v4809 = vpack.c.b16 %v4217, %v4209
        %v4810 = vpack.c.b16 %v4218, %v4210
        %v4811 = vpack.c.b16 %v4219, %v4211
        %v4812 = vpack.c.b16 %v4220, %v4212
        %v4813 = vpack.c.b16 %v4221, %v4213
        %v4814 = vpack.c.b16 %v4222, %v4214
        %v4815 = vpack.c.b16 %v4223, %v4215
        %v4816 = vpack.c.b16 %v4224, %v4216
        %v4817 = vpack.c.b16 %v4233, %v4225
        %v4818 = vpack.c.b16 %v4234, %v4226
        %v4819 = vpack.c.b16 %v4235, %v4227
        %v4820 = vpack.c.b16 %v4236, %v4228
        %v4821 = vpack.c.b16 %v4237, %v4229
        %v4822 = vpack.c.b16 %v4238, %v4230
        %v4823 = vpack.c.b16 %v4239, %v4231
        %v4824 = vpack.c.b16 %v4240, %v4232
        %v4825 = vpack.c.b16 %v4249, %v4241
        %v4826 = vpack.c.b16 %v4250, %v4242
        %v4827 = vpack.c.b16 %v4251, %v4243
        %v4828 = vpack.c.b16 %v4252, %v4244
        %v4829 = vpack.c.b16 %v4253, %v4245
        %v4830 = vpack.c.b16 %v4254, %v4246
        %v4831 = vpack.c.b16 %v4255, %v4247
        %v4832 = vpack.c.b16 %v4256, %v4248
        %v4833 = vpack.c.b16 %v4265, %v4257
        %v4834 = vpack.c.b16 %v4266, %v4258
        %v4835 = vpack.c.b16 %v4267, %v4259
        %v4836 = vpack.c.b16 %v4268, %v4260
        %v4837 = vpack.c.b16 %v4269, %v4261
        %v4838 = vpack.c.b16 %v4270, %v4262
        %v4839 = vpack.c.b16 %v4271, %v4263
        %v4840 = vpack.c.b16 %v4272, %v4264
        %v4841 = vpack.c.b16 %v4281, %v4273
        %v4842 = vpack.c.b16 %v4282, %v4274
        %v4843 = vpack.c.b16 %v4283, %v4275
        %v4844 = vpack.c.b16 %v4284, %v4276
        %v4845 = vpack.c.b16 %v4285, %v4277
        %v4846 = vpack.c.b16 %v4286, %v4278
        %v4847 = vpack.c.b16 %v4287, %v4279
        %v4848 = vpack.c.b16 %v4288, %v4280
        %v4849 = vpack.c.b16 %v4297, %v4289
        %v4850 = vpack.c.b16 %v4298, %v4290
        %v4851 = vpack.c.b16 %v4299, %v4291
        %v4852 = vpack.c.b16 %v4300, %v4292
        %v4853 = vpack.c.b16 %v4301, %v4293
        %v4854 = vpack.c.b16 %v4302, %v4294
        %v4855 = vpack.c.b16 %v4303, %v4295
        %v4856 = vpack.c.b16 %v4304, %v4296
        %v4857 = vpack.c.b16 %v4313, %v4305
        %v4858 = vpack.c.b16 %v4314, %v4306
        %v4859 = vpack.c.b16 %v4315, %v4307
        %v4860 = vpack.c.b16 %v4316, %v4308
        %v4861 = vpack.c.b16 %v4317, %v4309
        %v4862 = vpack.c.b16 %v4318, %v4310
        %v4863 = vpack.c.b16 %v4319, %v4311
        %v4864 = vpack.c.b16 %v4320, %v4312
        %v4865 = vpack.c.b16 %v4329, %v4321
        %v4866 = vpack.c.b16 %v4330, %v4322
        %v4867 = vpack.c.b16 %v4331, %v4323
        %v4868 = vpack.c.b16 %v4332, %v4324
        %v4869 = vpack.c.b16 %v4333, %v4325
        %v4870 = vpack.c.b16 %v4334, %v4326
        %v4871 = vpack.c.b16 %v4335, %v4327
        %v4872 = vpack.c.b16 %v4336, %v4328
        %v4873 = vpack.c.b16 %v4345, %v4337
        %v4874 = vpack.c.b16 %v4346, %v4338
        %v4875 = vpack.c.b16 %v4347, %v4339
        %v4876 = vpack.c.b16 %v4348, %v4340
        %v4877 = vpack.c.b16 %v4349, %v4341
        %v4878 = vpack.c.b16 %v4350, %v4342
        %v4879 = vpack.c.b16 %v4351, %v4343
        %v4880 = vpack.c.b16 %v4352, %v4344
        %v4881 = vpack.c.b16 %v4361, %v4353
        %v4882 = vpack.c.b16 %v4362, %v4354
        %v4883 = vpack.c.b16 %v4363, %v4355
        %v4884 = vpack.c.b16 %v4364, %v4356
        %v4885 = vpack.c.b16 %v4365, %v4357
        %v4886 = vpack.c.b16 %v4366, %v4358
        %v4887 = vpack.c.b16 %v4367, %v4359
        %v4888 = vpack.c.b16 %v4368, %v4360
        %v4889 = vpack.c.b16 %v4377, %v4369
        %v4890 = vpack.c.b16 %v4378, %v4370
        %v4891 = vpack.c.b16 %v4379, %v4371
        %v4892 = vpack.c.b16 %v4380, %v4372
        %v4893 = vpack.c.b16 %v4381, %v4373
        %v4894 = vpack.c.b16 %v4382, %v4374
        %v4895 = vpack.c.b16 %v4383, %v4375
        %v4896 = vpack.c.b16 %v4384, %v4376
        %5409 = vmatpush.bf16.msra.mxu0 %v4441
        %5410 = vmatpush.bf16.msra.mxu0 %v4433
        %5411 = vmatpush.bf16.msra.mxu0 %v4425
        %5412 = vmatpush.bf16.msra.mxu0 %v4417
        %5413 = vmatpush.bf16.msra.mxu0 %v4409
        %5414 = vmatpush.bf16.msra.mxu0 %v4401
        %5415 = vmatpush.bf16.msra.mxu0 %v4393
        %5416 = vmatpush.bf16.msra.mxu0 %v4385
        %5417 = vmatmul.bf16.gmra.mxu0 %v2721
        %v5418 = vpop.f32.mrf.mxu0
        %v5419 = vadd.f32 0.0, %v5418
        %v5420 = vpop.f32.mrf.mxu0
        %v5421 = vadd.f32 0.0, %v5420
        %5422 = vmatmul.bf16.gmra.mxu0 %v2729
        %v5423 = vpop.f32.mrf.mxu0
        %v5424 = vadd.f32 0.0, %v5423
        %v5425 = vpop.f32.mrf.mxu0
        %v5426 = vadd.f32 0.0, %v5425
        %5427 = vmatmul.bf16.gmra.mxu0 %v2737
        %v5428 = vpop.f32.mrf.mxu0
        %v5429 = vadd.f32 0.0, %v5428
        %v5430 = vpop.f32.mrf.mxu0
        %v5431 = vadd.f32 0.0, %v5430
        %5432 = vmatmul.bf16.gmra.mxu0 %v2745
        %v5433 = vpop.f32.mrf.mxu0
        %v5434 = vadd.f32 0.0, %v5433
        %v5435 = vpop.f32.mrf.mxu0
        %v5436 = vadd.f32 0.0, %v5435
        %5437 = vmatmul.bf16.gmra.mxu0 %v2753
        %v5438 = vpop.f32.mrf.mxu0
        %v5439 = vadd.f32 0.0, %v5438
        %v5440 = vpop.f32.mrf.mxu0
        %v5441 = vadd.f32 0.0, %v5440
        %5442 = vmatmul.bf16.gmra.mxu0 %v2761
        %v5443 = vpop.f32.mrf.mxu0
        %v5444 = vadd.f32 0.0, %v5443
        %v5445 = vpop.f32.mrf.mxu0
        %v5446 = vadd.f32 0.0, %v5445
        %5447 = vmatmul.bf16.gmra.mxu0 %v2769
        %v5448 = vpop.f32.mrf.mxu0
        %v5449 = vadd.f32 0.0, %v5448
        %v5450 = vpop.f32.mrf.mxu0
        %v5451 = vadd.f32 0.0, %v5450
        %5452 = vmatmul.bf16.gmra.mxu0 %v2777
        %v5453 = vpop.f32.mrf.mxu0
        %v5454 = vadd.f32 0.0, %v5453
        %v5455 = vpop.f32.mrf.mxu0
        %v5456 = vadd.f32 0.0, %v5455
        %5457 = vdwg.mxu0
        %5458 = vmatpush.bf16.msra.mxu0 %v4505
        %5459 = vmatpush.bf16.msra.mxu0 %v4497
        %5460 = vmatpush.bf16.msra.mxu0 %v4489
        %5461 = vmatpush.bf16.msra.mxu0 %v4481
        %5462 = vmatpush.bf16.msra.mxu0 %v4473
        %5463 = vmatpush.bf16.msra.mxu0 %v4465
        %5464 = vmatpush.bf16.msra.mxu0 %v4457
        %5465 = vmatpush.bf16.msra.mxu0 %v4449
        %5466 = vmatmul.bf16.gmra.mxu0 %v2722
        %v5467 = vpop.f32.mrf.mxu0
        %v5468 = vadd.f32 %v5419, %v5467
        %v5469 = vpop.f32.mrf.mxu0
        %v5470 = vadd.f32 %v5421, %v5469
        %5471 = vmatmul.bf16.gmra.mxu0 %v2730
        %v5472 = vpop.f32.mrf.mxu0
        %v5473 = vadd.f32 %v5424, %v5472
        %v5474 = vpop.f32.mrf.mxu0
        %v5475 = vadd.f32 %v5426, %v5474
        %5476 = vmatmul.bf16.gmra.mxu0 %v2738
        %v5477 = vpop.f32.mrf.mxu0
        %v5478 = vadd.f32 %v5429, %v5477
        %v5479 = vpop.f32.mrf.mxu0
        %v5480 = vadd.f32 %v5431, %v5479
        %5481 = vmatmul.bf16.gmra.mxu0 %v2746
        %v5482 = vpop.f32.mrf.mxu0
        %v5483 = vadd.f32 %v5434, %v5482
        %v5484 = vpop.f32.mrf.mxu0
        %v5485 = vadd.f32 %v5436, %v5484
        %5486 = vmatmul.bf16.gmra.mxu0 %v2754
        %v5487 = vpop.f32.mrf.mxu0
        %v5488 = vadd.f32 %v5439, %v5487
        %v5489 = vpop.f32.mrf.mxu0
        %v5490 = vadd.f32 %v5441, %v5489
        %5491 = vmatmul.bf16.gmra.mxu0 %v2762
        %v5492 = vpop.f32.mrf.mxu0
        %v5493 = vadd.f32 %v5444, %v5492
        %v5494 = vpop.f32.mrf.mxu0
        %v5495 = vadd.f32 %v5446, %v5494
        %5496 = vmatmul.bf16.gmra.mxu0 %v2770
        %v5497 = vpop.f32.mrf.mxu0
        %v5498 = vadd.f32 %v5449, %v5497
        %v5499 = vpop.f32.mrf.mxu0
        %v5500 = vadd.f32 %v5451, %v5499
        %5501 = vmatmul.bf16.gmra.mxu0 %v2778
        %v5502 = vpop.f32.mrf.mxu0
        %v5503 = vadd.f32 %v5454, %v5502
        %v5504 = vpop.f32.mrf.mxu0
        %v5505 = vadd.f32 %v5456, %v5504
        %5506 = vdwg.mxu0
        %5507 = vmatpush.bf16.msra.mxu0 %v4569
        %5508 = vmatpush.bf16.msra.mxu0 %v4561
        %5509 = vmatpush.bf16.msra.mxu0 %v4553
        %5510 = vmatpush.bf16.msra.mxu0 %v4545
        %5511 = vmatpush.bf16.msra.mxu0 %v4537
        %5512 = vmatpush.bf16.msra.mxu0 %v4529
        %5513 = vmatpush.bf16.msra.mxu0 %v4521
        %5514 = vmatpush.bf16.msra.mxu0 %v4513
        %5515 = vmatmul.bf16.gmra.mxu0 %v2723
        %v5516 = vpop.f32.mrf.mxu0
        %v5517 = vadd.f32 %v5468, %v5516
        %v5518 = vpop.f32.mrf.mxu0
        %v5519 = vadd.f32 %v5470, %v5518
        %5520 = vmatmul.bf16.gmra.mxu0 %v2731
        %v5521 = vpop.f32.mrf.mxu0
        %v5522 = vadd.f32 %v5473, %v5521
        %v5523 = vpop.f32.mrf.mxu0
        %v5524 = vadd.f32 %v5475, %v5523
        %5525 = vmatmul.bf16.gmra.mxu0 %v2739
        %v5526 = vpop.f32.mrf.mxu0
        %v5527 = vadd.f32 %v5478, %v5526
        %v5528 = vpop.f32.mrf.mxu0
        %v5529 = vadd.f32 %v5480, %v5528
        %5530 = vmatmul.bf16.gmra.mxu0 %v2747
        %v5531 = vpop.f32.mrf.mxu0
        %v5532 = vadd.f32 %v5483, %v5531
        %v5533 = vpop.f32.mrf.mxu0
        %v5534 = vadd.f32 %v5485, %v5533
        %5535 = vmatmul.bf16.gmra.mxu0 %v2755
        %v5536 = vpop.f32.mrf.mxu0
        %v5537 = vadd.f32 %v5488, %v5536
        %v5538 = vpop.f32.mrf.mxu0
        %v5539 = vadd.f32 %v5490, %v5538
        %5540 = vmatmul.bf16.gmra.mxu0 %v2763
        %v5541 = vpop.f32.mrf.mxu0
        %v5542 = vadd.f32 %v5493, %v5541
        %v5543 = vpop.f32.mrf.mxu0
        %v5544 = vadd.f32 %v5495, %v5543
        %5545 = vmatmul.bf16.gmra.mxu0 %v2771
        %v5546 = vpop.f32.mrf.mxu0
        %v5547 = vadd.f32 %v5498, %v5546
        %v5548 = vpop.f32.mrf.mxu0
        %v5549 = vadd.f32 %v5500, %v5548
        %5550 = vmatmul.bf16.gmra.mxu0 %v2779
        %v5551 = vpop.f32.mrf.mxu0
        %v5552 = vadd.f32 %v5503, %v5551
        %v5553 = vpop.f32.mrf.mxu0
        %v5554 = vadd.f32 %v5505, %v5553
        %5555 = vdwg.mxu0
        %5556 = vmatpush.bf16.msra.mxu0 %v4633
        %5557 = vmatpush.bf16.msra.mxu0 %v4625
        %5558 = vmatpush.bf16.msra.mxu0 %v4617
        %5559 = vmatpush.bf16.msra.mxu0 %v4609
        %5560 = vmatpush.bf16.msra.mxu0 %v4601
        %5561 = vmatpush.bf16.msra.mxu0 %v4593
        %5562 = vmatpush.bf16.msra.mxu0 %v4585
        %5563 = vmatpush.bf16.msra.mxu0 %v4577
        %5564 = vmatmul.bf16.gmra.mxu0 %v2724
        %v5565 = vpop.f32.mrf.mxu0
        %v5566 = vadd.f32 %v5517, %v5565
        %v5567 = vpop.f32.mrf.mxu0
        %v5568 = vadd.f32 %v5519, %v5567
        %5569 = vmatmul.bf16.gmra.mxu0 %v2732
        %v5570 = vpop.f32.mrf.mxu0
        %v5571 = vadd.f32 %v5522, %v5570
        %v5572 = vpop.f32.mrf.mxu0
        %v5573 = vadd.f32 %v5524, %v5572
        %5574 = vmatmul.bf16.gmra.mxu0 %v2740
        %v5575 = vpop.f32.mrf.mxu0
        %v5576 = vadd.f32 %v5527, %v5575
        %v5577 = vpop.f32.mrf.mxu0
        %v5578 = vadd.f32 %v5529, %v5577
        %5579 = vmatmul.bf16.gmra.mxu0 %v2748
        %v5580 = vpop.f32.mrf.mxu0
        %v5581 = vadd.f32 %v5532, %v5580
        %v5582 = vpop.f32.mrf.mxu0
        %v5583 = vadd.f32 %v5534, %v5582
        %5584 = vmatmul.bf16.gmra.mxu0 %v2756
        %v5585 = vpop.f32.mrf.mxu0
        %v5586 = vadd.f32 %v5537, %v5585
        %v5587 = vpop.f32.mrf.mxu0
        %v5588 = vadd.f32 %v5539, %v5587
        %5589 = vmatmul.bf16.gmra.mxu0 %v2764
        %v5590 = vpop.f32.mrf.mxu0
        %v5591 = vadd.f32 %v5542, %v5590
        %v5592 = vpop.f32.mrf.mxu0
        %v5593 = vadd.f32 %v5544, %v5592
        %5594 = vmatmul.bf16.gmra.mxu0 %v2772
        %v5595 = vpop.f32.mrf.mxu0
        %v5596 = vadd.f32 %v5547, %v5595
        %v5597 = vpop.f32.mrf.mxu0
        %v5598 = vadd.f32 %v5549, %v5597
        %5599 = vmatmul.bf16.gmra.mxu0 %v2780
        %v5600 = vpop.f32.mrf.mxu0
        %v5601 = vadd.f32 %v5552, %v5600
        %v5602 = vpop.f32.mrf.mxu0
        %v5603 = vadd.f32 %v5554, %v5602
        %5604 = vdwg.mxu0
        %5605 = vmatpush.bf16.msra.mxu0 %v4697
        %5606 = vmatpush.bf16.msra.mxu0 %v4689
        %5607 = vmatpush.bf16.msra.mxu0 %v4681
        %5608 = vmatpush.bf16.msra.mxu0 %v4673
        %5609 = vmatpush.bf16.msra.mxu0 %v4665
        %5610 = vmatpush.bf16.msra.mxu0 %v4657
        %5611 = vmatpush.bf16.msra.mxu0 %v4649
        %5612 = vmatpush.bf16.msra.mxu0 %v4641
        %5613 = vmatmul.bf16.gmra.mxu0 %v2725
        %v5614 = vpop.f32.mrf.mxu0
        %v5615 = vadd.f32 %v5566, %v5614
        %v5616 = vpop.f32.mrf.mxu0
        %v5617 = vadd.f32 %v5568, %v5616
        %5618 = vmatmul.bf16.gmra.mxu0 %v2733
        %v5619 = vpop.f32.mrf.mxu0
        %v5620 = vadd.f32 %v5571, %v5619
        %v5621 = vpop.f32.mrf.mxu0
        %v5622 = vadd.f32 %v5573, %v5621
        %5623 = vmatmul.bf16.gmra.mxu0 %v2741
        %v5624 = vpop.f32.mrf.mxu0
        %v5625 = vadd.f32 %v5576, %v5624
        %v5626 = vpop.f32.mrf.mxu0
        %v5627 = vadd.f32 %v5578, %v5626
        %5628 = vmatmul.bf16.gmra.mxu0 %v2749
        %v5629 = vpop.f32.mrf.mxu0
        %v5630 = vadd.f32 %v5581, %v5629
        %v5631 = vpop.f32.mrf.mxu0
        %v5632 = vadd.f32 %v5583, %v5631
        %5633 = vmatmul.bf16.gmra.mxu0 %v2757
        %v5634 = vpop.f32.mrf.mxu0
        %v5635 = vadd.f32 %v5586, %v5634
        %v5636 = vpop.f32.mrf.mxu0
        %v5637 = vadd.f32 %v5588, %v5636
        %5638 = vmatmul.bf16.gmra.mxu0 %v2765
        %v5639 = vpop.f32.mrf.mxu0
        %v5640 = vadd.f32 %v5591, %v5639
        %v5641 = vpop.f32.mrf.mxu0
        %v5642 = vadd.f32 %v5593, %v5641
        %5643 = vmatmul.bf16.gmra.mxu0 %v2773
        %v5644 = vpop.f32.mrf.mxu0
        %v5645 = vadd.f32 %v5596, %v5644
        %v5646 = vpop.f32.mrf.mxu0
        %v5647 = vadd.f32 %v5598, %v5646
        %5648 = vmatmul.bf16.gmra.mxu0 %v2781
        %v5649 = vpop.f32.mrf.mxu0
        %v5650 = vadd.f32 %v5601, %v5649
        %v5651 = vpop.f32.mrf.mxu0
        %v5652 = vadd.f32 %v5603, %v5651
        %5653 = vdwg.mxu0
        %5654 = vmatpush.bf16.msra.mxu0 %v4761
        %5655 = vmatpush.bf16.msra.mxu0 %v4753
        %5656 = vmatpush.bf16.msra.mxu0 %v4745
        %5657 = vmatpush.bf16.msra.mxu0 %v4737
        %5658 = vmatpush.bf16.msra.mxu0 %v4729
        %5659 = vmatpush.bf16.msra.mxu0 %v4721
        %5660 = vmatpush.bf16.msra.mxu0 %v4713
        %5661 = vmatpush.bf16.msra.mxu0 %v4705
        %5662 = vmatmul.bf16.gmra.mxu0 %v2726
        %v5663 = vpop.f32.mrf.mxu0
        %v5664 = vadd.f32 %v5615, %v5663
        %v5665 = vpop.f32.mrf.mxu0
        %v5666 = vadd.f32 %v5617, %v5665
        %5667 = vmatmul.bf16.gmra.mxu0 %v2734
        %v5668 = vpop.f32.mrf.mxu0
        %v5669 = vadd.f32 %v5620, %v5668
        %v5670 = vpop.f32.mrf.mxu0
        %v5671 = vadd.f32 %v5622, %v5670
        %5672 = vmatmul.bf16.gmra.mxu0 %v2742
        %v5673 = vpop.f32.mrf.mxu0
        %v5674 = vadd.f32 %v5625, %v5673
        %v5675 = vpop.f32.mrf.mxu0
        %v5676 = vadd.f32 %v5627, %v5675
        %5677 = vmatmul.bf16.gmra.mxu0 %v2750
        %v5678 = vpop.f32.mrf.mxu0
        %v5679 = vadd.f32 %v5630, %v5678
        %v5680 = vpop.f32.mrf.mxu0
        %v5681 = vadd.f32 %v5632, %v5680
        %5682 = vmatmul.bf16.gmra.mxu0 %v2758
        %v5683 = vpop.f32.mrf.mxu0
        %v5684 = vadd.f32 %v5635, %v5683
        %v5685 = vpop.f32.mrf.mxu0
        %v5686 = vadd.f32 %v5637, %v5685
        %5687 = vmatmul.bf16.gmra.mxu0 %v2766
        %v5688 = vpop.f32.mrf.mxu0
        %v5689 = vadd.f32 %v5640, %v5688
        %v5690 = vpop.f32.mrf.mxu0
        %v5691 = vadd.f32 %v5642, %v5690
        %5692 = vmatmul.bf16.gmra.mxu0 %v2774
        %v5693 = vpop.f32.mrf.mxu0
        %v5694 = vadd.f32 %v5645, %v5693
        %v5695 = vpop.f32.mrf.mxu0
        %v5696 = vadd.f32 %v5647, %v5695
        %5697 = vmatmul.bf16.gmra.mxu0 %v2782
        %v5698 = vpop.f32.mrf.mxu0
        %v5699 = vadd.f32 %v5650, %v5698
        %v5700 = vpop.f32.mrf.mxu0
        %v5701 = vadd.f32 %v5652, %v5700
        %5702 = vdwg.mxu0
        %5703 = vmatpush.bf16.msra.mxu0 %v4825
        %5704 = vmatpush.bf16.msra.mxu0 %v4817
        %5705 = vmatpush.bf16.msra.mxu0 %v4809
        %5706 = vmatpush.bf16.msra.mxu0 %v4801
        %5707 = vmatpush.bf16.msra.mxu0 %v4793
        %5708 = vmatpush.bf16.msra.mxu0 %v4785
        %5709 = vmatpush.bf16.msra.mxu0 %v4777
        %5710 = vmatpush.bf16.msra.mxu0 %v4769
        %5711 = vmatmul.bf16.gmra.mxu0 %v2727
        %v5712 = vpop.f32.mrf.mxu0
        %v5713 = vadd.f32 %v5664, %v5712
        %v5714 = vpop.f32.mrf.mxu0
        %v5715 = vadd.f32 %v5666, %v5714
        %5716 = vmatmul.bf16.gmra.mxu0 %v2735
        %v5717 = vpop.f32.mrf.mxu0
        %v5718 = vadd.f32 %v5669, %v5717
        %v5719 = vpop.f32.mrf.mxu0
        %v5720 = vadd.f32 %v5671, %v5719
        %5721 = vmatmul.bf16.gmra.mxu0 %v2743
        %v5722 = vpop.f32.mrf.mxu0
        %v5723 = vadd.f32 %v5674, %v5722
        %v5724 = vpop.f32.mrf.mxu0
        %v5725 = vadd.f32 %v5676, %v5724
        %5726 = vmatmul.bf16.gmra.mxu0 %v2751
        %v5727 = vpop.f32.mrf.mxu0
        %v5728 = vadd.f32 %v5679, %v5727
        %v5729 = vpop.f32.mrf.mxu0
        %v5730 = vadd.f32 %v5681, %v5729
        %5731 = vmatmul.bf16.gmra.mxu0 %v2759
        %v5732 = vpop.f32.mrf.mxu0
        %v5733 = vadd.f32 %v5684, %v5732
        %v5734 = vpop.f32.mrf.mxu0
        %v5735 = vadd.f32 %v5686, %v5734
        %5736 = vmatmul.bf16.gmra.mxu0 %v2767
        %v5737 = vpop.f32.mrf.mxu0
        %v5738 = vadd.f32 %v5689, %v5737
        %v5739 = vpop.f32.mrf.mxu0
        %v5740 = vadd.f32 %v5691, %v5739
        %5741 = vmatmul.bf16.gmra.mxu0 %v2775
        %v5742 = vpop.f32.mrf.mxu0
        %v5743 = vadd.f32 %v5694, %v5742
        %v5744 = vpop.f32.mrf.mxu0
        %v5745 = vadd.f32 %v5696, %v5744
        %5746 = vmatmul.bf16.gmra.mxu0 %v2783
        %v5747 = vpop.f32.mrf.mxu0
        %v5748 = vadd.f32 %v5699, %v5747
        %v5749 = vpop.f32.mrf.mxu0
        %v5750 = vadd.f32 %v5701, %v5749
        %5751 = vdwg.mxu0
        %5752 = vmatpush.bf16.msra.mxu0 %v4889
        %5753 = vmatpush.bf16.msra.mxu0 %v4881
        %5754 = vmatpush.bf16.msra.mxu0 %v4873
        %5755 = vmatpush.bf16.msra.mxu0 %v4865
        %5756 = vmatpush.bf16.msra.mxu0 %v4857
        %5757 = vmatpush.bf16.msra.mxu0 %v4849
        %5758 = vmatpush.bf16.msra.mxu0 %v4841
        %5759 = vmatpush.bf16.msra.mxu0 %v4833
        %5760 = vmatmul.bf16.gmra.mxu0 %v2728
        %v5761 = vpop.f32.mrf.mxu0
        %v5762 = vadd.f32 %v5713, %v5761
        %v5763 = vpop.f32.mrf.mxu0
        %v5764 = vadd.f32 %v5715, %v5763
        %5765 = vmatmul.bf16.gmra.mxu0 %v2736
        %v5766 = vpop.f32.mrf.mxu0
        %v5767 = vadd.f32 %v5718, %v5766
        %v5768 = vpop.f32.mrf.mxu0
        %v5769 = vadd.f32 %v5720, %v5768
        %5770 = vmatmul.bf16.gmra.mxu0 %v2744
        %v5771 = vpop.f32.mrf.mxu0
        %v5772 = vadd.f32 %v5723, %v5771
        %v5773 = vpop.f32.mrf.mxu0
        %v5774 = vadd.f32 %v5725, %v5773
        %5775 = vmatmul.bf16.gmra.mxu0 %v2752
        %v5776 = vpop.f32.mrf.mxu0
        %v5777 = vadd.f32 %v5728, %v5776
        %v5778 = vpop.f32.mrf.mxu0
        %v5779 = vadd.f32 %v5730, %v5778
        %5780 = vmatmul.bf16.gmra.mxu0 %v2760
        %v5781 = vpop.f32.mrf.mxu0
        %v5782 = vadd.f32 %v5733, %v5781
        %v5783 = vpop.f32.mrf.mxu0
        %v5784 = vadd.f32 %v5735, %v5783
        %5785 = vmatmul.bf16.gmra.mxu0 %v2768
        %v5786 = vpop.f32.mrf.mxu0
        %v5787 = vadd.f32 %v5738, %v5786
        %v5788 = vpop.f32.mrf.mxu0
        %v5789 = vadd.f32 %v5740, %v5788
        %5790 = vmatmul.bf16.gmra.mxu0 %v2776
        %v5791 = vpop.f32.mrf.mxu0
        %v5792 = vadd.f32 %v5743, %v5791
        %v5793 = vpop.f32.mrf.mxu0
        %v5794 = vadd.f32 %v5745, %v5793
        %5795 = vmatmul.bf16.gmra.mxu0 %v2784
        %v5796 = vpop.f32.mrf.mxu0
        %v5797 = vadd.f32 %v5748, %v5796
        %v5798 = vpop.f32.mrf.mxu0
        %v5799 = vadd.f32 %v5750, %v5798
        %5800 = vdwg.mxu0
        %5801 = vmatpush.bf16.msra.mxu0 %v4442
        %5802 = vmatpush.bf16.msra.mxu0 %v4434
        %5803 = vmatpush.bf16.msra.mxu0 %v4426
        %5804 = vmatpush.bf16.msra.mxu0 %v4418
        %5805 = vmatpush.bf16.msra.mxu0 %v4410
        %5806 = vmatpush.bf16.msra.mxu0 %v4402
        %5807 = vmatpush.bf16.msra.mxu0 %v4394
        %5808 = vmatpush.bf16.msra.mxu0 %v4386
        %5809 = vmatmul.bf16.gmra.mxu0 %v2721
        %v5810 = vpop.f32.mrf.mxu0
        %v5811 = vadd.f32 0.0, %v5810
        %v5812 = vpop.f32.mrf.mxu0
        %v5813 = vadd.f32 0.0, %v5812
        %5814 = vmatmul.bf16.gmra.mxu0 %v2729
        %v5815 = vpop.f32.mrf.mxu0
        %v5816 = vadd.f32 0.0, %v5815
        %v5817 = vpop.f32.mrf.mxu0
        %v5818 = vadd.f32 0.0, %v5817
        %5819 = vmatmul.bf16.gmra.mxu0 %v2737
        %v5820 = vpop.f32.mrf.mxu0
        %v5821 = vadd.f32 0.0, %v5820
        %v5822 = vpop.f32.mrf.mxu0
        %v5823 = vadd.f32 0.0, %v5822
        %5824 = vmatmul.bf16.gmra.mxu0 %v2745
        %v5825 = vpop.f32.mrf.mxu0
        %v5826 = vadd.f32 0.0, %v5825
        %v5827 = vpop.f32.mrf.mxu0
        %v5828 = vadd.f32 0.0, %v5827
        %5829 = vmatmul.bf16.gmra.mxu0 %v2753
        %v5830 = vpop.f32.mrf.mxu0
        %v5831 = vadd.f32 0.0, %v5830
        %v5832 = vpop.f32.mrf.mxu0
        %v5833 = vadd.f32 0.0, %v5832
        %5834 = vmatmul.bf16.gmra.mxu0 %v2761
        %v5835 = vpop.f32.mrf.mxu0
        %v5836 = vadd.f32 0.0, %v5835
        %v5837 = vpop.f32.mrf.mxu0
        %v5838 = vadd.f32 0.0, %v5837
        %5839 = vmatmul.bf16.gmra.mxu0 %v2769
        %v5840 = vpop.f32.mrf.mxu0
        %v5841 = vadd.f32 0.0, %v5840
        %v5842 = vpop.f32.mrf.mxu0
        %v5843 = vadd.f32 0.0, %v5842
        %5844 = vmatmul.bf16.gmra.mxu0 %v2777
        %v5845 = vpop.f32.mrf.mxu0
        %v5846 = vadd.f32 0.0, %v5845
        %v5847 = vpop.f32.mrf.mxu0
        %v5848 = vadd.f32 0.0, %v5847
        %5849 = vdwg.mxu0
        %5850 = vmatpush.bf16.msra.mxu0 %v4506
        %5851 = vmatpush.bf16.msra.mxu0 %v4498
        %5852 = vmatpush.bf16.msra.mxu0 %v4490
        %5853 = vmatpush.bf16.msra.mxu0 %v4482
        %5854 = vmatpush.bf16.msra.mxu0 %v4474
        %5855 = vmatpush.bf16.msra.mxu0 %v4466
        %5856 = vmatpush.bf16.msra.mxu0 %v4458
        %5857 = vmatpush.bf16.msra.mxu0 %v4450
        %5858 = vmatmul.bf16.gmra.mxu0 %v2722
        %v5859 = vpop.f32.mrf.mxu0
        %v5860 = vadd.f32 %v5811, %v5859
        %v5861 = vpop.f32.mrf.mxu0
        %v5862 = vadd.f32 %v5813, %v5861
        %5863 = vmatmul.bf16.gmra.mxu0 %v2730
        %v5864 = vpop.f32.mrf.mxu0
        %v5865 = vadd.f32 %v5816, %v5864
        %v5866 = vpop.f32.mrf.mxu0
        %v5867 = vadd.f32 %v5818, %v5866
        %5868 = vmatmul.bf16.gmra.mxu0 %v2738
        %v5869 = vpop.f32.mrf.mxu0
        %v5870 = vadd.f32 %v5821, %v5869
        %v5871 = vpop.f32.mrf.mxu0
        %v5872 = vadd.f32 %v5823, %v5871
        %5873 = vmatmul.bf16.gmra.mxu0 %v2746
        %v5874 = vpop.f32.mrf.mxu0
        %v5875 = vadd.f32 %v5826, %v5874
        %v5876 = vpop.f32.mrf.mxu0
        %v5877 = vadd.f32 %v5828, %v5876
        %5878 = vmatmul.bf16.gmra.mxu0 %v2754
        %v5879 = vpop.f32.mrf.mxu0
        %v5880 = vadd.f32 %v5831, %v5879
        %v5881 = vpop.f32.mrf.mxu0
        %v5882 = vadd.f32 %v5833, %v5881
        %5883 = vmatmul.bf16.gmra.mxu0 %v2762
        %v5884 = vpop.f32.mrf.mxu0
        %v5885 = vadd.f32 %v5836, %v5884
        %v5886 = vpop.f32.mrf.mxu0
        %v5887 = vadd.f32 %v5838, %v5886
        %5888 = vmatmul.bf16.gmra.mxu0 %v2770
        %v5889 = vpop.f32.mrf.mxu0
        %v5890 = vadd.f32 %v5841, %v5889
        %v5891 = vpop.f32.mrf.mxu0
        %v5892 = vadd.f32 %v5843, %v5891
        %5893 = vmatmul.bf16.gmra.mxu0 %v2778
        %v5894 = vpop.f32.mrf.mxu0
        %v5895 = vadd.f32 %v5846, %v5894
        %v5896 = vpop.f32.mrf.mxu0
        %v5897 = vadd.f32 %v5848, %v5896
        %5898 = vdwg.mxu0
        %5899 = vmatpush.bf16.msra.mxu0 %v4570
        %5900 = vmatpush.bf16.msra.mxu0 %v4562
        %5901 = vmatpush.bf16.msra.mxu0 %v4554
        %5902 = vmatpush.bf16.msra.mxu0 %v4546
        %5903 = vmatpush.bf16.msra.mxu0 %v4538
        %5904 = vmatpush.bf16.msra.mxu0 %v4530
        %5905 = vmatpush.bf16.msra.mxu0 %v4522
        %5906 = vmatpush.bf16.msra.mxu0 %v4514
        %5907 = vmatmul.bf16.gmra.mxu0 %v2723
        %v5908 = vpop.f32.mrf.mxu0
        %v5909 = vadd.f32 %v5860, %v5908
        %v5910 = vpop.f32.mrf.mxu0
        %v5911 = vadd.f32 %v5862, %v5910
        %5912 = vmatmul.bf16.gmra.mxu0 %v2731
        %v5913 = vpop.f32.mrf.mxu0
        %v5914 = vadd.f32 %v5865, %v5913
        %v5915 = vpop.f32.mrf.mxu0
        %v5916 = vadd.f32 %v5867, %v5915
        %5917 = vmatmul.bf16.gmra.mxu0 %v2739
        %v5918 = vpop.f32.mrf.mxu0
        %v5919 = vadd.f32 %v5870, %v5918
        %v5920 = vpop.f32.mrf.mxu0
        %v5921 = vadd.f32 %v5872, %v5920
        %5922 = vmatmul.bf16.gmra.mxu0 %v2747
        %v5923 = vpop.f32.mrf.mxu0
        %v5924 = vadd.f32 %v5875, %v5923
        %v5925 = vpop.f32.mrf.mxu0
        %v5926 = vadd.f32 %v5877, %v5925
        %5927 = vmatmul.bf16.gmra.mxu0 %v2755
        %v5928 = vpop.f32.mrf.mxu0
        %v5929 = vadd.f32 %v5880, %v5928
        %v5930 = vpop.f32.mrf.mxu0
        %v5931 = vadd.f32 %v5882, %v5930
        %5932 = vmatmul.bf16.gmra.mxu0 %v2763
        %v5933 = vpop.f32.mrf.mxu0
        %v5934 = vadd.f32 %v5885, %v5933
        %v5935 = vpop.f32.mrf.mxu0
        %v5936 = vadd.f32 %v5887, %v5935
        %5937 = vmatmul.bf16.gmra.mxu0 %v2771
        %v5938 = vpop.f32.mrf.mxu0
        %v5939 = vadd.f32 %v5890, %v5938
        %v5940 = vpop.f32.mrf.mxu0
        %v5941 = vadd.f32 %v5892, %v5940
        %5942 = vmatmul.bf16.gmra.mxu0 %v2779
        %v5943 = vpop.f32.mrf.mxu0
        %v5944 = vadd.f32 %v5895, %v5943
        %v5945 = vpop.f32.mrf.mxu0
        %v5946 = vadd.f32 %v5897, %v5945
        %5947 = vdwg.mxu0
        %5948 = vmatpush.bf16.msra.mxu0 %v4634
        %5949 = vmatpush.bf16.msra.mxu0 %v4626
        %5950 = vmatpush.bf16.msra.mxu0 %v4618
        %5951 = vmatpush.bf16.msra.mxu0 %v4610
        %5952 = vmatpush.bf16.msra.mxu0 %v4602
        %5953 = vmatpush.bf16.msra.mxu0 %v4594
        %5954 = vmatpush.bf16.msra.mxu0 %v4586
        %5955 = vmatpush.bf16.msra.mxu0 %v4578
        %5956 = vmatmul.bf16.gmra.mxu0 %v2724
        %v5957 = vpop.f32.mrf.mxu0
        %v5958 = vadd.f32 %v5909, %v5957
        %v5959 = vpop.f32.mrf.mxu0
        %v5960 = vadd.f32 %v5911, %v5959
        %5961 = vmatmul.bf16.gmra.mxu0 %v2732
        %v5962 = vpop.f32.mrf.mxu0
        %v5963 = vadd.f32 %v5914, %v5962
        %v5964 = vpop.f32.mrf.mxu0
        %v5965 = vadd.f32 %v5916, %v5964
        %5966 = vmatmul.bf16.gmra.mxu0 %v2740
        %v5967 = vpop.f32.mrf.mxu0
        %v5968 = vadd.f32 %v5919, %v5967
        %v5969 = vpop.f32.mrf.mxu0
        %v5970 = vadd.f32 %v5921, %v5969
        %5971 = vmatmul.bf16.gmra.mxu0 %v2748
        %v5972 = vpop.f32.mrf.mxu0
        %v5973 = vadd.f32 %v5924, %v5972
        %v5974 = vpop.f32.mrf.mxu0
        %v5975 = vadd.f32 %v5926, %v5974
        %5976 = vmatmul.bf16.gmra.mxu0 %v2756
        %v5977 = vpop.f32.mrf.mxu0
        %v5978 = vadd.f32 %v5929, %v5977
        %v5979 = vpop.f32.mrf.mxu0
        %v5980 = vadd.f32 %v5931, %v5979
        %5981 = vmatmul.bf16.gmra.mxu0 %v2764
        %v5982 = vpop.f32.mrf.mxu0
        %v5983 = vadd.f32 %v5934, %v5982
        %v5984 = vpop.f32.mrf.mxu0
        %v5985 = vadd.f32 %v5936, %v5984
        %5986 = vmatmul.bf16.gmra.mxu0 %v2772
        %v5987 = vpop.f32.mrf.mxu0
        %v5988 = vadd.f32 %v5939, %v5987
        %v5989 = vpop.f32.mrf.mxu0
        %v5990 = vadd.f32 %v5941, %v5989
        %5991 = vmatmul.bf16.gmra.mxu0 %v2780
        %v5992 = vpop.f32.mrf.mxu0
        %v5993 = vadd.f32 %v5944, %v5992
        %v5994 = vpop.f32.mrf.mxu0
        %v5995 = vadd.f32 %v5946, %v5994
        %5996 = vdwg.mxu0
        %5997 = vmatpush.bf16.msra.mxu0 %v4698
        %5998 = vmatpush.bf16.msra.mxu0 %v4690
        %5999 = vmatpush.bf16.msra.mxu0 %v4682
        %6000 = vmatpush.bf16.msra.mxu0 %v4674
        %6001 = vmatpush.bf16.msra.mxu0 %v4666
        %6002 = vmatpush.bf16.msra.mxu0 %v4658
        %6003 = vmatpush.bf16.msra.mxu0 %v4650
        %6004 = vmatpush.bf16.msra.mxu0 %v4642
        %6005 = vmatmul.bf16.gmra.mxu0 %v2725
        %v6006 = vpop.f32.mrf.mxu0
        %v6007 = vadd.f32 %v5958, %v6006
        %v6008 = vpop.f32.mrf.mxu0
        %v6009 = vadd.f32 %v5960, %v6008
        %6010 = vmatmul.bf16.gmra.mxu0 %v2733
        %v6011 = vpop.f32.mrf.mxu0
        %v6012 = vadd.f32 %v5963, %v6011
        %v6013 = vpop.f32.mrf.mxu0
        %v6014 = vadd.f32 %v5965, %v6013
        %6015 = vmatmul.bf16.gmra.mxu0 %v2741
        %v6016 = vpop.f32.mrf.mxu0
        %v6017 = vadd.f32 %v5968, %v6016
        %v6018 = vpop.f32.mrf.mxu0
        %v6019 = vadd.f32 %v5970, %v6018
        %6020 = vmatmul.bf16.gmra.mxu0 %v2749
        %v6021 = vpop.f32.mrf.mxu0
        %v6022 = vadd.f32 %v5973, %v6021
        %v6023 = vpop.f32.mrf.mxu0
        %v6024 = vadd.f32 %v5975, %v6023
        %6025 = vmatmul.bf16.gmra.mxu0 %v2757
        %v6026 = vpop.f32.mrf.mxu0
        %v6027 = vadd.f32 %v5978, %v6026
        %v6028 = vpop.f32.mrf.mxu0
        %v6029 = vadd.f32 %v5980, %v6028
        %6030 = vmatmul.bf16.gmra.mxu0 %v2765
        %v6031 = vpop.f32.mrf.mxu0
        %v6032 = vadd.f32 %v5983, %v6031
        %v6033 = vpop.f32.mrf.mxu0
        %v6034 = vadd.f32 %v5985, %v6033
        %6035 = vmatmul.bf16.gmra.mxu0 %v2773
        %v6036 = vpop.f32.mrf.mxu0
        %v6037 = vadd.f32 %v5988, %v6036
        %v6038 = vpop.f32.mrf.mxu0
        %v6039 = vadd.f32 %v5990, %v6038
        %6040 = vmatmul.bf16.gmra.mxu0 %v2781
        %v6041 = vpop.f32.mrf.mxu0
        %v6042 = vadd.f32 %v5993, %v6041
        %v6043 = vpop.f32.mrf.mxu0
        %v6044 = vadd.f32 %v5995, %v6043
        %6045 = vdwg.mxu0
        %6046 = vmatpush.bf16.msra.mxu0 %v4762
        %6047 = vmatpush.bf16.msra.mxu0 %v4754
        %6048 = vmatpush.bf16.msra.mxu0 %v4746
        %6049 = vmatpush.bf16.msra.mxu0 %v4738
        %6050 = vmatpush.bf16.msra.mxu0 %v4730
        %6051 = vmatpush.bf16.msra.mxu0 %v4722
        %6052 = vmatpush.bf16.msra.mxu0 %v4714
        %6053 = vmatpush.bf16.msra.mxu0 %v4706
        %6054 = vmatmul.bf16.gmra.mxu0 %v2726
        %v6055 = vpop.f32.mrf.mxu0
        %v6056 = vadd.f32 %v6007, %v6055
        %v6057 = vpop.f32.mrf.mxu0
        %v6058 = vadd.f32 %v6009, %v6057
        %6059 = vmatmul.bf16.gmra.mxu0 %v2734
        %v6060 = vpop.f32.mrf.mxu0
        %v6061 = vadd.f32 %v6012, %v6060
        %v6062 = vpop.f32.mrf.mxu0
        %v6063 = vadd.f32 %v6014, %v6062
        %6064 = vmatmul.bf16.gmra.mxu0 %v2742
        %v6065 = vpop.f32.mrf.mxu0
        %v6066 = vadd.f32 %v6017, %v6065
        %v6067 = vpop.f32.mrf.mxu0
        %v6068 = vadd.f32 %v6019, %v6067
        %6069 = vmatmul.bf16.gmra.mxu0 %v2750
        %v6070 = vpop.f32.mrf.mxu0
        %v6071 = vadd.f32 %v6022, %v6070
        %v6072 = vpop.f32.mrf.mxu0
        %v6073 = vadd.f32 %v6024, %v6072
        %6074 = vmatmul.bf16.gmra.mxu0 %v2758
        %v6075 = vpop.f32.mrf.mxu0
        %v6076 = vadd.f32 %v6027, %v6075
        %v6077 = vpop.f32.mrf.mxu0
        %v6078 = vadd.f32 %v6029, %v6077
        %6079 = vmatmul.bf16.gmra.mxu0 %v2766
        %v6080 = vpop.f32.mrf.mxu0
        %v6081 = vadd.f32 %v6032, %v6080
        %v6082 = vpop.f32.mrf.mxu0
        %v6083 = vadd.f32 %v6034, %v6082
        %6084 = vmatmul.bf16.gmra.mxu0 %v2774
        %v6085 = vpop.f32.mrf.mxu0
        %v6086 = vadd.f32 %v6037, %v6085
        %v6087 = vpop.f32.mrf.mxu0
        %v6088 = vadd.f32 %v6039, %v6087
        %6089 = vmatmul.bf16.gmra.mxu0 %v2782
        %v6090 = vpop.f32.mrf.mxu0
        %v6091 = vadd.f32 %v6042, %v6090
        %v6092 = vpop.f32.mrf.mxu0
        %v6093 = vadd.f32 %v6044, %v6092
        %6094 = vdwg.mxu0
        %6095 = vmatpush.bf16.msra.mxu0 %v4826
        %6096 = vmatpush.bf16.msra.mxu0 %v4818
        %6097 = vmatpush.bf16.msra.mxu0 %v4810
        %6098 = vmatpush.bf16.msra.mxu0 %v4802
        %6099 = vmatpush.bf16.msra.mxu0 %v4794
        %6100 = vmatpush.bf16.msra.mxu0 %v4786
        %6101 = vmatpush.bf16.msra.mxu0 %v4778
        %6102 = vmatpush.bf16.msra.mxu0 %v4770
        %6103 = vmatmul.bf16.gmra.mxu0 %v2727
        %v6104 = vpop.f32.mrf.mxu0
        %v6105 = vadd.f32 %v6056, %v6104
        %v6106 = vpop.f32.mrf.mxu0
        %v6107 = vadd.f32 %v6058, %v6106
        %6108 = vmatmul.bf16.gmra.mxu0 %v2735
        %v6109 = vpop.f32.mrf.mxu0
        %v6110 = vadd.f32 %v6061, %v6109
        %v6111 = vpop.f32.mrf.mxu0
        %v6112 = vadd.f32 %v6063, %v6111
        %6113 = vmatmul.bf16.gmra.mxu0 %v2743
        %v6114 = vpop.f32.mrf.mxu0
        %v6115 = vadd.f32 %v6066, %v6114
        %v6116 = vpop.f32.mrf.mxu0
        %v6117 = vadd.f32 %v6068, %v6116
        %6118 = vmatmul.bf16.gmra.mxu0 %v2751
        %v6119 = vpop.f32.mrf.mxu0
        %v6120 = vadd.f32 %v6071, %v6119
        %v6121 = vpop.f32.mrf.mxu0
        %v6122 = vadd.f32 %v6073, %v6121
        %6123 = vmatmul.bf16.gmra.mxu0 %v2759
        %v6124 = vpop.f32.mrf.mxu0
        %v6125 = vadd.f32 %v6076, %v6124
        %v6126 = vpop.f32.mrf.mxu0
        %v6127 = vadd.f32 %v6078, %v6126
        %6128 = vmatmul.bf16.gmra.mxu0 %v2767
        %v6129 = vpop.f32.mrf.mxu0
        %v6130 = vadd.f32 %v6081, %v6129
        %v6131 = vpop.f32.mrf.mxu0
        %v6132 = vadd.f32 %v6083, %v6131
        %6133 = vmatmul.bf16.gmra.mxu0 %v2775
        %v6134 = vpop.f32.mrf.mxu0
        %v6135 = vadd.f32 %v6086, %v6134
        %v6136 = vpop.f32.mrf.mxu0
        %v6137 = vadd.f32 %v6088, %v6136
        %6138 = vmatmul.bf16.gmra.mxu0 %v2783
        %v6139 = vpop.f32.mrf.mxu0
        %v6140 = vadd.f32 %v6091, %v6139
        %v6141 = vpop.f32.mrf.mxu0
        %v6142 = vadd.f32 %v6093, %v6141
        %6143 = vdwg.mxu0
        %6144 = vmatpush.bf16.msra.mxu0 %v4890
        %6145 = vmatpush.bf16.msra.mxu0 %v4882
        %6146 = vmatpush.bf16.msra.mxu0 %v4874
        %6147 = vmatpush.bf16.msra.mxu0 %v4866
        %6148 = vmatpush.bf16.msra.mxu0 %v4858
        %6149 = vmatpush.bf16.msra.mxu0 %v4850
        %6150 = vmatpush.bf16.msra.mxu0 %v4842
        %6151 = vmatpush.bf16.msra.mxu0 %v4834
        %6152 = vmatmul.bf16.gmra.mxu0 %v2728
        %v6153 = vpop.f32.mrf.mxu0
        %v6154 = vadd.f32 %v6105, %v6153
        %v6155 = vpop.f32.mrf.mxu0
        %v6156 = vadd.f32 %v6107, %v6155
        %6157 = vmatmul.bf16.gmra.mxu0 %v2736
        %v6158 = vpop.f32.mrf.mxu0
        %v6159 = vadd.f32 %v6110, %v6158
        %v6160 = vpop.f32.mrf.mxu0
        %v6161 = vadd.f32 %v6112, %v6160
        %6162 = vmatmul.bf16.gmra.mxu0 %v2744
        %v6163 = vpop.f32.mrf.mxu0
        %v6164 = vadd.f32 %v6115, %v6163
        %v6165 = vpop.f32.mrf.mxu0
        %v6166 = vadd.f32 %v6117, %v6165
        %6167 = vmatmul.bf16.gmra.mxu0 %v2752
        %v6168 = vpop.f32.mrf.mxu0
        %v6169 = vadd.f32 %v6120, %v6168
        %v6170 = vpop.f32.mrf.mxu0
        %v6171 = vadd.f32 %v6122, %v6170
        %6172 = vmatmul.bf16.gmra.mxu0 %v2760
        %v6173 = vpop.f32.mrf.mxu0
        %v6174 = vadd.f32 %v6125, %v6173
        %v6175 = vpop.f32.mrf.mxu0
        %v6176 = vadd.f32 %v6127, %v6175
        %6177 = vmatmul.bf16.gmra.mxu0 %v2768
        %v6178 = vpop.f32.mrf.mxu0
        %v6179 = vadd.f32 %v6130, %v6178
        %v6180 = vpop.f32.mrf.mxu0
        %v6181 = vadd.f32 %v6132, %v6180
        %6182 = vmatmul.bf16.gmra.mxu0 %v2776
        %v6183 = vpop.f32.mrf.mxu0
        %v6184 = vadd.f32 %v6135, %v6183
        %v6185 = vpop.f32.mrf.mxu0
        %v6186 = vadd.f32 %v6137, %v6185
        %6187 = vmatmul.bf16.gmra.mxu0 %v2784
        %v6188 = vpop.f32.mrf.mxu0
        %v6189 = vadd.f32 %v6140, %v6188
        %v6190 = vpop.f32.mrf.mxu0
        %v6191 = vadd.f32 %v6142, %v6190
        %6192 = vdwg.mxu0
        %6193 = vmatpush.bf16.msra.mxu0 %v4443
        %6194 = vmatpush.bf16.msra.mxu0 %v4435
        %6195 = vmatpush.bf16.msra.mxu0 %v4427
        %6196 = vmatpush.bf16.msra.mxu0 %v4419
        %6197 = vmatpush.bf16.msra.mxu0 %v4411
        %6198 = vmatpush.bf16.msra.mxu0 %v4403
        %6199 = vmatpush.bf16.msra.mxu0 %v4395
        %6200 = vmatpush.bf16.msra.mxu0 %v4387
        %6201 = vmatmul.bf16.gmra.mxu0 %v2721
        %v6202 = vpop.f32.mrf.mxu0
        %v6203 = vadd.f32 0.0, %v6202
        %v6204 = vpop.f32.mrf.mxu0
        %v6205 = vadd.f32 0.0, %v6204
        %6206 = vmatmul.bf16.gmra.mxu0 %v2729
        %v6207 = vpop.f32.mrf.mxu0
        %v6208 = vadd.f32 0.0, %v6207
        %v6209 = vpop.f32.mrf.mxu0
        %v6210 = vadd.f32 0.0, %v6209
        %6211 = vmatmul.bf16.gmra.mxu0 %v2737
        %v6212 = vpop.f32.mrf.mxu0
        %v6213 = vadd.f32 0.0, %v6212
        %v6214 = vpop.f32.mrf.mxu0
        %v6215 = vadd.f32 0.0, %v6214
        %6216 = vmatmul.bf16.gmra.mxu0 %v2745
        %v6217 = vpop.f32.mrf.mxu0
        %v6218 = vadd.f32 0.0, %v6217
        %v6219 = vpop.f32.mrf.mxu0
        %v6220 = vadd.f32 0.0, %v6219
        %6221 = vmatmul.bf16.gmra.mxu0 %v2753
        %v6222 = vpop.f32.mrf.mxu0
        %v6223 = vadd.f32 0.0, %v6222
        %v6224 = vpop.f32.mrf.mxu0
        %v6225 = vadd.f32 0.0, %v6224
        %6226 = vmatmul.bf16.gmra.mxu0 %v2761
        %v6227 = vpop.f32.mrf.mxu0
        %v6228 = vadd.f32 0.0, %v6227
        %v6229 = vpop.f32.mrf.mxu0
        %v6230 = vadd.f32 0.0, %v6229
        %6231 = vmatmul.bf16.gmra.mxu0 %v2769
        %v6232 = vpop.f32.mrf.mxu0
        %v6233 = vadd.f32 0.0, %v6232
        %v6234 = vpop.f32.mrf.mxu0
        %v6235 = vadd.f32 0.0, %v6234
        %6236 = vmatmul.bf16.gmra.mxu0 %v2777
        %v6237 = vpop.f32.mrf.mxu0
        %v6238 = vadd.f32 0.0, %v6237
        %v6239 = vpop.f32.mrf.mxu0
        %v6240 = vadd.f32 0.0, %v6239
        %6241 = vdwg.mxu0
        %6242 = vmatpush.bf16.msra.mxu0 %v4507
        %6243 = vmatpush.bf16.msra.mxu0 %v4499
        %6244 = vmatpush.bf16.msra.mxu0 %v4491
        %6245 = vmatpush.bf16.msra.mxu0 %v4483
        %6246 = vmatpush.bf16.msra.mxu0 %v4475
        %6247 = vmatpush.bf16.msra.mxu0 %v4467
        %6248 = vmatpush.bf16.msra.mxu0 %v4459
        %6249 = vmatpush.bf16.msra.mxu0 %v4451
        %6250 = vmatmul.bf16.gmra.mxu0 %v2722
        %v6251 = vpop.f32.mrf.mxu0
        %v6252 = vadd.f32 %v6203, %v6251
        %v6253 = vpop.f32.mrf.mxu0
        %v6254 = vadd.f32 %v6205, %v6253
        %6255 = vmatmul.bf16.gmra.mxu0 %v2730
        %v6256 = vpop.f32.mrf.mxu0
        %v6257 = vadd.f32 %v6208, %v6256
        %v6258 = vpop.f32.mrf.mxu0
        %v6259 = vadd.f32 %v6210, %v6258
        %6260 = vmatmul.bf16.gmra.mxu0 %v2738
        %v6261 = vpop.f32.mrf.mxu0
        %v6262 = vadd.f32 %v6213, %v6261
        %v6263 = vpop.f32.mrf.mxu0
        %v6264 = vadd.f32 %v6215, %v6263
        %6265 = vmatmul.bf16.gmra.mxu0 %v2746
        %v6266 = vpop.f32.mrf.mxu0
        %v6267 = vadd.f32 %v6218, %v6266
        %v6268 = vpop.f32.mrf.mxu0
        %v6269 = vadd.f32 %v6220, %v6268
        %6270 = vmatmul.bf16.gmra.mxu0 %v2754
        %v6271 = vpop.f32.mrf.mxu0
        %v6272 = vadd.f32 %v6223, %v6271
        %v6273 = vpop.f32.mrf.mxu0
        %v6274 = vadd.f32 %v6225, %v6273
        %6275 = vmatmul.bf16.gmra.mxu0 %v2762
        %v6276 = vpop.f32.mrf.mxu0
        %v6277 = vadd.f32 %v6228, %v6276
        %v6278 = vpop.f32.mrf.mxu0
        %v6279 = vadd.f32 %v6230, %v6278
        %6280 = vmatmul.bf16.gmra.mxu0 %v2770
        %v6281 = vpop.f32.mrf.mxu0
        %v6282 = vadd.f32 %v6233, %v6281
        %v6283 = vpop.f32.mrf.mxu0
        %v6284 = vadd.f32 %v6235, %v6283
        %6285 = vmatmul.bf16.gmra.mxu0 %v2778
        %v6286 = vpop.f32.mrf.mxu0
        %v6287 = vadd.f32 %v6238, %v6286
        %v6288 = vpop.f32.mrf.mxu0
        %v6289 = vadd.f32 %v6240, %v6288
        %6290 = vdwg.mxu0
        %6291 = vmatpush.bf16.msra.mxu0 %v4571
        %6292 = vmatpush.bf16.msra.mxu0 %v4563
        %6293 = vmatpush.bf16.msra.mxu0 %v4555
        %6294 = vmatpush.bf16.msra.mxu0 %v4547
        %6295 = vmatpush.bf16.msra.mxu0 %v4539
        %6296 = vmatpush.bf16.msra.mxu0 %v4531
        %6297 = vmatpush.bf16.msra.mxu0 %v4523
        %6298 = vmatpush.bf16.msra.mxu0 %v4515
        %6299 = vmatmul.bf16.gmra.mxu0 %v2723
        %v6300 = vpop.f32.mrf.mxu0
        %v6301 = vadd.f32 %v6252, %v6300
        %v6302 = vpop.f32.mrf.mxu0
        %v6303 = vadd.f32 %v6254, %v6302
        %6304 = vmatmul.bf16.gmra.mxu0 %v2731
        %v6305 = vpop.f32.mrf.mxu0
        %v6306 = vadd.f32 %v6257, %v6305
        %v6307 = vpop.f32.mrf.mxu0
        %v6308 = vadd.f32 %v6259, %v6307
        %6309 = vmatmul.bf16.gmra.mxu0 %v2739
        %v6310 = vpop.f32.mrf.mxu0
        %v6311 = vadd.f32 %v6262, %v6310
        %v6312 = vpop.f32.mrf.mxu0
        %v6313 = vadd.f32 %v6264, %v6312
        %6314 = vmatmul.bf16.gmra.mxu0 %v2747
        %v6315 = vpop.f32.mrf.mxu0
        %v6316 = vadd.f32 %v6267, %v6315
        %v6317 = vpop.f32.mrf.mxu0
        %v6318 = vadd.f32 %v6269, %v6317
        %6319 = vmatmul.bf16.gmra.mxu0 %v2755
        %v6320 = vpop.f32.mrf.mxu0
        %v6321 = vadd.f32 %v6272, %v6320
        %v6322 = vpop.f32.mrf.mxu0
        %v6323 = vadd.f32 %v6274, %v6322
        %6324 = vmatmul.bf16.gmra.mxu0 %v2763
        %v6325 = vpop.f32.mrf.mxu0
        %v6326 = vadd.f32 %v6277, %v6325
        %v6327 = vpop.f32.mrf.mxu0
        %v6328 = vadd.f32 %v6279, %v6327
        %6329 = vmatmul.bf16.gmra.mxu0 %v2771
        %v6330 = vpop.f32.mrf.mxu0
        %v6331 = vadd.f32 %v6282, %v6330
        %v6332 = vpop.f32.mrf.mxu0
        %v6333 = vadd.f32 %v6284, %v6332
        %6334 = vmatmul.bf16.gmra.mxu0 %v2779
        %v6335 = vpop.f32.mrf.mxu0
        %v6336 = vadd.f32 %v6287, %v6335
        %v6337 = vpop.f32.mrf.mxu0
        %v6338 = vadd.f32 %v6289, %v6337
        %6339 = vdwg.mxu0
        %6340 = vmatpush.bf16.msra.mxu0 %v4635
        %6341 = vmatpush.bf16.msra.mxu0 %v4627
        %6342 = vmatpush.bf16.msra.mxu0 %v4619
        %6343 = vmatpush.bf16.msra.mxu0 %v4611
        %6344 = vmatpush.bf16.msra.mxu0 %v4603
        %6345 = vmatpush.bf16.msra.mxu0 %v4595
        %6346 = vmatpush.bf16.msra.mxu0 %v4587
        %6347 = vmatpush.bf16.msra.mxu0 %v4579
        %6348 = vmatmul.bf16.gmra.mxu0 %v2724
        %v6349 = vpop.f32.mrf.mxu0
        %v6350 = vadd.f32 %v6301, %v6349
        %v6351 = vpop.f32.mrf.mxu0
        %v6352 = vadd.f32 %v6303, %v6351
        %6353 = vmatmul.bf16.gmra.mxu0 %v2732
        %v6354 = vpop.f32.mrf.mxu0
        %v6355 = vadd.f32 %v6306, %v6354
        %v6356 = vpop.f32.mrf.mxu0
        %v6357 = vadd.f32 %v6308, %v6356
        %6358 = vmatmul.bf16.gmra.mxu0 %v2740
        %v6359 = vpop.f32.mrf.mxu0
        %v6360 = vadd.f32 %v6311, %v6359
        %v6361 = vpop.f32.mrf.mxu0
        %v6362 = vadd.f32 %v6313, %v6361
        %6363 = vmatmul.bf16.gmra.mxu0 %v2748
        %v6364 = vpop.f32.mrf.mxu0
        %v6365 = vadd.f32 %v6316, %v6364
        %v6366 = vpop.f32.mrf.mxu0
        %v6367 = vadd.f32 %v6318, %v6366
        %6368 = vmatmul.bf16.gmra.mxu0 %v2756
        %v6369 = vpop.f32.mrf.mxu0
        %v6370 = vadd.f32 %v6321, %v6369
        %v6371 = vpop.f32.mrf.mxu0
        %v6372 = vadd.f32 %v6323, %v6371
        %6373 = vmatmul.bf16.gmra.mxu0 %v2764
        %v6374 = vpop.f32.mrf.mxu0
        %v6375 = vadd.f32 %v6326, %v6374
        %v6376 = vpop.f32.mrf.mxu0
        %v6377 = vadd.f32 %v6328, %v6376
        %6378 = vmatmul.bf16.gmra.mxu0 %v2772
        %v6379 = vpop.f32.mrf.mxu0
        %v6380 = vadd.f32 %v6331, %v6379
        %v6381 = vpop.f32.mrf.mxu0
        %v6382 = vadd.f32 %v6333, %v6381
        %6383 = vmatmul.bf16.gmra.mxu0 %v2780
        %v6384 = vpop.f32.mrf.mxu0
        %v6385 = vadd.f32 %v6336, %v6384
        %v6386 = vpop.f32.mrf.mxu0
        %v6387 = vadd.f32 %v6338, %v6386
        %6388 = vdwg.mxu0
        %6389 = vmatpush.bf16.msra.mxu0 %v4699
        %6390 = vmatpush.bf16.msra.mxu0 %v4691
        %6391 = vmatpush.bf16.msra.mxu0 %v4683
        %6392 = vmatpush.bf16.msra.mxu0 %v4675
        %6393 = vmatpush.bf16.msra.mxu0 %v4667
        %6394 = vmatpush.bf16.msra.mxu0 %v4659
        %6395 = vmatpush.bf16.msra.mxu0 %v4651
        %6396 = vmatpush.bf16.msra.mxu0 %v4643
        %6397 = vmatmul.bf16.gmra.mxu0 %v2725
        %v6398 = vpop.f32.mrf.mxu0
        %v6399 = vadd.f32 %v6350, %v6398
        %v6400 = vpop.f32.mrf.mxu0
        %v6401 = vadd.f32 %v6352, %v6400
        %6402 = vmatmul.bf16.gmra.mxu0 %v2733
        %v6403 = vpop.f32.mrf.mxu0
        %v6404 = vadd.f32 %v6355, %v6403
        %v6405 = vpop.f32.mrf.mxu0
        %v6406 = vadd.f32 %v6357, %v6405
        %6407 = vmatmul.bf16.gmra.mxu0 %v2741
        %v6408 = vpop.f32.mrf.mxu0
        %v6409 = vadd.f32 %v6360, %v6408
        %v6410 = vpop.f32.mrf.mxu0
        %v6411 = vadd.f32 %v6362, %v6410
        %6412 = vmatmul.bf16.gmra.mxu0 %v2749
        %v6413 = vpop.f32.mrf.mxu0
        %v6414 = vadd.f32 %v6365, %v6413
        %v6415 = vpop.f32.mrf.mxu0
        %v6416 = vadd.f32 %v6367, %v6415
        %6417 = vmatmul.bf16.gmra.mxu0 %v2757
        %v6418 = vpop.f32.mrf.mxu0
        %v6419 = vadd.f32 %v6370, %v6418
        %v6420 = vpop.f32.mrf.mxu0
        %v6421 = vadd.f32 %v6372, %v6420
        %6422 = vmatmul.bf16.gmra.mxu0 %v2765
        %v6423 = vpop.f32.mrf.mxu0
        %v6424 = vadd.f32 %v6375, %v6423
        %v6425 = vpop.f32.mrf.mxu0
        %v6426 = vadd.f32 %v6377, %v6425
        %6427 = vmatmul.bf16.gmra.mxu0 %v2773
        %v6428 = vpop.f32.mrf.mxu0
        %v6429 = vadd.f32 %v6380, %v6428
        %v6430 = vpop.f32.mrf.mxu0
        %v6431 = vadd.f32 %v6382, %v6430
        %6432 = vmatmul.bf16.gmra.mxu0 %v2781
        %v6433 = vpop.f32.mrf.mxu0
        %v6434 = vadd.f32 %v6385, %v6433
        %v6435 = vpop.f32.mrf.mxu0
        %v6436 = vadd.f32 %v6387, %v6435
        %6437 = vdwg.mxu0
        %6438 = vmatpush.bf16.msra.mxu0 %v4763
        %6439 = vmatpush.bf16.msra.mxu0 %v4755
        %6440 = vmatpush.bf16.msra.mxu0 %v4747
        %6441 = vmatpush.bf16.msra.mxu0 %v4739
        %6442 = vmatpush.bf16.msra.mxu0 %v4731
        %6443 = vmatpush.bf16.msra.mxu0 %v4723
        %6444 = vmatpush.bf16.msra.mxu0 %v4715
        %6445 = vmatpush.bf16.msra.mxu0 %v4707
        %6446 = vmatmul.bf16.gmra.mxu0 %v2726
        %v6447 = vpop.f32.mrf.mxu0
        %v6448 = vadd.f32 %v6399, %v6447
        %v6449 = vpop.f32.mrf.mxu0
        %v6450 = vadd.f32 %v6401, %v6449
        %6451 = vmatmul.bf16.gmra.mxu0 %v2734
        %v6452 = vpop.f32.mrf.mxu0
        %v6453 = vadd.f32 %v6404, %v6452
        %v6454 = vpop.f32.mrf.mxu0
        %v6455 = vadd.f32 %v6406, %v6454
        %6456 = vmatmul.bf16.gmra.mxu0 %v2742
        %v6457 = vpop.f32.mrf.mxu0
        %v6458 = vadd.f32 %v6409, %v6457
        %v6459 = vpop.f32.mrf.mxu0
        %v6460 = vadd.f32 %v6411, %v6459
        %6461 = vmatmul.bf16.gmra.mxu0 %v2750
        %v6462 = vpop.f32.mrf.mxu0
        %v6463 = vadd.f32 %v6414, %v6462
        %v6464 = vpop.f32.mrf.mxu0
        %v6465 = vadd.f32 %v6416, %v6464
        %6466 = vmatmul.bf16.gmra.mxu0 %v2758
        %v6467 = vpop.f32.mrf.mxu0
        %v6468 = vadd.f32 %v6419, %v6467
        %v6469 = vpop.f32.mrf.mxu0
        %v6470 = vadd.f32 %v6421, %v6469
        %6471 = vmatmul.bf16.gmra.mxu0 %v2766
        %v6472 = vpop.f32.mrf.mxu0
        %v6473 = vadd.f32 %v6424, %v6472
        %v6474 = vpop.f32.mrf.mxu0
        %v6475 = vadd.f32 %v6426, %v6474
        %6476 = vmatmul.bf16.gmra.mxu0 %v2774
        %v6477 = vpop.f32.mrf.mxu0
        %v6478 = vadd.f32 %v6429, %v6477
        %v6479 = vpop.f32.mrf.mxu0
        %v6480 = vadd.f32 %v6431, %v6479
        %6481 = vmatmul.bf16.gmra.mxu0 %v2782
        %v6482 = vpop.f32.mrf.mxu0
        %v6483 = vadd.f32 %v6434, %v6482
        %v6484 = vpop.f32.mrf.mxu0
        %v6485 = vadd.f32 %v6436, %v6484
        %6486 = vdwg.mxu0
        %6487 = vmatpush.bf16.msra.mxu0 %v4827
        %6488 = vmatpush.bf16.msra.mxu0 %v4819
        %6489 = vmatpush.bf16.msra.mxu0 %v4811
        %6490 = vmatpush.bf16.msra.mxu0 %v4803
        %6491 = vmatpush.bf16.msra.mxu0 %v4795
        %6492 = vmatpush.bf16.msra.mxu0 %v4787
        %6493 = vmatpush.bf16.msra.mxu0 %v4779
        %6494 = vmatpush.bf16.msra.mxu0 %v4771
        %6495 = vmatmul.bf16.gmra.mxu0 %v2727
        %v6496 = vpop.f32.mrf.mxu0
        %v6497 = vadd.f32 %v6448, %v6496
        %v6498 = vpop.f32.mrf.mxu0
        %v6499 = vadd.f32 %v6450, %v6498
        %6500 = vmatmul.bf16.gmra.mxu0 %v2735
        %v6501 = vpop.f32.mrf.mxu0
        %v6502 = vadd.f32 %v6453, %v6501
        %v6503 = vpop.f32.mrf.mxu0
        %v6504 = vadd.f32 %v6455, %v6503
        %6505 = vmatmul.bf16.gmra.mxu0 %v2743
        %v6506 = vpop.f32.mrf.mxu0
        %v6507 = vadd.f32 %v6458, %v6506
        %v6508 = vpop.f32.mrf.mxu0
        %v6509 = vadd.f32 %v6460, %v6508
        %6510 = vmatmul.bf16.gmra.mxu0 %v2751
        %v6511 = vpop.f32.mrf.mxu0
        %v6512 = vadd.f32 %v6463, %v6511
        %v6513 = vpop.f32.mrf.mxu0
        %v6514 = vadd.f32 %v6465, %v6513
        %6515 = vmatmul.bf16.gmra.mxu0 %v2759
        %v6516 = vpop.f32.mrf.mxu0
        %v6517 = vadd.f32 %v6468, %v6516
        %v6518 = vpop.f32.mrf.mxu0
        %v6519 = vadd.f32 %v6470, %v6518
        %6520 = vmatmul.bf16.gmra.mxu0 %v2767
        %v6521 = vpop.f32.mrf.mxu0
        %v6522 = vadd.f32 %v6473, %v6521
        %v6523 = vpop.f32.mrf.mxu0
        %v6524 = vadd.f32 %v6475, %v6523
        %6525 = vmatmul.bf16.gmra.mxu0 %v2775
        %v6526 = vpop.f32.mrf.mxu0
        %v6527 = vadd.f32 %v6478, %v6526
        %v6528 = vpop.f32.mrf.mxu0
        %v6529 = vadd.f32 %v6480, %v6528
        %6530 = vmatmul.bf16.gmra.mxu0 %v2783
        %v6531 = vpop.f32.mrf.mxu0
        %v6532 = vadd.f32 %v6483, %v6531
        %v6533 = vpop.f32.mrf.mxu0
        %v6534 = vadd.f32 %v6485, %v6533
        %6535 = vdwg.mxu0
        %6536 = vmatpush.bf16.msra.mxu0 %v4891
        %6537 = vmatpush.bf16.msra.mxu0 %v4883
        %6538 = vmatpush.bf16.msra.mxu0 %v4875
        %6539 = vmatpush.bf16.msra.mxu0 %v4867
        %6540 = vmatpush.bf16.msra.mxu0 %v4859
        %6541 = vmatpush.bf16.msra.mxu0 %v4851
        %6542 = vmatpush.bf16.msra.mxu0 %v4843
        %6543 = vmatpush.bf16.msra.mxu0 %v4835
        %6544 = vmatmul.bf16.gmra.mxu0 %v2728
        %v6545 = vpop.f32.mrf.mxu0
        %v6546 = vadd.f32 %v6497, %v6545
        %v6547 = vpop.f32.mrf.mxu0
        %v6548 = vadd.f32 %v6499, %v6547
        %6549 = vmatmul.bf16.gmra.mxu0 %v2736
        %v6550 = vpop.f32.mrf.mxu0
        %v6551 = vadd.f32 %v6502, %v6550
        %v6552 = vpop.f32.mrf.mxu0
        %v6553 = vadd.f32 %v6504, %v6552
        %6554 = vmatmul.bf16.gmra.mxu0 %v2744
        %v6555 = vpop.f32.mrf.mxu0
        %v6556 = vadd.f32 %v6507, %v6555
        %v6557 = vpop.f32.mrf.mxu0
        %v6558 = vadd.f32 %v6509, %v6557
        %6559 = vmatmul.bf16.gmra.mxu0 %v2752
        %v6560 = vpop.f32.mrf.mxu0
        %v6561 = vadd.f32 %v6512, %v6560
        %v6562 = vpop.f32.mrf.mxu0
        %v6563 = vadd.f32 %v6514, %v6562
        %6564 = vmatmul.bf16.gmra.mxu0 %v2760
        %v6565 = vpop.f32.mrf.mxu0
        %v6566 = vadd.f32 %v6517, %v6565
        %v6567 = vpop.f32.mrf.mxu0
        %v6568 = vadd.f32 %v6519, %v6567
        %6569 = vmatmul.bf16.gmra.mxu0 %v2768
        %v6570 = vpop.f32.mrf.mxu0
        %v6571 = vadd.f32 %v6522, %v6570
        %v6572 = vpop.f32.mrf.mxu0
        %v6573 = vadd.f32 %v6524, %v6572
        %6574 = vmatmul.bf16.gmra.mxu0 %v2776
        %v6575 = vpop.f32.mrf.mxu0
        %v6576 = vadd.f32 %v6527, %v6575
        %v6577 = vpop.f32.mrf.mxu0
        %v6578 = vadd.f32 %v6529, %v6577
        %6579 = vmatmul.bf16.gmra.mxu0 %v2784
        %v6580 = vpop.f32.mrf.mxu0
        %v6581 = vadd.f32 %v6532, %v6580
        %v6582 = vpop.f32.mrf.mxu0
        %v6583 = vadd.f32 %v6534, %v6582
        %6584 = vdwg.mxu0
        %6585 = vmatpush.bf16.msra.mxu0 %v4444
        %6586 = vmatpush.bf16.msra.mxu0 %v4436
        %6587 = vmatpush.bf16.msra.mxu0 %v4428
        %6588 = vmatpush.bf16.msra.mxu0 %v4420
        %6589 = vmatpush.bf16.msra.mxu0 %v4412
        %6590 = vmatpush.bf16.msra.mxu0 %v4404
        %6591 = vmatpush.bf16.msra.mxu0 %v4396
        %6592 = vmatpush.bf16.msra.mxu0 %v4388
        %6593 = vmatmul.bf16.gmra.mxu0 %v2721
        %v6594 = vpop.f32.mrf.mxu0
        %v6595 = vadd.f32 0.0, %v6594
        %v6596 = vpop.f32.mrf.mxu0
        %v6597 = vadd.f32 0.0, %v6596
        %6598 = vmatmul.bf16.gmra.mxu0 %v2729
        %v6599 = vpop.f32.mrf.mxu0
        %v6600 = vadd.f32 0.0, %v6599
        %v6601 = vpop.f32.mrf.mxu0
        %v6602 = vadd.f32 0.0, %v6601
        %6603 = vmatmul.bf16.gmra.mxu0 %v2737
        %v6604 = vpop.f32.mrf.mxu0
        %v6605 = vadd.f32 0.0, %v6604
        %v6606 = vpop.f32.mrf.mxu0
        %v6607 = vadd.f32 0.0, %v6606
        %6608 = vmatmul.bf16.gmra.mxu0 %v2745
        %v6609 = vpop.f32.mrf.mxu0
        %v6610 = vadd.f32 0.0, %v6609
        %v6611 = vpop.f32.mrf.mxu0
        %v6612 = vadd.f32 0.0, %v6611
        %6613 = vmatmul.bf16.gmra.mxu0 %v2753
        %v6614 = vpop.f32.mrf.mxu0
        %v6615 = vadd.f32 0.0, %v6614
        %v6616 = vpop.f32.mrf.mxu0
        %v6617 = vadd.f32 0.0, %v6616
        %6618 = vmatmul.bf16.gmra.mxu0 %v2761
        %v6619 = vpop.f32.mrf.mxu0
        %v6620 = vadd.f32 0.0, %v6619
        %v6621 = vpop.f32.mrf.mxu0
        %v6622 = vadd.f32 0.0, %v6621
        %6623 = vmatmul.bf16.gmra.mxu0 %v2769
        %v6624 = vpop.f32.mrf.mxu0
        %v6625 = vadd.f32 0.0, %v6624
        %v6626 = vpop.f32.mrf.mxu0
        %v6627 = vadd.f32 0.0, %v6626
        %6628 = vmatmul.bf16.gmra.mxu0 %v2777
        %v6629 = vpop.f32.mrf.mxu0
        %v6630 = vadd.f32 0.0, %v6629
        %v6631 = vpop.f32.mrf.mxu0
        %v6632 = vadd.f32 0.0, %v6631
        %6633 = vdwg.mxu0
        %6634 = vmatpush.bf16.msra.mxu0 %v4508
        %6635 = vmatpush.bf16.msra.mxu0 %v4500
        %6636 = vmatpush.bf16.msra.mxu0 %v4492
        %6637 = vmatpush.bf16.msra.mxu0 %v4484
        %6638 = vmatpush.bf16.msra.mxu0 %v4476
        %6639 = vmatpush.bf16.msra.mxu0 %v4468
        %6640 = vmatpush.bf16.msra.mxu0 %v4460
        %6641 = vmatpush.bf16.msra.mxu0 %v4452
        %6642 = vmatmul.bf16.gmra.mxu0 %v2722
        %v6643 = vpop.f32.mrf.mxu0
        %v6644 = vadd.f32 %v6595, %v6643
        %v6645 = vpop.f32.mrf.mxu0
        %v6646 = vadd.f32 %v6597, %v6645
        %6647 = vmatmul.bf16.gmra.mxu0 %v2730
        %v6648 = vpop.f32.mrf.mxu0
        %v6649 = vadd.f32 %v6600, %v6648
        %v6650 = vpop.f32.mrf.mxu0
        %v6651 = vadd.f32 %v6602, %v6650
        %6652 = vmatmul.bf16.gmra.mxu0 %v2738
        %v6653 = vpop.f32.mrf.mxu0
        %v6654 = vadd.f32 %v6605, %v6653
        %v6655 = vpop.f32.mrf.mxu0
        %v6656 = vadd.f32 %v6607, %v6655
        %6657 = vmatmul.bf16.gmra.mxu0 %v2746
        %v6658 = vpop.f32.mrf.mxu0
        %v6659 = vadd.f32 %v6610, %v6658
        %v6660 = vpop.f32.mrf.mxu0
        %v6661 = vadd.f32 %v6612, %v6660
        %6662 = vmatmul.bf16.gmra.mxu0 %v2754
        %v6663 = vpop.f32.mrf.mxu0
        %v6664 = vadd.f32 %v6615, %v6663
        %v6665 = vpop.f32.mrf.mxu0
        %v6666 = vadd.f32 %v6617, %v6665
        %6667 = vmatmul.bf16.gmra.mxu0 %v2762
        %v6668 = vpop.f32.mrf.mxu0
        %v6669 = vadd.f32 %v6620, %v6668
        %v6670 = vpop.f32.mrf.mxu0
        %v6671 = vadd.f32 %v6622, %v6670
        %6672 = vmatmul.bf16.gmra.mxu0 %v2770
        %v6673 = vpop.f32.mrf.mxu0
        %v6674 = vadd.f32 %v6625, %v6673
        %v6675 = vpop.f32.mrf.mxu0
        %v6676 = vadd.f32 %v6627, %v6675
        %6677 = vmatmul.bf16.gmra.mxu0 %v2778
        %v6678 = vpop.f32.mrf.mxu0
        %v6679 = vadd.f32 %v6630, %v6678
        %v6680 = vpop.f32.mrf.mxu0
        %v6681 = vadd.f32 %v6632, %v6680
        %6682 = vdwg.mxu0
        %6683 = vmatpush.bf16.msra.mxu0 %v4572
        %6684 = vmatpush.bf16.msra.mxu0 %v4564
        %6685 = vmatpush.bf16.msra.mxu0 %v4556
        %6686 = vmatpush.bf16.msra.mxu0 %v4548
        %6687 = vmatpush.bf16.msra.mxu0 %v4540
        %6688 = vmatpush.bf16.msra.mxu0 %v4532
        %6689 = vmatpush.bf16.msra.mxu0 %v4524
        %6690 = vmatpush.bf16.msra.mxu0 %v4516
        %6691 = vmatmul.bf16.gmra.mxu0 %v2723
        %v6692 = vpop.f32.mrf.mxu0
        %v6693 = vadd.f32 %v6644, %v6692
        %v6694 = vpop.f32.mrf.mxu0
        %v6695 = vadd.f32 %v6646, %v6694
        %6696 = vmatmul.bf16.gmra.mxu0 %v2731
        %v6697 = vpop.f32.mrf.mxu0
        %v6698 = vadd.f32 %v6649, %v6697
        %v6699 = vpop.f32.mrf.mxu0
        %v6700 = vadd.f32 %v6651, %v6699
        %6701 = vmatmul.bf16.gmra.mxu0 %v2739
        %v6702 = vpop.f32.mrf.mxu0
        %v6703 = vadd.f32 %v6654, %v6702
        %v6704 = vpop.f32.mrf.mxu0
        %v6705 = vadd.f32 %v6656, %v6704
        %6706 = vmatmul.bf16.gmra.mxu0 %v2747
        %v6707 = vpop.f32.mrf.mxu0
        %v6708 = vadd.f32 %v6659, %v6707
        %v6709 = vpop.f32.mrf.mxu0
        %v6710 = vadd.f32 %v6661, %v6709
        %6711 = vmatmul.bf16.gmra.mxu0 %v2755
        %v6712 = vpop.f32.mrf.mxu0
        %v6713 = vadd.f32 %v6664, %v6712
        %v6714 = vpop.f32.mrf.mxu0
        %v6715 = vadd.f32 %v6666, %v6714
        %6716 = vmatmul.bf16.gmra.mxu0 %v2763
        %v6717 = vpop.f32.mrf.mxu0
        %v6718 = vadd.f32 %v6669, %v6717
        %v6719 = vpop.f32.mrf.mxu0
        %v6720 = vadd.f32 %v6671, %v6719
        %6721 = vmatmul.bf16.gmra.mxu0 %v2771
        %v6722 = vpop.f32.mrf.mxu0
        %v6723 = vadd.f32 %v6674, %v6722
        %v6724 = vpop.f32.mrf.mxu0
        %v6725 = vadd.f32 %v6676, %v6724
        %6726 = vmatmul.bf16.gmra.mxu0 %v2779
        %v6727 = vpop.f32.mrf.mxu0
        %v6728 = vadd.f32 %v6679, %v6727
        %v6729 = vpop.f32.mrf.mxu0
        %v6730 = vadd.f32 %v6681, %v6729
        %6731 = vdwg.mxu0
        %6732 = vmatpush.bf16.msra.mxu0 %v4636
        %6733 = vmatpush.bf16.msra.mxu0 %v4628
        %6734 = vmatpush.bf16.msra.mxu0 %v4620
        %6735 = vmatpush.bf16.msra.mxu0 %v4612
        %6736 = vmatpush.bf16.msra.mxu0 %v4604
        %6737 = vmatpush.bf16.msra.mxu0 %v4596
        %6738 = vmatpush.bf16.msra.mxu0 %v4588
        %6739 = vmatpush.bf16.msra.mxu0 %v4580
        %6740 = vmatmul.bf16.gmra.mxu0 %v2724
        %v6741 = vpop.f32.mrf.mxu0
        %v6742 = vadd.f32 %v6693, %v6741
        %v6743 = vpop.f32.mrf.mxu0
        %v6744 = vadd.f32 %v6695, %v6743
        %6745 = vmatmul.bf16.gmra.mxu0 %v2732
        %v6746 = vpop.f32.mrf.mxu0
        %v6747 = vadd.f32 %v6698, %v6746
        %v6748 = vpop.f32.mrf.mxu0
        %v6749 = vadd.f32 %v6700, %v6748
        %6750 = vmatmul.bf16.gmra.mxu0 %v2740
        %v6751 = vpop.f32.mrf.mxu0
        %v6752 = vadd.f32 %v6703, %v6751
        %v6753 = vpop.f32.mrf.mxu0
        %v6754 = vadd.f32 %v6705, %v6753
        %6755 = vmatmul.bf16.gmra.mxu0 %v2748
        %v6756 = vpop.f32.mrf.mxu0
        %v6757 = vadd.f32 %v6708, %v6756
        %v6758 = vpop.f32.mrf.mxu0
        %v6759 = vadd.f32 %v6710, %v6758
        %6760 = vmatmul.bf16.gmra.mxu0 %v2756
        %v6761 = vpop.f32.mrf.mxu0
        %v6762 = vadd.f32 %v6713, %v6761
        %v6763 = vpop.f32.mrf.mxu0
        %v6764 = vadd.f32 %v6715, %v6763
        %6765 = vmatmul.bf16.gmra.mxu0 %v2764
        %v6766 = vpop.f32.mrf.mxu0
        %v6767 = vadd.f32 %v6718, %v6766
        %v6768 = vpop.f32.mrf.mxu0
        %v6769 = vadd.f32 %v6720, %v6768
        %6770 = vmatmul.bf16.gmra.mxu0 %v2772
        %v6771 = vpop.f32.mrf.mxu0
        %v6772 = vadd.f32 %v6723, %v6771
        %v6773 = vpop.f32.mrf.mxu0
        %v6774 = vadd.f32 %v6725, %v6773
        %6775 = vmatmul.bf16.gmra.mxu0 %v2780
        %v6776 = vpop.f32.mrf.mxu0
        %v6777 = vadd.f32 %v6728, %v6776
        %v6778 = vpop.f32.mrf.mxu0
        %v6779 = vadd.f32 %v6730, %v6778
        %6780 = vdwg.mxu0
        %6781 = vmatpush.bf16.msra.mxu0 %v4700
        %6782 = vmatpush.bf16.msra.mxu0 %v4692
        %6783 = vmatpush.bf16.msra.mxu0 %v4684
        %6784 = vmatpush.bf16.msra.mxu0 %v4676
        %6785 = vmatpush.bf16.msra.mxu0 %v4668
        %6786 = vmatpush.bf16.msra.mxu0 %v4660
        %6787 = vmatpush.bf16.msra.mxu0 %v4652
        %6788 = vmatpush.bf16.msra.mxu0 %v4644
        %6789 = vmatmul.bf16.gmra.mxu0 %v2725
        %v6790 = vpop.f32.mrf.mxu0
        %v6791 = vadd.f32 %v6742, %v6790
        %v6792 = vpop.f32.mrf.mxu0
        %v6793 = vadd.f32 %v6744, %v6792
        %6794 = vmatmul.bf16.gmra.mxu0 %v2733
        %v6795 = vpop.f32.mrf.mxu0
        %v6796 = vadd.f32 %v6747, %v6795
        %v6797 = vpop.f32.mrf.mxu0
        %v6798 = vadd.f32 %v6749, %v6797
        %6799 = vmatmul.bf16.gmra.mxu0 %v2741
        %v6800 = vpop.f32.mrf.mxu0
        %v6801 = vadd.f32 %v6752, %v6800
        %v6802 = vpop.f32.mrf.mxu0
        %v6803 = vadd.f32 %v6754, %v6802
        %6804 = vmatmul.bf16.gmra.mxu0 %v2749
        %v6805 = vpop.f32.mrf.mxu0
        %v6806 = vadd.f32 %v6757, %v6805
        %v6807 = vpop.f32.mrf.mxu0
        %v6808 = vadd.f32 %v6759, %v6807
        %6809 = vmatmul.bf16.gmra.mxu0 %v2757
        %v6810 = vpop.f32.mrf.mxu0
        %v6811 = vadd.f32 %v6762, %v6810
        %v6812 = vpop.f32.mrf.mxu0
        %v6813 = vadd.f32 %v6764, %v6812
        %6814 = vmatmul.bf16.gmra.mxu0 %v2765
        %v6815 = vpop.f32.mrf.mxu0
        %v6816 = vadd.f32 %v6767, %v6815
        %v6817 = vpop.f32.mrf.mxu0
        %v6818 = vadd.f32 %v6769, %v6817
        %6819 = vmatmul.bf16.gmra.mxu0 %v2773
        %v6820 = vpop.f32.mrf.mxu0
        %v6821 = vadd.f32 %v6772, %v6820
        %v6822 = vpop.f32.mrf.mxu0
        %v6823 = vadd.f32 %v6774, %v6822
        %6824 = vmatmul.bf16.gmra.mxu0 %v2781
        %v6825 = vpop.f32.mrf.mxu0
        %v6826 = vadd.f32 %v6777, %v6825
        %v6827 = vpop.f32.mrf.mxu0
        %v6828 = vadd.f32 %v6779, %v6827
        %6829 = vdwg.mxu0
        %6830 = vmatpush.bf16.msra.mxu0 %v4764
        %6831 = vmatpush.bf16.msra.mxu0 %v4756
        %6832 = vmatpush.bf16.msra.mxu0 %v4748
        %6833 = vmatpush.bf16.msra.mxu0 %v4740
        %6834 = vmatpush.bf16.msra.mxu0 %v4732
        %6835 = vmatpush.bf16.msra.mxu0 %v4724
        %6836 = vmatpush.bf16.msra.mxu0 %v4716
        %6837 = vmatpush.bf16.msra.mxu0 %v4708
        %6838 = vmatmul.bf16.gmra.mxu0 %v2726
        %v6839 = vpop.f32.mrf.mxu0
        %v6840 = vadd.f32 %v6791, %v6839
        %v6841 = vpop.f32.mrf.mxu0
        %v6842 = vadd.f32 %v6793, %v6841
        %6843 = vmatmul.bf16.gmra.mxu0 %v2734
        %v6844 = vpop.f32.mrf.mxu0
        %v6845 = vadd.f32 %v6796, %v6844
        %v6846 = vpop.f32.mrf.mxu0
        %v6847 = vadd.f32 %v6798, %v6846
        %6848 = vmatmul.bf16.gmra.mxu0 %v2742
        %v6849 = vpop.f32.mrf.mxu0
        %v6850 = vadd.f32 %v6801, %v6849
        %v6851 = vpop.f32.mrf.mxu0
        %v6852 = vadd.f32 %v6803, %v6851
        %6853 = vmatmul.bf16.gmra.mxu0 %v2750
        %v6854 = vpop.f32.mrf.mxu0
        %v6855 = vadd.f32 %v6806, %v6854
        %v6856 = vpop.f32.mrf.mxu0
        %v6857 = vadd.f32 %v6808, %v6856
        %6858 = vmatmul.bf16.gmra.mxu0 %v2758
        %v6859 = vpop.f32.mrf.mxu0
        %v6860 = vadd.f32 %v6811, %v6859
        %v6861 = vpop.f32.mrf.mxu0
        %v6862 = vadd.f32 %v6813, %v6861
        %6863 = vmatmul.bf16.gmra.mxu0 %v2766
        %v6864 = vpop.f32.mrf.mxu0
        %v6865 = vadd.f32 %v6816, %v6864
        %v6866 = vpop.f32.mrf.mxu0
        %v6867 = vadd.f32 %v6818, %v6866
        %6868 = vmatmul.bf16.gmra.mxu0 %v2774
        %v6869 = vpop.f32.mrf.mxu0
        %v6870 = vadd.f32 %v6821, %v6869
        %v6871 = vpop.f32.mrf.mxu0
        %v6872 = vadd.f32 %v6823, %v6871
        %6873 = vmatmul.bf16.gmra.mxu0 %v2782
        %v6874 = vpop.f32.mrf.mxu0
        %v6875 = vadd.f32 %v6826, %v6874
        %v6876 = vpop.f32.mrf.mxu0
        %v6877 = vadd.f32 %v6828, %v6876
        %6878 = vdwg.mxu0
        %6879 = vmatpush.bf16.msra.mxu0 %v4828
        %6880 = vmatpush.bf16.msra.mxu0 %v4820
        %6881 = vmatpush.bf16.msra.mxu0 %v4812
        %6882 = vmatpush.bf16.msra.mxu0 %v4804
        %6883 = vmatpush.bf16.msra.mxu0 %v4796
        %6884 = vmatpush.bf16.msra.mxu0 %v4788
        %6885 = vmatpush.bf16.msra.mxu0 %v4780
        %6886 = vmatpush.bf16.msra.mxu0 %v4772
        %6887 = vmatmul.bf16.gmra.mxu0 %v2727
        %v6888 = vpop.f32.mrf.mxu0
        %v6889 = vadd.f32 %v6840, %v6888
        %v6890 = vpop.f32.mrf.mxu0
        %v6891 = vadd.f32 %v6842, %v6890
        %6892 = vmatmul.bf16.gmra.mxu0 %v2735
        %v6893 = vpop.f32.mrf.mxu0
        %v6894 = vadd.f32 %v6845, %v6893
        %v6895 = vpop.f32.mrf.mxu0
        %v6896 = vadd.f32 %v6847, %v6895
        %6897 = vmatmul.bf16.gmra.mxu0 %v2743
        %v6898 = vpop.f32.mrf.mxu0
        %v6899 = vadd.f32 %v6850, %v6898
        %v6900 = vpop.f32.mrf.mxu0
        %v6901 = vadd.f32 %v6852, %v6900
        %6902 = vmatmul.bf16.gmra.mxu0 %v2751
        %v6903 = vpop.f32.mrf.mxu0
        %v6904 = vadd.f32 %v6855, %v6903
        %v6905 = vpop.f32.mrf.mxu0
        %v6906 = vadd.f32 %v6857, %v6905
        %6907 = vmatmul.bf16.gmra.mxu0 %v2759
        %v6908 = vpop.f32.mrf.mxu0
        %v6909 = vadd.f32 %v6860, %v6908
        %v6910 = vpop.f32.mrf.mxu0
        %v6911 = vadd.f32 %v6862, %v6910
        %6912 = vmatmul.bf16.gmra.mxu0 %v2767
        %v6913 = vpop.f32.mrf.mxu0
        %v6914 = vadd.f32 %v6865, %v6913
        %v6915 = vpop.f32.mrf.mxu0
        %v6916 = vadd.f32 %v6867, %v6915
        %6917 = vmatmul.bf16.gmra.mxu0 %v2775
        %v6918 = vpop.f32.mrf.mxu0
        %v6919 = vadd.f32 %v6870, %v6918
        %v6920 = vpop.f32.mrf.mxu0
        %v6921 = vadd.f32 %v6872, %v6920
        %6922 = vmatmul.bf16.gmra.mxu0 %v2783
        %v6923 = vpop.f32.mrf.mxu0
        %v6924 = vadd.f32 %v6875, %v6923
        %v6925 = vpop.f32.mrf.mxu0
        %v6926 = vadd.f32 %v6877, %v6925
        %6927 = vdwg.mxu0
        %6928 = vmatpush.bf16.msra.mxu0 %v4892
        %6929 = vmatpush.bf16.msra.mxu0 %v4884
        %6930 = vmatpush.bf16.msra.mxu0 %v4876
        %6931 = vmatpush.bf16.msra.mxu0 %v4868
        %6932 = vmatpush.bf16.msra.mxu0 %v4860
        %6933 = vmatpush.bf16.msra.mxu0 %v4852
        %6934 = vmatpush.bf16.msra.mxu0 %v4844
        %6935 = vmatpush.bf16.msra.mxu0 %v4836
        %6936 = vmatmul.bf16.gmra.mxu0 %v2728
        %v6937 = vpop.f32.mrf.mxu0
        %v6938 = vadd.f32 %v6889, %v6937
        %v6939 = vpop.f32.mrf.mxu0
        %v6940 = vadd.f32 %v6891, %v6939
        %6941 = vmatmul.bf16.gmra.mxu0 %v2736
        %v6942 = vpop.f32.mrf.mxu0
        %v6943 = vadd.f32 %v6894, %v6942
        %v6944 = vpop.f32.mrf.mxu0
        %v6945 = vadd.f32 %v6896, %v6944
        %6946 = vmatmul.bf16.gmra.mxu0 %v2744
        %v6947 = vpop.f32.mrf.mxu0
        %v6948 = vadd.f32 %v6899, %v6947
        %v6949 = vpop.f32.mrf.mxu0
        %v6950 = vadd.f32 %v6901, %v6949
        %6951 = vmatmul.bf16.gmra.mxu0 %v2752
        %v6952 = vpop.f32.mrf.mxu0
        %v6953 = vadd.f32 %v6904, %v6952
        %v6954 = vpop.f32.mrf.mxu0
        %v6955 = vadd.f32 %v6906, %v6954
        %6956 = vmatmul.bf16.gmra.mxu0 %v2760
        %v6957 = vpop.f32.mrf.mxu0
        %v6958 = vadd.f32 %v6909, %v6957
        %v6959 = vpop.f32.mrf.mxu0
        %v6960 = vadd.f32 %v6911, %v6959
        %6961 = vmatmul.bf16.gmra.mxu0 %v2768
        %v6962 = vpop.f32.mrf.mxu0
        %v6963 = vadd.f32 %v6914, %v6962
        %v6964 = vpop.f32.mrf.mxu0
        %v6965 = vadd.f32 %v6916, %v6964
        %6966 = vmatmul.bf16.gmra.mxu0 %v2776
        %v6967 = vpop.f32.mrf.mxu0
        %v6968 = vadd.f32 %v6919, %v6967
        %v6969 = vpop.f32.mrf.mxu0
        %v6970 = vadd.f32 %v6921, %v6969
        %6971 = vmatmul.bf16.gmra.mxu0 %v2784
        %v6972 = vpop.f32.mrf.mxu0
        %v6973 = vadd.f32 %v6924, %v6972
        %v6974 = vpop.f32.mrf.mxu0
        %v6975 = vadd.f32 %v6926, %v6974
        %6976 = vdwg.mxu0
        %6977 = vmatpush.bf16.msra.mxu0 %v4445
        %6978 = vmatpush.bf16.msra.mxu0 %v4437
        %6979 = vmatpush.bf16.msra.mxu0 %v4429
        %6980 = vmatpush.bf16.msra.mxu0 %v4421
        %6981 = vmatpush.bf16.msra.mxu0 %v4413
        %6982 = vmatpush.bf16.msra.mxu0 %v4405
        %6983 = vmatpush.bf16.msra.mxu0 %v4397
        %6984 = vmatpush.bf16.msra.mxu0 %v4389
        %6985 = vmatmul.bf16.gmra.mxu0 %v2721
        %v6986 = vpop.f32.mrf.mxu0
        %v6987 = vadd.f32 0.0, %v6986
        %v6988 = vpop.f32.mrf.mxu0
        %v6989 = vadd.f32 0.0, %v6988
        %6990 = vmatmul.bf16.gmra.mxu0 %v2729
        %v6991 = vpop.f32.mrf.mxu0
        %v6992 = vadd.f32 0.0, %v6991
        %v6993 = vpop.f32.mrf.mxu0
        %v6994 = vadd.f32 0.0, %v6993
        %6995 = vmatmul.bf16.gmra.mxu0 %v2737
        %v6996 = vpop.f32.mrf.mxu0
        %v6997 = vadd.f32 0.0, %v6996
        %v6998 = vpop.f32.mrf.mxu0
        %v6999 = vadd.f32 0.0, %v6998
        %7000 = vmatmul.bf16.gmra.mxu0 %v2745
        %v7001 = vpop.f32.mrf.mxu0
        %v7002 = vadd.f32 0.0, %v7001
        %v7003 = vpop.f32.mrf.mxu0
        %v7004 = vadd.f32 0.0, %v7003
        %7005 = vmatmul.bf16.gmra.mxu0 %v2753
        %v7006 = vpop.f32.mrf.mxu0
        %v7007 = vadd.f32 0.0, %v7006
        %v7008 = vpop.f32.mrf.mxu0
        %v7009 = vadd.f32 0.0, %v7008
        %7010 = vmatmul.bf16.gmra.mxu0 %v2761
        %v7011 = vpop.f32.mrf.mxu0
        %v7012 = vadd.f32 0.0, %v7011
        %v7013 = vpop.f32.mrf.mxu0
        %v7014 = vadd.f32 0.0, %v7013
        %7015 = vmatmul.bf16.gmra.mxu0 %v2769
        %v7016 = vpop.f32.mrf.mxu0
        %v7017 = vadd.f32 0.0, %v7016
        %v7018 = vpop.f32.mrf.mxu0
        %v7019 = vadd.f32 0.0, %v7018
        %7020 = vmatmul.bf16.gmra.mxu0 %v2777
        %v7021 = vpop.f32.mrf.mxu0
        %v7022 = vadd.f32 0.0, %v7021
        %v7023 = vpop.f32.mrf.mxu0
        %v7024 = vadd.f32 0.0, %v7023
        %7025 = vdwg.mxu0
        %7026 = vmatpush.bf16.msra.mxu0 %v4509
        %7027 = vmatpush.bf16.msra.mxu0 %v4501
        %7028 = vmatpush.bf16.msra.mxu0 %v4493
        %7029 = vmatpush.bf16.msra.mxu0 %v4485
        %7030 = vmatpush.bf16.msra.mxu0 %v4477
        %7031 = vmatpush.bf16.msra.mxu0 %v4469
        %7032 = vmatpush.bf16.msra.mxu0 %v4461
        %7033 = vmatpush.bf16.msra.mxu0 %v4453
        %7034 = vmatmul.bf16.gmra.mxu0 %v2722
        %v7035 = vpop.f32.mrf.mxu0
        %v7036 = vadd.f32 %v6987, %v7035
        %v7037 = vpop.f32.mrf.mxu0
        %v7038 = vadd.f32 %v6989, %v7037
        %7039 = vmatmul.bf16.gmra.mxu0 %v2730
        %v7040 = vpop.f32.mrf.mxu0
        %v7041 = vadd.f32 %v6992, %v7040
        %v7042 = vpop.f32.mrf.mxu0
        %v7043 = vadd.f32 %v6994, %v7042
        %7044 = vmatmul.bf16.gmra.mxu0 %v2738
        %v7045 = vpop.f32.mrf.mxu0
        %v7046 = vadd.f32 %v6997, %v7045
        %v7047 = vpop.f32.mrf.mxu0
        %v7048 = vadd.f32 %v6999, %v7047
        %7049 = vmatmul.bf16.gmra.mxu0 %v2746
        %v7050 = vpop.f32.mrf.mxu0
        %v7051 = vadd.f32 %v7002, %v7050
        %v7052 = vpop.f32.mrf.mxu0
        %v7053 = vadd.f32 %v7004, %v7052
        %7054 = vmatmul.bf16.gmra.mxu0 %v2754
        %v7055 = vpop.f32.mrf.mxu0
        %v7056 = vadd.f32 %v7007, %v7055
        %v7057 = vpop.f32.mrf.mxu0
        %v7058 = vadd.f32 %v7009, %v7057
        %7059 = vmatmul.bf16.gmra.mxu0 %v2762
        %v7060 = vpop.f32.mrf.mxu0
        %v7061 = vadd.f32 %v7012, %v7060
        %v7062 = vpop.f32.mrf.mxu0
        %v7063 = vadd.f32 %v7014, %v7062
        %7064 = vmatmul.bf16.gmra.mxu0 %v2770
        %v7065 = vpop.f32.mrf.mxu0
        %v7066 = vadd.f32 %v7017, %v7065
        %v7067 = vpop.f32.mrf.mxu0
        %v7068 = vadd.f32 %v7019, %v7067
        %7069 = vmatmul.bf16.gmra.mxu0 %v2778
        %v7070 = vpop.f32.mrf.mxu0
        %v7071 = vadd.f32 %v7022, %v7070
        %v7072 = vpop.f32.mrf.mxu0
        %v7073 = vadd.f32 %v7024, %v7072
        %7074 = vdwg.mxu0
        %7075 = vmatpush.bf16.msra.mxu0 %v4573
        %7076 = vmatpush.bf16.msra.mxu0 %v4565
        %7077 = vmatpush.bf16.msra.mxu0 %v4557
        %7078 = vmatpush.bf16.msra.mxu0 %v4549
        %7079 = vmatpush.bf16.msra.mxu0 %v4541
        %7080 = vmatpush.bf16.msra.mxu0 %v4533
        %7081 = vmatpush.bf16.msra.mxu0 %v4525
        %7082 = vmatpush.bf16.msra.mxu0 %v4517
        %7083 = vmatmul.bf16.gmra.mxu0 %v2723
        %v7084 = vpop.f32.mrf.mxu0
        %v7085 = vadd.f32 %v7036, %v7084
        %v7086 = vpop.f32.mrf.mxu0
        %v7087 = vadd.f32 %v7038, %v7086
        %7088 = vmatmul.bf16.gmra.mxu0 %v2731
        %v7089 = vpop.f32.mrf.mxu0
        %v7090 = vadd.f32 %v7041, %v7089
        %v7091 = vpop.f32.mrf.mxu0
        %v7092 = vadd.f32 %v7043, %v7091
        %7093 = vmatmul.bf16.gmra.mxu0 %v2739
        %v7094 = vpop.f32.mrf.mxu0
        %v7095 = vadd.f32 %v7046, %v7094
        %v7096 = vpop.f32.mrf.mxu0
        %v7097 = vadd.f32 %v7048, %v7096
        %7098 = vmatmul.bf16.gmra.mxu0 %v2747
        %v7099 = vpop.f32.mrf.mxu0
        %v7100 = vadd.f32 %v7051, %v7099
        %v7101 = vpop.f32.mrf.mxu0
        %v7102 = vadd.f32 %v7053, %v7101
        %7103 = vmatmul.bf16.gmra.mxu0 %v2755
        %v7104 = vpop.f32.mrf.mxu0
        %v7105 = vadd.f32 %v7056, %v7104
        %v7106 = vpop.f32.mrf.mxu0
        %v7107 = vadd.f32 %v7058, %v7106
        %7108 = vmatmul.bf16.gmra.mxu0 %v2763
        %v7109 = vpop.f32.mrf.mxu0
        %v7110 = vadd.f32 %v7061, %v7109
        %v7111 = vpop.f32.mrf.mxu0
        %v7112 = vadd.f32 %v7063, %v7111
        %7113 = vmatmul.bf16.gmra.mxu0 %v2771
        %v7114 = vpop.f32.mrf.mxu0
        %v7115 = vadd.f32 %v7066, %v7114
        %v7116 = vpop.f32.mrf.mxu0
        %v7117 = vadd.f32 %v7068, %v7116
        %7118 = vmatmul.bf16.gmra.mxu0 %v2779
        %v7119 = vpop.f32.mrf.mxu0
        %v7120 = vadd.f32 %v7071, %v7119
        %v7121 = vpop.f32.mrf.mxu0
        %v7122 = vadd.f32 %v7073, %v7121
        %7123 = vdwg.mxu0
        %7124 = vmatpush.bf16.msra.mxu0 %v4637
        %7125 = vmatpush.bf16.msra.mxu0 %v4629
        %7126 = vmatpush.bf16.msra.mxu0 %v4621
        %7127 = vmatpush.bf16.msra.mxu0 %v4613
        %7128 = vmatpush.bf16.msra.mxu0 %v4605
        %7129 = vmatpush.bf16.msra.mxu0 %v4597
        %7130 = vmatpush.bf16.msra.mxu0 %v4589
        %7131 = vmatpush.bf16.msra.mxu0 %v4581
        %7132 = vmatmul.bf16.gmra.mxu0 %v2724
        %v7133 = vpop.f32.mrf.mxu0
        %v7134 = vadd.f32 %v7085, %v7133
        %v7135 = vpop.f32.mrf.mxu0
        %v7136 = vadd.f32 %v7087, %v7135
        %7137 = vmatmul.bf16.gmra.mxu0 %v2732
        %v7138 = vpop.f32.mrf.mxu0
        %v7139 = vadd.f32 %v7090, %v7138
        %v7140 = vpop.f32.mrf.mxu0
        %v7141 = vadd.f32 %v7092, %v7140
        %7142 = vmatmul.bf16.gmra.mxu0 %v2740
        %v7143 = vpop.f32.mrf.mxu0
        %v7144 = vadd.f32 %v7095, %v7143
        %v7145 = vpop.f32.mrf.mxu0
        %v7146 = vadd.f32 %v7097, %v7145
        %7147 = vmatmul.bf16.gmra.mxu0 %v2748
        %v7148 = vpop.f32.mrf.mxu0
        %v7149 = vadd.f32 %v7100, %v7148
        %v7150 = vpop.f32.mrf.mxu0
        %v7151 = vadd.f32 %v7102, %v7150
        %7152 = vmatmul.bf16.gmra.mxu0 %v2756
        %v7153 = vpop.f32.mrf.mxu0
        %v7154 = vadd.f32 %v7105, %v7153
        %v7155 = vpop.f32.mrf.mxu0
        %v7156 = vadd.f32 %v7107, %v7155
        %7157 = vmatmul.bf16.gmra.mxu0 %v2764
        %v7158 = vpop.f32.mrf.mxu0
        %v7159 = vadd.f32 %v7110, %v7158
        %v7160 = vpop.f32.mrf.mxu0
        %v7161 = vadd.f32 %v7112, %v7160
        %7162 = vmatmul.bf16.gmra.mxu0 %v2772
        %v7163 = vpop.f32.mrf.mxu0
        %v7164 = vadd.f32 %v7115, %v7163
        %v7165 = vpop.f32.mrf.mxu0
        %v7166 = vadd.f32 %v7117, %v7165
        %7167 = vmatmul.bf16.gmra.mxu0 %v2780
        %v7168 = vpop.f32.mrf.mxu0
        %v7169 = vadd.f32 %v7120, %v7168
        %v7170 = vpop.f32.mrf.mxu0
        %v7171 = vadd.f32 %v7122, %v7170
        %7172 = vdwg.mxu0
        %7173 = vmatpush.bf16.msra.mxu0 %v4701
        %7174 = vmatpush.bf16.msra.mxu0 %v4693
        %7175 = vmatpush.bf16.msra.mxu0 %v4685
        %7176 = vmatpush.bf16.msra.mxu0 %v4677
        %7177 = vmatpush.bf16.msra.mxu0 %v4669
        %7178 = vmatpush.bf16.msra.mxu0 %v4661
        %7179 = vmatpush.bf16.msra.mxu0 %v4653
        %7180 = vmatpush.bf16.msra.mxu0 %v4645
        %7181 = vmatmul.bf16.gmra.mxu0 %v2725
        %v7182 = vpop.f32.mrf.mxu0
        %v7183 = vadd.f32 %v7134, %v7182
        %v7184 = vpop.f32.mrf.mxu0
        %v7185 = vadd.f32 %v7136, %v7184
        %7186 = vmatmul.bf16.gmra.mxu0 %v2733
        %v7187 = vpop.f32.mrf.mxu0
        %v7188 = vadd.f32 %v7139, %v7187
        %v7189 = vpop.f32.mrf.mxu0
        %v7190 = vadd.f32 %v7141, %v7189
        %7191 = vmatmul.bf16.gmra.mxu0 %v2741
        %v7192 = vpop.f32.mrf.mxu0
        %v7193 = vadd.f32 %v7144, %v7192
        %v7194 = vpop.f32.mrf.mxu0
        %v7195 = vadd.f32 %v7146, %v7194
        %7196 = vmatmul.bf16.gmra.mxu0 %v2749
        %v7197 = vpop.f32.mrf.mxu0
        %v7198 = vadd.f32 %v7149, %v7197
        %v7199 = vpop.f32.mrf.mxu0
        %v7200 = vadd.f32 %v7151, %v7199
        %7201 = vmatmul.bf16.gmra.mxu0 %v2757
        %v7202 = vpop.f32.mrf.mxu0
        %v7203 = vadd.f32 %v7154, %v7202
        %v7204 = vpop.f32.mrf.mxu0
        %v7205 = vadd.f32 %v7156, %v7204
        %7206 = vmatmul.bf16.gmra.mxu0 %v2765
        %v7207 = vpop.f32.mrf.mxu0
        %v7208 = vadd.f32 %v7159, %v7207
        %v7209 = vpop.f32.mrf.mxu0
        %v7210 = vadd.f32 %v7161, %v7209
        %7211 = vmatmul.bf16.gmra.mxu0 %v2773
        %v7212 = vpop.f32.mrf.mxu0
        %v7213 = vadd.f32 %v7164, %v7212
        %v7214 = vpop.f32.mrf.mxu0
        %v7215 = vadd.f32 %v7166, %v7214
        %7216 = vmatmul.bf16.gmra.mxu0 %v2781
        %v7217 = vpop.f32.mrf.mxu0
        %v7218 = vadd.f32 %v7169, %v7217
        %v7219 = vpop.f32.mrf.mxu0
        %v7220 = vadd.f32 %v7171, %v7219
        %7221 = vdwg.mxu0
        %7222 = vmatpush.bf16.msra.mxu0 %v4765
        %7223 = vmatpush.bf16.msra.mxu0 %v4757
        %7224 = vmatpush.bf16.msra.mxu0 %v4749
        %7225 = vmatpush.bf16.msra.mxu0 %v4741
        %7226 = vmatpush.bf16.msra.mxu0 %v4733
        %7227 = vmatpush.bf16.msra.mxu0 %v4725
        %7228 = vmatpush.bf16.msra.mxu0 %v4717
        %7229 = vmatpush.bf16.msra.mxu0 %v4709
        %7230 = vmatmul.bf16.gmra.mxu0 %v2726
        %v7231 = vpop.f32.mrf.mxu0
        %v7232 = vadd.f32 %v7183, %v7231
        %v7233 = vpop.f32.mrf.mxu0
        %v7234 = vadd.f32 %v7185, %v7233
        %7235 = vmatmul.bf16.gmra.mxu0 %v2734
        %v7236 = vpop.f32.mrf.mxu0
        %v7237 = vadd.f32 %v7188, %v7236
        %v7238 = vpop.f32.mrf.mxu0
        %v7239 = vadd.f32 %v7190, %v7238
        %7240 = vmatmul.bf16.gmra.mxu0 %v2742
        %v7241 = vpop.f32.mrf.mxu0
        %v7242 = vadd.f32 %v7193, %v7241
        %v7243 = vpop.f32.mrf.mxu0
        %v7244 = vadd.f32 %v7195, %v7243
        %7245 = vmatmul.bf16.gmra.mxu0 %v2750
        %v7246 = vpop.f32.mrf.mxu0
        %v7247 = vadd.f32 %v7198, %v7246
        %v7248 = vpop.f32.mrf.mxu0
        %v7249 = vadd.f32 %v7200, %v7248
        %7250 = vmatmul.bf16.gmra.mxu0 %v2758
        %v7251 = vpop.f32.mrf.mxu0
        %v7252 = vadd.f32 %v7203, %v7251
        %v7253 = vpop.f32.mrf.mxu0
        %v7254 = vadd.f32 %v7205, %v7253
        %7255 = vmatmul.bf16.gmra.mxu0 %v2766
        %v7256 = vpop.f32.mrf.mxu0
        %v7257 = vadd.f32 %v7208, %v7256
        %v7258 = vpop.f32.mrf.mxu0
        %v7259 = vadd.f32 %v7210, %v7258
        %7260 = vmatmul.bf16.gmra.mxu0 %v2774
        %v7261 = vpop.f32.mrf.mxu0
        %v7262 = vadd.f32 %v7213, %v7261
        %v7263 = vpop.f32.mrf.mxu0
        %v7264 = vadd.f32 %v7215, %v7263
        %7265 = vmatmul.bf16.gmra.mxu0 %v2782
        %v7266 = vpop.f32.mrf.mxu0
        %v7267 = vadd.f32 %v7218, %v7266
        %v7268 = vpop.f32.mrf.mxu0
        %v7269 = vadd.f32 %v7220, %v7268
        %7270 = vdwg.mxu0
        %7271 = vmatpush.bf16.msra.mxu0 %v4829
        %7272 = vmatpush.bf16.msra.mxu0 %v4821
        %7273 = vmatpush.bf16.msra.mxu0 %v4813
        %7274 = vmatpush.bf16.msra.mxu0 %v4805
        %7275 = vmatpush.bf16.msra.mxu0 %v4797
        %7276 = vmatpush.bf16.msra.mxu0 %v4789
        %7277 = vmatpush.bf16.msra.mxu0 %v4781
        %7278 = vmatpush.bf16.msra.mxu0 %v4773
        %7279 = vmatmul.bf16.gmra.mxu0 %v2727
        %v7280 = vpop.f32.mrf.mxu0
        %v7281 = vadd.f32 %v7232, %v7280
        %v7282 = vpop.f32.mrf.mxu0
        %v7283 = vadd.f32 %v7234, %v7282
        %7284 = vmatmul.bf16.gmra.mxu0 %v2735
        %v7285 = vpop.f32.mrf.mxu0
        %v7286 = vadd.f32 %v7237, %v7285
        %v7287 = vpop.f32.mrf.mxu0
        %v7288 = vadd.f32 %v7239, %v7287
        %7289 = vmatmul.bf16.gmra.mxu0 %v2743
        %v7290 = vpop.f32.mrf.mxu0
        %v7291 = vadd.f32 %v7242, %v7290
        %v7292 = vpop.f32.mrf.mxu0
        %v7293 = vadd.f32 %v7244, %v7292
        %7294 = vmatmul.bf16.gmra.mxu0 %v2751
        %v7295 = vpop.f32.mrf.mxu0
        %v7296 = vadd.f32 %v7247, %v7295
        %v7297 = vpop.f32.mrf.mxu0
        %v7298 = vadd.f32 %v7249, %v7297
        %7299 = vmatmul.bf16.gmra.mxu0 %v2759
        %v7300 = vpop.f32.mrf.mxu0
        %v7301 = vadd.f32 %v7252, %v7300
        %v7302 = vpop.f32.mrf.mxu0
        %v7303 = vadd.f32 %v7254, %v7302
        %7304 = vmatmul.bf16.gmra.mxu0 %v2767
        %v7305 = vpop.f32.mrf.mxu0
        %v7306 = vadd.f32 %v7257, %v7305
        %v7307 = vpop.f32.mrf.mxu0
        %v7308 = vadd.f32 %v7259, %v7307
        %7309 = vmatmul.bf16.gmra.mxu0 %v2775
        %v7310 = vpop.f32.mrf.mxu0
        %v7311 = vadd.f32 %v7262, %v7310
        %v7312 = vpop.f32.mrf.mxu0
        %v7313 = vadd.f32 %v7264, %v7312
        %7314 = vmatmul.bf16.gmra.mxu0 %v2783
        %v7315 = vpop.f32.mrf.mxu0
        %v7316 = vadd.f32 %v7267, %v7315
        %v7317 = vpop.f32.mrf.mxu0
        %v7318 = vadd.f32 %v7269, %v7317
        %7319 = vdwg.mxu0
        %7320 = vmatpush.bf16.msra.mxu0 %v4893
        %7321 = vmatpush.bf16.msra.mxu0 %v4885
        %7322 = vmatpush.bf16.msra.mxu0 %v4877
        %7323 = vmatpush.bf16.msra.mxu0 %v4869
        %7324 = vmatpush.bf16.msra.mxu0 %v4861
        %7325 = vmatpush.bf16.msra.mxu0 %v4853
        %7326 = vmatpush.bf16.msra.mxu0 %v4845
        %7327 = vmatpush.bf16.msra.mxu0 %v4837
        %7328 = vmatmul.bf16.gmra.mxu0 %v2728
        %v7329 = vpop.f32.mrf.mxu0
        %v7330 = vadd.f32 %v7281, %v7329
        %v7331 = vpop.f32.mrf.mxu0
        %v7332 = vadd.f32 %v7283, %v7331
        %7333 = vmatmul.bf16.gmra.mxu0 %v2736
        %v7334 = vpop.f32.mrf.mxu0
        %v7335 = vadd.f32 %v7286, %v7334
        %v7336 = vpop.f32.mrf.mxu0
        %v7337 = vadd.f32 %v7288, %v7336
        %7338 = vmatmul.bf16.gmra.mxu0 %v2744
        %v7339 = vpop.f32.mrf.mxu0
        %v7340 = vadd.f32 %v7291, %v7339
        %v7341 = vpop.f32.mrf.mxu0
        %v7342 = vadd.f32 %v7293, %v7341
        %7343 = vmatmul.bf16.gmra.mxu0 %v2752
        %v7344 = vpop.f32.mrf.mxu0
        %v7345 = vadd.f32 %v7296, %v7344
        %v7346 = vpop.f32.mrf.mxu0
        %v7347 = vadd.f32 %v7298, %v7346
        %7348 = vmatmul.bf16.gmra.mxu0 %v2760
        %v7349 = vpop.f32.mrf.mxu0
        %v7350 = vadd.f32 %v7301, %v7349
        %v7351 = vpop.f32.mrf.mxu0
        %v7352 = vadd.f32 %v7303, %v7351
        %7353 = vmatmul.bf16.gmra.mxu0 %v2768
        %v7354 = vpop.f32.mrf.mxu0
        %v7355 = vadd.f32 %v7306, %v7354
        %v7356 = vpop.f32.mrf.mxu0
        %v7357 = vadd.f32 %v7308, %v7356
        %7358 = vmatmul.bf16.gmra.mxu0 %v2776
        %v7359 = vpop.f32.mrf.mxu0
        %v7360 = vadd.f32 %v7311, %v7359
        %v7361 = vpop.f32.mrf.mxu0
        %v7362 = vadd.f32 %v7313, %v7361
        %7363 = vmatmul.bf16.gmra.mxu0 %v2784
        %v7364 = vpop.f32.mrf.mxu0
        %v7365 = vadd.f32 %v7316, %v7364
        %v7366 = vpop.f32.mrf.mxu0
        %v7367 = vadd.f32 %v7318, %v7366
        %7368 = vdwg.mxu0
        %7369 = vmatpush.bf16.msra.mxu0 %v4446
        %7370 = vmatpush.bf16.msra.mxu0 %v4438
        %7371 = vmatpush.bf16.msra.mxu0 %v4430
        %7372 = vmatpush.bf16.msra.mxu0 %v4422
        %7373 = vmatpush.bf16.msra.mxu0 %v4414
        %7374 = vmatpush.bf16.msra.mxu0 %v4406
        %7375 = vmatpush.bf16.msra.mxu0 %v4398
        %7376 = vmatpush.bf16.msra.mxu0 %v4390
        %7377 = vmatmul.bf16.gmra.mxu0 %v2721
        %v7378 = vpop.f32.mrf.mxu0
        %v7379 = vadd.f32 0.0, %v7378
        %v7380 = vpop.f32.mrf.mxu0
        %v7381 = vadd.f32 0.0, %v7380
        %7382 = vmatmul.bf16.gmra.mxu0 %v2729
        %v7383 = vpop.f32.mrf.mxu0
        %v7384 = vadd.f32 0.0, %v7383
        %v7385 = vpop.f32.mrf.mxu0
        %v7386 = vadd.f32 0.0, %v7385
        %7387 = vmatmul.bf16.gmra.mxu0 %v2737
        %v7388 = vpop.f32.mrf.mxu0
        %v7389 = vadd.f32 0.0, %v7388
        %v7390 = vpop.f32.mrf.mxu0
        %v7391 = vadd.f32 0.0, %v7390
        %7392 = vmatmul.bf16.gmra.mxu0 %v2745
        %v7393 = vpop.f32.mrf.mxu0
        %v7394 = vadd.f32 0.0, %v7393
        %v7395 = vpop.f32.mrf.mxu0
        %v7396 = vadd.f32 0.0, %v7395
        %7397 = vmatmul.bf16.gmra.mxu0 %v2753
        %v7398 = vpop.f32.mrf.mxu0
        %v7399 = vadd.f32 0.0, %v7398
        %v7400 = vpop.f32.mrf.mxu0
        %v7401 = vadd.f32 0.0, %v7400
        %7402 = vmatmul.bf16.gmra.mxu0 %v2761
        %v7403 = vpop.f32.mrf.mxu0
        %v7404 = vadd.f32 0.0, %v7403
        %v7405 = vpop.f32.mrf.mxu0
        %v7406 = vadd.f32 0.0, %v7405
        %7407 = vmatmul.bf16.gmra.mxu0 %v2769
        %v7408 = vpop.f32.mrf.mxu0
        %v7409 = vadd.f32 0.0, %v7408
        %v7410 = vpop.f32.mrf.mxu0
        %v7411 = vadd.f32 0.0, %v7410
        %7412 = vmatmul.bf16.gmra.mxu0 %v2777
        %v7413 = vpop.f32.mrf.mxu0
        %v7414 = vadd.f32 0.0, %v7413
        %v7415 = vpop.f32.mrf.mxu0
        %v7416 = vadd.f32 0.0, %v7415
        %7417 = vdwg.mxu0
        %7418 = vmatpush.bf16.msra.mxu0 %v4510
        %7419 = vmatpush.bf16.msra.mxu0 %v4502
        %7420 = vmatpush.bf16.msra.mxu0 %v4494
        %7421 = vmatpush.bf16.msra.mxu0 %v4486
        %7422 = vmatpush.bf16.msra.mxu0 %v4478
        %7423 = vmatpush.bf16.msra.mxu0 %v4470
        %7424 = vmatpush.bf16.msra.mxu0 %v4462
        %7425 = vmatpush.bf16.msra.mxu0 %v4454
        %7426 = vmatmul.bf16.gmra.mxu0 %v2722
        %v7427 = vpop.f32.mrf.mxu0
        %v7428 = vadd.f32 %v7379, %v7427
        %v7429 = vpop.f32.mrf.mxu0
        %v7430 = vadd.f32 %v7381, %v7429
        %7431 = vmatmul.bf16.gmra.mxu0 %v2730
        %v7432 = vpop.f32.mrf.mxu0
        %v7433 = vadd.f32 %v7384, %v7432
        %v7434 = vpop.f32.mrf.mxu0
        %v7435 = vadd.f32 %v7386, %v7434
        %7436 = vmatmul.bf16.gmra.mxu0 %v2738
        %v7437 = vpop.f32.mrf.mxu0
        %v7438 = vadd.f32 %v7389, %v7437
        %v7439 = vpop.f32.mrf.mxu0
        %v7440 = vadd.f32 %v7391, %v7439
        %7441 = vmatmul.bf16.gmra.mxu0 %v2746
        %v7442 = vpop.f32.mrf.mxu0
        %v7443 = vadd.f32 %v7394, %v7442
        %v7444 = vpop.f32.mrf.mxu0
        %v7445 = vadd.f32 %v7396, %v7444
        %7446 = vmatmul.bf16.gmra.mxu0 %v2754
        %v7447 = vpop.f32.mrf.mxu0
        %v7448 = vadd.f32 %v7399, %v7447
        %v7449 = vpop.f32.mrf.mxu0
        %v7450 = vadd.f32 %v7401, %v7449
        %7451 = vmatmul.bf16.gmra.mxu0 %v2762
        %v7452 = vpop.f32.mrf.mxu0
        %v7453 = vadd.f32 %v7404, %v7452
        %v7454 = vpop.f32.mrf.mxu0
        %v7455 = vadd.f32 %v7406, %v7454
        %7456 = vmatmul.bf16.gmra.mxu0 %v2770
        %v7457 = vpop.f32.mrf.mxu0
        %v7458 = vadd.f32 %v7409, %v7457
        %v7459 = vpop.f32.mrf.mxu0
        %v7460 = vadd.f32 %v7411, %v7459
        %7461 = vmatmul.bf16.gmra.mxu0 %v2778
        %v7462 = vpop.f32.mrf.mxu0
        %v7463 = vadd.f32 %v7414, %v7462
        %v7464 = vpop.f32.mrf.mxu0
        %v7465 = vadd.f32 %v7416, %v7464
        %7466 = vdwg.mxu0
        %7467 = vmatpush.bf16.msra.mxu0 %v4574
        %7468 = vmatpush.bf16.msra.mxu0 %v4566
        %7469 = vmatpush.bf16.msra.mxu0 %v4558
        %7470 = vmatpush.bf16.msra.mxu0 %v4550
        %7471 = vmatpush.bf16.msra.mxu0 %v4542
        %7472 = vmatpush.bf16.msra.mxu0 %v4534
        %7473 = vmatpush.bf16.msra.mxu0 %v4526
        %7474 = vmatpush.bf16.msra.mxu0 %v4518
        %7475 = vmatmul.bf16.gmra.mxu0 %v2723
        %v7476 = vpop.f32.mrf.mxu0
        %v7477 = vadd.f32 %v7428, %v7476
        %v7478 = vpop.f32.mrf.mxu0
        %v7479 = vadd.f32 %v7430, %v7478
        %7480 = vmatmul.bf16.gmra.mxu0 %v2731
        %v7481 = vpop.f32.mrf.mxu0
        %v7482 = vadd.f32 %v7433, %v7481
        %v7483 = vpop.f32.mrf.mxu0
        %v7484 = vadd.f32 %v7435, %v7483
        %7485 = vmatmul.bf16.gmra.mxu0 %v2739
        %v7486 = vpop.f32.mrf.mxu0
        %v7487 = vadd.f32 %v7438, %v7486
        %v7488 = vpop.f32.mrf.mxu0
        %v7489 = vadd.f32 %v7440, %v7488
        %7490 = vmatmul.bf16.gmra.mxu0 %v2747
        %v7491 = vpop.f32.mrf.mxu0
        %v7492 = vadd.f32 %v7443, %v7491
        %v7493 = vpop.f32.mrf.mxu0
        %v7494 = vadd.f32 %v7445, %v7493
        %7495 = vmatmul.bf16.gmra.mxu0 %v2755
        %v7496 = vpop.f32.mrf.mxu0
        %v7497 = vadd.f32 %v7448, %v7496
        %v7498 = vpop.f32.mrf.mxu0
        %v7499 = vadd.f32 %v7450, %v7498
        %7500 = vmatmul.bf16.gmra.mxu0 %v2763
        %v7501 = vpop.f32.mrf.mxu0
        %v7502 = vadd.f32 %v7453, %v7501
        %v7503 = vpop.f32.mrf.mxu0
        %v7504 = vadd.f32 %v7455, %v7503
        %7505 = vmatmul.bf16.gmra.mxu0 %v2771
        %v7506 = vpop.f32.mrf.mxu0
        %v7507 = vadd.f32 %v7458, %v7506
        %v7508 = vpop.f32.mrf.mxu0
        %v7509 = vadd.f32 %v7460, %v7508
        %7510 = vmatmul.bf16.gmra.mxu0 %v2779
        %v7511 = vpop.f32.mrf.mxu0
        %v7512 = vadd.f32 %v7463, %v7511
        %v7513 = vpop.f32.mrf.mxu0
        %v7514 = vadd.f32 %v7465, %v7513
        %7515 = vdwg.mxu0
        %7516 = vmatpush.bf16.msra.mxu0 %v4638
        %7517 = vmatpush.bf16.msra.mxu0 %v4630
        %7518 = vmatpush.bf16.msra.mxu0 %v4622
        %7519 = vmatpush.bf16.msra.mxu0 %v4614
        %7520 = vmatpush.bf16.msra.mxu0 %v4606
        %7521 = vmatpush.bf16.msra.mxu0 %v4598
        %7522 = vmatpush.bf16.msra.mxu0 %v4590
        %7523 = vmatpush.bf16.msra.mxu0 %v4582
        %7524 = vmatmul.bf16.gmra.mxu0 %v2724
        %v7525 = vpop.f32.mrf.mxu0
        %v7526 = vadd.f32 %v7477, %v7525
        %v7527 = vpop.f32.mrf.mxu0
        %v7528 = vadd.f32 %v7479, %v7527
        %7529 = vmatmul.bf16.gmra.mxu0 %v2732
        %v7530 = vpop.f32.mrf.mxu0
        %v7531 = vadd.f32 %v7482, %v7530
        %v7532 = vpop.f32.mrf.mxu0
        %v7533 = vadd.f32 %v7484, %v7532
        %7534 = vmatmul.bf16.gmra.mxu0 %v2740
        %v7535 = vpop.f32.mrf.mxu0
        %v7536 = vadd.f32 %v7487, %v7535
        %v7537 = vpop.f32.mrf.mxu0
        %v7538 = vadd.f32 %v7489, %v7537
        %7539 = vmatmul.bf16.gmra.mxu0 %v2748
        %v7540 = vpop.f32.mrf.mxu0
        %v7541 = vadd.f32 %v7492, %v7540
        %v7542 = vpop.f32.mrf.mxu0
        %v7543 = vadd.f32 %v7494, %v7542
        %7544 = vmatmul.bf16.gmra.mxu0 %v2756
        %v7545 = vpop.f32.mrf.mxu0
        %v7546 = vadd.f32 %v7497, %v7545
        %v7547 = vpop.f32.mrf.mxu0
        %v7548 = vadd.f32 %v7499, %v7547
        %7549 = vmatmul.bf16.gmra.mxu0 %v2764
        %v7550 = vpop.f32.mrf.mxu0
        %v7551 = vadd.f32 %v7502, %v7550
        %v7552 = vpop.f32.mrf.mxu0
        %v7553 = vadd.f32 %v7504, %v7552
        %7554 = vmatmul.bf16.gmra.mxu0 %v2772
        %v7555 = vpop.f32.mrf.mxu0
        %v7556 = vadd.f32 %v7507, %v7555
        %v7557 = vpop.f32.mrf.mxu0
        %v7558 = vadd.f32 %v7509, %v7557
        %7559 = vmatmul.bf16.gmra.mxu0 %v2780
        %v7560 = vpop.f32.mrf.mxu0
        %v7561 = vadd.f32 %v7512, %v7560
        %v7562 = vpop.f32.mrf.mxu0
        %v7563 = vadd.f32 %v7514, %v7562
        %7564 = vdwg.mxu0
        %7565 = vmatpush.bf16.msra.mxu0 %v4702
        %7566 = vmatpush.bf16.msra.mxu0 %v4694
        %7567 = vmatpush.bf16.msra.mxu0 %v4686
        %7568 = vmatpush.bf16.msra.mxu0 %v4678
        %7569 = vmatpush.bf16.msra.mxu0 %v4670
        %7570 = vmatpush.bf16.msra.mxu0 %v4662
        %7571 = vmatpush.bf16.msra.mxu0 %v4654
        %7572 = vmatpush.bf16.msra.mxu0 %v4646
        %7573 = vmatmul.bf16.gmra.mxu0 %v2725
        %v7574 = vpop.f32.mrf.mxu0
        %v7575 = vadd.f32 %v7526, %v7574
        %v7576 = vpop.f32.mrf.mxu0
        %v7577 = vadd.f32 %v7528, %v7576
        %7578 = vmatmul.bf16.gmra.mxu0 %v2733
        %v7579 = vpop.f32.mrf.mxu0
        %v7580 = vadd.f32 %v7531, %v7579
        %v7581 = vpop.f32.mrf.mxu0
        %v7582 = vadd.f32 %v7533, %v7581
        %7583 = vmatmul.bf16.gmra.mxu0 %v2741
        %v7584 = vpop.f32.mrf.mxu0
        %v7585 = vadd.f32 %v7536, %v7584
        %v7586 = vpop.f32.mrf.mxu0
        %v7587 = vadd.f32 %v7538, %v7586
        %7588 = vmatmul.bf16.gmra.mxu0 %v2749
        %v7589 = vpop.f32.mrf.mxu0
        %v7590 = vadd.f32 %v7541, %v7589
        %v7591 = vpop.f32.mrf.mxu0
        %v7592 = vadd.f32 %v7543, %v7591
        %7593 = vmatmul.bf16.gmra.mxu0 %v2757
        %v7594 = vpop.f32.mrf.mxu0
        %v7595 = vadd.f32 %v7546, %v7594
        %v7596 = vpop.f32.mrf.mxu0
        %v7597 = vadd.f32 %v7548, %v7596
        %7598 = vmatmul.bf16.gmra.mxu0 %v2765
        %v7599 = vpop.f32.mrf.mxu0
        %v7600 = vadd.f32 %v7551, %v7599
        %v7601 = vpop.f32.mrf.mxu0
        %v7602 = vadd.f32 %v7553, %v7601
        %7603 = vmatmul.bf16.gmra.mxu0 %v2773
        %v7604 = vpop.f32.mrf.mxu0
        %v7605 = vadd.f32 %v7556, %v7604
        %v7606 = vpop.f32.mrf.mxu0
        %v7607 = vadd.f32 %v7558, %v7606
        %7608 = vmatmul.bf16.gmra.mxu0 %v2781
        %v7609 = vpop.f32.mrf.mxu0
        %v7610 = vadd.f32 %v7561, %v7609
        %v7611 = vpop.f32.mrf.mxu0
        %v7612 = vadd.f32 %v7563, %v7611
        %7613 = vdwg.mxu0
        %7614 = vmatpush.bf16.msra.mxu0 %v4766
        %7615 = vmatpush.bf16.msra.mxu0 %v4758
        %7616 = vmatpush.bf16.msra.mxu0 %v4750
        %7617 = vmatpush.bf16.msra.mxu0 %v4742
        %7618 = vmatpush.bf16.msra.mxu0 %v4734
        %7619 = vmatpush.bf16.msra.mxu0 %v4726
        %7620 = vmatpush.bf16.msra.mxu0 %v4718
        %7621 = vmatpush.bf16.msra.mxu0 %v4710
        %7622 = vmatmul.bf16.gmra.mxu0 %v2726
        %v7623 = vpop.f32.mrf.mxu0
        %v7624 = vadd.f32 %v7575, %v7623
        %v7625 = vpop.f32.mrf.mxu0
        %v7626 = vadd.f32 %v7577, %v7625
        %7627 = vmatmul.bf16.gmra.mxu0 %v2734
        %v7628 = vpop.f32.mrf.mxu0
        %v7629 = vadd.f32 %v7580, %v7628
        %v7630 = vpop.f32.mrf.mxu0
        %v7631 = vadd.f32 %v7582, %v7630
        %7632 = vmatmul.bf16.gmra.mxu0 %v2742
        %v7633 = vpop.f32.mrf.mxu0
        %v7634 = vadd.f32 %v7585, %v7633
        %v7635 = vpop.f32.mrf.mxu0
        %v7636 = vadd.f32 %v7587, %v7635
        %7637 = vmatmul.bf16.gmra.mxu0 %v2750
        %v7638 = vpop.f32.mrf.mxu0
        %v7639 = vadd.f32 %v7590, %v7638
        %v7640 = vpop.f32.mrf.mxu0
        %v7641 = vadd.f32 %v7592, %v7640
        %7642 = vmatmul.bf16.gmra.mxu0 %v2758
        %v7643 = vpop.f32.mrf.mxu0
        %v7644 = vadd.f32 %v7595, %v7643
        %v7645 = vpop.f32.mrf.mxu0
        %v7646 = vadd.f32 %v7597, %v7645
        %7647 = vmatmul.bf16.gmra.mxu0 %v2766
        %v7648 = vpop.f32.mrf.mxu0
        %v7649 = vadd.f32 %v7600, %v7648
        %v7650 = vpop.f32.mrf.mxu0
        %v7651 = vadd.f32 %v7602, %v7650
        %7652 = vmatmul.bf16.gmra.mxu0 %v2774
        %v7653 = vpop.f32.mrf.mxu0
        %v7654 = vadd.f32 %v7605, %v7653
        %v7655 = vpop.f32.mrf.mxu0
        %v7656 = vadd.f32 %v7607, %v7655
        %7657 = vmatmul.bf16.gmra.mxu0 %v2782
        %v7658 = vpop.f32.mrf.mxu0
        %v7659 = vadd.f32 %v7610, %v7658
        %v7660 = vpop.f32.mrf.mxu0
        %v7661 = vadd.f32 %v7612, %v7660
        %7662 = vdwg.mxu0
        %7663 = vmatpush.bf16.msra.mxu0 %v4830
        %7664 = vmatpush.bf16.msra.mxu0 %v4822
        %7665 = vmatpush.bf16.msra.mxu0 %v4814
        %7666 = vmatpush.bf16.msra.mxu0 %v4806
        %7667 = vmatpush.bf16.msra.mxu0 %v4798
        %7668 = vmatpush.bf16.msra.mxu0 %v4790
        %7669 = vmatpush.bf16.msra.mxu0 %v4782
        %7670 = vmatpush.bf16.msra.mxu0 %v4774
        %7671 = vmatmul.bf16.gmra.mxu0 %v2727
        %v7672 = vpop.f32.mrf.mxu0
        %v7673 = vadd.f32 %v7624, %v7672
        %v7674 = vpop.f32.mrf.mxu0
        %v7675 = vadd.f32 %v7626, %v7674
        %7676 = vmatmul.bf16.gmra.mxu0 %v2735
        %v7677 = vpop.f32.mrf.mxu0
        %v7678 = vadd.f32 %v7629, %v7677
        %v7679 = vpop.f32.mrf.mxu0
        %v7680 = vadd.f32 %v7631, %v7679
        %7681 = vmatmul.bf16.gmra.mxu0 %v2743
        %v7682 = vpop.f32.mrf.mxu0
        %v7683 = vadd.f32 %v7634, %v7682
        %v7684 = vpop.f32.mrf.mxu0
        %v7685 = vadd.f32 %v7636, %v7684
        %7686 = vmatmul.bf16.gmra.mxu0 %v2751
        %v7687 = vpop.f32.mrf.mxu0
        %v7688 = vadd.f32 %v7639, %v7687
        %v7689 = vpop.f32.mrf.mxu0
        %v7690 = vadd.f32 %v7641, %v7689
        %7691 = vmatmul.bf16.gmra.mxu0 %v2759
        %v7692 = vpop.f32.mrf.mxu0
        %v7693 = vadd.f32 %v7644, %v7692
        %v7694 = vpop.f32.mrf.mxu0
        %v7695 = vadd.f32 %v7646, %v7694
        %7696 = vmatmul.bf16.gmra.mxu0 %v2767
        %v7697 = vpop.f32.mrf.mxu0
        %v7698 = vadd.f32 %v7649, %v7697
        %v7699 = vpop.f32.mrf.mxu0
        %v7700 = vadd.f32 %v7651, %v7699
        %7701 = vmatmul.bf16.gmra.mxu0 %v2775
        %v7702 = vpop.f32.mrf.mxu0
        %v7703 = vadd.f32 %v7654, %v7702
        %v7704 = vpop.f32.mrf.mxu0
        %v7705 = vadd.f32 %v7656, %v7704
        %7706 = vmatmul.bf16.gmra.mxu0 %v2783
        %v7707 = vpop.f32.mrf.mxu0
        %v7708 = vadd.f32 %v7659, %v7707
        %v7709 = vpop.f32.mrf.mxu0
        %v7710 = vadd.f32 %v7661, %v7709
        %7711 = vdwg.mxu0
        %7712 = vmatpush.bf16.msra.mxu0 %v4894
        %7713 = vmatpush.bf16.msra.mxu0 %v4886
        %7714 = vmatpush.bf16.msra.mxu0 %v4878
        %7715 = vmatpush.bf16.msra.mxu0 %v4870
        %7716 = vmatpush.bf16.msra.mxu0 %v4862
        %7717 = vmatpush.bf16.msra.mxu0 %v4854
        %7718 = vmatpush.bf16.msra.mxu0 %v4846
        %7719 = vmatpush.bf16.msra.mxu0 %v4838
        %7720 = vmatmul.bf16.gmra.mxu0 %v2728
        %v7721 = vpop.f32.mrf.mxu0
        %v7722 = vadd.f32 %v7673, %v7721
        %v7723 = vpop.f32.mrf.mxu0
        %v7724 = vadd.f32 %v7675, %v7723
        %7725 = vmatmul.bf16.gmra.mxu0 %v2736
        %v7726 = vpop.f32.mrf.mxu0
        %v7727 = vadd.f32 %v7678, %v7726
        %v7728 = vpop.f32.mrf.mxu0
        %v7729 = vadd.f32 %v7680, %v7728
        %7730 = vmatmul.bf16.gmra.mxu0 %v2744
        %v7731 = vpop.f32.mrf.mxu0
        %v7732 = vadd.f32 %v7683, %v7731
        %v7733 = vpop.f32.mrf.mxu0
        %v7734 = vadd.f32 %v7685, %v7733
        %7735 = vmatmul.bf16.gmra.mxu0 %v2752
        %v7736 = vpop.f32.mrf.mxu0
        %v7737 = vadd.f32 %v7688, %v7736
        %v7738 = vpop.f32.mrf.mxu0
        %v7739 = vadd.f32 %v7690, %v7738
        %7740 = vmatmul.bf16.gmra.mxu0 %v2760
        %v7741 = vpop.f32.mrf.mxu0
        %v7742 = vadd.f32 %v7693, %v7741
        %v7743 = vpop.f32.mrf.mxu0
        %v7744 = vadd.f32 %v7695, %v7743
        %7745 = vmatmul.bf16.gmra.mxu0 %v2768
        %v7746 = vpop.f32.mrf.mxu0
        %v7747 = vadd.f32 %v7698, %v7746
        %v7748 = vpop.f32.mrf.mxu0
        %v7749 = vadd.f32 %v7700, %v7748
        %7750 = vmatmul.bf16.gmra.mxu0 %v2776
        %v7751 = vpop.f32.mrf.mxu0
        %v7752 = vadd.f32 %v7703, %v7751
        %v7753 = vpop.f32.mrf.mxu0
        %v7754 = vadd.f32 %v7705, %v7753
        %7755 = vmatmul.bf16.gmra.mxu0 %v2784
        %v7756 = vpop.f32.mrf.mxu0
        %v7757 = vadd.f32 %v7708, %v7756
        %v7758 = vpop.f32.mrf.mxu0
        %v7759 = vadd.f32 %v7710, %v7758
        %7760 = vdwg.mxu0
        %7761 = vmatpush.bf16.msra.mxu0 %v4447
        %7762 = vmatpush.bf16.msra.mxu0 %v4439
        %7763 = vmatpush.bf16.msra.mxu0 %v4431
        %7764 = vmatpush.bf16.msra.mxu0 %v4423
        %7765 = vmatpush.bf16.msra.mxu0 %v4415
        %7766 = vmatpush.bf16.msra.mxu0 %v4407
        %7767 = vmatpush.bf16.msra.mxu0 %v4399
        %7768 = vmatpush.bf16.msra.mxu0 %v4391
        %7769 = vmatmul.bf16.gmra.mxu0 %v2721
        %v7770 = vpop.f32.mrf.mxu0
        %v7771 = vadd.f32 0.0, %v7770
        %v7772 = vpop.f32.mrf.mxu0
        %v7773 = vadd.f32 0.0, %v7772
        %7774 = vmatmul.bf16.gmra.mxu0 %v2729
        %v7775 = vpop.f32.mrf.mxu0
        %v7776 = vadd.f32 0.0, %v7775
        %v7777 = vpop.f32.mrf.mxu0
        %v7778 = vadd.f32 0.0, %v7777
        %7779 = vmatmul.bf16.gmra.mxu0 %v2737
        %v7780 = vpop.f32.mrf.mxu0
        %v7781 = vadd.f32 0.0, %v7780
        %v7782 = vpop.f32.mrf.mxu0
        %v7783 = vadd.f32 0.0, %v7782
        %7784 = vmatmul.bf16.gmra.mxu0 %v2745
        %v7785 = vpop.f32.mrf.mxu0
        %v7786 = vadd.f32 0.0, %v7785
        %v7787 = vpop.f32.mrf.mxu0
        %v7788 = vadd.f32 0.0, %v7787
        %7789 = vmatmul.bf16.gmra.mxu0 %v2753
        %v7790 = vpop.f32.mrf.mxu0
        %v7791 = vadd.f32 0.0, %v7790
        %v7792 = vpop.f32.mrf.mxu0
        %v7793 = vadd.f32 0.0, %v7792
        %7794 = vmatmul.bf16.gmra.mxu0 %v2761
        %v7795 = vpop.f32.mrf.mxu0
        %v7796 = vadd.f32 0.0, %v7795
        %v7797 = vpop.f32.mrf.mxu0
        %v7798 = vadd.f32 0.0, %v7797
        %7799 = vmatmul.bf16.gmra.mxu0 %v2769
        %v7800 = vpop.f32.mrf.mxu0
        %v7801 = vadd.f32 0.0, %v7800
        %v7802 = vpop.f32.mrf.mxu0
        %v7803 = vadd.f32 0.0, %v7802
        %7804 = vmatmul.bf16.gmra.mxu0 %v2777
        %v7805 = vpop.f32.mrf.mxu0
        %v7806 = vadd.f32 0.0, %v7805
        %v7807 = vpop.f32.mrf.mxu0
        %v7808 = vadd.f32 0.0, %v7807
        %7809 = vdwg.mxu0
        %7810 = vmatpush.bf16.msra.mxu0 %v4511
        %7811 = vmatpush.bf16.msra.mxu0 %v4503
        %7812 = vmatpush.bf16.msra.mxu0 %v4495
        %7813 = vmatpush.bf16.msra.mxu0 %v4487
        %7814 = vmatpush.bf16.msra.mxu0 %v4479
        %7815 = vmatpush.bf16.msra.mxu0 %v4471
        %7816 = vmatpush.bf16.msra.mxu0 %v4463
        %7817 = vmatpush.bf16.msra.mxu0 %v4455
        %7818 = vmatmul.bf16.gmra.mxu0 %v2722
        %v7819 = vpop.f32.mrf.mxu0
        %v7820 = vadd.f32 %v7771, %v7819
        %v7821 = vpop.f32.mrf.mxu0
        %v7822 = vadd.f32 %v7773, %v7821
        %7823 = vmatmul.bf16.gmra.mxu0 %v2730
        %v7824 = vpop.f32.mrf.mxu0
        %v7825 = vadd.f32 %v7776, %v7824
        %v7826 = vpop.f32.mrf.mxu0
        %v7827 = vadd.f32 %v7778, %v7826
        %7828 = vmatmul.bf16.gmra.mxu0 %v2738
        %v7829 = vpop.f32.mrf.mxu0
        %v7830 = vadd.f32 %v7781, %v7829
        %v7831 = vpop.f32.mrf.mxu0
        %v7832 = vadd.f32 %v7783, %v7831
        %7833 = vmatmul.bf16.gmra.mxu0 %v2746
        %v7834 = vpop.f32.mrf.mxu0
        %v7835 = vadd.f32 %v7786, %v7834
        %v7836 = vpop.f32.mrf.mxu0
        %v7837 = vadd.f32 %v7788, %v7836
        %7838 = vmatmul.bf16.gmra.mxu0 %v2754
        %v7839 = vpop.f32.mrf.mxu0
        %v7840 = vadd.f32 %v7791, %v7839
        %v7841 = vpop.f32.mrf.mxu0
        %v7842 = vadd.f32 %v7793, %v7841
        %7843 = vmatmul.bf16.gmra.mxu0 %v2762
        %v7844 = vpop.f32.mrf.mxu0
        %v7845 = vadd.f32 %v7796, %v7844
        %v7846 = vpop.f32.mrf.mxu0
        %v7847 = vadd.f32 %v7798, %v7846
        %7848 = vmatmul.bf16.gmra.mxu0 %v2770
        %v7849 = vpop.f32.mrf.mxu0
        %v7850 = vadd.f32 %v7801, %v7849
        %v7851 = vpop.f32.mrf.mxu0
        %v7852 = vadd.f32 %v7803, %v7851
        %7853 = vmatmul.bf16.gmra.mxu0 %v2778
        %v7854 = vpop.f32.mrf.mxu0
        %v7855 = vadd.f32 %v7806, %v7854
        %v7856 = vpop.f32.mrf.mxu0
        %v7857 = vadd.f32 %v7808, %v7856
        %7858 = vdwg.mxu0
        %7859 = vmatpush.bf16.msra.mxu0 %v4575
        %7860 = vmatpush.bf16.msra.mxu0 %v4567
        %7861 = vmatpush.bf16.msra.mxu0 %v4559
        %7862 = vmatpush.bf16.msra.mxu0 %v4551
        %7863 = vmatpush.bf16.msra.mxu0 %v4543
        %7864 = vmatpush.bf16.msra.mxu0 %v4535
        %7865 = vmatpush.bf16.msra.mxu0 %v4527
        %7866 = vmatpush.bf16.msra.mxu0 %v4519
        %7867 = vmatmul.bf16.gmra.mxu0 %v2723
        %v7868 = vpop.f32.mrf.mxu0
        %v7869 = vadd.f32 %v7820, %v7868
        %v7870 = vpop.f32.mrf.mxu0
        %v7871 = vadd.f32 %v7822, %v7870
        %7872 = vmatmul.bf16.gmra.mxu0 %v2731
        %v7873 = vpop.f32.mrf.mxu0
        %v7874 = vadd.f32 %v7825, %v7873
        %v7875 = vpop.f32.mrf.mxu0
        %v7876 = vadd.f32 %v7827, %v7875
        %7877 = vmatmul.bf16.gmra.mxu0 %v2739
        %v7878 = vpop.f32.mrf.mxu0
        %v7879 = vadd.f32 %v7830, %v7878
        %v7880 = vpop.f32.mrf.mxu0
        %v7881 = vadd.f32 %v7832, %v7880
        %7882 = vmatmul.bf16.gmra.mxu0 %v2747
        %v7883 = vpop.f32.mrf.mxu0
        %v7884 = vadd.f32 %v7835, %v7883
        %v7885 = vpop.f32.mrf.mxu0
        %v7886 = vadd.f32 %v7837, %v7885
        %7887 = vmatmul.bf16.gmra.mxu0 %v2755
        %v7888 = vpop.f32.mrf.mxu0
        %v7889 = vadd.f32 %v7840, %v7888
        %v7890 = vpop.f32.mrf.mxu0
        %v7891 = vadd.f32 %v7842, %v7890
        %7892 = vmatmul.bf16.gmra.mxu0 %v2763
        %v7893 = vpop.f32.mrf.mxu0
        %v7894 = vadd.f32 %v7845, %v7893
        %v7895 = vpop.f32.mrf.mxu0
        %v7896 = vadd.f32 %v7847, %v7895
        %7897 = vmatmul.bf16.gmra.mxu0 %v2771
        %v7898 = vpop.f32.mrf.mxu0
        %v7899 = vadd.f32 %v7850, %v7898
        %v7900 = vpop.f32.mrf.mxu0
        %v7901 = vadd.f32 %v7852, %v7900
        %7902 = vmatmul.bf16.gmra.mxu0 %v2779
        %v7903 = vpop.f32.mrf.mxu0
        %v7904 = vadd.f32 %v7855, %v7903
        %v7905 = vpop.f32.mrf.mxu0
        %v7906 = vadd.f32 %v7857, %v7905
        %7907 = vdwg.mxu0
        %7908 = vmatpush.bf16.msra.mxu0 %v4639
        %7909 = vmatpush.bf16.msra.mxu0 %v4631
        %7910 = vmatpush.bf16.msra.mxu0 %v4623
        %7911 = vmatpush.bf16.msra.mxu0 %v4615
        %7912 = vmatpush.bf16.msra.mxu0 %v4607
        %7913 = vmatpush.bf16.msra.mxu0 %v4599
        %7914 = vmatpush.bf16.msra.mxu0 %v4591
        %7915 = vmatpush.bf16.msra.mxu0 %v4583
        %7916 = vmatmul.bf16.gmra.mxu0 %v2724
        %v7917 = vpop.f32.mrf.mxu0
        %v7918 = vadd.f32 %v7869, %v7917
        %v7919 = vpop.f32.mrf.mxu0
        %v7920 = vadd.f32 %v7871, %v7919
        %7921 = vmatmul.bf16.gmra.mxu0 %v2732
        %v7922 = vpop.f32.mrf.mxu0
        %v7923 = vadd.f32 %v7874, %v7922
        %v7924 = vpop.f32.mrf.mxu0
        %v7925 = vadd.f32 %v7876, %v7924
        %7926 = vmatmul.bf16.gmra.mxu0 %v2740
        %v7927 = vpop.f32.mrf.mxu0
        %v7928 = vadd.f32 %v7879, %v7927
        %v7929 = vpop.f32.mrf.mxu0
        %v7930 = vadd.f32 %v7881, %v7929
        %7931 = vmatmul.bf16.gmra.mxu0 %v2748
        %v7932 = vpop.f32.mrf.mxu0
        %v7933 = vadd.f32 %v7884, %v7932
        %v7934 = vpop.f32.mrf.mxu0
        %v7935 = vadd.f32 %v7886, %v7934
        %7936 = vmatmul.bf16.gmra.mxu0 %v2756
        %v7937 = vpop.f32.mrf.mxu0
        %v7938 = vadd.f32 %v7889, %v7937
        %v7939 = vpop.f32.mrf.mxu0
        %v7940 = vadd.f32 %v7891, %v7939
        %7941 = vmatmul.bf16.gmra.mxu0 %v2764
        %v7942 = vpop.f32.mrf.mxu0
        %v7943 = vadd.f32 %v7894, %v7942
        %v7944 = vpop.f32.mrf.mxu0
        %v7945 = vadd.f32 %v7896, %v7944
        %7946 = vmatmul.bf16.gmra.mxu0 %v2772
        %v7947 = vpop.f32.mrf.mxu0
        %v7948 = vadd.f32 %v7899, %v7947
        %v7949 = vpop.f32.mrf.mxu0
        %v7950 = vadd.f32 %v7901, %v7949
        %7951 = vmatmul.bf16.gmra.mxu0 %v2780
        %v7952 = vpop.f32.mrf.mxu0
        %v7953 = vadd.f32 %v7904, %v7952
        %v7954 = vpop.f32.mrf.mxu0
        %v7955 = vadd.f32 %v7906, %v7954
        %7956 = vdwg.mxu0
        %7957 = vmatpush.bf16.msra.mxu0 %v4703
        %7958 = vmatpush.bf16.msra.mxu0 %v4695
        %7959 = vmatpush.bf16.msra.mxu0 %v4687
        %7960 = vmatpush.bf16.msra.mxu0 %v4679
        %7961 = vmatpush.bf16.msra.mxu0 %v4671
        %7962 = vmatpush.bf16.msra.mxu0 %v4663
        %7963 = vmatpush.bf16.msra.mxu0 %v4655
        %7964 = vmatpush.bf16.msra.mxu0 %v4647
        %7965 = vmatmul.bf16.gmra.mxu0 %v2725
        %v7966 = vpop.f32.mrf.mxu0
        %v7967 = vadd.f32 %v7918, %v7966
        %v7968 = vpop.f32.mrf.mxu0
        %v7969 = vadd.f32 %v7920, %v7968
        %7970 = vmatmul.bf16.gmra.mxu0 %v2733
        %v7971 = vpop.f32.mrf.mxu0
        %v7972 = vadd.f32 %v7923, %v7971
        %v7973 = vpop.f32.mrf.mxu0
        %v7974 = vadd.f32 %v7925, %v7973
        %7975 = vmatmul.bf16.gmra.mxu0 %v2741
        %v7976 = vpop.f32.mrf.mxu0
        %v7977 = vadd.f32 %v7928, %v7976
        %v7978 = vpop.f32.mrf.mxu0
        %v7979 = vadd.f32 %v7930, %v7978
        %7980 = vmatmul.bf16.gmra.mxu0 %v2749
        %v7981 = vpop.f32.mrf.mxu0
        %v7982 = vadd.f32 %v7933, %v7981
        %v7983 = vpop.f32.mrf.mxu0
        %v7984 = vadd.f32 %v7935, %v7983
        %7985 = vmatmul.bf16.gmra.mxu0 %v2757
        %v7986 = vpop.f32.mrf.mxu0
        %v7987 = vadd.f32 %v7938, %v7986
        %v7988 = vpop.f32.mrf.mxu0
        %v7989 = vadd.f32 %v7940, %v7988
        %7990 = vmatmul.bf16.gmra.mxu0 %v2765
        %v7991 = vpop.f32.mrf.mxu0
        %v7992 = vadd.f32 %v7943, %v7991
        %v7993 = vpop.f32.mrf.mxu0
        %v7994 = vadd.f32 %v7945, %v7993
        %7995 = vmatmul.bf16.gmra.mxu0 %v2773
        %v7996 = vpop.f32.mrf.mxu0
        %v7997 = vadd.f32 %v7948, %v7996
        %v7998 = vpop.f32.mrf.mxu0
        %v7999 = vadd.f32 %v7950, %v7998
        %8000 = vmatmul.bf16.gmra.mxu0 %v2781
        %v8001 = vpop.f32.mrf.mxu0
        %v8002 = vadd.f32 %v7953, %v8001
        %v8003 = vpop.f32.mrf.mxu0
        %v8004 = vadd.f32 %v7955, %v8003
        %8005 = vdwg.mxu0
        %8006 = vmatpush.bf16.msra.mxu0 %v4767
        %8007 = vmatpush.bf16.msra.mxu0 %v4759
        %8008 = vmatpush.bf16.msra.mxu0 %v4751
        %8009 = vmatpush.bf16.msra.mxu0 %v4743
        %8010 = vmatpush.bf16.msra.mxu0 %v4735
        %8011 = vmatpush.bf16.msra.mxu0 %v4727
        %8012 = vmatpush.bf16.msra.mxu0 %v4719
        %8013 = vmatpush.bf16.msra.mxu0 %v4711
        %8014 = vmatmul.bf16.gmra.mxu0 %v2726
        %v8015 = vpop.f32.mrf.mxu0
        %v8016 = vadd.f32 %v7967, %v8015
        %v8017 = vpop.f32.mrf.mxu0
        %v8018 = vadd.f32 %v7969, %v8017
        %8019 = vmatmul.bf16.gmra.mxu0 %v2734
        %v8020 = vpop.f32.mrf.mxu0
        %v8021 = vadd.f32 %v7972, %v8020
        %v8022 = vpop.f32.mrf.mxu0
        %v8023 = vadd.f32 %v7974, %v8022
        %8024 = vmatmul.bf16.gmra.mxu0 %v2742
        %v8025 = vpop.f32.mrf.mxu0
        %v8026 = vadd.f32 %v7977, %v8025
        %v8027 = vpop.f32.mrf.mxu0
        %v8028 = vadd.f32 %v7979, %v8027
        %8029 = vmatmul.bf16.gmra.mxu0 %v2750
        %v8030 = vpop.f32.mrf.mxu0
        %v8031 = vadd.f32 %v7982, %v8030
        %v8032 = vpop.f32.mrf.mxu0
        %v8033 = vadd.f32 %v7984, %v8032
        %8034 = vmatmul.bf16.gmra.mxu0 %v2758
        %v8035 = vpop.f32.mrf.mxu0
        %v8036 = vadd.f32 %v7987, %v8035
        %v8037 = vpop.f32.mrf.mxu0
        %v8038 = vadd.f32 %v7989, %v8037
        %8039 = vmatmul.bf16.gmra.mxu0 %v2766
        %v8040 = vpop.f32.mrf.mxu0
        %v8041 = vadd.f32 %v7992, %v8040
        %v8042 = vpop.f32.mrf.mxu0
        %v8043 = vadd.f32 %v7994, %v8042
        %8044 = vmatmul.bf16.gmra.mxu0 %v2774
        %v8045 = vpop.f32.mrf.mxu0
        %v8046 = vadd.f32 %v7997, %v8045
        %v8047 = vpop.f32.mrf.mxu0
        %v8048 = vadd.f32 %v7999, %v8047
        %8049 = vmatmul.bf16.gmra.mxu0 %v2782
        %v8050 = vpop.f32.mrf.mxu0
        %v8051 = vadd.f32 %v8002, %v8050
        %v8052 = vpop.f32.mrf.mxu0
        %v8053 = vadd.f32 %v8004, %v8052
        %8054 = vdwg.mxu0
        %8055 = vmatpush.bf16.msra.mxu0 %v4831
        %8056 = vmatpush.bf16.msra.mxu0 %v4823
        %8057 = vmatpush.bf16.msra.mxu0 %v4815
        %8058 = vmatpush.bf16.msra.mxu0 %v4807
        %8059 = vmatpush.bf16.msra.mxu0 %v4799
        %8060 = vmatpush.bf16.msra.mxu0 %v4791
        %8061 = vmatpush.bf16.msra.mxu0 %v4783
        %8062 = vmatpush.bf16.msra.mxu0 %v4775
        %8063 = vmatmul.bf16.gmra.mxu0 %v2727
        %v8064 = vpop.f32.mrf.mxu0
        %v8065 = vadd.f32 %v8016, %v8064
        %v8066 = vpop.f32.mrf.mxu0
        %v8067 = vadd.f32 %v8018, %v8066
        %8068 = vmatmul.bf16.gmra.mxu0 %v2735
        %v8069 = vpop.f32.mrf.mxu0
        %v8070 = vadd.f32 %v8021, %v8069
        %v8071 = vpop.f32.mrf.mxu0
        %v8072 = vadd.f32 %v8023, %v8071
        %8073 = vmatmul.bf16.gmra.mxu0 %v2743
        %v8074 = vpop.f32.mrf.mxu0
        %v8075 = vadd.f32 %v8026, %v8074
        %v8076 = vpop.f32.mrf.mxu0
        %v8077 = vadd.f32 %v8028, %v8076
        %8078 = vmatmul.bf16.gmra.mxu0 %v2751
        %v8079 = vpop.f32.mrf.mxu0
        %v8080 = vadd.f32 %v8031, %v8079
        %v8081 = vpop.f32.mrf.mxu0
        %v8082 = vadd.f32 %v8033, %v8081
        %8083 = vmatmul.bf16.gmra.mxu0 %v2759
        %v8084 = vpop.f32.mrf.mxu0
        %v8085 = vadd.f32 %v8036, %v8084
        %v8086 = vpop.f32.mrf.mxu0
        %v8087 = vadd.f32 %v8038, %v8086
        %8088 = vmatmul.bf16.gmra.mxu0 %v2767
        %v8089 = vpop.f32.mrf.mxu0
        %v8090 = vadd.f32 %v8041, %v8089
        %v8091 = vpop.f32.mrf.mxu0
        %v8092 = vadd.f32 %v8043, %v8091
        %8093 = vmatmul.bf16.gmra.mxu0 %v2775
        %v8094 = vpop.f32.mrf.mxu0
        %v8095 = vadd.f32 %v8046, %v8094
        %v8096 = vpop.f32.mrf.mxu0
        %v8097 = vadd.f32 %v8048, %v8096
        %8098 = vmatmul.bf16.gmra.mxu0 %v2783
        %v8099 = vpop.f32.mrf.mxu0
        %v8100 = vadd.f32 %v8051, %v8099
        %v8101 = vpop.f32.mrf.mxu0
        %v8102 = vadd.f32 %v8053, %v8101
        %8103 = vdwg.mxu0
        %8104 = vmatpush.bf16.msra.mxu0 %v4895
        %8105 = vmatpush.bf16.msra.mxu0 %v4887
        %8106 = vmatpush.bf16.msra.mxu0 %v4879
        %8107 = vmatpush.bf16.msra.mxu0 %v4871
        %8108 = vmatpush.bf16.msra.mxu0 %v4863
        %8109 = vmatpush.bf16.msra.mxu0 %v4855
        %8110 = vmatpush.bf16.msra.mxu0 %v4847
        %8111 = vmatpush.bf16.msra.mxu0 %v4839
        %8112 = vmatmul.bf16.gmra.mxu0 %v2728
        %v8113 = vpop.f32.mrf.mxu0
        %v8114 = vadd.f32 %v8065, %v8113
        %v8115 = vpop.f32.mrf.mxu0
        %v8116 = vadd.f32 %v8067, %v8115
        %8117 = vmatmul.bf16.gmra.mxu0 %v2736
        %v8118 = vpop.f32.mrf.mxu0
        %v8119 = vadd.f32 %v8070, %v8118
        %v8120 = vpop.f32.mrf.mxu0
        %v8121 = vadd.f32 %v8072, %v8120
        %8122 = vmatmul.bf16.gmra.mxu0 %v2744
        %v8123 = vpop.f32.mrf.mxu0
        %v8124 = vadd.f32 %v8075, %v8123
        %v8125 = vpop.f32.mrf.mxu0
        %v8126 = vadd.f32 %v8077, %v8125
        %8127 = vmatmul.bf16.gmra.mxu0 %v2752
        %v8128 = vpop.f32.mrf.mxu0
        %v8129 = vadd.f32 %v8080, %v8128
        %v8130 = vpop.f32.mrf.mxu0
        %v8131 = vadd.f32 %v8082, %v8130
        %8132 = vmatmul.bf16.gmra.mxu0 %v2760
        %v8133 = vpop.f32.mrf.mxu0
        %v8134 = vadd.f32 %v8085, %v8133
        %v8135 = vpop.f32.mrf.mxu0
        %v8136 = vadd.f32 %v8087, %v8135
        %8137 = vmatmul.bf16.gmra.mxu0 %v2768
        %v8138 = vpop.f32.mrf.mxu0
        %v8139 = vadd.f32 %v8090, %v8138
        %v8140 = vpop.f32.mrf.mxu0
        %v8141 = vadd.f32 %v8092, %v8140
        %8142 = vmatmul.bf16.gmra.mxu0 %v2776
        %v8143 = vpop.f32.mrf.mxu0
        %v8144 = vadd.f32 %v8095, %v8143
        %v8145 = vpop.f32.mrf.mxu0
        %v8146 = vadd.f32 %v8097, %v8145
        %8147 = vmatmul.bf16.gmra.mxu0 %v2784
        %v8148 = vpop.f32.mrf.mxu0
        %v8149 = vadd.f32 %v8100, %v8148
        %v8150 = vpop.f32.mrf.mxu0
        %v8151 = vadd.f32 %v8102, %v8150
        %8152 = vdwg.mxu0
        %8153 = vmatpush.bf16.msra.mxu0 %v4448
        %8154 = vmatpush.bf16.msra.mxu0 %v4440
        %8155 = vmatpush.bf16.msra.mxu0 %v4432
        %8156 = vmatpush.bf16.msra.mxu0 %v4424
        %8157 = vmatpush.bf16.msra.mxu0 %v4416
        %8158 = vmatpush.bf16.msra.mxu0 %v4408
        %8159 = vmatpush.bf16.msra.mxu0 %v4400
        %8160 = vmatpush.bf16.msra.mxu0 %v4392
        %8161 = vmatmul.bf16.gmra.mxu0 %v2721
        %v8162 = vpop.f32.mrf.mxu0
        %v8163 = vadd.f32 0.0, %v8162
        %v8164 = vpop.f32.mrf.mxu0
        %v8165 = vadd.f32 0.0, %v8164
        %8166 = vmatmul.bf16.gmra.mxu0 %v2729
        %v8167 = vpop.f32.mrf.mxu0
        %v8168 = vadd.f32 0.0, %v8167
        %v8169 = vpop.f32.mrf.mxu0
        %v8170 = vadd.f32 0.0, %v8169
        %8171 = vmatmul.bf16.gmra.mxu0 %v2737
        %v8172 = vpop.f32.mrf.mxu0
        %v8173 = vadd.f32 0.0, %v8172
        %v8174 = vpop.f32.mrf.mxu0
        %v8175 = vadd.f32 0.0, %v8174
        %8176 = vmatmul.bf16.gmra.mxu0 %v2745
        %v8177 = vpop.f32.mrf.mxu0
        %v8178 = vadd.f32 0.0, %v8177
        %v8179 = vpop.f32.mrf.mxu0
        %v8180 = vadd.f32 0.0, %v8179
        %8181 = vmatmul.bf16.gmra.mxu0 %v2753
        %v8182 = vpop.f32.mrf.mxu0
        %v8183 = vadd.f32 0.0, %v8182
        %v8184 = vpop.f32.mrf.mxu0
        %v8185 = vadd.f32 0.0, %v8184
        %8186 = vmatmul.bf16.gmra.mxu0 %v2761
        %v8187 = vpop.f32.mrf.mxu0
        %v8188 = vadd.f32 0.0, %v8187
        %v8189 = vpop.f32.mrf.mxu0
        %v8190 = vadd.f32 0.0, %v8189
        %8191 = vmatmul.bf16.gmra.mxu0 %v2769
        %v8192 = vpop.f32.mrf.mxu0
        %v8193 = vadd.f32 0.0, %v8192
        %v8194 = vpop.f32.mrf.mxu0
        %v8195 = vadd.f32 0.0, %v8194
        %8196 = vmatmul.bf16.gmra.mxu0 %v2777
        %v8197 = vpop.f32.mrf.mxu0
        %v8198 = vadd.f32 0.0, %v8197
        %v8199 = vpop.f32.mrf.mxu0
        %v8200 = vadd.f32 0.0, %v8199
        %8201 = vdwg.mxu0
        %8202 = vmatpush.bf16.msra.mxu0 %v4512
        %8203 = vmatpush.bf16.msra.mxu0 %v4504
        %8204 = vmatpush.bf16.msra.mxu0 %v4496
        %8205 = vmatpush.bf16.msra.mxu0 %v4488
        %8206 = vmatpush.bf16.msra.mxu0 %v4480
        %8207 = vmatpush.bf16.msra.mxu0 %v4472
        %8208 = vmatpush.bf16.msra.mxu0 %v4464
        %8209 = vmatpush.bf16.msra.mxu0 %v4456
        %8210 = vmatmul.bf16.gmra.mxu0 %v2722
        %v8211 = vpop.f32.mrf.mxu0
        %v8212 = vadd.f32 %v8163, %v8211
        %v8213 = vpop.f32.mrf.mxu0
        %v8214 = vadd.f32 %v8165, %v8213
        %8215 = vmatmul.bf16.gmra.mxu0 %v2730
        %v8216 = vpop.f32.mrf.mxu0
        %v8217 = vadd.f32 %v8168, %v8216
        %v8218 = vpop.f32.mrf.mxu0
        %v8219 = vadd.f32 %v8170, %v8218
        %8220 = vmatmul.bf16.gmra.mxu0 %v2738
        %v8221 = vpop.f32.mrf.mxu0
        %v8222 = vadd.f32 %v8173, %v8221
        %v8223 = vpop.f32.mrf.mxu0
        %v8224 = vadd.f32 %v8175, %v8223
        %8225 = vmatmul.bf16.gmra.mxu0 %v2746
        %v8226 = vpop.f32.mrf.mxu0
        %v8227 = vadd.f32 %v8178, %v8226
        %v8228 = vpop.f32.mrf.mxu0
        %v8229 = vadd.f32 %v8180, %v8228
        %8230 = vmatmul.bf16.gmra.mxu0 %v2754
        %v8231 = vpop.f32.mrf.mxu0
        %v8232 = vadd.f32 %v8183, %v8231
        %v8233 = vpop.f32.mrf.mxu0
        %v8234 = vadd.f32 %v8185, %v8233
        %8235 = vmatmul.bf16.gmra.mxu0 %v2762
        %v8236 = vpop.f32.mrf.mxu0
        %v8237 = vadd.f32 %v8188, %v8236
        %v8238 = vpop.f32.mrf.mxu0
        %v8239 = vadd.f32 %v8190, %v8238
        %8240 = vmatmul.bf16.gmra.mxu0 %v2770
        %v8241 = vpop.f32.mrf.mxu0
        %v8242 = vadd.f32 %v8193, %v8241
        %v8243 = vpop.f32.mrf.mxu0
        %v8244 = vadd.f32 %v8195, %v8243
        %8245 = vmatmul.bf16.gmra.mxu0 %v2778
        %v8246 = vpop.f32.mrf.mxu0
        %v8247 = vadd.f32 %v8198, %v8246
        %v8248 = vpop.f32.mrf.mxu0
        %v8249 = vadd.f32 %v8200, %v8248
        %8250 = vdwg.mxu0
        %8251 = vmatpush.bf16.msra.mxu0 %v4576
        %8252 = vmatpush.bf16.msra.mxu0 %v4568
        %8253 = vmatpush.bf16.msra.mxu0 %v4560
        %8254 = vmatpush.bf16.msra.mxu0 %v4552
        %8255 = vmatpush.bf16.msra.mxu0 %v4544
        %8256 = vmatpush.bf16.msra.mxu0 %v4536
        %8257 = vmatpush.bf16.msra.mxu0 %v4528
        %8258 = vmatpush.bf16.msra.mxu0 %v4520
        %8259 = vmatmul.bf16.gmra.mxu0 %v2723
        %v8260 = vpop.f32.mrf.mxu0
        %v8261 = vadd.f32 %v8212, %v8260
        %v8262 = vpop.f32.mrf.mxu0
        %v8263 = vadd.f32 %v8214, %v8262
        %8264 = vmatmul.bf16.gmra.mxu0 %v2731
        %v8265 = vpop.f32.mrf.mxu0
        %v8266 = vadd.f32 %v8217, %v8265
        %v8267 = vpop.f32.mrf.mxu0
        %v8268 = vadd.f32 %v8219, %v8267
        %8269 = vmatmul.bf16.gmra.mxu0 %v2739
        %v8270 = vpop.f32.mrf.mxu0
        %v8271 = vadd.f32 %v8222, %v8270
        %v8272 = vpop.f32.mrf.mxu0
        %v8273 = vadd.f32 %v8224, %v8272
        %8274 = vmatmul.bf16.gmra.mxu0 %v2747
        %v8275 = vpop.f32.mrf.mxu0
        %v8276 = vadd.f32 %v8227, %v8275
        %v8277 = vpop.f32.mrf.mxu0
        %v8278 = vadd.f32 %v8229, %v8277
        %8279 = vmatmul.bf16.gmra.mxu0 %v2755
        %v8280 = vpop.f32.mrf.mxu0
        %v8281 = vadd.f32 %v8232, %v8280
        %v8282 = vpop.f32.mrf.mxu0
        %v8283 = vadd.f32 %v8234, %v8282
        %8284 = vmatmul.bf16.gmra.mxu0 %v2763
        %v8285 = vpop.f32.mrf.mxu0
        %v8286 = vadd.f32 %v8237, %v8285
        %v8287 = vpop.f32.mrf.mxu0
        %v8288 = vadd.f32 %v8239, %v8287
        %8289 = vmatmul.bf16.gmra.mxu0 %v2771
        %v8290 = vpop.f32.mrf.mxu0
        %v8291 = vadd.f32 %v8242, %v8290
        %v8292 = vpop.f32.mrf.mxu0
        %v8293 = vadd.f32 %v8244, %v8292
        %8294 = vmatmul.bf16.gmra.mxu0 %v2779
        %v8295 = vpop.f32.mrf.mxu0
        %v8296 = vadd.f32 %v8247, %v8295
        %v8297 = vpop.f32.mrf.mxu0
        %v8298 = vadd.f32 %v8249, %v8297
        %8299 = vdwg.mxu0
        %8300 = vmatpush.bf16.msra.mxu0 %v4640
        %8301 = vmatpush.bf16.msra.mxu0 %v4632
        %8302 = vmatpush.bf16.msra.mxu0 %v4624
        %8303 = vmatpush.bf16.msra.mxu0 %v4616
        %8304 = vmatpush.bf16.msra.mxu0 %v4608
        %8305 = vmatpush.bf16.msra.mxu0 %v4600
        %8306 = vmatpush.bf16.msra.mxu0 %v4592
        %8307 = vmatpush.bf16.msra.mxu0 %v4584
        %8308 = vmatmul.bf16.gmra.mxu0 %v2724
        %v8309 = vpop.f32.mrf.mxu0
        %v8310 = vadd.f32 %v8261, %v8309
        %v8311 = vpop.f32.mrf.mxu0
        %v8312 = vadd.f32 %v8263, %v8311
        %8313 = vmatmul.bf16.gmra.mxu0 %v2732
        %v8314 = vpop.f32.mrf.mxu0
        %v8315 = vadd.f32 %v8266, %v8314
        %v8316 = vpop.f32.mrf.mxu0
        %v8317 = vadd.f32 %v8268, %v8316
        %8318 = vmatmul.bf16.gmra.mxu0 %v2740
        %v8319 = vpop.f32.mrf.mxu0
        %v8320 = vadd.f32 %v8271, %v8319
        %v8321 = vpop.f32.mrf.mxu0
        %v8322 = vadd.f32 %v8273, %v8321
        %8323 = vmatmul.bf16.gmra.mxu0 %v2748
        %v8324 = vpop.f32.mrf.mxu0
        %v8325 = vadd.f32 %v8276, %v8324
        %v8326 = vpop.f32.mrf.mxu0
        %v8327 = vadd.f32 %v8278, %v8326
        %8328 = vmatmul.bf16.gmra.mxu0 %v2756
        %v8329 = vpop.f32.mrf.mxu0
        %v8330 = vadd.f32 %v8281, %v8329
        %v8331 = vpop.f32.mrf.mxu0
        %v8332 = vadd.f32 %v8283, %v8331
        %8333 = vmatmul.bf16.gmra.mxu0 %v2764
        %v8334 = vpop.f32.mrf.mxu0
        %v8335 = vadd.f32 %v8286, %v8334
        %v8336 = vpop.f32.mrf.mxu0
        %v8337 = vadd.f32 %v8288, %v8336
        %8338 = vmatmul.bf16.gmra.mxu0 %v2772
        %v8339 = vpop.f32.mrf.mxu0
        %v8340 = vadd.f32 %v8291, %v8339
        %v8341 = vpop.f32.mrf.mxu0
        %v8342 = vadd.f32 %v8293, %v8341
        %8343 = vmatmul.bf16.gmra.mxu0 %v2780
        %v8344 = vpop.f32.mrf.mxu0
        %v8345 = vadd.f32 %v8296, %v8344
        %v8346 = vpop.f32.mrf.mxu0
        %v8347 = vadd.f32 %v8298, %v8346
        %8348 = vdwg.mxu0
        %8349 = vmatpush.bf16.msra.mxu0 %v4704
        %8350 = vmatpush.bf16.msra.mxu0 %v4696
        %8351 = vmatpush.bf16.msra.mxu0 %v4688
        %8352 = vmatpush.bf16.msra.mxu0 %v4680
        %8353 = vmatpush.bf16.msra.mxu0 %v4672
        %8354 = vmatpush.bf16.msra.mxu0 %v4664
        %8355 = vmatpush.bf16.msra.mxu0 %v4656
        %8356 = vmatpush.bf16.msra.mxu0 %v4648
        %8357 = vmatmul.bf16.gmra.mxu0 %v2725
        %v8358 = vpop.f32.mrf.mxu0
        %v8359 = vadd.f32 %v8310, %v8358
        %v8360 = vpop.f32.mrf.mxu0
        %v8361 = vadd.f32 %v8312, %v8360
        %8362 = vmatmul.bf16.gmra.mxu0 %v2733
        %v8363 = vpop.f32.mrf.mxu0
        %v8364 = vadd.f32 %v8315, %v8363
        %v8365 = vpop.f32.mrf.mxu0
        %v8366 = vadd.f32 %v8317, %v8365
        %8367 = vmatmul.bf16.gmra.mxu0 %v2741
        %v8368 = vpop.f32.mrf.mxu0
        %v8369 = vadd.f32 %v8320, %v8368
        %v8370 = vpop.f32.mrf.mxu0
        %v8371 = vadd.f32 %v8322, %v8370
        %8372 = vmatmul.bf16.gmra.mxu0 %v2749
        %v8373 = vpop.f32.mrf.mxu0
        %v8374 = vadd.f32 %v8325, %v8373
        %v8375 = vpop.f32.mrf.mxu0
        %v8376 = vadd.f32 %v8327, %v8375
        %8377 = vmatmul.bf16.gmra.mxu0 %v2757
        %v8378 = vpop.f32.mrf.mxu0
        %v8379 = vadd.f32 %v8330, %v8378
        %v8380 = vpop.f32.mrf.mxu0
        %v8381 = vadd.f32 %v8332, %v8380
        %8382 = vmatmul.bf16.gmra.mxu0 %v2765
        %v8383 = vpop.f32.mrf.mxu0
        %v8384 = vadd.f32 %v8335, %v8383
        %v8385 = vpop.f32.mrf.mxu0
        %v8386 = vadd.f32 %v8337, %v8385
        %8387 = vmatmul.bf16.gmra.mxu0 %v2773
        %v8388 = vpop.f32.mrf.mxu0
        %v8389 = vadd.f32 %v8340, %v8388
        %v8390 = vpop.f32.mrf.mxu0
        %v8391 = vadd.f32 %v8342, %v8390
        %8392 = vmatmul.bf16.gmra.mxu0 %v2781
        %v8393 = vpop.f32.mrf.mxu0
        %v8394 = vadd.f32 %v8345, %v8393
        %v8395 = vpop.f32.mrf.mxu0
        %v8396 = vadd.f32 %v8347, %v8395
        %8397 = vdwg.mxu0
        %8398 = vmatpush.bf16.msra.mxu0 %v4768
        %8399 = vmatpush.bf16.msra.mxu0 %v4760
        %8400 = vmatpush.bf16.msra.mxu0 %v4752
        %8401 = vmatpush.bf16.msra.mxu0 %v4744
        %8402 = vmatpush.bf16.msra.mxu0 %v4736
        %8403 = vmatpush.bf16.msra.mxu0 %v4728
        %8404 = vmatpush.bf16.msra.mxu0 %v4720
        %8405 = vmatpush.bf16.msra.mxu0 %v4712
        %8406 = vmatmul.bf16.gmra.mxu0 %v2726
        %v8407 = vpop.f32.mrf.mxu0
        %v8408 = vadd.f32 %v8359, %v8407
        %v8409 = vpop.f32.mrf.mxu0
        %v8410 = vadd.f32 %v8361, %v8409
        %8411 = vmatmul.bf16.gmra.mxu0 %v2734
        %v8412 = vpop.f32.mrf.mxu0
        %v8413 = vadd.f32 %v8364, %v8412
        %v8414 = vpop.f32.mrf.mxu0
        %v8415 = vadd.f32 %v8366, %v8414
        %8416 = vmatmul.bf16.gmra.mxu0 %v2742
        %v8417 = vpop.f32.mrf.mxu0
        %v8418 = vadd.f32 %v8369, %v8417
        %v8419 = vpop.f32.mrf.mxu0
        %v8420 = vadd.f32 %v8371, %v8419
        %8421 = vmatmul.bf16.gmra.mxu0 %v2750
        %v8422 = vpop.f32.mrf.mxu0
        %v8423 = vadd.f32 %v8374, %v8422
        %v8424 = vpop.f32.mrf.mxu0
        %v8425 = vadd.f32 %v8376, %v8424
        %8426 = vmatmul.bf16.gmra.mxu0 %v2758
        %v8427 = vpop.f32.mrf.mxu0
        %v8428 = vadd.f32 %v8379, %v8427
        %v8429 = vpop.f32.mrf.mxu0
        %v8430 = vadd.f32 %v8381, %v8429
        %8431 = vmatmul.bf16.gmra.mxu0 %v2766
        %v8432 = vpop.f32.mrf.mxu0
        %v8433 = vadd.f32 %v8384, %v8432
        %v8434 = vpop.f32.mrf.mxu0
        %v8435 = vadd.f32 %v8386, %v8434
        %8436 = vmatmul.bf16.gmra.mxu0 %v2774
        %v8437 = vpop.f32.mrf.mxu0
        %v8438 = vadd.f32 %v8389, %v8437
        %v8439 = vpop.f32.mrf.mxu0
        %v8440 = vadd.f32 %v8391, %v8439
        %8441 = vmatmul.bf16.gmra.mxu0 %v2782
        %v8442 = vpop.f32.mrf.mxu0
        %v8443 = vadd.f32 %v8394, %v8442
        %v8444 = vpop.f32.mrf.mxu0
        %v8445 = vadd.f32 %v8396, %v8444
        %8446 = vdwg.mxu0
        %8447 = vmatpush.bf16.msra.mxu0 %v4832
        %8448 = vmatpush.bf16.msra.mxu0 %v4824
        %8449 = vmatpush.bf16.msra.mxu0 %v4816
        %8450 = vmatpush.bf16.msra.mxu0 %v4808
        %8451 = vmatpush.bf16.msra.mxu0 %v4800
        %8452 = vmatpush.bf16.msra.mxu0 %v4792
        %8453 = vmatpush.bf16.msra.mxu0 %v4784
        %8454 = vmatpush.bf16.msra.mxu0 %v4776
        %8455 = vmatmul.bf16.gmra.mxu0 %v2727
        %v8456 = vpop.f32.mrf.mxu0
        %v8457 = vadd.f32 %v8408, %v8456
        %v8458 = vpop.f32.mrf.mxu0
        %v8459 = vadd.f32 %v8410, %v8458
        %8460 = vmatmul.bf16.gmra.mxu0 %v2735
        %v8461 = vpop.f32.mrf.mxu0
        %v8462 = vadd.f32 %v8413, %v8461
        %v8463 = vpop.f32.mrf.mxu0
        %v8464 = vadd.f32 %v8415, %v8463
        %8465 = vmatmul.bf16.gmra.mxu0 %v2743
        %v8466 = vpop.f32.mrf.mxu0
        %v8467 = vadd.f32 %v8418, %v8466
        %v8468 = vpop.f32.mrf.mxu0
        %v8469 = vadd.f32 %v8420, %v8468
        %8470 = vmatmul.bf16.gmra.mxu0 %v2751
        %v8471 = vpop.f32.mrf.mxu0
        %v8472 = vadd.f32 %v8423, %v8471
        %v8473 = vpop.f32.mrf.mxu0
        %v8474 = vadd.f32 %v8425, %v8473
        %8475 = vmatmul.bf16.gmra.mxu0 %v2759
        %v8476 = vpop.f32.mrf.mxu0
        %v8477 = vadd.f32 %v8428, %v8476
        %v8478 = vpop.f32.mrf.mxu0
        %v8479 = vadd.f32 %v8430, %v8478
        %8480 = vmatmul.bf16.gmra.mxu0 %v2767
        %v8481 = vpop.f32.mrf.mxu0
        %v8482 = vadd.f32 %v8433, %v8481
        %v8483 = vpop.f32.mrf.mxu0
        %v8484 = vadd.f32 %v8435, %v8483
        %8485 = vmatmul.bf16.gmra.mxu0 %v2775
        %v8486 = vpop.f32.mrf.mxu0
        %v8487 = vadd.f32 %v8438, %v8486
        %v8488 = vpop.f32.mrf.mxu0
        %v8489 = vadd.f32 %v8440, %v8488
        %8490 = vmatmul.bf16.gmra.mxu0 %v2783
        %v8491 = vpop.f32.mrf.mxu0
        %v8492 = vadd.f32 %v8443, %v8491
        %v8493 = vpop.f32.mrf.mxu0
        %v8494 = vadd.f32 %v8445, %v8493
        %8495 = vdwg.mxu0
        %8496 = vmatpush.bf16.msra.mxu0 %v4896
        %8497 = vmatpush.bf16.msra.mxu0 %v4888
        %8498 = vmatpush.bf16.msra.mxu0 %v4880
        %8499 = vmatpush.bf16.msra.mxu0 %v4872
        %8500 = vmatpush.bf16.msra.mxu0 %v4864
        %8501 = vmatpush.bf16.msra.mxu0 %v4856
        %8502 = vmatpush.bf16.msra.mxu0 %v4848
        %8503 = vmatpush.bf16.msra.mxu0 %v4840
        %8504 = vmatmul.bf16.gmra.mxu0 %v2728
        %v8505 = vpop.f32.mrf.mxu0
        %v8506 = vadd.f32 %v8457, %v8505
        %v8507 = vpop.f32.mrf.mxu0
        %v8508 = vadd.f32 %v8459, %v8507
        %8509 = vmatmul.bf16.gmra.mxu0 %v2736
        %v8510 = vpop.f32.mrf.mxu0
        %v8511 = vadd.f32 %v8462, %v8510
        %v8512 = vpop.f32.mrf.mxu0
        %v8513 = vadd.f32 %v8464, %v8512
        %8514 = vmatmul.bf16.gmra.mxu0 %v2744
        %v8515 = vpop.f32.mrf.mxu0
        %v8516 = vadd.f32 %v8467, %v8515
        %v8517 = vpop.f32.mrf.mxu0
        %v8518 = vadd.f32 %v8469, %v8517
        %8519 = vmatmul.bf16.gmra.mxu0 %v2752
        %v8520 = vpop.f32.mrf.mxu0
        %v8521 = vadd.f32 %v8472, %v8520
        %v8522 = vpop.f32.mrf.mxu0
        %v8523 = vadd.f32 %v8474, %v8522
        %8524 = vmatmul.bf16.gmra.mxu0 %v2760
        %v8525 = vpop.f32.mrf.mxu0
        %v8526 = vadd.f32 %v8477, %v8525
        %v8527 = vpop.f32.mrf.mxu0
        %v8528 = vadd.f32 %v8479, %v8527
        %8529 = vmatmul.bf16.gmra.mxu0 %v2768
        %v8530 = vpop.f32.mrf.mxu0
        %v8531 = vadd.f32 %v8482, %v8530
        %v8532 = vpop.f32.mrf.mxu0
        %v8533 = vadd.f32 %v8484, %v8532
        %8534 = vmatmul.bf16.gmra.mxu0 %v2776
        %v8535 = vpop.f32.mrf.mxu0
        %v8536 = vadd.f32 %v8487, %v8535
        %v8537 = vpop.f32.mrf.mxu0
        %v8538 = vadd.f32 %v8489, %v8537
        %8539 = vmatmul.bf16.gmra.mxu0 %v2784
        %v8540 = vpop.f32.mrf.mxu0
        %v8541 = vadd.f32 %v8492, %v8540
        %v8542 = vpop.f32.mrf.mxu0
        %v8543 = vadd.f32 %v8494, %v8542
        %8544 = vdwg.mxu0
        %v8545 = vpack.c.bf16 %v6154, %v5762
        %v8546 = vpack.c.bf16 %v6938, %v6546
        %v8547 = vpack.c.bf16 %v7722, %v7330
        %v8548 = vpack.c.bf16 %v8506, %v8114
        %v8549 = vpack.c.bf16 %v6156, %v5764
        %v8550 = vpack.c.bf16 %v6940, %v6548
        %v8551 = vpack.c.bf16 %v7724, %v7332
        %v8552 = vpack.c.bf16 %v8508, %v8116
        %v8553 = vpack.c.bf16 %v6159, %v5767
        %v8554 = vpack.c.bf16 %v6943, %v6551
        %v8555 = vpack.c.bf16 %v7727, %v7335
        %v8556 = vpack.c.bf16 %v8511, %v8119
        %v8557 = vpack.c.bf16 %v6161, %v5769
        %v8558 = vpack.c.bf16 %v6945, %v6553
        %v8559 = vpack.c.bf16 %v7729, %v7337
        %v8560 = vpack.c.bf16 %v8513, %v8121
        %v8561 = vpack.c.bf16 %v6164, %v5772
        %v8562 = vpack.c.bf16 %v6948, %v6556
        %v8563 = vpack.c.bf16 %v7732, %v7340
        %v8564 = vpack.c.bf16 %v8516, %v8124
        %v8565 = vpack.c.bf16 %v6166, %v5774
        %v8566 = vpack.c.bf16 %v6950, %v6558
        %v8567 = vpack.c.bf16 %v7734, %v7342
        %v8568 = vpack.c.bf16 %v8518, %v8126
        %v8569 = vpack.c.bf16 %v6169, %v5777
        %v8570 = vpack.c.bf16 %v6953, %v6561
        %v8571 = vpack.c.bf16 %v7737, %v7345
        %v8572 = vpack.c.bf16 %v8521, %v8129
        %v8573 = vpack.c.bf16 %v6171, %v5779
        %v8574 = vpack.c.bf16 %v6955, %v6563
        %v8575 = vpack.c.bf16 %v7739, %v7347
        %v8576 = vpack.c.bf16 %v8523, %v8131
        %v8577 = vpack.c.bf16 %v6174, %v5782
        %v8578 = vpack.c.bf16 %v6958, %v6566
        %v8579 = vpack.c.bf16 %v7742, %v7350
        %v8580 = vpack.c.bf16 %v8526, %v8134
        %v8581 = vpack.c.bf16 %v6176, %v5784
        %v8582 = vpack.c.bf16 %v6960, %v6568
        %v8583 = vpack.c.bf16 %v7744, %v7352
        %v8584 = vpack.c.bf16 %v8528, %v8136
        %v8585 = vpack.c.bf16 %v6179, %v5787
        %v8586 = vpack.c.bf16 %v6963, %v6571
        %v8587 = vpack.c.bf16 %v7747, %v7355
        %v8588 = vpack.c.bf16 %v8531, %v8139
        %v8589 = vpack.c.bf16 %v6181, %v5789
        %v8590 = vpack.c.bf16 %v6965, %v6573
        %v8591 = vpack.c.bf16 %v7749, %v7357
        %v8592 = vpack.c.bf16 %v8533, %v8141
        %v8593 = vpack.c.bf16 %v6184, %v5792
        %v8594 = vpack.c.bf16 %v6968, %v6576
        %v8595 = vpack.c.bf16 %v7752, %v7360
        %v8596 = vpack.c.bf16 %v8536, %v8144
        %v8597 = vpack.c.bf16 %v6186, %v5794
        %v8598 = vpack.c.bf16 %v6970, %v6578
        %v8599 = vpack.c.bf16 %v7754, %v7362
        %v8600 = vpack.c.bf16 %v8538, %v8146
        %v8601 = vpack.c.bf16 %v6189, %v5797
        %v8602 = vpack.c.bf16 %v6973, %v6581
        %v8603 = vpack.c.bf16 %v7757, %v7365
        %v8604 = vpack.c.bf16 %v8541, %v8149
        %v8605 = vpack.c.bf16 %v6191, %v5799
        %v8606 = vpack.c.bf16 %v6975, %v6583
        %v8607 = vpack.c.bf16 %v7759, %v7367
        %v8608 = vpack.c.bf16 %v8543, %v8151
        %v8609 = vld [vmem:[#allocation6] sm:$0xff]
        %v8611 = vperm.slane %v8609, 0
        %v8612 = vperm.slane %v8609, 1
        %v8613 = vperm.slane %v8609, 2
        %v8614 = vperm.slane %v8609, 3
        %v8615 = vperm.slane %v8609, 4
        %v8616 = vperm.slane %v8609, 5
        %v8617 = vperm.slane %v8609, 6
        %v8618 = vperm.slane %v8609, 7
        %v8627 = vpack.c.bf16 %v8612, %v8611
        %v8628 = vpack.c.bf16 %v8614, %v8613
        %v8629 = vpack.c.bf16 %v8616, %v8615
        %v8630 = vpack.c.bf16 %v8618, %v8617
        %v8635 = vunpack.c.l.b16 %v8627
        %v8636 = vunpack.c.h.b16 %v8627
        %v8637 = vunpack.c.l.b16 %v8628
        %v8638 = vunpack.c.h.b16 %v8628
        %v8639 = vunpack.c.l.b16 %v8629
        %v8640 = vunpack.c.h.b16 %v8629
        %v8641 = vunpack.c.l.b16 %v8630
        %v8642 = vunpack.c.h.b16 %v8630
        %v8643 = vpack.c.b16 %v8635, %v8635
        %v8644 = vpack.c.b16 %v8636, %v8636
        %v8645 = vpack.c.b16 %v8637, %v8637
        %v8646 = vpack.c.b16 %v8638, %v8638
        %v8647 = vpack.c.b16 %v8639, %v8639
        %v8648 = vpack.c.b16 %v8640, %v8640
        %v8649 = vpack.c.b16 %v8641, %v8641
        %v8650 = vpack.c.b16 %v8642, %v8642
        %v8652 = vpack.i.b16 %v8643, %v8643
        %v8654 = vperm.slane %v8652, 0
        %v8656 = vpack.i.b16 %v8644, %v8644
        %v8658 = vperm.slane %v8656, 0
        %v8660 = vpack.i.b16 %v8645, %v8645
        %v8662 = vperm.slane %v8660, 0
        %v8664 = vpack.i.b16 %v8646, %v8646
        %v8666 = vperm.slane %v8664, 0
        %v8668 = vpack.i.b16 %v8647, %v8647
        %v8670 = vperm.slane %v8668, 0
        %v8672 = vpack.i.b16 %v8648, %v8648
        %v8674 = vperm.slane %v8672, 0
        %v8676 = vpack.i.b16 %v8649, %v8649
        %v8678 = vperm.slane %v8676, 0
        %v8680 = vpack.i.b16 %v8650, %v8650
        %v8682 = vperm.slane %v8680, 0
        %v8683 = vunpack.c.l.bf16 %v8545
        %v8684 = vunpack.c.h.bf16 %v8545
        %v8685 = vunpack.c.l.bf16 %v8546
        %v8686 = vunpack.c.h.bf16 %v8546
        %v8687 = vunpack.c.l.bf16 %v8547
        %v8688 = vunpack.c.h.bf16 %v8547
        %v8689 = vunpack.c.l.bf16 %v8548
        %v8690 = vunpack.c.h.bf16 %v8548
        %v8691 = vunpack.c.l.bf16 %v8549
        %v8692 = vunpack.c.h.bf16 %v8549
        %v8693 = vunpack.c.l.bf16 %v8550
        %v8694 = vunpack.c.h.bf16 %v8550
        %v8695 = vunpack.c.l.bf16 %v8551
        %v8696 = vunpack.c.h.bf16 %v8551
        %v8697 = vunpack.c.l.bf16 %v8552
        %v8698 = vunpack.c.h.bf16 %v8552
        %v8699 = vunpack.c.l.bf16 %v8553
        %v8700 = vunpack.c.h.bf16 %v8553
        %v8701 = vunpack.c.l.bf16 %v8554
        %v8702 = vunpack.c.h.bf16 %v8554
        %v8703 = vunpack.c.l.bf16 %v8555
        %v8704 = vunpack.c.h.bf16 %v8555
        %v8705 = vunpack.c.l.bf16 %v8556
        %v8706 = vunpack.c.h.bf16 %v8556
        %v8707 = vunpack.c.l.bf16 %v8557
        %v8708 = vunpack.c.h.bf16 %v8557
        %v8709 = vunpack.c.l.bf16 %v8558
        %v8710 = vunpack.c.h.bf16 %v8558
        %v8711 = vunpack.c.l.bf16 %v8559
        %v8712 = vunpack.c.h.bf16 %v8559
        %v8713 = vunpack.c.l.bf16 %v8560
        %v8714 = vunpack.c.h.bf16 %v8560
        %v8715 = vunpack.c.l.bf16 %v8561
        %v8716 = vunpack.c.h.bf16 %v8561
        %v8717 = vunpack.c.l.bf16 %v8562
        %v8718 = vunpack.c.h.bf16 %v8562
        %v8719 = vunpack.c.l.bf16 %v8563
        %v8720 = vunpack.c.h.bf16 %v8563
        %v8721 = vunpack.c.l.bf16 %v8564
        %v8722 = vunpack.c.h.bf16 %v8564
        %v8723 = vunpack.c.l.bf16 %v8565
        %v8724 = vunpack.c.h.bf16 %v8565
        %v8725 = vunpack.c.l.bf16 %v8566
        %v8726 = vunpack.c.h.bf16 %v8566
        %v8727 = vunpack.c.l.bf16 %v8567
        %v8728 = vunpack.c.h.bf16 %v8567
        %v8729 = vunpack.c.l.bf16 %v8568
        %v8730 = vunpack.c.h.bf16 %v8568
        %v8731 = vunpack.c.l.bf16 %v8569
        %v8732 = vunpack.c.h.bf16 %v8569
        %v8733 = vunpack.c.l.bf16 %v8570
        %v8734 = vunpack.c.h.bf16 %v8570
        %v8735 = vunpack.c.l.bf16 %v8571
        %v8736 = vunpack.c.h.bf16 %v8571
        %v8737 = vunpack.c.l.bf16 %v8572
        %v8738 = vunpack.c.h.bf16 %v8572
        %v8739 = vunpack.c.l.bf16 %v8573
        %v8740 = vunpack.c.h.bf16 %v8573
        %v8741 = vunpack.c.l.bf16 %v8574
        %v8742 = vunpack.c.h.bf16 %v8574
        %v8743 = vunpack.c.l.bf16 %v8575
        %v8744 = vunpack.c.h.bf16 %v8575
        %v8745 = vunpack.c.l.bf16 %v8576
        %v8746 = vunpack.c.h.bf16 %v8576
        %v8747 = vunpack.c.l.bf16 %v8577
        %v8748 = vunpack.c.h.bf16 %v8577
        %v8749 = vunpack.c.l.bf16 %v8578
        %v8750 = vunpack.c.h.bf16 %v8578
        %v8751 = vunpack.c.l.bf16 %v8579
        %v8752 = vunpack.c.h.bf16 %v8579
        %v8753 = vunpack.c.l.bf16 %v8580
        %v8754 = vunpack.c.h.bf16 %v8580
        %v8755 = vunpack.c.l.bf16 %v8581
        %v8756 = vunpack.c.h.bf16 %v8581
        %v8757 = vunpack.c.l.bf16 %v8582
        %v8758 = vunpack.c.h.bf16 %v8582
        %v8759 = vunpack.c.l.bf16 %v8583
        %v8760 = vunpack.c.h.bf16 %v8583
        %v8761 = vunpack.c.l.bf16 %v8584
        %v8762 = vunpack.c.h.bf16 %v8584
        %v8763 = vunpack.c.l.bf16 %v8585
        %v8764 = vunpack.c.h.bf16 %v8585
        %v8765 = vunpack.c.l.bf16 %v8586
        %v8766 = vunpack.c.h.bf16 %v8586
        %v8767 = vunpack.c.l.bf16 %v8587
        %v8768 = vunpack.c.h.bf16 %v8587
        %v8769 = vunpack.c.l.bf16 %v8588
        %v8770 = vunpack.c.h.bf16 %v8588
        %v8771 = vunpack.c.l.bf16 %v8589
        %v8772 = vunpack.c.h.bf16 %v8589
        %v8773 = vunpack.c.l.bf16 %v8590
        %v8774 = vunpack.c.h.bf16 %v8590
        %v8775 = vunpack.c.l.bf16 %v8591
        %v8776 = vunpack.c.h.bf16 %v8591
        %v8777 = vunpack.c.l.bf16 %v8592
        %v8778 = vunpack.c.h.bf16 %v8592
        %v8779 = vunpack.c.l.bf16 %v8593
        %v8780 = vunpack.c.h.bf16 %v8593
        %v8781 = vunpack.c.l.bf16 %v8594
        %v8782 = vunpack.c.h.bf16 %v8594
        %v8783 = vunpack.c.l.bf16 %v8595
        %v8784 = vunpack.c.h.bf16 %v8595
        %v8785 = vunpack.c.l.bf16 %v8596
        %v8786 = vunpack.c.h.bf16 %v8596
        %v8787 = vunpack.c.l.bf16 %v8597
        %v8788 = vunpack.c.h.bf16 %v8597
        %v8789 = vunpack.c.l.bf16 %v8598
        %v8790 = vunpack.c.h.bf16 %v8598
        %v8791 = vunpack.c.l.bf16 %v8599
        %v8792 = vunpack.c.h.bf16 %v8599
        %v8793 = vunpack.c.l.bf16 %v8600
        %v8794 = vunpack.c.h.bf16 %v8600
        %v8795 = vunpack.c.l.bf16 %v8601
        %v8796 = vunpack.c.h.bf16 %v8601
        %v8797 = vunpack.c.l.bf16 %v8602
        %v8798 = vunpack.c.h.bf16 %v8602
        %v8799 = vunpack.c.l.bf16 %v8603
        %v8800 = vunpack.c.h.bf16 %v8603
        %v8801 = vunpack.c.l.bf16 %v8604
        %v8802 = vunpack.c.h.bf16 %v8604
        %v8803 = vunpack.c.l.bf16 %v8605
        %v8804 = vunpack.c.h.bf16 %v8605
        %v8805 = vunpack.c.l.bf16 %v8606
        %v8806 = vunpack.c.h.bf16 %v8606
        %v8807 = vunpack.c.l.bf16 %v8607
        %v8808 = vunpack.c.h.bf16 %v8607
        %v8809 = vunpack.c.l.bf16 %v8608
        %v8810 = vunpack.c.h.bf16 %v8608
        %v8811 = vunpack.c.l.bf16 %v8654
        %v8812 = vunpack.c.l.bf16 %v8658
        %v8813 = vunpack.c.l.bf16 %v8662
        %v8814 = vunpack.c.l.bf16 %v8666
        %v8815 = vunpack.c.l.bf16 %v8670
        %v8816 = vunpack.c.l.bf16 %v8674
        %v8817 = vunpack.c.l.bf16 %v8678
        %v8818 = vunpack.c.l.bf16 %v8682
        %v8819 = vadd.f32 %v8683, %v8811
        %v8820 = vadd.f32 %v8684, %v8812
        %v8821 = vadd.f32 %v8685, %v8813
        %v8822 = vadd.f32 %v8686, %v8814
        %v8823 = vadd.f32 %v8687, %v8815
        %v8824 = vadd.f32 %v8688, %v8816
        %v8825 = vadd.f32 %v8689, %v8817
        %v8826 = vadd.f32 %v8690, %v8818
        %v8827 = vadd.f32 %v8691, %v8811
        %v8828 = vadd.f32 %v8692, %v8812
        %v8829 = vadd.f32 %v8693, %v8813
        %v8830 = vadd.f32 %v8694, %v8814
        %v8831 = vadd.f32 %v8695, %v8815
        %v8832 = vadd.f32 %v8696, %v8816
        %v8833 = vadd.f32 %v8697, %v8817
        %v8834 = vadd.f32 %v8698, %v8818
        %v8835 = vadd.f32 %v8699, %v8811
        %v8836 = vadd.f32 %v8700, %v8812
        %v8837 = vadd.f32 %v8701, %v8813
        %v8838 = vadd.f32 %v8702, %v8814
        %v8839 = vadd.f32 %v8703, %v8815
        %v8840 = vadd.f32 %v8704, %v8816
        %v8841 = vadd.f32 %v8705, %v8817
        %v8842 = vadd.f32 %v8706, %v8818
        %v8843 = vadd.f32 %v8707, %v8811
        %v8844 = vadd.f32 %v8708, %v8812
        %v8845 = vadd.f32 %v8709, %v8813
        %v8846 = vadd.f32 %v8710, %v8814
        %v8847 = vadd.f32 %v8711, %v8815
        %v8848 = vadd.f32 %v8712, %v8816
        %v8849 = vadd.f32 %v8713, %v8817
        %v8850 = vadd.f32 %v8714, %v8818
        %v8851 = vadd.f32 %v8715, %v8811
        %v8852 = vadd.f32 %v8716, %v8812
        %v8853 = vadd.f32 %v8717, %v8813
        %v8854 = vadd.f32 %v8718, %v8814
        %v8855 = vadd.f32 %v8719, %v8815
        %v8856 = vadd.f32 %v8720, %v8816
        %v8857 = vadd.f32 %v8721, %v8817
        %v8858 = vadd.f32 %v8722, %v8818
        %v8859 = vadd.f32 %v8723, %v8811
        %v8860 = vadd.f32 %v8724, %v8812
        %v8861 = vadd.f32 %v8725, %v8813
        %v8862 = vadd.f32 %v8726, %v8814
        %v8863 = vadd.f32 %v8727, %v8815
        %v8864 = vadd.f32 %v8728, %v8816
        %v8865 = vadd.f32 %v8729, %v8817
        %v8866 = vadd.f32 %v8730, %v8818
        %v8867 = vadd.f32 %v8731, %v8811
        %v8868 = vadd.f32 %v8732, %v8812
        %v8869 = vadd.f32 %v8733, %v8813
        %v8870 = vadd.f32 %v8734, %v8814
        %v8871 = vadd.f32 %v8735, %v8815
        %v8872 = vadd.f32 %v8736, %v8816
        %v8873 = vadd.f32 %v8737, %v8817
        %v8874 = vadd.f32 %v8738, %v8818
        %v8875 = vadd.f32 %v8739, %v8811
        %v8876 = vadd.f32 %v8740, %v8812
        %v8877 = vadd.f32 %v8741, %v8813
        %v8878 = vadd.f32 %v8742, %v8814
        %v8879 = vadd.f32 %v8743, %v8815
        %v8880 = vadd.f32 %v8744, %v8816
        %v8881 = vadd.f32 %v8745, %v8817
        %v8882 = vadd.f32 %v8746, %v8818
        %v8883 = vadd.f32 %v8747, %v8811
        %v8884 = vadd.f32 %v8748, %v8812
        %v8885 = vadd.f32 %v8749, %v8813
        %v8886 = vadd.f32 %v8750, %v8814
        %v8887 = vadd.f32 %v8751, %v8815
        %v8888 = vadd.f32 %v8752, %v8816
        %v8889 = vadd.f32 %v8753, %v8817
        %v8890 = vadd.f32 %v8754, %v8818
        %v8891 = vadd.f32 %v8755, %v8811
        %v8892 = vadd.f32 %v8756, %v8812
        %v8893 = vadd.f32 %v8757, %v8813
        %v8894 = vadd.f32 %v8758, %v8814
        %v8895 = vadd.f32 %v8759, %v8815
        %v8896 = vadd.f32 %v8760, %v8816
        %v8897 = vadd.f32 %v8761, %v8817
        %v8898 = vadd.f32 %v8762, %v8818
        %v8899 = vadd.f32 %v8763, %v8811
        %v8900 = vadd.f32 %v8764, %v8812
        %v8901 = vadd.f32 %v8765, %v8813
        %v8902 = vadd.f32 %v8766, %v8814
        %v8903 = vadd.f32 %v8767, %v8815
        %v8904 = vadd.f32 %v8768, %v8816
        %v8905 = vadd.f32 %v8769, %v8817
        %v8906 = vadd.f32 %v8770, %v8818
        %v8907 = vadd.f32 %v8771, %v8811
        %v8908 = vadd.f32 %v8772, %v8812
        %v8909 = vadd.f32 %v8773, %v8813
        %v8910 = vadd.f32 %v8774, %v8814
        %v8911 = vadd.f32 %v8775, %v8815
        %v8912 = vadd.f32 %v8776, %v8816
        %v8913 = vadd.f32 %v8777, %v8817
        %v8914 = vadd.f32 %v8778, %v8818
        %v8915 = vadd.f32 %v8779, %v8811
        %v8916 = vadd.f32 %v8780, %v8812
        %v8917 = vadd.f32 %v8781, %v8813
        %v8918 = vadd.f32 %v8782, %v8814
        %v8919 = vadd.f32 %v8783, %v8815
        %v8920 = vadd.f32 %v8784, %v8816
        %v8921 = vadd.f32 %v8785, %v8817
        %v8922 = vadd.f32 %v8786, %v8818
        %v8923 = vadd.f32 %v8787, %v8811
        %v8924 = vadd.f32 %v8788, %v8812
        %v8925 = vadd.f32 %v8789, %v8813
        %v8926 = vadd.f32 %v8790, %v8814
        %v8927 = vadd.f32 %v8791, %v8815
        %v8928 = vadd.f32 %v8792, %v8816
        %v8929 = vadd.f32 %v8793, %v8817
        %v8930 = vadd.f32 %v8794, %v8818
        %v8931 = vadd.f32 %v8795, %v8811
        %v8932 = vadd.f32 %v8796, %v8812
        %v8933 = vadd.f32 %v8797, %v8813
        %v8934 = vadd.f32 %v8798, %v8814
        %v8935 = vadd.f32 %v8799, %v8815
        %v8936 = vadd.f32 %v8800, %v8816
        %v8937 = vadd.f32 %v8801, %v8817
        %v8938 = vadd.f32 %v8802, %v8818
        %v8939 = vadd.f32 %v8803, %v8811
        %v8940 = vadd.f32 %v8804, %v8812
        %v8941 = vadd.f32 %v8805, %v8813
        %v8942 = vadd.f32 %v8806, %v8814
        %v8943 = vadd.f32 %v8807, %v8815
        %v8944 = vadd.f32 %v8808, %v8816
        %v8945 = vadd.f32 %v8809, %v8817
        %v8946 = vadd.f32 %v8810, %v8818
        %v8947 = vpack.c.bf16 %v8820, %v8819
        %v8948 = vpack.c.bf16 %v8822, %v8821
        %v8949 = vpack.c.bf16 %v8824, %v8823
        %v8950 = vpack.c.bf16 %v8826, %v8825
        %v8951 = vpack.c.bf16 %v8828, %v8827
        %v8952 = vpack.c.bf16 %v8830, %v8829
        %v8953 = vpack.c.bf16 %v8832, %v8831
        %v8954 = vpack.c.bf16 %v8834, %v8833
        %v8955 = vpack.c.bf16 %v8836, %v8835
        %v8956 = vpack.c.bf16 %v8838, %v8837
        %v8957 = vpack.c.bf16 %v8840, %v8839
        %v8958 = vpack.c.bf16 %v8842, %v8841
        %v8959 = vpack.c.bf16 %v8844, %v8843
        %v8960 = vpack.c.bf16 %v8846, %v8845
        %v8961 = vpack.c.bf16 %v8848, %v8847
        %v8962 = vpack.c.bf16 %v8850, %v8849
        %v8963 = vpack.c.bf16 %v8852, %v8851
        %v8964 = vpack.c.bf16 %v8854, %v8853
        %v8965 = vpack.c.bf16 %v8856, %v8855
        %v8966 = vpack.c.bf16 %v8858, %v8857
        %v8967 = vpack.c.bf16 %v8860, %v8859
        %v8968 = vpack.c.bf16 %v8862, %v8861
        %v8969 = vpack.c.bf16 %v8864, %v8863
        %v8970 = vpack.c.bf16 %v8866, %v8865
        %v8971 = vpack.c.bf16 %v8868, %v8867
        %v8972 = vpack.c.bf16 %v8870, %v8869
        %v8973 = vpack.c.bf16 %v8872, %v8871
        %v8974 = vpack.c.bf16 %v8874, %v8873
        %v8975 = vpack.c.bf16 %v8876, %v8875
        %v8976 = vpack.c.bf16 %v8878, %v8877
        %v8977 = vpack.c.bf16 %v8880, %v8879
        %v8978 = vpack.c.bf16 %v8882, %v8881
        %v8979 = vpack.c.bf16 %v8884, %v8883
        %v8980 = vpack.c.bf16 %v8886, %v8885
        %v8981 = vpack.c.bf16 %v8888, %v8887
        %v8982 = vpack.c.bf16 %v8890, %v8889
        %v8983 = vpack.c.bf16 %v8892, %v8891
        %v8984 = vpack.c.bf16 %v8894, %v8893
        %v8985 = vpack.c.bf16 %v8896, %v8895
        %v8986 = vpack.c.bf16 %v8898, %v8897
        %v8987 = vpack.c.bf16 %v8900, %v8899
        %v8988 = vpack.c.bf16 %v8902, %v8901
        %v8989 = vpack.c.bf16 %v8904, %v8903
        %v8990 = vpack.c.bf16 %v8906, %v8905
        %v8991 = vpack.c.bf16 %v8908, %v8907
        %v8992 = vpack.c.bf16 %v8910, %v8909
        %v8993 = vpack.c.bf16 %v8912, %v8911
        %v8994 = vpack.c.bf16 %v8914, %v8913
        %v8995 = vpack.c.bf16 %v8916, %v8915
        %v8996 = vpack.c.bf16 %v8918, %v8917
        %v8997 = vpack.c.bf16 %v8920, %v8919
        %v8998 = vpack.c.bf16 %v8922, %v8921
        %v8999 = vpack.c.bf16 %v8924, %v8923
        %v9000 = vpack.c.bf16 %v8926, %v8925
        %v9001 = vpack.c.bf16 %v8928, %v8927
        %v9002 = vpack.c.bf16 %v8930, %v8929
        %v9003 = vpack.c.bf16 %v8932, %v8931
        %v9004 = vpack.c.bf16 %v8934, %v8933
        %v9005 = vpack.c.bf16 %v8936, %v8935
        %v9006 = vpack.c.bf16 %v8938, %v8937
        %v9007 = vpack.c.bf16 %v8940, %v8939
        %v9008 = vpack.c.bf16 %v8942, %v8941
        %v9009 = vpack.c.bf16 %v8944, %v8943
        %v9010 = vpack.c.bf16 %v8946, %v8945
        %v9011 = vunpack.c.l.bf16 %v8947
        %v9012 = vunpack.c.h.bf16 %v8947
        %v9013 = vunpack.c.l.bf16 %v8948
        %v9014 = vunpack.c.h.bf16 %v8948
        %v9015 = vunpack.c.l.bf16 %v8949
        %v9016 = vunpack.c.h.bf16 %v8949
        %v9017 = vunpack.c.l.bf16 %v8950
        %v9018 = vunpack.c.h.bf16 %v8950
        %v9019 = vunpack.c.l.bf16 %v8951
        %v9020 = vunpack.c.h.bf16 %v8951
        %v9021 = vunpack.c.l.bf16 %v8952
        %v9022 = vunpack.c.h.bf16 %v8952
        %v9023 = vunpack.c.l.bf16 %v8953
        %v9024 = vunpack.c.h.bf16 %v8953
        %v9025 = vunpack.c.l.bf16 %v8954
        %v9026 = vunpack.c.h.bf16 %v8954
        %v9027 = vunpack.c.l.bf16 %v8955
        %v9028 = vunpack.c.h.bf16 %v8955
        %v9029 = vunpack.c.l.bf16 %v8956
        %v9030 = vunpack.c.h.bf16 %v8956
        %v9031 = vunpack.c.l.bf16 %v8957
        %v9032 = vunpack.c.h.bf16 %v8957
        %v9033 = vunpack.c.l.bf16 %v8958
        %v9034 = vunpack.c.h.bf16 %v8958
        %v9035 = vunpack.c.l.bf16 %v8959
        %v9036 = vunpack.c.h.bf16 %v8959
        %v9037 = vunpack.c.l.bf16 %v8960
        %v9038 = vunpack.c.h.bf16 %v8960
        %v9039 = vunpack.c.l.bf16 %v8961
        %v9040 = vunpack.c.h.bf16 %v8961
        %v9041 = vunpack.c.l.bf16 %v8962
        %v9042 = vunpack.c.h.bf16 %v8962
        %v9043 = vunpack.c.l.bf16 %v8963
        %v9044 = vunpack.c.h.bf16 %v8963
        %v9045 = vunpack.c.l.bf16 %v8964
        %v9046 = vunpack.c.h.bf16 %v8964
        %v9047 = vunpack.c.l.bf16 %v8965
        %v9048 = vunpack.c.h.bf16 %v8965
        %v9049 = vunpack.c.l.bf16 %v8966
        %v9050 = vunpack.c.h.bf16 %v8966
        %v9051 = vunpack.c.l.bf16 %v8967
        %v9052 = vunpack.c.h.bf16 %v8967
        %v9053 = vunpack.c.l.bf16 %v8968
        %v9054 = vunpack.c.h.bf16 %v8968
        %v9055 = vunpack.c.l.bf16 %v8969
        %v9056 = vunpack.c.h.bf16 %v8969
        %v9057 = vunpack.c.l.bf16 %v8970
        %v9058 = vunpack.c.h.bf16 %v8970
        %v9059 = vunpack.c.l.bf16 %v8971
        %v9060 = vunpack.c.h.bf16 %v8971
        %v9061 = vunpack.c.l.bf16 %v8972
        %v9062 = vunpack.c.h.bf16 %v8972
        %v9063 = vunpack.c.l.bf16 %v8973
        %v9064 = vunpack.c.h.bf16 %v8973
        %v9065 = vunpack.c.l.bf16 %v8974
        %v9066 = vunpack.c.h.bf16 %v8974
        %v9067 = vunpack.c.l.bf16 %v8975
        %v9068 = vunpack.c.h.bf16 %v8975
        %v9069 = vunpack.c.l.bf16 %v8976
        %v9070 = vunpack.c.h.bf16 %v8976
        %v9071 = vunpack.c.l.bf16 %v8977
        %v9072 = vunpack.c.h.bf16 %v8977
        %v9073 = vunpack.c.l.bf16 %v8978
        %v9074 = vunpack.c.h.bf16 %v8978
        %v9075 = vunpack.c.l.bf16 %v8979
        %v9076 = vunpack.c.h.bf16 %v8979
        %v9077 = vunpack.c.l.bf16 %v8980
        %v9078 = vunpack.c.h.bf16 %v8980
        %v9079 = vunpack.c.l.bf16 %v8981
        %v9080 = vunpack.c.h.bf16 %v8981
        %v9081 = vunpack.c.l.bf16 %v8982
        %v9082 = vunpack.c.h.bf16 %v8982
        %v9083 = vunpack.c.l.bf16 %v8983
        %v9084 = vunpack.c.h.bf16 %v8983
        %v9085 = vunpack.c.l.bf16 %v8984
        %v9086 = vunpack.c.h.bf16 %v8984
        %v9087 = vunpack.c.l.bf16 %v8985
        %v9088 = vunpack.c.h.bf16 %v8985
        %v9089 = vunpack.c.l.bf16 %v8986
        %v9090 = vunpack.c.h.bf16 %v8986
        %v9091 = vunpack.c.l.bf16 %v8987
        %v9092 = vunpack.c.h.bf16 %v8987
        %v9093 = vunpack.c.l.bf16 %v8988
        %v9094 = vunpack.c.h.bf16 %v8988
        %v9095 = vunpack.c.l.bf16 %v8989
        %v9096 = vunpack.c.h.bf16 %v8989
        %v9097 = vunpack.c.l.bf16 %v8990
        %v9098 = vunpack.c.h.bf16 %v8990
        %v9099 = vunpack.c.l.bf16 %v8991
        %v9100 = vunpack.c.h.bf16 %v8991
        %v9101 = vunpack.c.l.bf16 %v8992
        %v9102 = vunpack.c.h.bf16 %v8992
        %v9103 = vunpack.c.l.bf16 %v8993
        %v9104 = vunpack.c.h.bf16 %v8993
        %v9105 = vunpack.c.l.bf16 %v8994
        %v9106 = vunpack.c.h.bf16 %v8994
        %v9107 = vunpack.c.l.bf16 %v8995
        %v9108 = vunpack.c.h.bf16 %v8995
        %v9109 = vunpack.c.l.bf16 %v8996
        %v9110 = vunpack.c.h.bf16 %v8996
        %v9111 = vunpack.c.l.bf16 %v8997
        %v9112 = vunpack.c.h.bf16 %v8997
        %v9113 = vunpack.c.l.bf16 %v8998
        %v9114 = vunpack.c.h.bf16 %v8998
        %v9115 = vunpack.c.l.bf16 %v8999
        %v9116 = vunpack.c.h.bf16 %v8999
        %v9117 = vunpack.c.l.bf16 %v9000
        %v9118 = vunpack.c.h.bf16 %v9000
        %v9119 = vunpack.c.l.bf16 %v9001
        %v9120 = vunpack.c.h.bf16 %v9001
        %v9121 = vunpack.c.l.bf16 %v9002
        %v9122 = vunpack.c.h.bf16 %v9002
        %v9123 = vunpack.c.l.bf16 %v9003
        %v9124 = vunpack.c.h.bf16 %v9003
        %v9125 = vunpack.c.l.bf16 %v9004
        %v9126 = vunpack.c.h.bf16 %v9004
        %v9127 = vunpack.c.l.bf16 %v9005
        %v9128 = vunpack.c.h.bf16 %v9005
        %v9129 = vunpack.c.l.bf16 %v9006
        %v9130 = vunpack.c.h.bf16 %v9006
        %v9131 = vunpack.c.l.bf16 %v9007
        %v9132 = vunpack.c.h.bf16 %v9007
        %v9133 = vunpack.c.l.bf16 %v9008
        %v9134 = vunpack.c.h.bf16 %v9008
        %v9135 = vunpack.c.l.bf16 %v9009
        %v9136 = vunpack.c.h.bf16 %v9009
        %v9137 = vunpack.c.l.bf16 %v9010
        %v9138 = vunpack.c.h.bf16 %v9010
        %vm9139 = vcmp.gt.f32.partialorder %v9011, 0.0
        %vm9140 = vcmp.gt.f32.partialorder %v9012, 0.0
        %vm9141 = vcmp.gt.f32.partialorder %v9013, 0.0
        %vm9142 = vcmp.gt.f32.partialorder %v9014, 0.0
        %vm9143 = vcmp.gt.f32.partialorder %v9015, 0.0
        %vm9144 = vcmp.gt.f32.partialorder %v9016, 0.0
        %vm9145 = vcmp.gt.f32.partialorder %v9017, 0.0
        %vm9146 = vcmp.gt.f32.partialorder %v9018, 0.0
        %vm9147 = vcmp.gt.f32.partialorder %v9019, 0.0
        %vm9148 = vcmp.gt.f32.partialorder %v9020, 0.0
        %vm9149 = vcmp.gt.f32.partialorder %v9021, 0.0
        %vm9150 = vcmp.gt.f32.partialorder %v9022, 0.0
        %vm9151 = vcmp.gt.f32.partialorder %v9023, 0.0
        %vm9152 = vcmp.gt.f32.partialorder %v9024, 0.0
        %vm9153 = vcmp.gt.f32.partialorder %v9025, 0.0
        %vm9154 = vcmp.gt.f32.partialorder %v9026, 0.0
        %vm9155 = vcmp.gt.f32.partialorder %v9027, 0.0
        %vm9156 = vcmp.gt.f32.partialorder %v9028, 0.0
        %vm9157 = vcmp.gt.f32.partialorder %v9029, 0.0
        %vm9158 = vcmp.gt.f32.partialorder %v9030, 0.0
        %vm9159 = vcmp.gt.f32.partialorder %v9031, 0.0
        %vm9160 = vcmp.gt.f32.partialorder %v9032, 0.0
        %vm9161 = vcmp.gt.f32.partialorder %v9033, 0.0
        %vm9162 = vcmp.gt.f32.partialorder %v9034, 0.0
        %vm9163 = vcmp.gt.f32.partialorder %v9035, 0.0
        %vm9164 = vcmp.gt.f32.partialorder %v9036, 0.0
        %vm9165 = vcmp.gt.f32.partialorder %v9037, 0.0
        %vm9166 = vcmp.gt.f32.partialorder %v9038, 0.0
        %vm9167 = vcmp.gt.f32.partialorder %v9039, 0.0
        %vm9168 = vcmp.gt.f32.partialorder %v9040, 0.0
        %vm9169 = vcmp.gt.f32.partialorder %v9041, 0.0
        %vm9170 = vcmp.gt.f32.partialorder %v9042, 0.0
        %vm9171 = vcmp.gt.f32.partialorder %v9043, 0.0
        %vm9172 = vcmp.gt.f32.partialorder %v9044, 0.0
        %vm9173 = vcmp.gt.f32.partialorder %v9045, 0.0
        %vm9174 = vcmp.gt.f32.partialorder %v9046, 0.0
        %vm9175 = vcmp.gt.f32.partialorder %v9047, 0.0
        %vm9176 = vcmp.gt.f32.partialorder %v9048, 0.0
        %vm9177 = vcmp.gt.f32.partialorder %v9049, 0.0
        %vm9178 = vcmp.gt.f32.partialorder %v9050, 0.0
        %vm9179 = vcmp.gt.f32.partialorder %v9051, 0.0
        %vm9180 = vcmp.gt.f32.partialorder %v9052, 0.0
        %vm9181 = vcmp.gt.f32.partialorder %v9053, 0.0
        %vm9182 = vcmp.gt.f32.partialorder %v9054, 0.0
        %vm9183 = vcmp.gt.f32.partialorder %v9055, 0.0
        %vm9184 = vcmp.gt.f32.partialorder %v9056, 0.0
        %vm9185 = vcmp.gt.f32.partialorder %v9057, 0.0
        %vm9186 = vcmp.gt.f32.partialorder %v9058, 0.0
        %vm9187 = vcmp.gt.f32.partialorder %v9059, 0.0
        %vm9188 = vcmp.gt.f32.partialorder %v9060, 0.0
        %vm9189 = vcmp.gt.f32.partialorder %v9061, 0.0
        %vm9190 = vcmp.gt.f32.partialorder %v9062, 0.0
        %vm9191 = vcmp.gt.f32.partialorder %v9063, 0.0
        %vm9192 = vcmp.gt.f32.partialorder %v9064, 0.0
        %vm9193 = vcmp.gt.f32.partialorder %v9065, 0.0
        %vm9194 = vcmp.gt.f32.partialorder %v9066, 0.0
        %vm9195 = vcmp.gt.f32.partialorder %v9067, 0.0
        %vm9196 = vcmp.gt.f32.partialorder %v9068, 0.0
        %vm9197 = vcmp.gt.f32.partialorder %v9069, 0.0
        %vm9198 = vcmp.gt.f32.partialorder %v9070, 0.0
        %vm9199 = vcmp.gt.f32.partialorder %v9071, 0.0
        %vm9200 = vcmp.gt.f32.partialorder %v9072, 0.0
        %vm9201 = vcmp.gt.f32.partialorder %v9073, 0.0
        %vm9202 = vcmp.gt.f32.partialorder %v9074, 0.0
        %vm9203 = vcmp.gt.f32.partialorder %v9075, 0.0
        %vm9204 = vcmp.gt.f32.partialorder %v9076, 0.0
        %vm9205 = vcmp.gt.f32.partialorder %v9077, 0.0
        %vm9206 = vcmp.gt.f32.partialorder %v9078, 0.0
        %vm9207 = vcmp.gt.f32.partialorder %v9079, 0.0
        %vm9208 = vcmp.gt.f32.partialorder %v9080, 0.0
        %vm9209 = vcmp.gt.f32.partialorder %v9081, 0.0
        %vm9210 = vcmp.gt.f32.partialorder %v9082, 0.0
        %vm9211 = vcmp.gt.f32.partialorder %v9083, 0.0
        %vm9212 = vcmp.gt.f32.partialorder %v9084, 0.0
        %vm9213 = vcmp.gt.f32.partialorder %v9085, 0.0
        %vm9214 = vcmp.gt.f32.partialorder %v9086, 0.0
        %vm9215 = vcmp.gt.f32.partialorder %v9087, 0.0
        %vm9216 = vcmp.gt.f32.partialorder %v9088, 0.0
        %vm9217 = vcmp.gt.f32.partialorder %v9089, 0.0
        %vm9218 = vcmp.gt.f32.partialorder %v9090, 0.0
        %vm9219 = vcmp.gt.f32.partialorder %v9091, 0.0
        %vm9220 = vcmp.gt.f32.partialorder %v9092, 0.0
        %vm9221 = vcmp.gt.f32.partialorder %v9093, 0.0
        %vm9222 = vcmp.gt.f32.partialorder %v9094, 0.0
        %vm9223 = vcmp.gt.f32.partialorder %v9095, 0.0
        %vm9224 = vcmp.gt.f32.partialorder %v9096, 0.0
        %vm9225 = vcmp.gt.f32.partialorder %v9097, 0.0
        %vm9226 = vcmp.gt.f32.partialorder %v9098, 0.0
        %vm9227 = vcmp.gt.f32.partialorder %v9099, 0.0
        %vm9228 = vcmp.gt.f32.partialorder %v9100, 0.0
        %vm9229 = vcmp.gt.f32.partialorder %v9101, 0.0
        %vm9230 = vcmp.gt.f32.partialorder %v9102, 0.0
        %vm9231 = vcmp.gt.f32.partialorder %v9103, 0.0
        %vm9232 = vcmp.gt.f32.partialorder %v9104, 0.0
        %vm9233 = vcmp.gt.f32.partialorder %v9105, 0.0
        %vm9234 = vcmp.gt.f32.partialorder %v9106, 0.0
        %vm9235 = vcmp.gt.f32.partialorder %v9107, 0.0
        %vm9236 = vcmp.gt.f32.partialorder %v9108, 0.0
        %vm9237 = vcmp.gt.f32.partialorder %v9109, 0.0
        %vm9238 = vcmp.gt.f32.partialorder %v9110, 0.0
        %vm9239 = vcmp.gt.f32.partialorder %v9111, 0.0
        %vm9240 = vcmp.gt.f32.partialorder %v9112, 0.0
        %vm9241 = vcmp.gt.f32.partialorder %v9113, 0.0
        %vm9242 = vcmp.gt.f32.partialorder %v9114, 0.0
        %vm9243 = vcmp.gt.f32.partialorder %v9115, 0.0
        %vm9244 = vcmp.gt.f32.partialorder %v9116, 0.0
        %vm9245 = vcmp.gt.f32.partialorder %v9117, 0.0
        %vm9246 = vcmp.gt.f32.partialorder %v9118, 0.0
        %vm9247 = vcmp.gt.f32.partialorder %v9119, 0.0
        %vm9248 = vcmp.gt.f32.partialorder %v9120, 0.0
        %vm9249 = vcmp.gt.f32.partialorder %v9121, 0.0
        %vm9250 = vcmp.gt.f32.partialorder %v9122, 0.0
        %vm9251 = vcmp.gt.f32.partialorder %v9123, 0.0
        %vm9252 = vcmp.gt.f32.partialorder %v9124, 0.0
        %vm9253 = vcmp.gt.f32.partialorder %v9125, 0.0
        %vm9254 = vcmp.gt.f32.partialorder %v9126, 0.0
        %vm9255 = vcmp.gt.f32.partialorder %v9127, 0.0
        %vm9256 = vcmp.gt.f32.partialorder %v9128, 0.0
        %vm9257 = vcmp.gt.f32.partialorder %v9129, 0.0
        %vm9258 = vcmp.gt.f32.partialorder %v9130, 0.0
        %vm9259 = vcmp.gt.f32.partialorder %v9131, 0.0
        %vm9260 = vcmp.gt.f32.partialorder %v9132, 0.0
        %vm9261 = vcmp.gt.f32.partialorder %v9133, 0.0
        %vm9262 = vcmp.gt.f32.partialorder %v9134, 0.0
        %vm9263 = vcmp.gt.f32.partialorder %v9135, 0.0
        %vm9264 = vcmp.gt.f32.partialorder %v9136, 0.0
        %vm9265 = vcmp.gt.f32.partialorder %v9137, 0.0
        %vm9266 = vcmp.gt.f32.partialorder %v9138, 0.0
        %v9267 = vmul.f32 %v9011, 0.010009766
        %v9268 = vmul.f32 %v9012, 0.010009766
        %v9269 = vmul.f32 %v9013, 0.010009766
        %v9270 = vmul.f32 %v9014, 0.010009766
        %v9271 = vmul.f32 %v9015, 0.010009766
        %v9272 = vmul.f32 %v9016, 0.010009766
        %v9273 = vmul.f32 %v9017, 0.010009766
        %v9274 = vmul.f32 %v9018, 0.010009766
        %v9275 = vmul.f32 %v9019, 0.010009766
        %v9276 = vmul.f32 %v9020, 0.010009766
        %v9277 = vmul.f32 %v9021, 0.010009766
        %v9278 = vmul.f32 %v9022, 0.010009766
        %v9279 = vmul.f32 %v9023, 0.010009766
        %v9280 = vmul.f32 %v9024, 0.010009766
        %v9281 = vmul.f32 %v9025, 0.010009766
        %v9282 = vmul.f32 %v9026, 0.010009766
        %v9283 = vmul.f32 %v9027, 0.010009766
        %v9284 = vmul.f32 %v9028, 0.010009766
        %v9285 = vmul.f32 %v9029, 0.010009766
        %v9286 = vmul.f32 %v9030, 0.010009766
        %v9287 = vmul.f32 %v9031, 0.010009766
        %v9288 = vmul.f32 %v9032, 0.010009766
        %v9289 = vmul.f32 %v9033, 0.010009766
        %v9290 = vmul.f32 %v9034, 0.010009766
        %v9291 = vmul.f32 %v9035, 0.010009766
        %v9292 = vmul.f32 %v9036, 0.010009766
        %v9293 = vmul.f32 %v9037, 0.010009766
        %v9294 = vmul.f32 %v9038, 0.010009766
        %v9295 = vmul.f32 %v9039, 0.010009766
        %v9296 = vmul.f32 %v9040, 0.010009766
        %v9297 = vmul.f32 %v9041, 0.010009766
        %v9298 = vmul.f32 %v9042, 0.010009766
        %v9299 = vmul.f32 %v9043, 0.010009766
        %v9300 = vmul.f32 %v9044, 0.010009766
        %v9301 = vmul.f32 %v9045, 0.010009766
        %v9302 = vmul.f32 %v9046, 0.010009766
        %v9303 = vmul.f32 %v9047, 0.010009766
        %v9304 = vmul.f32 %v9048, 0.010009766
        %v9305 = vmul.f32 %v9049, 0.010009766
        %v9306 = vmul.f32 %v9050, 0.010009766
        %v9307 = vmul.f32 %v9051, 0.010009766
        %v9308 = vmul.f32 %v9052, 0.010009766
        %v9309 = vmul.f32 %v9053, 0.010009766
        %v9310 = vmul.f32 %v9054, 0.010009766
        %v9311 = vmul.f32 %v9055, 0.010009766
        %v9312 = vmul.f32 %v9056, 0.010009766
        %v9313 = vmul.f32 %v9057, 0.010009766
        %v9314 = vmul.f32 %v9058, 0.010009766
        %v9315 = vmul.f32 %v9059, 0.010009766
        %v9316 = vmul.f32 %v9060, 0.010009766
        %v9317 = vmul.f32 %v9061, 0.010009766
        %v9318 = vmul.f32 %v9062, 0.010009766
        %v9319 = vmul.f32 %v9063, 0.010009766
        %v9320 = vmul.f32 %v9064, 0.010009766
        %v9321 = vmul.f32 %v9065, 0.010009766
        %v9322 = vmul.f32 %v9066, 0.010009766
        %v9323 = vmul.f32 %v9067, 0.010009766
        %v9324 = vmul.f32 %v9068, 0.010009766
        %v9325 = vmul.f32 %v9069, 0.010009766
        %v9326 = vmul.f32 %v9070, 0.010009766
        %v9327 = vmul.f32 %v9071, 0.010009766
        %v9328 = vmul.f32 %v9072, 0.010009766
        %v9329 = vmul.f32 %v9073, 0.010009766
        %v9330 = vmul.f32 %v9074, 0.010009766
        %v9331 = vmul.f32 %v9075, 0.010009766
        %v9332 = vmul.f32 %v9076, 0.010009766
        %v9333 = vmul.f32 %v9077, 0.010009766
        %v9334 = vmul.f32 %v9078, 0.010009766
        %v9335 = vmul.f32 %v9079, 0.010009766
        %v9336 = vmul.f32 %v9080, 0.010009766
        %v9337 = vmul.f32 %v9081, 0.010009766
        %v9338 = vmul.f32 %v9082, 0.010009766
        %v9339 = vmul.f32 %v9083, 0.010009766
        %v9340 = vmul.f32 %v9084, 0.010009766
        %v9341 = vmul.f32 %v9085, 0.010009766
        %v9342 = vmul.f32 %v9086, 0.010009766
        %v9343 = vmul.f32 %v9087, 0.010009766
        %v9344 = vmul.f32 %v9088, 0.010009766
        %v9345 = vmul.f32 %v9089, 0.010009766
        %v9346 = vmul.f32 %v9090, 0.010009766
        %v9347 = vmul.f32 %v9091, 0.010009766
        %v9348 = vmul.f32 %v9092, 0.010009766
        %v9349 = vmul.f32 %v9093, 0.010009766
        %v9350 = vmul.f32 %v9094, 0.010009766
        %v9351 = vmul.f32 %v9095, 0.010009766
        %v9352 = vmul.f32 %v9096, 0.010009766
        %v9353 = vmul.f32 %v9097, 0.010009766
        %v9354 = vmul.f32 %v9098, 0.010009766
        %v9355 = vmul.f32 %v9099, 0.010009766
        %v9356 = vmul.f32 %v9100, 0.010009766
        %v9357 = vmul.f32 %v9101, 0.010009766
        %v9358 = vmul.f32 %v9102, 0.010009766
        %v9359 = vmul.f32 %v9103, 0.010009766
        %v9360 = vmul.f32 %v9104, 0.010009766
        %v9361 = vmul.f32 %v9105, 0.010009766
        %v9362 = vmul.f32 %v9106, 0.010009766
        %v9363 = vmul.f32 %v9107, 0.010009766
        %v9364 = vmul.f32 %v9108, 0.010009766
        %v9365 = vmul.f32 %v9109, 0.010009766
        %v9366 = vmul.f32 %v9110, 0.010009766
        %v9367 = vmul.f32 %v9111, 0.010009766
        %v9368 = vmul.f32 %v9112, 0.010009766
        %v9369 = vmul.f32 %v9113, 0.010009766
        %v9370 = vmul.f32 %v9114, 0.010009766
        %v9371 = vmul.f32 %v9115, 0.010009766
        %v9372 = vmul.f32 %v9116, 0.010009766
        %v9373 = vmul.f32 %v9117, 0.010009766
        %v9374 = vmul.f32 %v9118, 0.010009766
        %v9375 = vmul.f32 %v9119, 0.010009766
        %v9376 = vmul.f32 %v9120, 0.010009766
        %v9377 = vmul.f32 %v9121, 0.010009766
        %v9378 = vmul.f32 %v9122, 0.010009766
        %v9379 = vmul.f32 %v9123, 0.010009766
        %v9380 = vmul.f32 %v9124, 0.010009766
        %v9381 = vmul.f32 %v9125, 0.010009766
        %v9382 = vmul.f32 %v9126, 0.010009766
        %v9383 = vmul.f32 %v9127, 0.010009766
        %v9384 = vmul.f32 %v9128, 0.010009766
        %v9385 = vmul.f32 %v9129, 0.010009766
        %v9386 = vmul.f32 %v9130, 0.010009766
        %v9387 = vmul.f32 %v9131, 0.010009766
        %v9388 = vmul.f32 %v9132, 0.010009766
        %v9389 = vmul.f32 %v9133, 0.010009766
        %v9390 = vmul.f32 %v9134, 0.010009766
        %v9391 = vmul.f32 %v9135, 0.010009766
        %v9392 = vmul.f32 %v9136, 0.010009766
        %v9393 = vmul.f32 %v9137, 0.010009766
        %v9394 = vmul.f32 %v9138, 0.010009766
        %v9395 = vpack.c.bf16 %v9268, %v9267
        %v9396 = vpack.c.bf16 %v9270, %v9269
        %v9397 = vpack.c.bf16 %v9272, %v9271
        %v9398 = vpack.c.bf16 %v9274, %v9273
        %v9399 = vpack.c.bf16 %v9276, %v9275
        %v9400 = vpack.c.bf16 %v9278, %v9277
        %v9401 = vpack.c.bf16 %v9280, %v9279
        %v9402 = vpack.c.bf16 %v9282, %v9281
        %v9403 = vpack.c.bf16 %v9284, %v9283
        %v9404 = vpack.c.bf16 %v9286, %v9285
        %v9405 = vpack.c.bf16 %v9288, %v9287
        %v9406 = vpack.c.bf16 %v9290, %v9289
        %v9407 = vpack.c.bf16 %v9292, %v9291
        %v9408 = vpack.c.bf16 %v9294, %v9293
        %v9409 = vpack.c.bf16 %v9296, %v9295
        %v9410 = vpack.c.bf16 %v9298, %v9297
        %v9411 = vpack.c.bf16 %v9300, %v9299
        %v9412 = vpack.c.bf16 %v9302, %v9301
        %v9413 = vpack.c.bf16 %v9304, %v9303
        %v9414 = vpack.c.bf16 %v9306, %v9305
        %v9415 = vpack.c.bf16 %v9308, %v9307
        %v9416 = vpack.c.bf16 %v9310, %v9309
        %v9417 = vpack.c.bf16 %v9312, %v9311
        %v9418 = vpack.c.bf16 %v9314, %v9313
        %v9419 = vpack.c.bf16 %v9316, %v9315
        %v9420 = vpack.c.bf16 %v9318, %v9317
        %v9421 = vpack.c.bf16 %v9320, %v9319
        %v9422 = vpack.c.bf16 %v9322, %v9321
        %v9423 = vpack.c.bf16 %v9324, %v9323
        %v9424 = vpack.c.bf16 %v9326, %v9325
        %v9425 = vpack.c.bf16 %v9328, %v9327
        %v9426 = vpack.c.bf16 %v9330, %v9329
        %v9427 = vpack.c.bf16 %v9332, %v9331
        %v9428 = vpack.c.bf16 %v9334, %v9333
        %v9429 = vpack.c.bf16 %v9336, %v9335
        %v9430 = vpack.c.bf16 %v9338, %v9337
        %v9431 = vpack.c.bf16 %v9340, %v9339
        %v9432 = vpack.c.bf16 %v9342, %v9341
        %v9433 = vpack.c.bf16 %v9344, %v9343
        %v9434 = vpack.c.bf16 %v9346, %v9345
        %v9435 = vpack.c.bf16 %v9348, %v9347
        %v9436 = vpack.c.bf16 %v9350, %v9349
        %v9437 = vpack.c.bf16 %v9352, %v9351
        %v9438 = vpack.c.bf16 %v9354, %v9353
        %v9439 = vpack.c.bf16 %v9356, %v9355
        %v9440 = vpack.c.bf16 %v9358, %v9357
        %v9441 = vpack.c.bf16 %v9360, %v9359
        %v9442 = vpack.c.bf16 %v9362, %v9361
        %v9443 = vpack.c.bf16 %v9364, %v9363
        %v9444 = vpack.c.bf16 %v9366, %v9365
        %v9445 = vpack.c.bf16 %v9368, %v9367
        %v9446 = vpack.c.bf16 %v9370, %v9369
        %v9447 = vpack.c.bf16 %v9372, %v9371
        %v9448 = vpack.c.bf16 %v9374, %v9373
        %v9449 = vpack.c.bf16 %v9376, %v9375
        %v9450 = vpack.c.bf16 %v9378, %v9377
        %v9451 = vpack.c.bf16 %v9380, %v9379
        %v9452 = vpack.c.bf16 %v9382, %v9381
        %v9453 = vpack.c.bf16 %v9384, %v9383
        %v9454 = vpack.c.bf16 %v9386, %v9385
        %v9455 = vpack.c.bf16 %v9388, %v9387
        %v9456 = vpack.c.bf16 %v9390, %v9389
        %v9457 = vpack.c.bf16 %v9392, %v9391
        %v9458 = vpack.c.bf16 %v9394, %v9393
        %vm9459 = vmpackc.low %vm9140, %vm9139
        %vm9460 = vmpackc.low %vm9142, %vm9141
        %vm9461 = vmpackc.low %vm9144, %vm9143
        %vm9462 = vmpackc.low %vm9146, %vm9145
        %vm9463 = vmpackc.low %vm9148, %vm9147
        %vm9464 = vmpackc.low %vm9150, %vm9149
        %vm9465 = vmpackc.low %vm9152, %vm9151
        %vm9466 = vmpackc.low %vm9154, %vm9153
        %vm9467 = vmpackc.low %vm9156, %vm9155
        %vm9468 = vmpackc.low %vm9158, %vm9157
        %vm9469 = vmpackc.low %vm9160, %vm9159
        %vm9470 = vmpackc.low %vm9162, %vm9161
        %vm9471 = vmpackc.low %vm9164, %vm9163
        %vm9472 = vmpackc.low %vm9166, %vm9165
        %vm9473 = vmpackc.low %vm9168, %vm9167
        %vm9474 = vmpackc.low %vm9170, %vm9169
        %vm9475 = vmpackc.low %vm9172, %vm9171
        %vm9476 = vmpackc.low %vm9174, %vm9173
        %vm9477 = vmpackc.low %vm9176, %vm9175
        %vm9478 = vmpackc.low %vm9178, %vm9177
        %vm9479 = vmpackc.low %vm9180, %vm9179
        %vm9480 = vmpackc.low %vm9182, %vm9181
        %vm9481 = vmpackc.low %vm9184, %vm9183
        %vm9482 = vmpackc.low %vm9186, %vm9185
        %vm9483 = vmpackc.low %vm9188, %vm9187
        %vm9484 = vmpackc.low %vm9190, %vm9189
        %vm9485 = vmpackc.low %vm9192, %vm9191
        %vm9486 = vmpackc.low %vm9194, %vm9193
        %vm9487 = vmpackc.low %vm9196, %vm9195
        %vm9488 = vmpackc.low %vm9198, %vm9197
        %vm9489 = vmpackc.low %vm9200, %vm9199
        %vm9490 = vmpackc.low %vm9202, %vm9201
        %vm9491 = vmpackc.low %vm9204, %vm9203
        %vm9492 = vmpackc.low %vm9206, %vm9205
        %vm9493 = vmpackc.low %vm9208, %vm9207
        %vm9494 = vmpackc.low %vm9210, %vm9209
        %vm9495 = vmpackc.low %vm9212, %vm9211
        %vm9496 = vmpackc.low %vm9214, %vm9213
        %vm9497 = vmpackc.low %vm9216, %vm9215
        %vm9498 = vmpackc.low %vm9218, %vm9217
        %vm9499 = vmpackc.low %vm9220, %vm9219
        %vm9500 = vmpackc.low %vm9222, %vm9221
        %vm9501 = vmpackc.low %vm9224, %vm9223
        %vm9502 = vmpackc.low %vm9226, %vm9225
        %vm9503 = vmpackc.low %vm9228, %vm9227
        %vm9504 = vmpackc.low %vm9230, %vm9229
        %vm9505 = vmpackc.low %vm9232, %vm9231
        %vm9506 = vmpackc.low %vm9234, %vm9233
        %vm9507 = vmpackc.low %vm9236, %vm9235
        %vm9508 = vmpackc.low %vm9238, %vm9237
        %vm9509 = vmpackc.low %vm9240, %vm9239
        %vm9510 = vmpackc.low %vm9242, %vm9241
        %vm9511 = vmpackc.low %vm9244, %vm9243
        %vm9512 = vmpackc.low %vm9246, %vm9245
        %vm9513 = vmpackc.low %vm9248, %vm9247
        %vm9514 = vmpackc.low %vm9250, %vm9249
        %vm9515 = vmpackc.low %vm9252, %vm9251
        %vm9516 = vmpackc.low %vm9254, %vm9253
        %vm9517 = vmpackc.low %vm9256, %vm9255
        %vm9518 = vmpackc.low %vm9258, %vm9257
        %vm9519 = vmpackc.low %vm9260, %vm9259
        %vm9520 = vmpackc.low %vm9262, %vm9261
        %vm9521 = vmpackc.low %vm9264, %vm9263
        %vm9522 = vmpackc.low %vm9266, %vm9265
        %v9523 = vsel %vm9459, %v8947, %v9395
        %v9524 = vsel %vm9460, %v8948, %v9396
        %v9525 = vsel %vm9461, %v8949, %v9397
        %v9526 = vsel %vm9462, %v8950, %v9398
        %v9527 = vsel %vm9463, %v8951, %v9399
        %v9528 = vsel %vm9464, %v8952, %v9400
        %v9529 = vsel %vm9465, %v8953, %v9401
        %v9530 = vsel %vm9466, %v8954, %v9402
        %v9531 = vsel %vm9467, %v8955, %v9403
        %v9532 = vsel %vm9468, %v8956, %v9404
        %v9533 = vsel %vm9469, %v8957, %v9405
        %v9534 = vsel %vm9470, %v8958, %v9406
        %v9535 = vsel %vm9471, %v8959, %v9407
        %v9536 = vsel %vm9472, %v8960, %v9408
        %v9537 = vsel %vm9473, %v8961, %v9409
        %v9538 = vsel %vm9474, %v8962, %v9410
        %v9539 = vsel %vm9475, %v8963, %v9411
        %v9540 = vsel %vm9476, %v8964, %v9412
        %v9541 = vsel %vm9477, %v8965, %v9413
        %v9542 = vsel %vm9478, %v8966, %v9414
        %v9543 = vsel %vm9479, %v8967, %v9415
        %v9544 = vsel %vm9480, %v8968, %v9416
        %v9545 = vsel %vm9481, %v8969, %v9417
        %v9546 = vsel %vm9482, %v8970, %v9418
        %v9547 = vsel %vm9483, %v8971, %v9419
        %v9548 = vsel %vm9484, %v8972, %v9420
        %v9549 = vsel %vm9485, %v8973, %v9421
        %v9550 = vsel %vm9486, %v8974, %v9422
        %v9551 = vsel %vm9487, %v8975, %v9423
        %v9552 = vsel %vm9488, %v8976, %v9424
        %v9553 = vsel %vm9489, %v8977, %v9425
        %v9554 = vsel %vm9490, %v8978, %v9426
        %v9555 = vsel %vm9491, %v8979, %v9427
        %v9556 = vsel %vm9492, %v8980, %v9428
        %v9557 = vsel %vm9493, %v8981, %v9429
        %v9558 = vsel %vm9494, %v8982, %v9430
        %v9559 = vsel %vm9495, %v8983, %v9431
        %v9560 = vsel %vm9496, %v8984, %v9432
        %v9561 = vsel %vm9497, %v8985, %v9433
        %v9562 = vsel %vm9498, %v8986, %v9434
        %v9563 = vsel %vm9499, %v8987, %v9435
        %v9564 = vsel %vm9500, %v8988, %v9436
        %v9565 = vsel %vm9501, %v8989, %v9437
        %v9566 = vsel %vm9502, %v8990, %v9438
        %v9567 = vsel %vm9503, %v8991, %v9439
        %v9568 = vsel %vm9504, %v8992, %v9440
        %v9569 = vsel %vm9505, %v8993, %v9441
        %v9570 = vsel %vm9506, %v8994, %v9442
        %v9571 = vsel %vm9507, %v8995, %v9443
        %v9572 = vsel %vm9508, %v8996, %v9444
        %v9573 = vsel %vm9509, %v8997, %v9445
        %v9574 = vsel %vm9510, %v8998, %v9446
        %v9575 = vsel %vm9511, %v8999, %v9447
        %v9576 = vsel %vm9512, %v9000, %v9448
        %v9577 = vsel %vm9513, %v9001, %v9449
        %v9578 = vsel %vm9514, %v9002, %v9450
        %v9579 = vsel %vm9515, %v9003, %v9451
        %v9580 = vsel %vm9516, %v9004, %v9452
        %v9581 = vsel %vm9517, %v9005, %v9453
        %v9582 = vsel %vm9518, %v9006, %v9454
        %v9583 = vsel %vm9519, %v9007, %v9455
        %v9584 = vsel %vm9520, %v9008, %v9456
        %v9585 = vsel %vm9521, %v9009, %v9457
        %v9586 = vsel %vm9522, %v9010, %v9458
        %v9587 = vld [vmem:[%s5] sm:$0xf]
        %v9588 = vld [vmem:[%s5 + $0x4] sm:$0xf]
        %v9589 = vld [vmem:[%s5 + $0x8] sm:$0xf]
        %v9590 = vld [vmem:[%s5 + $0xc] sm:$0xf]
        %v9591 = vld [vmem:[%s5 + $0x10] sm:$0xf]
        %v9592 = vld [vmem:[%s5 + $0x14] sm:$0xf]
        %v9593 = vld [vmem:[%s5 + $0x18] sm:$0xf]
        %v9594 = vld [vmem:[%s5 + $0x1c] sm:$0xf]
        %v9595 = vld [vmem:[%s5 + $0x20] sm:$0xf]
        %v9596 = vld [vmem:[%s5 + $0x24] sm:$0xf]
        %v9597 = vld [vmem:[%s5 + $0x28] sm:$0xf]
        %v9598 = vld [vmem:[%s5 + $0x2c] sm:$0xf]
        %v9599 = vld [vmem:[%s5 + $0x30] sm:$0xf]
        %v9600 = vld [vmem:[%s5 + $0x34] sm:$0xf]
        %v9601 = vld [vmem:[%s5 + $0x38] sm:$0xf]
        %v9602 = vld [vmem:[%s5 + $0x3c] sm:$0xf]
        %v9603 = vld [vmem:[%s5 + $0x40] sm:$0xf]
        %v9604 = vld [vmem:[%s5 + $0x44] sm:$0xf]
        %v9605 = vld [vmem:[%s5 + $0x48] sm:$0xf]
        %v9606 = vld [vmem:[%s5 + $0x4c] sm:$0xf]
        %v9607 = vld [vmem:[%s5 + $0x50] sm:$0xf]
        %v9608 = vld [vmem:[%s5 + $0x54] sm:$0xf]
        %v9609 = vld [vmem:[%s5 + $0x58] sm:$0xf]
        %v9610 = vld [vmem:[%s5 + $0x5c] sm:$0xf]
        %v9611 = vld [vmem:[%s5 + $0x60] sm:$0xf]
        %v9612 = vld [vmem:[%s5 + $0x64] sm:$0xf]
        %v9613 = vld [vmem:[%s5 + $0x68] sm:$0xf]
        %v9614 = vld [vmem:[%s5 + $0x6c] sm:$0xf]
        %v9615 = vld [vmem:[%s5 + $0x70] sm:$0xf]
        %v9616 = vld [vmem:[%s5 + $0x74] sm:$0xf]
        %v9617 = vld [vmem:[%s5 + $0x78] sm:$0xf]
        %v9618 = vld [vmem:[%s5 + $0x7c] sm:$0xf]
        %v9619 = vld [vmem:[%s5 + $0x80] sm:$0xf]
        %v9620 = vld [vmem:[%s5 + $0x84] sm:$0xf]
        %v9621 = vld [vmem:[%s5 + $0x88] sm:$0xf]
        %v9622 = vld [vmem:[%s5 + $0x8c] sm:$0xf]
        %v9623 = vld [vmem:[%s5 + $0x90] sm:$0xf]
        %v9624 = vld [vmem:[%s5 + $0x94] sm:$0xf]
        %v9625 = vld [vmem:[%s5 + $0x98] sm:$0xf]
        %v9626 = vld [vmem:[%s5 + $0x9c] sm:$0xf]
        %v9627 = vld [vmem:[%s5 + $0xa0] sm:$0xf]
        %v9628 = vld [vmem:[%s5 + $0xa4] sm:$0xf]
        %v9629 = vld [vmem:[%s5 + $0xa8] sm:$0xf]
        %v9630 = vld [vmem:[%s5 + $0xac] sm:$0xf]
        %v9631 = vld [vmem:[%s5 + $0xb0] sm:$0xf]
        %v9632 = vld [vmem:[%s5 + $0xb4] sm:$0xf]
        %v9633 = vld [vmem:[%s5 + $0xb8] sm:$0xf]
        %v9634 = vld [vmem:[%s5 + $0xbc] sm:$0xf]
        %v9635 = vld [vmem:[%s5 + $0xc0] sm:$0xf]
        %v9636 = vld [vmem:[%s5 + $0xc4] sm:$0xf]
        %v9637 = vld [vmem:[%s5 + $0xc8] sm:$0xf]
        %v9638 = vld [vmem:[%s5 + $0xcc] sm:$0xf]
        %v9639 = vld [vmem:[%s5 + $0xd0] sm:$0xf]
        %v9640 = vld [vmem:[%s5 + $0xd4] sm:$0xf]
        %v9641 = vld [vmem:[%s5 + $0xd8] sm:$0xf]
        %v9642 = vld [vmem:[%s5 + $0xdc] sm:$0xf]
        %v9643 = vld [vmem:[%s5 + $0xe0] sm:$0xf]
        %v9644 = vld [vmem:[%s5 + $0xe4] sm:$0xf]
        %v9645 = vld [vmem:[%s5 + $0xe8] sm:$0xf]
        %v9646 = vld [vmem:[%s5 + $0xec] sm:$0xf]
        %v9647 = vld [vmem:[%s5 + $0xf0] sm:$0xf]
        %v9648 = vld [vmem:[%s5 + $0xf4] sm:$0xf]
        %v9649 = vld [vmem:[%s5 + $0xf8] sm:$0xf]
        %v9650 = vld [vmem:[%s5 + $0xfc] sm:$0xf]
        %v9651 = vld [vmem:[%s5 + $0x100] sm:$0xf]
        %v9652 = vld [vmem:[%s5 + $0x104] sm:$0xf]
        %v9653 = vld [vmem:[%s5 + $0x108] sm:$0xf]
        %v9654 = vld [vmem:[%s5 + $0x10c] sm:$0xf]
        %v9655 = vld [vmem:[%s5 + $0x110] sm:$0xf]
        %v9656 = vld [vmem:[%s5 + $0x114] sm:$0xf]
        %v9657 = vld [vmem:[%s5 + $0x118] sm:$0xf]
        %v9658 = vld [vmem:[%s5 + $0x11c] sm:$0xf]
        %v9659 = vld [vmem:[%s5 + $0x120] sm:$0xf]
        %v9660 = vld [vmem:[%s5 + $0x124] sm:$0xf]
        %v9661 = vld [vmem:[%s5 + $0x128] sm:$0xf]
        %v9662 = vld [vmem:[%s5 + $0x12c] sm:$0xf]
        %v9663 = vld [vmem:[%s5 + $0x130] sm:$0xf]
        %v9664 = vld [vmem:[%s5 + $0x134] sm:$0xf]
        %v9665 = vld [vmem:[%s5 + $0x138] sm:$0xf]
        %v9666 = vld [vmem:[%s5 + $0x13c] sm:$0xf]
        %v9667 = vld [vmem:[%s5 + $0x140] sm:$0xf]
        %v9668 = vld [vmem:[%s5 + $0x144] sm:$0xf]
        %v9669 = vld [vmem:[%s5 + $0x148] sm:$0xf]
        %v9670 = vld [vmem:[%s5 + $0x14c] sm:$0xf]
        %v9671 = vld [vmem:[%s5 + $0x150] sm:$0xf]
        %v9672 = vld [vmem:[%s5 + $0x154] sm:$0xf]
        %v9673 = vld [vmem:[%s5 + $0x158] sm:$0xf]
        %v9674 = vld [vmem:[%s5 + $0x15c] sm:$0xf]
        %v9675 = vld [vmem:[%s5 + $0x160] sm:$0xf]
        %v9676 = vld [vmem:[%s5 + $0x164] sm:$0xf]
        %v9677 = vld [vmem:[%s5 + $0x168] sm:$0xf]
        %v9678 = vld [vmem:[%s5 + $0x16c] sm:$0xf]
        %v9679 = vld [vmem:[%s5 + $0x170] sm:$0xf]
        %v9680 = vld [vmem:[%s5 + $0x174] sm:$0xf]
        %v9681 = vld [vmem:[%s5 + $0x178] sm:$0xf]
        %v9682 = vld [vmem:[%s5 + $0x17c] sm:$0xf]
        %v9683 = vld [vmem:[%s5 + $0x180] sm:$0xf]
        %v9684 = vld [vmem:[%s5 + $0x184] sm:$0xf]
        %v9685 = vld [vmem:[%s5 + $0x188] sm:$0xf]
        %v9686 = vld [vmem:[%s5 + $0x18c] sm:$0xf]
        %v9687 = vld [vmem:[%s5 + $0x190] sm:$0xf]
        %v9688 = vld [vmem:[%s5 + $0x194] sm:$0xf]
        %v9689 = vld [vmem:[%s5 + $0x198] sm:$0xf]
        %v9690 = vld [vmem:[%s5 + $0x19c] sm:$0xf]
        %v9691 = vld [vmem:[%s5 + $0x1a0] sm:$0xf]
        %v9692 = vld [vmem:[%s5 + $0x1a4] sm:$0xf]
        %v9693 = vld [vmem:[%s5 + $0x1a8] sm:$0xf]
        %v9694 = vld [vmem:[%s5 + $0x1ac] sm:$0xf]
        %v9695 = vld [vmem:[%s5 + $0x1b0] sm:$0xf]
        %v9696 = vld [vmem:[%s5 + $0x1b4] sm:$0xf]
        %v9697 = vld [vmem:[%s5 + $0x1b8] sm:$0xf]
        %v9698 = vld [vmem:[%s5 + $0x1bc] sm:$0xf]
        %v9699 = vld [vmem:[%s5 + $0x1c0] sm:$0xf]
        %v9700 = vld [vmem:[%s5 + $0x1c4] sm:$0xf]
        %v9701 = vld [vmem:[%s5 + $0x1c8] sm:$0xf]
        %v9702 = vld [vmem:[%s5 + $0x1cc] sm:$0xf]
        %v9703 = vld [vmem:[%s5 + $0x1d0] sm:$0xf]
        %v9704 = vld [vmem:[%s5 + $0x1d4] sm:$0xf]
        %v9705 = vld [vmem:[%s5 + $0x1d8] sm:$0xf]
        %v9706 = vld [vmem:[%s5 + $0x1dc] sm:$0xf]
        %v9707 = vld [vmem:[%s5 + $0x1e0] sm:$0xf]
        %v9708 = vld [vmem:[%s5 + $0x1e4] sm:$0xf]
        %v9709 = vld [vmem:[%s5 + $0x1e8] sm:$0xf]
        %v9710 = vld [vmem:[%s5 + $0x1ec] sm:$0xf]
        %v9711 = vld [vmem:[%s5 + $0x1f0] sm:$0xf]
        %v9712 = vld [vmem:[%s5 + $0x1f4] sm:$0xf]
        %v9713 = vld [vmem:[%s5 + $0x1f8] sm:$0xf]
        %v9714 = vld [vmem:[%s5 + $0x1fc] sm:$0xf]
        %v9715 = vld [vmem:[#allocation7] sm:$0x1]
        %v9717 = vperm.slane %v9715, 0
        %v9783 = vunpack.c.l.b16 %v9523
        %v9784 = vunpack.c.h.b16 %v9523
        %v9785 = vunpack.c.l.b16 %v9524
        %v9786 = vunpack.c.h.b16 %v9524
        %v9787 = vunpack.c.l.b16 %v9525
        %v9788 = vunpack.c.h.b16 %v9525
        %v9789 = vunpack.c.l.b16 %v9526
        %v9790 = vunpack.c.h.b16 %v9526
        %v9791 = vunpack.c.l.b16 %v9527
        %v9792 = vunpack.c.h.b16 %v9527
        %v9793 = vunpack.c.l.b16 %v9528
        %v9794 = vunpack.c.h.b16 %v9528
        %v9795 = vunpack.c.l.b16 %v9529
        %v9796 = vunpack.c.h.b16 %v9529
        %v9797 = vunpack.c.l.b16 %v9530
        %v9798 = vunpack.c.h.b16 %v9530
        %v9799 = vunpack.c.l.b16 %v9531
        %v9800 = vunpack.c.h.b16 %v9531
        %v9801 = vunpack.c.l.b16 %v9532
        %v9802 = vunpack.c.h.b16 %v9532
        %v9803 = vunpack.c.l.b16 %v9533
        %v9804 = vunpack.c.h.b16 %v9533
        %v9805 = vunpack.c.l.b16 %v9534
        %v9806 = vunpack.c.h.b16 %v9534
        %v9807 = vunpack.c.l.b16 %v9535
        %v9808 = vunpack.c.h.b16 %v9535
        %v9809 = vunpack.c.l.b16 %v9536
        %v9810 = vunpack.c.h.b16 %v9536
        %v9811 = vunpack.c.l.b16 %v9537
        %v9812 = vunpack.c.h.b16 %v9537
        %v9813 = vunpack.c.l.b16 %v9538
        %v9814 = vunpack.c.h.b16 %v9538
        %v9815 = vunpack.c.l.b16 %v9539
        %v9816 = vunpack.c.h.b16 %v9539
        %v9817 = vunpack.c.l.b16 %v9540
        %v9818 = vunpack.c.h.b16 %v9540
        %v9819 = vunpack.c.l.b16 %v9541
        %v9820 = vunpack.c.h.b16 %v9541
        %v9821 = vunpack.c.l.b16 %v9542
        %v9822 = vunpack.c.h.b16 %v9542
        %v9823 = vunpack.c.l.b16 %v9543
        %v9824 = vunpack.c.h.b16 %v9543
        %v9825 = vunpack.c.l.b16 %v9544
        %v9826 = vunpack.c.h.b16 %v9544
        %v9827 = vunpack.c.l.b16 %v9545
        %v9828 = vunpack.c.h.b16 %v9545
        %v9829 = vunpack.c.l.b16 %v9546
        %v9830 = vunpack.c.h.b16 %v9546
        %v9831 = vunpack.c.l.b16 %v9547
        %v9832 = vunpack.c.h.b16 %v9547
        %v9833 = vunpack.c.l.b16 %v9548
        %v9834 = vunpack.c.h.b16 %v9548
        %v9835 = vunpack.c.l.b16 %v9549
        %v9836 = vunpack.c.h.b16 %v9549
        %v9837 = vunpack.c.l.b16 %v9550
        %v9838 = vunpack.c.h.b16 %v9550
        %v9839 = vunpack.c.l.b16 %v9551
        %v9840 = vunpack.c.h.b16 %v9551
        %v9841 = vunpack.c.l.b16 %v9552
        %v9842 = vunpack.c.h.b16 %v9552
        %v9843 = vunpack.c.l.b16 %v9553
        %v9844 = vunpack.c.h.b16 %v9553
        %v9845 = vunpack.c.l.b16 %v9554
        %v9846 = vunpack.c.h.b16 %v9554
        %v9847 = vunpack.c.l.b16 %v9555
        %v9848 = vunpack.c.h.b16 %v9555
        %v9849 = vunpack.c.l.b16 %v9556
        %v9850 = vunpack.c.h.b16 %v9556
        %v9851 = vunpack.c.l.b16 %v9557
        %v9852 = vunpack.c.h.b16 %v9557
        %v9853 = vunpack.c.l.b16 %v9558
        %v9854 = vunpack.c.h.b16 %v9558
        %v9855 = vunpack.c.l.b16 %v9559
        %v9856 = vunpack.c.h.b16 %v9559
        %v9857 = vunpack.c.l.b16 %v9560
        %v9858 = vunpack.c.h.b16 %v9560
        %v9859 = vunpack.c.l.b16 %v9561
        %v9860 = vunpack.c.h.b16 %v9561
        %v9861 = vunpack.c.l.b16 %v9562
        %v9862 = vunpack.c.h.b16 %v9562
        %v9863 = vunpack.c.l.b16 %v9563
        %v9864 = vunpack.c.h.b16 %v9563
        %v9865 = vunpack.c.l.b16 %v9564
        %v9866 = vunpack.c.h.b16 %v9564
        %v9867 = vunpack.c.l.b16 %v9565
        %v9868 = vunpack.c.h.b16 %v9565
        %v9869 = vunpack.c.l.b16 %v9566
        %v9870 = vunpack.c.h.b16 %v9566
        %v9871 = vunpack.c.l.b16 %v9567
        %v9872 = vunpack.c.h.b16 %v9567
        %v9873 = vunpack.c.l.b16 %v9568
        %v9874 = vunpack.c.h.b16 %v9568
        %v9875 = vunpack.c.l.b16 %v9569
        %v9876 = vunpack.c.h.b16 %v9569
        %v9877 = vunpack.c.l.b16 %v9570
        %v9878 = vunpack.c.h.b16 %v9570
        %v9879 = vunpack.c.l.b16 %v9571
        %v9880 = vunpack.c.h.b16 %v9571
        %v9881 = vunpack.c.l.b16 %v9572
        %v9882 = vunpack.c.h.b16 %v9572
        %v9883 = vunpack.c.l.b16 %v9573
        %v9884 = vunpack.c.h.b16 %v9573
        %v9885 = vunpack.c.l.b16 %v9574
        %v9886 = vunpack.c.h.b16 %v9574
        %v9887 = vunpack.c.l.b16 %v9575
        %v9888 = vunpack.c.h.b16 %v9575
        %v9889 = vunpack.c.l.b16 %v9576
        %v9890 = vunpack.c.h.b16 %v9576
        %v9891 = vunpack.c.l.b16 %v9577
        %v9892 = vunpack.c.h.b16 %v9577
        %v9893 = vunpack.c.l.b16 %v9578
        %v9894 = vunpack.c.h.b16 %v9578
        %v9895 = vunpack.c.l.b16 %v9579
        %v9896 = vunpack.c.h.b16 %v9579
        %v9897 = vunpack.c.l.b16 %v9580
        %v9898 = vunpack.c.h.b16 %v9580
        %v9899 = vunpack.c.l.b16 %v9581
        %v9900 = vunpack.c.h.b16 %v9581
        %v9901 = vunpack.c.l.b16 %v9582
        %v9902 = vunpack.c.h.b16 %v9582
        %v9903 = vunpack.c.l.b16 %v9583
        %v9904 = vunpack.c.h.b16 %v9583
        %v9905 = vunpack.c.l.b16 %v9584
        %v9906 = vunpack.c.h.b16 %v9584
        %v9907 = vunpack.c.l.b16 %v9585
        %v9908 = vunpack.c.h.b16 %v9585
        %v9909 = vunpack.c.l.b16 %v9586
        %v9910 = vunpack.c.h.b16 %v9586
        %v9911 = vpack.c.b16 %v9791, %v9783
        %v9912 = vpack.c.b16 %v9792, %v9784
        %v9913 = vpack.c.b16 %v9793, %v9785
        %v9914 = vpack.c.b16 %v9794, %v9786
        %v9915 = vpack.c.b16 %v9795, %v9787
        %v9916 = vpack.c.b16 %v9796, %v9788
        %v9917 = vpack.c.b16 %v9797, %v9789
        %v9918 = vpack.c.b16 %v9798, %v9790
        %v9919 = vpack.c.b16 %v9807, %v9799
        %v9920 = vpack.c.b16 %v9808, %v9800
        %v9921 = vpack.c.b16 %v9809, %v9801
        %v9922 = vpack.c.b16 %v9810, %v9802
        %v9923 = vpack.c.b16 %v9811, %v9803
        %v9924 = vpack.c.b16 %v9812, %v9804
        %v9925 = vpack.c.b16 %v9813, %v9805
        %v9926 = vpack.c.b16 %v9814, %v9806
        %v9927 = vpack.c.b16 %v9823, %v9815
        %v9928 = vpack.c.b16 %v9824, %v9816
        %v9929 = vpack.c.b16 %v9825, %v9817
        %v9930 = vpack.c.b16 %v9826, %v9818
        %v9931 = vpack.c.b16 %v9827, %v9819
        %v9932 = vpack.c.b16 %v9828, %v9820
        %v9933 = vpack.c.b16 %v9829, %v9821
        %v9934 = vpack.c.b16 %v9830, %v9822
        %v9935 = vpack.c.b16 %v9839, %v9831
        %v9936 = vpack.c.b16 %v9840, %v9832
        %v9937 = vpack.c.b16 %v9841, %v9833
        %v9938 = vpack.c.b16 %v9842, %v9834
        %v9939 = vpack.c.b16 %v9843, %v9835
        %v9940 = vpack.c.b16 %v9844, %v9836
        %v9941 = vpack.c.b16 %v9845, %v9837
        %v9942 = vpack.c.b16 %v9846, %v9838
        %v9943 = vpack.c.b16 %v9855, %v9847
        %v9944 = vpack.c.b16 %v9856, %v9848
        %v9945 = vpack.c.b16 %v9857, %v9849
        %v9946 = vpack.c.b16 %v9858, %v9850
        %v9947 = vpack.c.b16 %v9859, %v9851
        %v9948 = vpack.c.b16 %v9860, %v9852
        %v9949 = vpack.c.b16 %v9861, %v9853
        %v9950 = vpack.c.b16 %v9862, %v9854
        %v9951 = vpack.c.b16 %v9871, %v9863
        %v9952 = vpack.c.b16 %v9872, %v9864
        %v9953 = vpack.c.b16 %v9873, %v9865
        %v9954 = vpack.c.b16 %v9874, %v9866
        %v9955 = vpack.c.b16 %v9875, %v9867
        %v9956 = vpack.c.b16 %v9876, %v9868
        %v9957 = vpack.c.b16 %v9877, %v9869
        %v9958 = vpack.c.b16 %v9878, %v9870
        %v9959 = vpack.c.b16 %v9887, %v9879
        %v9960 = vpack.c.b16 %v9888, %v9880
        %v9961 = vpack.c.b16 %v9889, %v9881
        %v9962 = vpack.c.b16 %v9890, %v9882
        %v9963 = vpack.c.b16 %v9891, %v9883
        %v9964 = vpack.c.b16 %v9892, %v9884
        %v9965 = vpack.c.b16 %v9893, %v9885
        %v9966 = vpack.c.b16 %v9894, %v9886
        %v9967 = vpack.c.b16 %v9903, %v9895
        %v9968 = vpack.c.b16 %v9904, %v9896
        %v9969 = vpack.c.b16 %v9905, %v9897
        %v9970 = vpack.c.b16 %v9906, %v9898
        %v9971 = vpack.c.b16 %v9907, %v9899
        %v9972 = vpack.c.b16 %v9908, %v9900
        %v9973 = vpack.c.b16 %v9909, %v9901
        %v9974 = vpack.c.b16 %v9910, %v9902
        %v10167 = vunpack.c.l.b16 %v9587
        %v10168 = vunpack.c.l.b16 %v9588
        %v10169 = vunpack.c.l.b16 %v9589
        %v10170 = vunpack.c.l.b16 %v9590
        %v10171 = vunpack.c.l.b16 %v9591
        %v10172 = vunpack.c.l.b16 %v9592
        %v10173 = vunpack.c.l.b16 %v9593
        %v10174 = vunpack.c.l.b16 %v9594
        %v10175 = vunpack.c.l.b16 %v9595
        %v10176 = vunpack.c.l.b16 %v9596
        %v10177 = vunpack.c.l.b16 %v9597
        %v10178 = vunpack.c.l.b16 %v9598
        %v10179 = vunpack.c.l.b16 %v9599
        %v10180 = vunpack.c.l.b16 %v9600
        %v10181 = vunpack.c.l.b16 %v9601
        %v10182 = vunpack.c.l.b16 %v9602
        %v10183 = vunpack.c.l.b16 %v9603
        %v10184 = vunpack.c.l.b16 %v9604
        %v10185 = vunpack.c.l.b16 %v9605
        %v10186 = vunpack.c.l.b16 %v9606
        %v10187 = vunpack.c.l.b16 %v9607
        %v10188 = vunpack.c.l.b16 %v9608
        %v10189 = vunpack.c.l.b16 %v9609
        %v10190 = vunpack.c.l.b16 %v9610
        %v10191 = vunpack.c.l.b16 %v9611
        %v10192 = vunpack.c.l.b16 %v9612
        %v10193 = vunpack.c.l.b16 %v9613
        %v10194 = vunpack.c.l.b16 %v9614
        %v10195 = vunpack.c.l.b16 %v9615
        %v10196 = vunpack.c.l.b16 %v9616
        %v10197 = vunpack.c.l.b16 %v9617
        %v10198 = vunpack.c.l.b16 %v9618
        %v10199 = vunpack.c.l.b16 %v9619
        %v10200 = vunpack.c.l.b16 %v9620
        %v10201 = vunpack.c.l.b16 %v9621
        %v10202 = vunpack.c.l.b16 %v9622
        %v10203 = vunpack.c.l.b16 %v9623
        %v10204 = vunpack.c.l.b16 %v9624
        %v10205 = vunpack.c.l.b16 %v9625
        %v10206 = vunpack.c.l.b16 %v9626
        %v10207 = vunpack.c.l.b16 %v9627
        %v10208 = vunpack.c.l.b16 %v9628
        %v10209 = vunpack.c.l.b16 %v9629
        %v10210 = vunpack.c.l.b16 %v9630
        %v10211 = vunpack.c.l.b16 %v9631
        %v10212 = vunpack.c.l.b16 %v9632
        %v10213 = vunpack.c.l.b16 %v9633
        %v10214 = vunpack.c.l.b16 %v9634
        %v10215 = vunpack.c.l.b16 %v9635
        %v10216 = vunpack.c.l.b16 %v9636
        %v10217 = vunpack.c.l.b16 %v9637
        %v10218 = vunpack.c.l.b16 %v9638
        %v10219 = vunpack.c.l.b16 %v9639
        %v10220 = vunpack.c.l.b16 %v9640
        %v10221 = vunpack.c.l.b16 %v9641
        %v10222 = vunpack.c.l.b16 %v9642
        %v10223 = vunpack.c.l.b16 %v9643
        %v10224 = vunpack.c.l.b16 %v9644
        %v10225 = vunpack.c.l.b16 %v9645
        %v10226 = vunpack.c.l.b16 %v9646
        %v10227 = vunpack.c.l.b16 %v9647
        %v10228 = vunpack.c.l.b16 %v9648
        %v10229 = vunpack.c.l.b16 %v9649
        %v10230 = vunpack.c.l.b16 %v9650
        %v10231 = vunpack.c.l.b16 %v9651
        %v10232 = vunpack.c.l.b16 %v9652
        %v10233 = vunpack.c.l.b16 %v9653
        %v10234 = vunpack.c.l.b16 %v9654
        %v10235 = vunpack.c.l.b16 %v9655
        %v10236 = vunpack.c.l.b16 %v9656
        %v10237 = vunpack.c.l.b16 %v9657
        %v10238 = vunpack.c.l.b16 %v9658
        %v10239 = vunpack.c.l.b16 %v9659
        %v10240 = vunpack.c.l.b16 %v9660
        %v10241 = vunpack.c.l.b16 %v9661
        %v10242 = vunpack.c.l.b16 %v9662
        %v10243 = vunpack.c.l.b16 %v9663
        %v10244 = vunpack.c.l.b16 %v9664
        %v10245 = vunpack.c.l.b16 %v9665
        %v10246 = vunpack.c.l.b16 %v9666
        %v10247 = vunpack.c.l.b16 %v9667
        %v10248 = vunpack.c.l.b16 %v9668
        %v10249 = vunpack.c.l.b16 %v9669
        %v10250 = vunpack.c.l.b16 %v9670
        %v10251 = vunpack.c.l.b16 %v9671
        %v10252 = vunpack.c.l.b16 %v9672
        %v10253 = vunpack.c.l.b16 %v9673
        %v10254 = vunpack.c.l.b16 %v9674
        %v10255 = vunpack.c.l.b16 %v9675
        %v10256 = vunpack.c.l.b16 %v9676
        %v10257 = vunpack.c.l.b16 %v9677
        %v10258 = vunpack.c.l.b16 %v9678
        %v10259 = vunpack.c.l.b16 %v9679
        %v10260 = vunpack.c.l.b16 %v9680
        %v10261 = vunpack.c.l.b16 %v9681
        %v10262 = vunpack.c.l.b16 %v9682
        %v10263 = vunpack.c.l.b16 %v9683
        %v10264 = vunpack.c.l.b16 %v9684
        %v10265 = vunpack.c.l.b16 %v9685
        %v10266 = vunpack.c.l.b16 %v9686
        %v10267 = vunpack.c.l.b16 %v9687
        %v10268 = vunpack.c.l.b16 %v9688
        %v10269 = vunpack.c.l.b16 %v9689
        %v10270 = vunpack.c.l.b16 %v9690
        %v10271 = vunpack.c.l.b16 %v9691
        %v10272 = vunpack.c.l.b16 %v9692
        %v10273 = vunpack.c.l.b16 %v9693
        %v10274 = vunpack.c.l.b16 %v9694
        %v10275 = vunpack.c.l.b16 %v9695
        %v10276 = vunpack.c.l.b16 %v9696
        %v10277 = vunpack.c.l.b16 %v9697
        %v10278 = vunpack.c.l.b16 %v9698
        %v10279 = vunpack.c.l.b16 %v9699
        %v10280 = vunpack.c.l.b16 %v9700
        %v10281 = vunpack.c.l.b16 %v9701
        %v10282 = vunpack.c.l.b16 %v9702
        %v10283 = vunpack.c.l.b16 %v9703
        %v10284 = vunpack.c.l.b16 %v9704
        %v10285 = vunpack.c.l.b16 %v9705
        %v10286 = vunpack.c.l.b16 %v9706
        %v10287 = vunpack.c.l.b16 %v9707
        %v10288 = vunpack.c.l.b16 %v9708
        %v10289 = vunpack.c.l.b16 %v9709
        %v10290 = vunpack.c.l.b16 %v9710
        %v10291 = vunpack.c.l.b16 %v9711
        %v10292 = vunpack.c.l.b16 %v9712
        %v10293 = vunpack.c.l.b16 %v9713
        %v10294 = vunpack.c.l.b16 %v9714
        %v10295 = vpack.c.b16 %v10168, %v10167
        %v10296 = vpack.c.b16 %v10170, %v10169
        %v10297 = vpack.c.b16 %v10172, %v10171
        %v10298 = vpack.c.b16 %v10174, %v10173
        %v10299 = vpack.c.b16 %v10176, %v10175
        %v10300 = vpack.c.b16 %v10178, %v10177
        %v10301 = vpack.c.b16 %v10180, %v10179
        %v10302 = vpack.c.b16 %v10182, %v10181
        %v10303 = vpack.c.b16 %v10184, %v10183
        %v10304 = vpack.c.b16 %v10186, %v10185
        %v10305 = vpack.c.b16 %v10188, %v10187
        %v10306 = vpack.c.b16 %v10190, %v10189
        %v10307 = vpack.c.b16 %v10192, %v10191
        %v10308 = vpack.c.b16 %v10194, %v10193
        %v10309 = vpack.c.b16 %v10196, %v10195
        %v10310 = vpack.c.b16 %v10198, %v10197
        %v10311 = vpack.c.b16 %v10200, %v10199
        %v10312 = vpack.c.b16 %v10202, %v10201
        %v10313 = vpack.c.b16 %v10204, %v10203
        %v10314 = vpack.c.b16 %v10206, %v10205
        %v10315 = vpack.c.b16 %v10208, %v10207
        %v10316 = vpack.c.b16 %v10210, %v10209
        %v10317 = vpack.c.b16 %v10212, %v10211
        %v10318 = vpack.c.b16 %v10214, %v10213
        %v10319 = vpack.c.b16 %v10216, %v10215
        %v10320 = vpack.c.b16 %v10218, %v10217
        %v10321 = vpack.c.b16 %v10220, %v10219
        %v10322 = vpack.c.b16 %v10222, %v10221
        %v10323 = vpack.c.b16 %v10224, %v10223
        %v10324 = vpack.c.b16 %v10226, %v10225
        %v10325 = vpack.c.b16 %v10228, %v10227
        %v10326 = vpack.c.b16 %v10230, %v10229
        %v10327 = vpack.c.b16 %v10232, %v10231
        %v10328 = vpack.c.b16 %v10234, %v10233
        %v10329 = vpack.c.b16 %v10236, %v10235
        %v10330 = vpack.c.b16 %v10238, %v10237
        %v10331 = vpack.c.b16 %v10240, %v10239
        %v10332 = vpack.c.b16 %v10242, %v10241
        %v10333 = vpack.c.b16 %v10244, %v10243
        %v10334 = vpack.c.b16 %v10246, %v10245
        %v10335 = vpack.c.b16 %v10248, %v10247
        %v10336 = vpack.c.b16 %v10250, %v10249
        %v10337 = vpack.c.b16 %v10252, %v10251
        %v10338 = vpack.c.b16 %v10254, %v10253
        %v10339 = vpack.c.b16 %v10256, %v10255
        %v10340 = vpack.c.b16 %v10258, %v10257
        %v10341 = vpack.c.b16 %v10260, %v10259
        %v10342 = vpack.c.b16 %v10262, %v10261
        %v10343 = vpack.c.b16 %v10264, %v10263
        %v10344 = vpack.c.b16 %v10266, %v10265
        %v10345 = vpack.c.b16 %v10268, %v10267
        %v10346 = vpack.c.b16 %v10270, %v10269
        %v10347 = vpack.c.b16 %v10272, %v10271
        %v10348 = vpack.c.b16 %v10274, %v10273
        %v10349 = vpack.c.b16 %v10276, %v10275
        %v10350 = vpack.c.b16 %v10278, %v10277
        %v10351 = vpack.c.b16 %v10280, %v10279
        %v10352 = vpack.c.b16 %v10282, %v10281
        %v10353 = vpack.c.b16 %v10284, %v10283
        %v10354 = vpack.c.b16 %v10286, %v10285
        %v10355 = vpack.c.b16 %v10288, %v10287
        %v10356 = vpack.c.b16 %v10290, %v10289
        %v10357 = vpack.c.b16 %v10292, %v10291
        %v10358 = vpack.c.b16 %v10294, %v10293
        %10423 = vmatpush.bf16.msra.mxu0 %v10302
        %10424 = vmatpush.bf16.msra.mxu0 %v10301
        %10425 = vmatpush.bf16.msra.mxu0 %v10300
        %10426 = vmatpush.bf16.msra.mxu0 %v10299
        %10427 = vmatpush.bf16.msra.mxu0 %v10298
        %10428 = vmatpush.bf16.msra.mxu0 %v10297
        %10429 = vmatpush.bf16.msra.mxu0 %v10296
        %10430 = vmatpush.bf16.msra.mxu0 %v10295
        %10431 = vmatmul.bf16.gmra.mxu0 %v9911
        %v10432 = vpop.f32.mrf.mxu0
        %v10433 = vadd.f32 %v9717, %v10432
        %v10434 = vpop.f32.mrf.mxu0
        %v10435 = vadd.f32 %v9717, %v10434
        %10436 = vmatmul.bf16.gmra.mxu0 %v9919
        %v10437 = vpop.f32.mrf.mxu0
        %v10438 = vadd.f32 %v9717, %v10437
        %v10439 = vpop.f32.mrf.mxu0
        %v10440 = vadd.f32 %v9717, %v10439
        %10441 = vmatmul.bf16.gmra.mxu0 %v9927
        %v10442 = vpop.f32.mrf.mxu0
        %v10443 = vadd.f32 %v9717, %v10442
        %v10444 = vpop.f32.mrf.mxu0
        %v10445 = vadd.f32 %v9717, %v10444
        %10446 = vmatmul.bf16.gmra.mxu0 %v9935
        %v10447 = vpop.f32.mrf.mxu0
        %v10448 = vadd.f32 %v9717, %v10447
        %v10449 = vpop.f32.mrf.mxu0
        %v10450 = vadd.f32 %v9717, %v10449
        %10451 = vmatmul.bf16.gmra.mxu0 %v9943
        %v10452 = vpop.f32.mrf.mxu0
        %v10453 = vadd.f32 %v9717, %v10452
        %v10454 = vpop.f32.mrf.mxu0
        %v10455 = vadd.f32 %v9717, %v10454
        %10456 = vmatmul.bf16.gmra.mxu0 %v9951
        %v10457 = vpop.f32.mrf.mxu0
        %v10458 = vadd.f32 %v9717, %v10457
        %v10459 = vpop.f32.mrf.mxu0
        %v10460 = vadd.f32 %v9717, %v10459
        %10461 = vmatmul.bf16.gmra.mxu0 %v9959
        %v10462 = vpop.f32.mrf.mxu0
        %v10463 = vadd.f32 %v9717, %v10462
        %v10464 = vpop.f32.mrf.mxu0
        %v10465 = vadd.f32 %v9717, %v10464
        %10466 = vmatmul.bf16.gmra.mxu0 %v9967
        %v10467 = vpop.f32.mrf.mxu0
        %v10468 = vadd.f32 %v9717, %v10467
        %v10469 = vpop.f32.mrf.mxu0
        %v10470 = vadd.f32 %v9717, %v10469
        %10471 = vdwg.mxu0
        %10472 = vmatpush.bf16.msra.mxu0 %v10310
        %10473 = vmatpush.bf16.msra.mxu0 %v10309
        %10474 = vmatpush.bf16.msra.mxu0 %v10308
        %10475 = vmatpush.bf16.msra.mxu0 %v10307
        %10476 = vmatpush.bf16.msra.mxu0 %v10306
        %10477 = vmatpush.bf16.msra.mxu0 %v10305
        %10478 = vmatpush.bf16.msra.mxu0 %v10304
        %10479 = vmatpush.bf16.msra.mxu0 %v10303
        %10480 = vmatmul.bf16.gmra.mxu0 %v9912
        %v10481 = vpop.f32.mrf.mxu0
        %v10482 = vadd.f32 %v10433, %v10481
        %v10483 = vpop.f32.mrf.mxu0
        %v10484 = vadd.f32 %v10435, %v10483
        %10485 = vmatmul.bf16.gmra.mxu0 %v9920
        %v10486 = vpop.f32.mrf.mxu0
        %v10487 = vadd.f32 %v10438, %v10486
        %v10488 = vpop.f32.mrf.mxu0
        %v10489 = vadd.f32 %v10440, %v10488
        %10490 = vmatmul.bf16.gmra.mxu0 %v9928
        %v10491 = vpop.f32.mrf.mxu0
        %v10492 = vadd.f32 %v10443, %v10491
        %v10493 = vpop.f32.mrf.mxu0
        %v10494 = vadd.f32 %v10445, %v10493
        %10495 = vmatmul.bf16.gmra.mxu0 %v9936
        %v10496 = vpop.f32.mrf.mxu0
        %v10497 = vadd.f32 %v10448, %v10496
        %v10498 = vpop.f32.mrf.mxu0
        %v10499 = vadd.f32 %v10450, %v10498
        %10500 = vmatmul.bf16.gmra.mxu0 %v9944
        %v10501 = vpop.f32.mrf.mxu0
        %v10502 = vadd.f32 %v10453, %v10501
        %v10503 = vpop.f32.mrf.mxu0
        %v10504 = vadd.f32 %v10455, %v10503
        %10505 = vmatmul.bf16.gmra.mxu0 %v9952
        %v10506 = vpop.f32.mrf.mxu0
        %v10507 = vadd.f32 %v10458, %v10506
        %v10508 = vpop.f32.mrf.mxu0
        %v10509 = vadd.f32 %v10460, %v10508
        %10510 = vmatmul.bf16.gmra.mxu0 %v9960
        %v10511 = vpop.f32.mrf.mxu0
        %v10512 = vadd.f32 %v10463, %v10511
        %v10513 = vpop.f32.mrf.mxu0
        %v10514 = vadd.f32 %v10465, %v10513
        %10515 = vmatmul.bf16.gmra.mxu0 %v9968
        %v10516 = vpop.f32.mrf.mxu0
        %v10517 = vadd.f32 %v10468, %v10516
        %v10518 = vpop.f32.mrf.mxu0
        %v10519 = vadd.f32 %v10470, %v10518
        %10520 = vdwg.mxu0
        %10521 = vmatpush.bf16.msra.mxu0 %v10318
        %10522 = vmatpush.bf16.msra.mxu0 %v10317
        %10523 = vmatpush.bf16.msra.mxu0 %v10316
        %10524 = vmatpush.bf16.msra.mxu0 %v10315
        %10525 = vmatpush.bf16.msra.mxu0 %v10314
        %10526 = vmatpush.bf16.msra.mxu0 %v10313
        %10527 = vmatpush.bf16.msra.mxu0 %v10312
        %10528 = vmatpush.bf16.msra.mxu0 %v10311
        %10529 = vmatmul.bf16.gmra.mxu0 %v9913
        %v10530 = vpop.f32.mrf.mxu0
        %v10531 = vadd.f32 %v10482, %v10530
        %v10532 = vpop.f32.mrf.mxu0
        %v10533 = vadd.f32 %v10484, %v10532
        %10534 = vmatmul.bf16.gmra.mxu0 %v9921
        %v10535 = vpop.f32.mrf.mxu0
        %v10536 = vadd.f32 %v10487, %v10535
        %v10537 = vpop.f32.mrf.mxu0
        %v10538 = vadd.f32 %v10489, %v10537
        %10539 = vmatmul.bf16.gmra.mxu0 %v9929
        %v10540 = vpop.f32.mrf.mxu0
        %v10541 = vadd.f32 %v10492, %v10540
        %v10542 = vpop.f32.mrf.mxu0
        %v10543 = vadd.f32 %v10494, %v10542
        %10544 = vmatmul.bf16.gmra.mxu0 %v9937
        %v10545 = vpop.f32.mrf.mxu0
        %v10546 = vadd.f32 %v10497, %v10545
        %v10547 = vpop.f32.mrf.mxu0
        %v10548 = vadd.f32 %v10499, %v10547
        %10549 = vmatmul.bf16.gmra.mxu0 %v9945
        %v10550 = vpop.f32.mrf.mxu0
        %v10551 = vadd.f32 %v10502, %v10550
        %v10552 = vpop.f32.mrf.mxu0
        %v10553 = vadd.f32 %v10504, %v10552
        %10554 = vmatmul.bf16.gmra.mxu0 %v9953
        %v10555 = vpop.f32.mrf.mxu0
        %v10556 = vadd.f32 %v10507, %v10555
        %v10557 = vpop.f32.mrf.mxu0
        %v10558 = vadd.f32 %v10509, %v10557
        %10559 = vmatmul.bf16.gmra.mxu0 %v9961
        %v10560 = vpop.f32.mrf.mxu0
        %v10561 = vadd.f32 %v10512, %v10560
        %v10562 = vpop.f32.mrf.mxu0
        %v10563 = vadd.f32 %v10514, %v10562
        %10564 = vmatmul.bf16.gmra.mxu0 %v9969
        %v10565 = vpop.f32.mrf.mxu0
        %v10566 = vadd.f32 %v10517, %v10565
        %v10567 = vpop.f32.mrf.mxu0
        %v10568 = vadd.f32 %v10519, %v10567
        %10569 = vdwg.mxu0
        %10570 = vmatpush.bf16.msra.mxu0 %v10326
        %10571 = vmatpush.bf16.msra.mxu0 %v10325
        %10572 = vmatpush.bf16.msra.mxu0 %v10324
        %10573 = vmatpush.bf16.msra.mxu0 %v10323
        %10574 = vmatpush.bf16.msra.mxu0 %v10322
        %10575 = vmatpush.bf16.msra.mxu0 %v10321
        %10576 = vmatpush.bf16.msra.mxu0 %v10320
        %10577 = vmatpush.bf16.msra.mxu0 %v10319
        %10578 = vmatmul.bf16.gmra.mxu0 %v9914
        %v10579 = vpop.f32.mrf.mxu0
        %v10580 = vadd.f32 %v10531, %v10579
        %v10581 = vpop.f32.mrf.mxu0
        %v10582 = vadd.f32 %v10533, %v10581
        %10583 = vmatmul.bf16.gmra.mxu0 %v9922
        %v10584 = vpop.f32.mrf.mxu0
        %v10585 = vadd.f32 %v10536, %v10584
        %v10586 = vpop.f32.mrf.mxu0
        %v10587 = vadd.f32 %v10538, %v10586
        %10588 = vmatmul.bf16.gmra.mxu0 %v9930
        %v10589 = vpop.f32.mrf.mxu0
        %v10590 = vadd.f32 %v10541, %v10589
        %v10591 = vpop.f32.mrf.mxu0
        %v10592 = vadd.f32 %v10543, %v10591
        %10593 = vmatmul.bf16.gmra.mxu0 %v9938
        %v10594 = vpop.f32.mrf.mxu0
        %v10595 = vadd.f32 %v10546, %v10594
        %v10596 = vpop.f32.mrf.mxu0
        %v10597 = vadd.f32 %v10548, %v10596
        %10598 = vmatmul.bf16.gmra.mxu0 %v9946
        %v10599 = vpop.f32.mrf.mxu0
        %v10600 = vadd.f32 %v10551, %v10599
        %v10601 = vpop.f32.mrf.mxu0
        %v10602 = vadd.f32 %v10553, %v10601
        %10603 = vmatmul.bf16.gmra.mxu0 %v9954
        %v10604 = vpop.f32.mrf.mxu0
        %v10605 = vadd.f32 %v10556, %v10604
        %v10606 = vpop.f32.mrf.mxu0
        %v10607 = vadd.f32 %v10558, %v10606
        %10608 = vmatmul.bf16.gmra.mxu0 %v9962
        %v10609 = vpop.f32.mrf.mxu0
        %v10610 = vadd.f32 %v10561, %v10609
        %v10611 = vpop.f32.mrf.mxu0
        %v10612 = vadd.f32 %v10563, %v10611
        %10613 = vmatmul.bf16.gmra.mxu0 %v9970
        %v10614 = vpop.f32.mrf.mxu0
        %v10615 = vadd.f32 %v10566, %v10614
        %v10616 = vpop.f32.mrf.mxu0
        %v10617 = vadd.f32 %v10568, %v10616
        %10618 = vdwg.mxu0
        %10619 = vmatpush.bf16.msra.mxu0 %v10334
        %10620 = vmatpush.bf16.msra.mxu0 %v10333
        %10621 = vmatpush.bf16.msra.mxu0 %v10332
        %10622 = vmatpush.bf16.msra.mxu0 %v10331
        %10623 = vmatpush.bf16.msra.mxu0 %v10330
        %10624 = vmatpush.bf16.msra.mxu0 %v10329
        %10625 = vmatpush.bf16.msra.mxu0 %v10328
        %10626 = vmatpush.bf16.msra.mxu0 %v10327
        %10627 = vmatmul.bf16.gmra.mxu0 %v9915
        %v10628 = vpop.f32.mrf.mxu0
        %v10629 = vadd.f32 %v10580, %v10628
        %v10630 = vpop.f32.mrf.mxu0
        %v10631 = vadd.f32 %v10582, %v10630
        %10632 = vmatmul.bf16.gmra.mxu0 %v9923
        %v10633 = vpop.f32.mrf.mxu0
        %v10634 = vadd.f32 %v10585, %v10633
        %v10635 = vpop.f32.mrf.mxu0
        %v10636 = vadd.f32 %v10587, %v10635
        %10637 = vmatmul.bf16.gmra.mxu0 %v9931
        %v10638 = vpop.f32.mrf.mxu0
        %v10639 = vadd.f32 %v10590, %v10638
        %v10640 = vpop.f32.mrf.mxu0
        %v10641 = vadd.f32 %v10592, %v10640
        %10642 = vmatmul.bf16.gmra.mxu0 %v9939
        %v10643 = vpop.f32.mrf.mxu0
        %v10644 = vadd.f32 %v10595, %v10643
        %v10645 = vpop.f32.mrf.mxu0
        %v10646 = vadd.f32 %v10597, %v10645
        %10647 = vmatmul.bf16.gmra.mxu0 %v9947
        %v10648 = vpop.f32.mrf.mxu0
        %v10649 = vadd.f32 %v10600, %v10648
        %v10650 = vpop.f32.mrf.mxu0
        %v10651 = vadd.f32 %v10602, %v10650
        %10652 = vmatmul.bf16.gmra.mxu0 %v9955
        %v10653 = vpop.f32.mrf.mxu0
        %v10654 = vadd.f32 %v10605, %v10653
        %v10655 = vpop.f32.mrf.mxu0
        %v10656 = vadd.f32 %v10607, %v10655
        %10657 = vmatmul.bf16.gmra.mxu0 %v9963
        %v10658 = vpop.f32.mrf.mxu0
        %v10659 = vadd.f32 %v10610, %v10658
        %v10660 = vpop.f32.mrf.mxu0
        %v10661 = vadd.f32 %v10612, %v10660
        %10662 = vmatmul.bf16.gmra.mxu0 %v9971
        %v10663 = vpop.f32.mrf.mxu0
        %v10664 = vadd.f32 %v10615, %v10663
        %v10665 = vpop.f32.mrf.mxu0
        %v10666 = vadd.f32 %v10617, %v10665
        %10667 = vdwg.mxu0
        %10668 = vmatpush.bf16.msra.mxu0 %v10342
        %10669 = vmatpush.bf16.msra.mxu0 %v10341
        %10670 = vmatpush.bf16.msra.mxu0 %v10340
        %10671 = vmatpush.bf16.msra.mxu0 %v10339
        %10672 = vmatpush.bf16.msra.mxu0 %v10338
        %10673 = vmatpush.bf16.msra.mxu0 %v10337
        %10674 = vmatpush.bf16.msra.mxu0 %v10336
        %10675 = vmatpush.bf16.msra.mxu0 %v10335
        %10676 = vmatmul.bf16.gmra.mxu0 %v9916
        %v10677 = vpop.f32.mrf.mxu0
        %v10678 = vadd.f32 %v10629, %v10677
        %v10679 = vpop.f32.mrf.mxu0
        %v10680 = vadd.f32 %v10631, %v10679
        %10681 = vmatmul.bf16.gmra.mxu0 %v9924
        %v10682 = vpop.f32.mrf.mxu0
        %v10683 = vadd.f32 %v10634, %v10682
        %v10684 = vpop.f32.mrf.mxu0
        %v10685 = vadd.f32 %v10636, %v10684
        %10686 = vmatmul.bf16.gmra.mxu0 %v9932
        %v10687 = vpop.f32.mrf.mxu0
        %v10688 = vadd.f32 %v10639, %v10687
        %v10689 = vpop.f32.mrf.mxu0
        %v10690 = vadd.f32 %v10641, %v10689
        %10691 = vmatmul.bf16.gmra.mxu0 %v9940
        %v10692 = vpop.f32.mrf.mxu0
        %v10693 = vadd.f32 %v10644, %v10692
        %v10694 = vpop.f32.mrf.mxu0
        %v10695 = vadd.f32 %v10646, %v10694
        %10696 = vmatmul.bf16.gmra.mxu0 %v9948
        %v10697 = vpop.f32.mrf.mxu0
        %v10698 = vadd.f32 %v10649, %v10697
        %v10699 = vpop.f32.mrf.mxu0
        %v10700 = vadd.f32 %v10651, %v10699
        %10701 = vmatmul.bf16.gmra.mxu0 %v9956
        %v10702 = vpop.f32.mrf.mxu0
        %v10703 = vadd.f32 %v10654, %v10702
        %v10704 = vpop.f32.mrf.mxu0
        %v10705 = vadd.f32 %v10656, %v10704
        %10706 = vmatmul.bf16.gmra.mxu0 %v9964
        %v10707 = vpop.f32.mrf.mxu0
        %v10708 = vadd.f32 %v10659, %v10707
        %v10709 = vpop.f32.mrf.mxu0
        %v10710 = vadd.f32 %v10661, %v10709
        %10711 = vmatmul.bf16.gmra.mxu0 %v9972
        %v10712 = vpop.f32.mrf.mxu0
        %v10713 = vadd.f32 %v10664, %v10712
        %v10714 = vpop.f32.mrf.mxu0
        %v10715 = vadd.f32 %v10666, %v10714
        %10716 = vdwg.mxu0
        %10717 = vmatpush.bf16.msra.mxu0 %v10350
        %10718 = vmatpush.bf16.msra.mxu0 %v10349
        %10719 = vmatpush.bf16.msra.mxu0 %v10348
        %10720 = vmatpush.bf16.msra.mxu0 %v10347
        %10721 = vmatpush.bf16.msra.mxu0 %v10346
        %10722 = vmatpush.bf16.msra.mxu0 %v10345
        %10723 = vmatpush.bf16.msra.mxu0 %v10344
        %10724 = vmatpush.bf16.msra.mxu0 %v10343
        %10725 = vmatmul.bf16.gmra.mxu0 %v9917
        %v10726 = vpop.f32.mrf.mxu0
        %v10727 = vadd.f32 %v10678, %v10726
        %v10728 = vpop.f32.mrf.mxu0
        %v10729 = vadd.f32 %v10680, %v10728
        %10730 = vmatmul.bf16.gmra.mxu0 %v9925
        %v10731 = vpop.f32.mrf.mxu0
        %v10732 = vadd.f32 %v10683, %v10731
        %v10733 = vpop.f32.mrf.mxu0
        %v10734 = vadd.f32 %v10685, %v10733
        %10735 = vmatmul.bf16.gmra.mxu0 %v9933
        %v10736 = vpop.f32.mrf.mxu0
        %v10737 = vadd.f32 %v10688, %v10736
        %v10738 = vpop.f32.mrf.mxu0
        %v10739 = vadd.f32 %v10690, %v10738
        %10740 = vmatmul.bf16.gmra.mxu0 %v9941
        %v10741 = vpop.f32.mrf.mxu0
        %v10742 = vadd.f32 %v10693, %v10741
        %v10743 = vpop.f32.mrf.mxu0
        %v10744 = vadd.f32 %v10695, %v10743
        %10745 = vmatmul.bf16.gmra.mxu0 %v9949
        %v10746 = vpop.f32.mrf.mxu0
        %v10747 = vadd.f32 %v10698, %v10746
        %v10748 = vpop.f32.mrf.mxu0
        %v10749 = vadd.f32 %v10700, %v10748
        %10750 = vmatmul.bf16.gmra.mxu0 %v9957
        %v10751 = vpop.f32.mrf.mxu0
        %v10752 = vadd.f32 %v10703, %v10751
        %v10753 = vpop.f32.mrf.mxu0
        %v10754 = vadd.f32 %v10705, %v10753
        %10755 = vmatmul.bf16.gmra.mxu0 %v9965
        %v10756 = vpop.f32.mrf.mxu0
        %v10757 = vadd.f32 %v10708, %v10756
        %v10758 = vpop.f32.mrf.mxu0
        %v10759 = vadd.f32 %v10710, %v10758
        %10760 = vmatmul.bf16.gmra.mxu0 %v9973
        %v10761 = vpop.f32.mrf.mxu0
        %v10762 = vadd.f32 %v10713, %v10761
        %v10763 = vpop.f32.mrf.mxu0
        %v10764 = vadd.f32 %v10715, %v10763
        %10765 = vdwg.mxu0
        %10766 = vmatpush.bf16.msra.mxu0 %v10358
        %10767 = vmatpush.bf16.msra.mxu0 %v10357
        %10768 = vmatpush.bf16.msra.mxu0 %v10356
        %10769 = vmatpush.bf16.msra.mxu0 %v10355
        %10770 = vmatpush.bf16.msra.mxu0 %v10354
        %10771 = vmatpush.bf16.msra.mxu0 %v10353
        %10772 = vmatpush.bf16.msra.mxu0 %v10352
        %10773 = vmatpush.bf16.msra.mxu0 %v10351
        %10774 = vmatmul.bf16.gmra.mxu0 %v9918
        %v10775 = vpop.f32.mrf.mxu0
        %v10776 = vadd.f32 %v10727, %v10775
        %v10777 = vpop.f32.mrf.mxu0
        %v10778 = vadd.f32 %v10729, %v10777
        %10779 = vmatmul.bf16.gmra.mxu0 %v9926
        %v10780 = vpop.f32.mrf.mxu0
        %v10781 = vadd.f32 %v10732, %v10780
        %v10782 = vpop.f32.mrf.mxu0
        %v10783 = vadd.f32 %v10734, %v10782
        %10784 = vmatmul.bf16.gmra.mxu0 %v9934
        %v10785 = vpop.f32.mrf.mxu0
        %v10786 = vadd.f32 %v10737, %v10785
        %v10787 = vpop.f32.mrf.mxu0
        %v10788 = vadd.f32 %v10739, %v10787
        %10789 = vmatmul.bf16.gmra.mxu0 %v9942
        %v10790 = vpop.f32.mrf.mxu0
        %v10791 = vadd.f32 %v10742, %v10790
        %v10792 = vpop.f32.mrf.mxu0
        %v10793 = vadd.f32 %v10744, %v10792
        %10794 = vmatmul.bf16.gmra.mxu0 %v9950
        %v10795 = vpop.f32.mrf.mxu0
        %v10796 = vadd.f32 %v10747, %v10795
        %v10797 = vpop.f32.mrf.mxu0
        %v10798 = vadd.f32 %v10749, %v10797
        %10799 = vmatmul.bf16.gmra.mxu0 %v9958
        %v10800 = vpop.f32.mrf.mxu0
        %v10801 = vadd.f32 %v10752, %v10800
        %v10802 = vpop.f32.mrf.mxu0
        %v10803 = vadd.f32 %v10754, %v10802
        %10804 = vmatmul.bf16.gmra.mxu0 %v9966
        %v10805 = vpop.f32.mrf.mxu0
        %v10806 = vadd.f32 %v10757, %v10805
        %v10807 = vpop.f32.mrf.mxu0
        %v10808 = vadd.f32 %v10759, %v10807
        %10809 = vmatmul.bf16.gmra.mxu0 %v9974
        %v10810 = vpop.f32.mrf.mxu0
        %v10811 = vadd.f32 %v10762, %v10810
        %v10812 = vpop.f32.mrf.mxu0
        %v10813 = vadd.f32 %v10764, %v10812
        %10814 = vdwg.mxu0
        %10815 = vst.msk [vmem:[%s380] sm:$0xff] %vm406, %v10776
        %10816 = vst.msk [vmem:[%s380 + $0x8] sm:$0xff] %vm406, %v10778
        %10817 = vst.msk [vmem:[%s380 + $0x10] sm:$0xff] %vm406, %v10781
        %10818 = vst.msk [vmem:[%s380 + $0x18] sm:$0xff] %vm406, %v10783
        %10819 = vst.msk [vmem:[%s380 + $0x20] sm:$0xff] %vm406, %v10786
        %10820 = vst.msk [vmem:[%s380 + $0x28] sm:$0xff] %vm406, %v10788
        %10821 = vst.msk [vmem:[%s380 + $0x30] sm:$0xff] %vm406, %v10791
        %10822 = vst.msk [vmem:[%s380 + $0x38] sm:$0xff] %vm406, %v10793
        %10823 = vst.msk [vmem:[%s380 + $0x40] sm:$0xff] %vm406, %v10796
        %10824 = vst.msk [vmem:[%s380 + $0x48] sm:$0xff] %vm406, %v10798
        %10825 = vst.msk [vmem:[%s380 + $0x50] sm:$0xff] %vm406, %v10801
        %10826 = vst.msk [vmem:[%s380 + $0x58] sm:$0xff] %vm406, %v10803
        %10827 = vst.msk [vmem:[%s380 + $0x60] sm:$0xff] %vm406, %v10806
        %10828 = vst.msk [vmem:[%s380 + $0x68] sm:$0xff] %vm406, %v10808
        %10829 = vst.msk [vmem:[%s380 + $0x70] sm:$0xff] %vm406, %v10811
        %10830 = vst.msk [vmem:[%s380 + $0x78] sm:$0xff] %vm406, %v10813
        %s10831 = smul.u32 16, %s26
        %p10832 = scmp.lt.s32.totalorder %s25, 5
        %s10833 = scalar_select %p10832, %s25, 5
        %p10834 = scmp.lt.s32.totalorder %s10831, 15
        %s10835 = scalar_select %p10834, %s10831, 15
        %s10836 = smul.addr %s10833, 16
        %s10837 = sadd.s32 %s10835, %s10836
        %s10838 = smul.addr %s10837, 8
        %s10839 = scalar_lea.vmem %s7, %s10838
        // Predicated region
        $region65: #{network_forward.1} parent=47 // pred_check
          %p10840 = pneg %p210
        $region66: #{network_forward.1} parent=47 // pred_check_branch
          %10842 = sbr.rel (%p10840) target = $region68
        $region67: #{network_forward.1} parent=47 // pred_region
          %s10843 = smul.u32 16, %s26
        $region68: #{network_forward.1} parent=47 // pred_fallthru
          _
      $region48: #{network_forward.1} parent=5 // pred_fallthru
        _
      %p10844 = scmp.le.s32.totalorder 2, %s16
      // Predicated region
      $region69: #{network_forward.1} parent=5 // pred_check
        %p10845 = pneg %p10844
      $region70: #{network_forward.1} parent=5 // pred_check_branch
        %10847 = sbr.rel (%p10845) target = $region72
      $region71: #{network_forward.1} parent=5 // pred_region
        %s10848 = ssub.s32 %s16, 2
        // Predicated region
        $region73: #{network_forward.1} parent=71 // pred_check
          %p10849 = pneg %p216
        $region74: #{network_forward.1} parent=71 // pred_check_branch
          %10851 = sbr.rel (%p10849) target = $region76
        $region75: #{network_forward.1} parent=71 // pred_region
          %s10852 = smul.u32 16, %s28
          %p10853 = scmp.lt.s32.totalorder %s27, 5
          %s10854 = scalar_select %p10853, %s27, 5
          %p10855 = scmp.lt.s32.totalorder %s10852, 15
          %s10856 = scalar_select %p10855, %s10852, 15
          %s10857 = smul.addr %s10854, 16
          %s10858 = sadd.s32 %s10856, %s10857
          %s10859 = smul.addr %s10858, 8
          %s10860 = scalar_lea.vmem %s7, %s10859
        $region76: #{network_forward.1} parent=71 // pred_fallthru
          _
      $region72: #{network_forward.1} parent=5 // pred_fallthru
        _
    $region6: #{network_forward.1} parent=1 // loop_footer
      %s20 = sadd.s32 1, %s16
    $region7: #{network_forward.1} parent=1 // loop_footer_branch
      %15 = sbr.rel target = $region3
    $region8: #{network_forward.1} parent=1 // loop_exit
      _
    %10861 = vsyncpa [#allocation3], 1
    %s10862 = scalar_lea.sflag [#allocation3], 1
    %10863 = vsyncpa %s10862, 1
    %10864 = vsyncpa [#allocation5], 1
    %10865 = vsyncpa [#allocation8], 1

</llo_original>
